<compile_context>
chip_gen: v7x
topology: tpu7x:2x2x1
jax: 0.10.0
libtpu: 0.0.40
codegen_flags: <defaults>
</compile_context>

<pallas_src>
import functools

import numpy as np

import jax
import jax.numpy as jnp
from jax import lax
from jax.experimental import pallas as pl
from jax.experimental.pallas import tpu as pltpu


# ----------------------------- fixed CNN geometry ---------------------------
IMG = 28                 # input spatial extent (28x28, 1 channel)
K5 = 5                   # conv kernel size
C1, C2 = 10, 20          # conv1 / conv2 output channels
P1W = 12                 # pooled conv1 spatial extent (12x12)
P2W = 4                  # pooled conv2 spatial extent (4x4) == number of row bands
BAND = K5 + 1            # pooled-conv1 rows needed per conv2 row-pair band (6)
ROWS_IN = 16             # raw input rows needed per band (4*y2 .. 4*y2+15)

# stage 1 (conv1) Toeplitz matmul:  [4*tb, 512] @ [512, 768] x 4 parity blocks
S1_K = ROWS_IN * IMG     # 448 real K
S1_KPAD = 512            # K padded to a lane multiple
S1_GRP = C1 * P1W        # 120 columns per pooled-conv1 row (co*12 + ox)
S1_BLK = 768             # BAND*S1_GRP = 720 -> padded to 6*128 per parity block
S1_N = 4 * S1_BLK        # 3072: the four 2x2-pool parity blocks

# stage 2 (conv2) Toeplitz matmul:  [4*tb, 768] @ [768, 128] x 4 parity blocks
S2_K = S1_BLK            # 768
S2_GRP = C2 * P2W        # 80 columns (c2*4 + x')
S2_BLK = 128             # 80 -> padded to 128 per parity block
S2_N = 4 * S2_BLK        # 512

# fc stage
FC1_K = P2W * S2_BLK     # 512 (4 row groups of 128 lanes)
FC1_N = 128              # 50 -> padded to 128
FEAT = C2 * P2W * P2W    # 320 (reference only)


# ------------------------------- Pallas kernel ------------------------------
def _fused_cnn_kernel(x_ref, w1_ref, b1_ref, w2_ref, b2_ref,
                      wf1_ref, bf1_ref, wf2_ref, bf2_ref, o_ref, *, tb):
    cdt = w1_ref.dtype
    x = x_ref[...]                                              # [4*tb, 512]

    # conv1: four per-parity Toeplitz dots with the 2x2 max-pool folded in as a
    # running max (never materializes the [4*tb, 3072] f32 pre-pool activation).
    m1 = jnp.dot(x, w1_ref[:, :S1_BLK], preferred_element_type=jnp.float32)
    for k in range(1, 4):
        m1 = jnp.maximum(
            m1, jnp.dot(x, w1_ref[:, k * S1_BLK:(k + 1) * S1_BLK],
                        preferred_element_type=jnp.float32))
    # Bias after the pool (bias is parity-replicated: max(z+b) == max(z)+b), ReLU.
    p1 = jnp.maximum(m1 + b1_ref[...], 0.0).astype(cdt)        # [4*tb, 768]

    # conv2: same structure.
    m2 = jnp.dot(p1, w2_ref[:, :S2_BLK], preferred_element_type=jnp.float32)
    for k in range(1, 4):
        m2 = jnp.maximum(
            m2, jnp.dot(p1, w2_ref[:, k * S2_BLK:(k + 1) * S2_BLK],
                        preferred_element_type=jnp.float32))
    p2 = jnp.maximum(m2 + b2_ref[...], 0.0)                     # [4*tb, 128] f32

    # fc1: the PyTorch NCHW flatten is folded into wf1's row order; the former
    # jnp.concatenate row-gather is replaced by a sum of 4 dots (no relayout).
    hf = jnp.dot(p2[:tb, :].astype(cdt), wf1_ref[:S2_BLK, :],
                 preferred_element_type=jnp.float32)
    for y in range(1, P2W):
        hf = hf + jnp.dot(p2[y * tb:(y + 1) * tb, :].astype(cdt),
                          wf1_ref[y * S2_BLK:(y + 1) * S2_BLK, :],
                          preferred_element_type=jnp.float32)
    hf = jnp.maximum(hf + bf1_ref[...], 0.0).astype(cdt)        # [tb, 128]

    # fc2 (output padded to >=128 lanes for a lane-dense store).
    out = jnp.dot(hf, wf2_ref[...],
                  preferred_element_type=jnp.float32) + bf2_ref[...]
    o_ref[...] = out.astype(o_ref.dtype)                        # [tb, nout_pad]


# ------------------------- host-side parameter packing ----------------------
def pack_params(params, compute_dtype=jnp.bfloat16):
    """One-time packing of PyTorch-layout parameters into the padded, lane-aligned
    Toeplitz / permuted matrices the fused kernel consumes (outside the hot path)."""
    c1w = np.asarray(params["conv1_w"], np.float32)         # [10, 1, 5, 5]
    c1b = np.asarray(params["conv1_b"], np.float32)
    c2w = np.asarray(params["conv2_w"], np.float32)         # [20, 10, 5, 5]
    c2b = np.asarray(params["conv2_b"], np.float32)
    f1w = np.asarray(params["fc1_w"], np.float32)           # [50, 320]
    f1b = np.asarray(params["fc1_b"], np.float32)
    f2w = np.asarray(params["fc2_w"], np.float32)           # [num_out, 50]
    f2b = np.asarray(params["fc2_b"], np.float32)
    nh = f1w.shape[0]
    num_out = f2w.shape[0]
    nout_pad = max(FC1_N, ((num_out + 127) // 128) * 128)   # lane-dense output

    # conv1 Toeplitz [512, 3072]:
    #   column (2*py+px)*768 + j*120 + co*12 + ox holds z1[b, co, 4*y2+2*j+py, 2*ox+px]
    #   row    r*28 + ix                          holds x[b, 4*y2+r, ix]
    w1p = np.zeros((S1_KPAD, S1_N), np.float32)
    py, px, j, co, ox, dy, dx = np.meshgrid(
        np.arange(2), np.arange(2), np.arange(BAND), np.arange(C1),
        np.arange(P1W), np.arange(K5), np.arange(K5), indexing="ij")
    col = (2 * py + px) * S1_BLK + j * S1_GRP + co * P1W + ox
    row = (2 * j + py + dy) * IMG + (2 * ox + px + dx)
    w1p[row.ravel(), col.ravel()] = c1w[co, 0, dy, dx].ravel()
    # conv1 bias: one parity block's worth (added after the pool max).
    b1e = np.zeros((S1_BLK,), np.float32)
    j, co, ox = np.meshgrid(np.arange(BAND), np.arange(C1), np.arange(P1W),
                            indexing="ij")
    b1e[(j * S1_GRP + co * P1W + ox).ravel()] = c1b[co].ravel()

    # conv2 Toeplitz [768, 512]:
    #   column (2*qy+qx)*128 + c2*4 + x' holds z2[b, c2, 2*y2+qy, 2*x'+qx]
    #   row    j*120 + ci*12 + ox        holds p1[b, ci, 2*y2+j, ox]
    w2p = np.zeros((S2_K, S2_N), np.float32)
    qy, qx, c2, xo, ci, dy, dx = np.meshgrid(
        np.arange(2), np.arange(2), np.arange(C2), np.arange(P2W),
        np.arange(C1), np.arange(K5), np.arange(K5), indexing="ij")
    col = (2 * qy + qx) * S2_BLK + c2 * P2W + xo
    row = (qy + dy) * S1_GRP + ci * P1W + (2 * xo + qx + dx)
    w2p[row.ravel(), col.ravel()] = c2w[c2, ci, dy, dx].ravel()
    b2e = np.zeros((S2_BLK,), np.float32)
    c2i, xo = np.meshgrid(np.arange(C2), np.arange(P2W), indexing="ij")
    b2e[(c2i * P2W + xo).ravel()] = c2b[c2i].ravel()

    # fc1 [512, 128]: fold PyTorch's NCHW flatten (c2*16 + y2*4 + x') into a
    # row permutation; kernel-side feature index is y2*128 + c2*4 + x'.
    wf1p = np.zeros((FC1_K, FC1_N), np.float32)
    y2, c2, xo, n = np.meshgrid(
        np.arange(P2W), np.arange(C2), np.arange(P2W), np.arange(nh),
        indexing="ij")
    wf1p[(y2 * S2_BLK + c2 * P2W + xo).ravel(), n.ravel()] = \
        f1w[n, c2 * (P2W * P2W) + y2 * P2W + xo].ravel()
    bf1 = np.zeros((FC1_N,), np.float32)
    bf1[:nh] = f1b

    # fc2 [128, nout_pad] (output lanes padded to a multiple of 128).
    wf2p = np.zeros((FC1_N, nout_pad), np.float32)
    wf2p[:nh, :num_out] = f2w.T
    bf2 = np.zeros((nout_pad,), np.float32)
    bf2[:num_out] = f2b

    return {
        "w1": jnp.asarray(w1p, compute_dtype),
        "b1": jnp.asarray(b1e.reshape(1, -1)),          # f32
        "w2": jnp.asarray(w2p, compute_dtype),
        "b2": jnp.asarray(b2e.reshape(1, -1)),          # f32
        "wf1": jnp.asarray(wf1p, compute_dtype),
        "bf1": jnp.asarray(bf1.reshape(1, -1)),         # f32
        "wf2": jnp.asarray(wf2p, compute_dtype),
        "bf2": jnp.asarray(bf2.reshape(1, -1)),         # f32
    }


# ------------------------------- forward wrapper ----------------------------
def _prep_input(x_nchw, tb, compute_dtype):
    """[B,1,28,28] -> [4*B, 512]: row (blk*4*tb + y2*tb + bw) holds input rows
    4*y2 .. 4*y2+15 of image b = blk*tb + bw, flattened row-major, zero-padded."""
    B = x_nchw.shape[0]
    x = x_nchw.reshape(B, IMG, IMG).astype(jnp.float32)
    bands = jnp.stack([x[:, 4 * y2:4 * y2 + ROWS_IN, :] for y2 in range(P2W)],
                      axis=1)                                # [B, 4, 16, 28]
    bands = bands.reshape(B, P2W, S1_K)
    nblk = B // tb
    bands = bands.reshape(nblk, tb, P2W, S1_K).transpose(0, 2, 1, 3)
    bands = bands.reshape(nblk * P2W * tb, S1_K)
    xp = jnp.pad(bands, ((0, 0), (0, S1_KPAD - S1_K)))
    return xp.astype(compute_dtype)


def _choose_tb(batch):
    """Largest batch tile (multiple of 8, <= 64 so 4*tb <= 256 == the v6e/v7x MXU
    height) dividing `batch`, preferring a grid of >= 2 so v7x's two TensorCores
    both get work ("parallel" batch axis). Small batches fall back gracefully."""
    cands = [t for t in (64, 56, 48, 40, 32, 24, 16, 8) if batch % t == 0]
    if not cands:
        raise ValueError(f"batch {batch} must be a multiple of 8")
    for t in cands:
        if batch // t >= 2:
            return t
    return cands[0]


def _const_spec(shape):
    """Grid-constant operand (weights/biases): fetched once; single-buffered to
    avoid the default double-buffer footprint (matters on v7x's 64 MiB VMEM)."""
    try:
        return pl.BlockSpec(shape, lambda i: (0, 0), pipeline_mode=pl.Buffered(1))
    except TypeError:                      # older BlockSpec without pipeline_mode
        return pl.BlockSpec(shape, lambda i: (0, 0))


def unbounded_grid_locnet_forward(packed, x_nchw, *, num_out, tb=None):
    """Forward of UnBoundedGridLocNet: [B,1,28,28] -> [B, grid_h*grid_w, 2]."""
    B = x_nchw.shape[0]
    if tb is None:
        tb = _choose_tb(B)
    nout_pad = packed["wf2"].shape[1]
    assert B % tb == 0 and tb % 8 == 0 and num_out <= nout_pad, (B, tb, num_out)
    cdt = packed["w1"].dtype
    xp = _prep_input(x_nchw, tb, cdt)

    out = pl.pallas_call(
        functools.partial(_fused_cnn_kernel, tb=tb),
        out_shape=jax.ShapeDtypeStruct((B, nout_pad), jnp.float32),
        grid_spec=pltpu.PrefetchScalarGridSpec(
            num_scalar_prefetch=0,
            grid=(B // tb,),
            in_specs=[
                pl.BlockSpec((P2W * tb, S1_KPAD), lambda i: (i, 0)),  # input bands
                _const_spec((S1_KPAD, S1_N)),      # conv1 Toeplitz
                _const_spec((1, S1_BLK)),          # conv1 bias (post-pool)
                _const_spec((S2_K, S2_N)),         # conv2 Toeplitz
                _const_spec((1, S2_BLK)),          # conv2 bias (post-pool)
                _const_spec((FC1_K, FC1_N)),       # fc1 (flatten-permuted)
                _const_spec((1, FC1_N)),
                _const_spec((FC1_N, nout_pad)),    # fc2 (lane-padded)
                _const_spec((1, nout_pad)),
            ],
            out_specs=pl.BlockSpec((tb, nout_pad), lambda i: (i, 0)),
        ),
        compiler_params=pltpu.CompilerParams(
            dimension_semantics=("parallel",),
            vmem_limit_bytes=32 * 1024 * 1024),   # fits v7x's 64 MiB/TC budget
    )(xp, packed["w1"], packed["b1"], packed["w2"], packed["b2"],
      packed["wf1"], packed["bf1"], packed["wf2"], packed["bf2"])

    return out[:, :num_out].reshape(B, -1, 2)


# ------------------------------ reference & init ----------------------------
def init_params(key, grid_h, grid_w, target_control_points):
    """Deterministic synthetic init matching the PyTorch module's shapes."""
    ks = jax.random.split(key, 6)

    def u(k, shape, fan_in):
        bound = 1.0 / (fan_in ** 0.5)
        return jax.random.uniform(k, shape, jnp.float32, -bound, bound)

    num_out = grid_h * grid_w * 2
    return {
        "conv1_w": u(ks[0], (C1, 1, K5, K5), 1 * K5 * K5),
        "conv1_b": u(ks[1], (C1,), 1 * K5 * K5),
        "conv2_w": u(ks[2], (C2, C1, K5, K5), C1 * K5 * K5),
        "conv2_b": u(ks[3], (C2,), C1 * K5 * K5),
        "fc1_w": u(ks[4], (50, FEAT), FEAT),
        "fc1_b": u(ks[5], (50,), FEAT),
        # UnBoundedGridLocNet.__init__: fc2.weight.zero_(), fc2.bias = tcp
        "fc2_w": jnp.zeros((num_out, 50), jnp.float32),
        "fc2_b": target_control_points.reshape(-1).astype(jnp.float32),
    }


def reference_forward(params, x_nchw):
    """Pure-JAX reference (eval-mode PyTorch semantics) for correctness checks."""
    dn = ("NCHW", "OIHW", "NCHW")
    prec = lax.Precision.HIGHEST
    z1 = lax.conv_general_dilated(x_nchw, params["conv1_w"], (1, 1), "VALID",
                                  dimension_numbers=dn, precision=prec)
    z1 = z1 + params["conv1_b"][None, :, None, None]
    p1 = jnp.maximum(lax.reduce_window(z1, -jnp.inf, lax.max,
                                       (1, 1, 2, 2), (1, 1, 2, 2), "VALID"), 0.0)
    z2 = lax.conv_general_dilated(p1, params["conv2_w"], (1, 1), "VALID",
                                  dimension_numbers=dn, precision=prec)
    z2 = z2 + params["conv2_b"][None, :, None, None]
    p2 = jnp.maximum(lax.reduce_window(z2, -jnp.inf, lax.max,
                                       (1, 1, 2, 2), (1, 1, 2, 2), "VALID"), 0.0)
    f = p2.reshape(x_nchw.shape[0], FEAT)
    h = jnp.maximum(jnp.dot(f, params["fc1_w"].T, precision=prec)
                    + params["fc1_b"], 0.0)
    out = jnp.dot(h, params["fc2_w"].T, precision=prec) + params["fc2_b"]
    return out.reshape(x_nchw.shape[0], -1, 2)


# ------------------------------------ main -----------------------------------
if __name__ == "__main__":
    grid_h, grid_w = 2, 2
    num_out = grid_h * grid_w * 2
    ys = jnp.linspace(-1.0, 1.0, grid_h)
    xs = jnp.linspace(-1.0, 1.0, grid_w)
    tcp = jnp.stack(jnp.meshgrid(ys, xs, indexing="ij"), axis=-1).reshape(-1, 2)

    key = jax.random.PRNGKey(0)
    pkey, xkey, tkey = jax.random.split(key, 3)
    B = 64   # auto-chosen tb=32 -> M=128 per dot, grid=2 (both v7x TCs busy)
    x = jax.random.normal(xkey, (B, 1, IMG, IMG), jnp.float32)

    fwd = jax.jit(unbounded_grid_locnet_forward, static_argnames=("num_out", "tb"))

    # Internal numerical check with a non-zero fc2 so the whole conv/fc pipeline
    # is exercised (f32 packing: tight-ish tol; bf16 packing: loose tol).
    test_params = init_params(pkey, grid_h, grid_w, tcp)
    k1, k2 = jax.random.split(tkey)
    test_params["fc2_w"] = 0.1 * jax.random.normal(k1, test_params["fc2_w"].shape)
    test_params["fc2_b"] = 0.1 * jax.random.normal(k2, test_params["fc2_b"].shape)
    want = reference_forward(test_params, x)

    got32 = jax.block_until_ready(
        fwd(pack_params(test_params, jnp.float32), x, num_out=num_out))
    assert got32.shape == want.shape, (got32.shape, want.shape)
    assert jnp.allclose(got32, want, atol=5e-2, rtol=5e-2), \
        float(jnp.max(jnp.abs(got32 - want)))

    got16 = jax.block_until_ready(
        fwd(pack_params(test_params, jnp.bfloat16), x, num_out=num_out))
    assert jnp.allclose(got16, want, atol=0.25, rtol=0.25), \
        float(jnp.max(jnp.abs(got16 - want)))

    # Faithful UnBoundedGridLocNet params (fc2.weight = 0, fc2.bias = tcp):
    # every batch element must reproduce the target control points exactly.
    params = init_params(pkey, grid_h, grid_w, tcp)
    packed = pack_params(params, jnp.bfloat16)
    out = jax.block_until_ready(fwd(packed, x, num_out=num_out))
    assert out.shape == (B, grid_h * grid_w, 2), out.shape
    assert jnp.allclose(out, jnp.broadcast_to(tcp[None], out.shape), atol=1e-5)
    print("KERNEL_OK")
</pallas_src>

<mosaic_0001>
module attributes {stable_mosaic.version = 11 : i64} {
  func.func @_fused_cnn_kernel(%arg0: i32, %arg1: memref<128x512xf32, #tpu.memory_space<vmem>>, %arg2: memref<512x3072xf32, #tpu.memory_space<vmem>>, %arg3: memref<1x768xf32, #tpu.memory_space<vmem>>, %arg4: memref<768x512xf32, #tpu.memory_space<vmem>>, %arg5: memref<1x128xf32, #tpu.memory_space<vmem>>, %arg6: memref<512x128xf32, #tpu.memory_space<vmem>>, %arg7: memref<1x128xf32, #tpu.memory_space<vmem>>, %arg8: memref<128x128xf32, #tpu.memory_space<vmem>>, %arg9: memref<1x128xf32, #tpu.memory_space<vmem>>, %arg10: memref<32x128xf32, #tpu.memory_space<vmem>>) attributes {dimension_semantics = [#tpu.dimension_semantics<parallel>], iteration_bounds = array<i64: 2>, scalar_prefetch = 0 : i64, scratch_operands = 0 : i64, tpu.core_type = #tpu.core_type<tc>, window_params = [{transform_indices = @transform_0, window_bounds = array<i64: 128, 512>}, {pipeline_mode = #tpu.pipeline_mode<synchronous>, transform_indices = @transform_1, window_bounds = array<i64: 512, 3072>}, {pipeline_mode = #tpu.pipeline_mode<synchronous>, transform_indices = @transform_2, window_bounds = array<i64: 1, 768>}, {pipeline_mode = #tpu.pipeline_mode<synchronous>, transform_indices = @transform_3, window_bounds = array<i64: 768, 512>}, {pipeline_mode = #tpu.pipeline_mode<synchronous>, transform_indices = @transform_4, window_bounds = array<i64: 1, 128>}, {pipeline_mode = #tpu.pipeline_mode<synchronous>, transform_indices = @transform_5, window_bounds = array<i64: 512, 128>}, {pipeline_mode = #tpu.pipeline_mode<synchronous>, transform_indices = @transform_6, window_bounds = array<i64: 1, 128>}, {pipeline_mode = #tpu.pipeline_mode<synchronous>, transform_indices = @transform_7, window_bounds = array<i64: 128, 128>}, {pipeline_mode = #tpu.pipeline_mode<synchronous>, transform_indices = @transform_8, window_bounds = array<i64: 1, 128>}, {transform_indices = @transform_9, window_bounds = array<i64: 32, 128>}]} {
    %c0 = arith.constant 0 : index
    %c0_0 = arith.constant 0 : index
    %0 = vector.load %arg1[%c0, %c0_0] : memref<128x512xf32, #tpu.memory_space<vmem>>, vector<128x512xf32>
    %c0_1 = arith.constant 0 : index
    %c0_2 = arith.constant 0 : index
    %1 = vector.load %arg2[%c0_1, %c0_2] : memref<512x3072xf32, #tpu.memory_space<vmem>>, vector<512x768xf32>
    %cst = arith.constant dense<0.000000e+00> : vector<128x768xf32>
    %2 = tpu.matmul %0, %1, %cst {dimension_numbers = #tpu.dot_dimension_numbers<[1], [0], [0], [1], [0, 0, 1, 1], [], []>} : vector<128x512xf32>, vector<512x768xf32>, vector<128x768xf32> -> vector<128x768xf32>
    %c0_3 = arith.constant 0 : index
    %c768 = arith.constant 768 : index
    %3 = vector.load %arg2[%c0_3, %c768] : memref<512x3072xf32, #tpu.memory_space<vmem>>, vector<512x768xf32>
    %cst_4 = arith.constant dense<0.000000e+00> : vector<128x768xf32>
    %4 = tpu.matmul %0, %3, %cst_4 {dimension_numbers = #tpu.dot_dimension_numbers<[1], [0], [0], [1], [0, 0, 1, 1], [], []>} : vector<128x512xf32>, vector<512x768xf32>, vector<128x768xf32> -> vector<128x768xf32>
    %5 = arith.maximumf %2, %4 : vector<128x768xf32>
    %c0_5 = arith.constant 0 : index
    %c1536 = arith.constant 1536 : index
    %6 = vector.load %arg2[%c0_5, %c1536] : memref<512x3072xf32, #tpu.memory_space<vmem>>, vector<512x768xf32>
    %cst_6 = arith.constant dense<0.000000e+00> : vector<128x768xf32>
    %7 = tpu.matmul %0, %6, %cst_6 {dimension_numbers = #tpu.dot_dimension_numbers<[1], [0], [0], [1], [0, 0, 1, 1], [], []>} : vector<128x512xf32>, vector<512x768xf32>, vector<128x768xf32> -> vector<128x768xf32>
    %8 = arith.maximumf %5, %7 : vector<128x768xf32>
    %c0_7 = arith.constant 0 : index
    %c2304 = arith.constant 2304 : index
    %9 = vector.load %arg2[%c0_7, %c2304] : memref<512x3072xf32, #tpu.memory_space<vmem>>, vector<512x768xf32>
    %cst_8 = arith.constant dense<0.000000e+00> : vector<128x768xf32>
    %10 = tpu.matmul %0, %9, %cst_8 {dimension_numbers = #tpu.dot_dimension_numbers<[1], [0], [0], [1], [0, 0, 1, 1], [], []>} : vector<128x512xf32>, vector<512x768xf32>, vector<128x768xf32> -> vector<128x768xf32>
    %11 = arith.maximumf %8, %10 : vector<128x768xf32>
    %c0_9 = arith.constant 0 : index
    %c0_10 = arith.constant 0 : index
    %12 = vector.load %arg3[%c0_9, %c0_10] : memref<1x768xf32, #tpu.memory_space<vmem>>, vector<1x768xf32>
    %13 = vector.broadcast %12 : vector<1x768xf32> to vector<128x768xf32>
    %14 = arith.addf %11, %13 : vector<128x768xf32>
    %cst_11 = arith.constant 0.000000e+00 : f32
    %15 = vector.broadcast %cst_11 : f32 to vector<128x768xf32>
    %16 = arith.maximumf %14, %15 : vector<128x768xf32>
    %c0_12 = arith.constant 0 : index
    %c0_13 = arith.constant 0 : index
    %17 = vector.load %arg4[%c0_12, %c0_13] : memref<768x512xf32, #tpu.memory_space<vmem>>, vector<768x128xf32>
    %cst_14 = arith.constant dense<0.000000e+00> : vector<128x128xf32>
    %18 = tpu.matmul %16, %17, %cst_14 {dimension_numbers = #tpu.dot_dimension_numbers<[1], [0], [0], [1], [0, 0, 1, 1], [], []>} : vector<128x768xf32>, vector<768x128xf32>, vector<128x128xf32> -> vector<128x128xf32>
    %c0_15 = arith.constant 0 : index
    %c128 = arith.constant 128 : index
    %19 = vector.load %arg4[%c0_15, %c128] : memref<768x512xf32, #tpu.memory_space<vmem>>, vector<768x128xf32>
    %cst_16 = arith.constant dense<0.000000e+00> : vector<128x128xf32>
    %20 = tpu.matmul %16, %19, %cst_16 {dimension_numbers = #tpu.dot_dimension_numbers<[1], [0], [0], [1], [0, 0, 1, 1], [], []>} : vector<128x768xf32>, vector<768x128xf32>, vector<128x128xf32> -> vector<128x128xf32>
    %21 = arith.maximumf %18, %20 : vector<128x128xf32>
    %c0_17 = arith.constant 0 : index
    %c256 = arith.constant 256 : index
    %22 = vector.load %arg4[%c0_17, %c256] : memref<768x512xf32, #tpu.memory_space<vmem>>, vector<768x128xf32>
    %cst_18 = arith.constant dense<0.000000e+00> : vector<128x128xf32>
    %23 = tpu.matmul %16, %22, %cst_18 {dimension_numbers = #tpu.dot_dimension_numbers<[1], [0], [0], [1], [0, 0, 1, 1], [], []>} : vector<128x768xf32>, vector<768x128xf32>, vector<128x128xf32> -> vector<128x128xf32>
    %24 = arith.maximumf %21, %23 : vector<128x128xf32>
    %c0_19 = arith.constant 0 : index
    %c384 = arith.constant 384 : index
    %25 = vector.load %arg4[%c0_19, %c384] : memref<768x512xf32, #tpu.memory_space<vmem>>, vector<768x128xf32>
    %cst_20 = arith.constant dense<0.000000e+00> : vector<128x128xf32>
    %26 = tpu.matmul %16, %25, %cst_20 {dimension_numbers = #tpu.dot_dimension_numbers<[1], [0], [0], [1], [0, 0, 1, 1], [], []>} : vector<128x768xf32>, vector<768x128xf32>, vector<128x128xf32> -> vector<128x128xf32>
    %27 = arith.maximumf %24, %26 : vector<128x128xf32>
    %c0_21 = arith.constant 0 : index
    %c0_22 = arith.constant 0 : index
    %28 = vector.load %arg5[%c0_21, %c0_22] : memref<1x128xf32, #tpu.memory_space<vmem>>, vector<1x128xf32>
    %29 = vector.broadcast %28 : vector<1x128xf32> to vector<128x128xf32>
    %30 = arith.addf %27, %29 : vector<128x128xf32>
    %cst_23 = arith.constant 0.000000e+00 : f32
    %31 = vector.broadcast %cst_23 : f32 to vector<128x128xf32>
    %32 = arith.maximumf %30, %31 : vector<128x128xf32>
    %33 = vector.extract_strided_slice %32 {offsets = [0, 0], sizes = [32, 128], strides = [1, 1]} : vector<128x128xf32> to vector<32x128xf32>
    %c0_24 = arith.constant 0 : index
    %c0_25 = arith.constant 0 : index
    %34 = vector.load %arg6[%c0_24, %c0_25] : memref<512x128xf32, #tpu.memory_space<vmem>>, vector<128x128xf32>
    %cst_26 = arith.constant dense<0.000000e+00> : vector<32x128xf32>
    %35 = tpu.matmul %33, %34, %cst_26 {dimension_numbers = #tpu.dot_dimension_numbers<[1], [0], [0], [1], [0, 0, 1, 1], [], []>} : vector<32x128xf32>, vector<128x128xf32>, vector<32x128xf32> -> vector<32x128xf32>
    %36 = vector.extract_strided_slice %32 {offsets = [32, 0], sizes = [32, 128], strides = [1, 1]} : vector<128x128xf32> to vector<32x128xf32>
    %c128_27 = arith.constant 128 : index
    %c0_28 = arith.constant 0 : index
    %37 = vector.load %arg6[%c128_27, %c0_28] : memref<512x128xf32, #tpu.memory_space<vmem>>, vector<128x128xf32>
    %cst_29 = arith.constant dense<0.000000e+00> : vector<32x128xf32>
    %38 = tpu.matmul %36, %37, %cst_29 {dimension_numbers = #tpu.dot_dimension_numbers<[1], [0], [0], [1], [0, 0, 1, 1], [], []>} : vector<32x128xf32>, vector<128x128xf32>, vector<32x128xf32> -> vector<32x128xf32>
    %39 = arith.addf %35, %38 : vector<32x128xf32>
    %40 = vector.extract_strided_slice %32 {offsets = [64, 0], sizes = [32, 128], strides = [1, 1]} : vector<128x128xf32> to vector<32x128xf32>
    %c256_30 = arith.constant 256 : index
    %c0_31 = arith.constant 0 : index
    %41 = vector.load %arg6[%c256_30, %c0_31] : memref<512x128xf32, #tpu.memory_space<vmem>>, vector<128x128xf32>
    %cst_32 = arith.constant dense<0.000000e+00> : vector<32x128xf32>
    %42 = tpu.matmul %40, %41, %cst_32 {dimension_numbers = #tpu.dot_dimension_numbers<[1], [0], [0], [1], [0, 0, 1, 1], [], []>} : vector<32x128xf32>, vector<128x128xf32>, vector<32x128xf32> -> vector<32x128xf32>
    %43 = arith.addf %39, %42 : vector<32x128xf32>
    %44 = vector.extract_strided_slice %32 {offsets = [96, 0], sizes = [32, 128], strides = [1, 1]} : vector<128x128xf32> to vector<32x128xf32>
    %c384_33 = arith.constant 384 : index
    %c0_34 = arith.constant 0 : index
    %45 = vector.load %arg6[%c384_33, %c0_34] : memref<512x128xf32, #tpu.memory_space<vmem>>, vector<128x128xf32>
    %cst_35 = arith.constant dense<0.000000e+00> : vector<32x128xf32>
    %46 = tpu.matmul %44, %45, %cst_35 {dimension_numbers = #tpu.dot_dimension_numbers<[1], [0], [0], [1], [0, 0, 1, 1], [], []>} : vector<32x128xf32>, vector<128x128xf32>, vector<32x128xf32> -> vector<32x128xf32>
    %47 = arith.addf %43, %46 : vector<32x128xf32>
    %c0_36 = arith.constant 0 : index
    %c0_37 = arith.constant 0 : index
    %48 = vector.load %arg7[%c0_36, %c0_37] : memref<1x128xf32, #tpu.memory_space<vmem>>, vector<1x128xf32>
    %49 = vector.broadcast %48 : vector<1x128xf32> to vector<32x128xf32>
    %50 = arith.addf %47, %49 : vector<32x128xf32>
    %cst_38 = arith.constant 0.000000e+00 : f32
    %51 = vector.broadcast %cst_38 : f32 to vector<32x128xf32>
    %52 = arith.maximumf %50, %51 : vector<32x128xf32>
    %c0_39 = arith.constant 0 : index
    %c0_40 = arith.constant 0 : index
    %53 = vector.load %arg8[%c0_39, %c0_40] : memref<128x128xf32, #tpu.memory_space<vmem>>, vector<128x128xf32>
    %cst_41 = arith.constant dense<0.000000e+00> : vector<32x128xf32>
    %54 = tpu.matmul %52, %53, %cst_41 {dimension_numbers = #tpu.dot_dimension_numbers<[1], [0], [0], [1], [0, 0, 1, 1], [], []>} : vector<32x128xf32>, vector<128x128xf32>, vector<32x128xf32> -> vector<32x128xf32>
    %c0_42 = arith.constant 0 : index
    %c0_43 = arith.constant 0 : index
    %55 = vector.load %arg9[%c0_42, %c0_43] : memref<1x128xf32, #tpu.memory_space<vmem>>, vector<1x128xf32>
    %56 = vector.broadcast %55 : vector<1x128xf32> to vector<32x128xf32>
    %57 = arith.addf %54, %56 : vector<32x128xf32>
    %c0_44 = arith.constant 0 : index
    %c0_45 = arith.constant 0 : index
    %58 = vector.load %arg10[%c0_44, %c0_45] : memref<32x128xf32, #tpu.memory_space<vmem>>, vector<32x128xf32>
    tpu.vector_store %arg10[%c0_44, %c0_45], %57 {strides = array<i32>} : memref<32x128xf32, #tpu.memory_space<vmem>>, vector<32x128xf32>,
    return
  }
  func.func @transform_0(%arg0: i32) -> (i32, i32) {
    %c0_i32 = arith.constant 0 : i32
    %c0_i32_0 = arith.constant 0 : i32
    return %arg0, %c0_i32 : i32, i32
  }
  func.func @transform_1(%arg0: i32) -> (i32, i32) {
    %c0_i32 = arith.constant 0 : i32
    %c0_i32_0 = arith.constant 0 : i32
    %c0_i32_1 = arith.constant 0 : i32
    return %c0_i32, %c0_i32_0 : i32, i32
  }
  func.func @transform_2(%arg0: i32) -> (i32, i32) {
    %c0_i32 = arith.constant 0 : i32
    %c0_i32_0 = arith.constant 0 : i32
    %c0_i32_1 = arith.constant 0 : i32
    return %c0_i32, %c0_i32_0 : i32, i32
  }
  func.func @transform_3(%arg0: i32) -> (i32, i32) {
    %c0_i32 = arith.constant 0 : i32
    %c0_i32_0 = arith.constant 0 : i32
    %c0_i32_1 = arith.constant 0 : i32
    return %c0_i32, %c0_i32_0 : i32, i32
  }
  func.func @transform_4(%arg0: i32) -> (i32, i32) {
    %c0_i32 = arith.constant 0 : i32
    %c0_i32_0 = arith.constant 0 : i32
    %c0_i32_1 = arith.constant 0 : i32
    return %c0_i32, %c0_i32_0 : i32, i32
  }
  func.func @transform_5(%arg0: i32) -> (i32, i32) {
    %c0_i32 = arith.constant 0 : i32
    %c0_i32_0 = arith.constant 0 : i32
    %c0_i32_1 = arith.constant 0 : i32
    return %c0_i32, %c0_i32_0 : i32, i32
  }
  func.func @transform_6(%arg0: i32) -> (i32, i32) {
    %c0_i32 = arith.constant 0 : i32
    %c0_i32_0 = arith.constant 0 : i32
    %c0_i32_1 = arith.constant 0 : i32
    return %c0_i32, %c0_i32_0 : i32, i32
  }
  func.func @transform_7(%arg0: i32) -> (i32, i32) {
    %c0_i32 = arith.constant 0 : i32
    %c0_i32_0 = arith.constant 0 : i32
    %c0_i32_1 = arith.constant 0 : i32
    return %c0_i32, %c0_i32_0 : i32, i32
  }
  func.func @transform_8(%arg0: i32) -> (i32, i32) {
    %c0_i32 = arith.constant 0 : i32
    %c0_i32_0 = arith.constant 0 : i32
    %c0_i32_1 = arith.constant 0 : i32
    return %c0_i32, %c0_i32_0 : i32, i32
  }
  func.func @transform_9(%arg0: i32) -> (i32, i32) {
    %c0_i32 = arith.constant 0 : i32
    %c0_i32_0 = arith.constant 0 : i32
    return %arg0, %c0_i32 : i32, i32
  }
}

</mosaic_0001>

<llo_original>
// kernel: unbounded_grid_locnet_forward.1
$region0: #{unbounded_grid_locnet_forward.1}
  #allocation0 [shape = 'u32[]', space=smem, size = 0x4, offset = 0x4, fixed_abs, tag = 'smem constant byte address 0x4 - core index']
  #allocation1 [shape = 'u32[144,128]{1,0:T(1,128)}', space=vmem, size = 0x12000, scoped, tag = 'internal scratch']
  %s0 = inlined_call_operand.vmem [shape: f32[256,512], index: 0, kind: input, shape index: {}]
  %s1 = inlined_call_operand.vmem [shape: f32[512,3072], index: 1, kind: input, shape index: {}]
  %s2 = inlined_call_operand.vmem [shape: f32[1,768], index: 2, kind: input, shape index: {}]
  %s3 = inlined_call_operand.vmem [shape: f32[768,512], index: 3, kind: input, shape index: {}]
  %s4 = inlined_call_operand.vmem [shape: f32[1,128], index: 4, kind: input, shape index: {}]
  %s5 = inlined_call_operand.vmem [shape: f32[512,128], index: 5, kind: input, shape index: {}]
  %s6 = inlined_call_operand.vmem [shape: f32[1,128], index: 6, kind: input, shape index: {}]
  %s7 = inlined_call_operand.vmem [shape: f32[128,128], index: 7, kind: input, shape index: {}]
  %s8 = inlined_call_operand.vmem [shape: f32[1,128], index: 8, kind: input, shape index: {}]
  %s9 = inlined_call_operand.vmem [shape: f32[64,128], index: 9, kind: output, shape index: {}]
  %s10 = sld [smem:[#allocation0]]
  $region69: #{unbounded_grid_locnet_forward.1} parent=0
    _
  %s12 = ssub.s32 1, %s10
  %s13 = scalar_select 0, %s12, %s10
  loop: start=0, step=1, limit=4
  $region2: #{unbounded_grid_locnet_forward.1} parent=0 // loop_pre_header
    _
  $region3: #{unbounded_grid_locnet_forward.1} parent=0 // loop_header
    %s15 = sphi 0, %s19
    %p16 = scmp.ge.s32.totalorder %s15, 4
    %s25 = sphi 0, %s27
    %s28 = sphi 0, %s25
    %s29 = sphi 0, %s28
    %s45 = sphi 0, %s29
    %s49 = sphi 0, %s49
    %s51 = sphi 0, %s49
    %s52 = sphi 0, %s51
    %s66 = sphi 0, %s52
    %s70 = sphi 0, %s70
    %s72 = sphi 0, %s70
    %s73 = sphi 0, %s72
    %s87 = sphi 0, %s73
    %s91 = sphi 0, %s91
    %s93 = sphi 0, %s91
    %s94 = sphi 0, %s93
    %s108 = sphi 0, %s94
    %s112 = sphi 0, %s112
    %s114 = sphi 0, %s112
    %s115 = sphi 0, %s114
    %s129 = sphi 0, %s115
    %s133 = sphi 0, %s133
    %s135 = sphi 0, %s133
    %s136 = sphi 0, %s135
    %s150 = sphi 0, %s136
    %s154 = sphi 0, %s154
    %s156 = sphi 0, %s154
    %s157 = sphi 0, %s156
    %s171 = sphi 0, %s157
    %s175 = sphi 0, %s175
    %s177 = sphi 0, %s175
    %s178 = sphi 0, %s177
    %s192 = sphi 0, %s178
    %s196 = sphi 0, %s196
    %s198 = sphi 0, %s196
    %s199 = sphi 0, %s198
    %s213 = sphi 0, %s199
    %s219 = sphi 0, %s221
    %s222 = sphi 0, %s219
    %s223 = sphi 0, %s222
    %s239 = sphi 0, %s223
  $region4: #{unbounded_grid_locnet_forward.1} parent=0 // loop_header_branch
    %18 = sbr.rel (%p16) target = $region8
  $region5: #{unbounded_grid_locnet_forward.1} parent=0 // loop_body
    %s20 = ssub.s32 %s15, 1
    %s21 = ssub.s32 %s15, 2
    %s22 = sadd.s32 %s15, 1
    %s23 = ssub.s32 %s15, %s22
    %p24 = scmp.eq.s32.totalorder %s23, 0
    %s26 = sadd.s32 %s25, 1
    %s27 = scalar_select %p24, %s25, %s26
    %p30 = pneg %p24
    %p31 = scmp.eq.s32.totalorder %s15, 1
    %p32 = por %p30, %p31
    %p33 = scmp.ne.s32.totalorder %s25, %s28
    %p34 = scmp.eq.s32.totalorder %s15, 0
    %p35 = por %p33, %p34
    %p36 = scmp.ne.s32.totalorder %s25, %s28
    %p37 = scmp.eq.s32.totalorder %s20, 1
    %p38 = por %p36, %p37
    %p39 = scmp.ne.s32.totalorder %s28, %s29
    %p40 = scmp.eq.s32.totalorder %s20, 0
    %p41 = por %p39, %p40
    %p42 = scmp.ne.s32.totalorder %s28, %s29
    %p43 = scmp.eq.s32.totalorder %s21, 1
    %p44 = por %p42, %p43
    %p46 = scmp.ne.s32.totalorder %s29, %s45
    %p47 = scmp.eq.s32.totalorder %s21, 0
    %p48 = por %p46, %p47
    %s50 = sadd.s32 %s49, 1
    %p53 = scmp.eq.s32.totalorder %s15, 1
    %p54 = scmp.ne.s32.totalorder %s49, %s51
    %p55 = scmp.eq.s32.totalorder %s15, 0
    %p56 = por %p54, %p55
    %p57 = scmp.ne.s32.totalorder %s49, %s51
    %p58 = scmp.eq.s32.totalorder %s20, 1
    %p59 = por %p57, %p58
    %p60 = scmp.ne.s32.totalorder %s51, %s52
    %p61 = scmp.eq.s32.totalorder %s20, 0
    %p62 = por %p60, %p61
    %p63 = scmp.ne.s32.totalorder %s51, %s52
    %p64 = scmp.eq.s32.totalorder %s21, 1
    %p65 = por %p63, %p64
    %p67 = scmp.ne.s32.totalorder %s52, %s66
    %p68 = scmp.eq.s32.totalorder %s21, 0
    %p69 = por %p67, %p68
    %s71 = sadd.s32 %s70, 1
    %p74 = scmp.eq.s32.totalorder %s15, 1
    %p75 = scmp.ne.s32.totalorder %s70, %s72
    %p76 = scmp.eq.s32.totalorder %s15, 0
    %p77 = por %p75, %p76
    %p78 = scmp.ne.s32.totalorder %s70, %s72
    %p79 = scmp.eq.s32.totalorder %s20, 1
    %p80 = por %p78, %p79
    %p81 = scmp.ne.s32.totalorder %s72, %s73
    %p82 = scmp.eq.s32.totalorder %s20, 0
    %p83 = por %p81, %p82
    %p84 = scmp.ne.s32.totalorder %s72, %s73
    %p85 = scmp.eq.s32.totalorder %s21, 1
    %p86 = por %p84, %p85
    %p88 = scmp.ne.s32.totalorder %s73, %s87
    %p89 = scmp.eq.s32.totalorder %s21, 0
    %p90 = por %p88, %p89
    %s92 = sadd.s32 %s91, 1
    %p95 = scmp.eq.s32.totalorder %s15, 1
    %p96 = scmp.ne.s32.totalorder %s91, %s93
    %p97 = scmp.eq.s32.totalorder %s15, 0
    %p98 = por %p96, %p97
    %p99 = scmp.ne.s32.totalorder %s91, %s93
    %p100 = scmp.eq.s32.totalorder %s20, 1
    %p101 = por %p99, %p100
    %p102 = scmp.ne.s32.totalorder %s93, %s94
    %p103 = scmp.eq.s32.totalorder %s20, 0
    %p104 = por %p102, %p103
    %p105 = scmp.ne.s32.totalorder %s93, %s94
    %p106 = scmp.eq.s32.totalorder %s21, 1
    %p107 = por %p105, %p106
    %p109 = scmp.ne.s32.totalorder %s94, %s108
    %p110 = scmp.eq.s32.totalorder %s21, 0
    %p111 = por %p109, %p110
    %s113 = sadd.s32 %s112, 1
    %p116 = scmp.eq.s32.totalorder %s15, 1
    %p117 = scmp.ne.s32.totalorder %s112, %s114
    %p118 = scmp.eq.s32.totalorder %s15, 0
    %p119 = por %p117, %p118
    %p120 = scmp.ne.s32.totalorder %s112, %s114
    %p121 = scmp.eq.s32.totalorder %s20, 1
    %p122 = por %p120, %p121
    %p123 = scmp.ne.s32.totalorder %s114, %s115
    %p124 = scmp.eq.s32.totalorder %s20, 0
    %p125 = por %p123, %p124
    %p126 = scmp.ne.s32.totalorder %s114, %s115
    %p127 = scmp.eq.s32.totalorder %s21, 1
    %p128 = por %p126, %p127
    %p130 = scmp.ne.s32.totalorder %s115, %s129
    %p131 = scmp.eq.s32.totalorder %s21, 0
    %p132 = por %p130, %p131
    %s134 = sadd.s32 %s133, 1
    %p137 = scmp.eq.s32.totalorder %s15, 1
    %p138 = scmp.ne.s32.totalorder %s133, %s135
    %p139 = scmp.eq.s32.totalorder %s15, 0
    %p140 = por %p138, %p139
    %p141 = scmp.ne.s32.totalorder %s133, %s135
    %p142 = scmp.eq.s32.totalorder %s20, 1
    %p143 = por %p141, %p142
    %p144 = scmp.ne.s32.totalorder %s135, %s136
    %p145 = scmp.eq.s32.totalorder %s20, 0
    %p146 = por %p144, %p145
    %p147 = scmp.ne.s32.totalorder %s135, %s136
    %p148 = scmp.eq.s32.totalorder %s21, 1
    %p149 = por %p147, %p148
    %p151 = scmp.ne.s32.totalorder %s136, %s150
    %p152 = scmp.eq.s32.totalorder %s21, 0
    %p153 = por %p151, %p152
    %s155 = sadd.s32 %s154, 1
    %p158 = scmp.eq.s32.totalorder %s15, 1
    %p159 = scmp.ne.s32.totalorder %s154, %s156
    %p160 = scmp.eq.s32.totalorder %s15, 0
    %p161 = por %p159, %p160
    %p162 = scmp.ne.s32.totalorder %s154, %s156
    %p163 = scmp.eq.s32.totalorder %s20, 1
    %p164 = por %p162, %p163
    %p165 = scmp.ne.s32.totalorder %s156, %s157
    %p166 = scmp.eq.s32.totalorder %s20, 0
    %p167 = por %p165, %p166
    %p168 = scmp.ne.s32.totalorder %s156, %s157
    %p169 = scmp.eq.s32.totalorder %s21, 1
    %p170 = por %p168, %p169
    %p172 = scmp.ne.s32.totalorder %s157, %s171
    %p173 = scmp.eq.s32.totalorder %s21, 0
    %p174 = por %p172, %p173
    %s176 = sadd.s32 %s175, 1
    %p179 = scmp.eq.s32.totalorder %s15, 1
    %p180 = scmp.ne.s32.totalorder %s175, %s177
    %p181 = scmp.eq.s32.totalorder %s15, 0
    %p182 = por %p180, %p181
    %p183 = scmp.ne.s32.totalorder %s175, %s177
    %p184 = scmp.eq.s32.totalorder %s20, 1
    %p185 = por %p183, %p184
    %p186 = scmp.ne.s32.totalorder %s177, %s178
    %p187 = scmp.eq.s32.totalorder %s20, 0
    %p188 = por %p186, %p187
    %p189 = scmp.ne.s32.totalorder %s177, %s178
    %p190 = scmp.eq.s32.totalorder %s21, 1
    %p191 = por %p189, %p190
    %p193 = scmp.ne.s32.totalorder %s178, %s192
    %p194 = scmp.eq.s32.totalorder %s21, 0
    %p195 = por %p193, %p194
    %s197 = sadd.s32 %s196, 1
    %p200 = scmp.eq.s32.totalorder %s15, 1
    %p201 = scmp.ne.s32.totalorder %s196, %s198
    %p202 = scmp.eq.s32.totalorder %s15, 0
    %p203 = por %p201, %p202
    %p204 = scmp.ne.s32.totalorder %s196, %s198
    %p205 = scmp.eq.s32.totalorder %s20, 1
    %p206 = por %p204, %p205
    %p207 = scmp.ne.s32.totalorder %s198, %s199
    %p208 = scmp.eq.s32.totalorder %s20, 0
    %p209 = por %p207, %p208
    %p210 = scmp.ne.s32.totalorder %s198, %s199
    %p211 = scmp.eq.s32.totalorder %s21, 1
    %p212 = por %p210, %p211
    %p214 = scmp.ne.s32.totalorder %s199, %s213
    %p215 = scmp.eq.s32.totalorder %s21, 0
    %p216 = por %p214, %p215
    %s217 = ssub.s32 %s15, %s22
    %p218 = scmp.eq.s32.totalorder %s217, 0
    %s220 = sadd.s32 %s219, 1
    %s221 = scalar_select %p218, %s219, %s220
    %p224 = pneg %p218
    %p225 = scmp.eq.s32.totalorder %s15, 1
    %p226 = por %p224, %p225
    %p227 = scmp.ne.s32.totalorder %s219, %s222
    %p228 = scmp.eq.s32.totalorder %s15, 0
    %p229 = por %p227, %p228
    %p230 = scmp.ne.s32.totalorder %s219, %s222
    %p231 = scmp.eq.s32.totalorder %s20, 1
    %p232 = por %p230, %p231
    %p233 = scmp.ne.s32.totalorder %s222, %s223
    %p234 = scmp.eq.s32.totalorder %s20, 0
    %p235 = por %p233, %p234
    %p236 = scmp.ne.s32.totalorder %s222, %s223
    %p237 = scmp.eq.s32.totalorder %s21, 1
    %p238 = por %p236, %p237
    %p240 = scmp.ne.s32.totalorder %s223, %s239
    %p241 = scmp.eq.s32.totalorder %s21, 0
    %p242 = por %p240, %p241
    %p243 = scmp.le.s32.totalorder 1, %s15
    %p244 = scmp.lt.s32.totalorder %s15, 3
    %p245 = pnand %p243, %p244
    %p246 = pneg %p245
    // Predicated region
    $region9: #{unbounded_grid_locnet_forward.1} parent=5 // pred_check
      _
    $region10: #{unbounded_grid_locnet_forward.1} parent=5 // pred_check_branch
      %248 = sbr.rel (%p245) target = $region12
    $region11: #{unbounded_grid_locnet_forward.1} parent=5 // pred_region
      %s249 = ssub.s32 %s15, 1
      // Predicated region
      $region13: #{unbounded_grid_locnet_forward.1} parent=11 // pred_check
        %p250 = pneg %p62
      $region14: #{unbounded_grid_locnet_forward.1} parent=11 // pred_check_branch
        %252 = sbr.rel (%p250) target = $region16
      $region15: #{unbounded_grid_locnet_forward.1} parent=11 // pred_region
        _
      $region16: #{unbounded_grid_locnet_forward.1} parent=11 // pred_fallthru
        _
      // Predicated region
      $region17: #{unbounded_grid_locnet_forward.1} parent=11 // pred_check
        %p253 = pneg %p83
      $region18: #{unbounded_grid_locnet_forward.1} parent=11 // pred_check_branch
        %255 = sbr.rel (%p253) target = $region20
      $region19: #{unbounded_grid_locnet_forward.1} parent=11 // pred_region
        _
      $region20: #{unbounded_grid_locnet_forward.1} parent=11 // pred_fallthru
        _
      // Predicated region
      $region21: #{unbounded_grid_locnet_forward.1} parent=11 // pred_check
        %p256 = pneg %p104
      $region22: #{unbounded_grid_locnet_forward.1} parent=11 // pred_check_branch
        %258 = sbr.rel (%p256) target = $region24
      $region23: #{unbounded_grid_locnet_forward.1} parent=11 // pred_region
        _
      $region24: #{unbounded_grid_locnet_forward.1} parent=11 // pred_fallthru
        _
      // Predicated region
      $region25: #{unbounded_grid_locnet_forward.1} parent=11 // pred_check
        %p259 = pneg %p125
      $region26: #{unbounded_grid_locnet_forward.1} parent=11 // pred_check_branch
        %261 = sbr.rel (%p259) target = $region28
      $region27: #{unbounded_grid_locnet_forward.1} parent=11 // pred_region
        _
      $region28: #{unbounded_grid_locnet_forward.1} parent=11 // pred_fallthru
        _
      // Predicated region
      $region29: #{unbounded_grid_locnet_forward.1} parent=11 // pred_check
        %p262 = pneg %p146
      $region30: #{unbounded_grid_locnet_forward.1} parent=11 // pred_check_branch
        %264 = sbr.rel (%p262) target = $region32
      $region31: #{unbounded_grid_locnet_forward.1} parent=11 // pred_region
        _
      $region32: #{unbounded_grid_locnet_forward.1} parent=11 // pred_fallthru
        _
      // Predicated region
      $region33: #{unbounded_grid_locnet_forward.1} parent=11 // pred_check
        %p265 = pneg %p167
      $region34: #{unbounded_grid_locnet_forward.1} parent=11 // pred_check_branch
        %267 = sbr.rel (%p265) target = $region36
      $region35: #{unbounded_grid_locnet_forward.1} parent=11 // pred_region
        _
      $region36: #{unbounded_grid_locnet_forward.1} parent=11 // pred_fallthru
        _
      // Predicated region
      $region37: #{unbounded_grid_locnet_forward.1} parent=11 // pred_check
        %p268 = pneg %p188
      $region38: #{unbounded_grid_locnet_forward.1} parent=11 // pred_check_branch
        %270 = sbr.rel (%p268) target = $region40
      $region39: #{unbounded_grid_locnet_forward.1} parent=11 // pred_region
        _
      $region40: #{unbounded_grid_locnet_forward.1} parent=11 // pred_fallthru
        _
      // Predicated region
      $region41: #{unbounded_grid_locnet_forward.1} parent=11 // pred_check
        %p271 = pneg %p209
      $region42: #{unbounded_grid_locnet_forward.1} parent=11 // pred_check_branch
        %273 = sbr.rel (%p271) target = $region44
      $region43: #{unbounded_grid_locnet_forward.1} parent=11 // pred_region
        _
      $region44: #{unbounded_grid_locnet_forward.1} parent=11 // pred_fallthru
        _
    $region12: #{unbounded_grid_locnet_forward.1} parent=5 // pred_fallthru
      _
    %p274 = scmp.lt.s32.totalorder %s15, 2
    // Predicated region
    $region45: #{unbounded_grid_locnet_forward.1} parent=5 // pred_check
      %p275 = pneg %p274
    $region46: #{unbounded_grid_locnet_forward.1} parent=5 // pred_check_branch
      %277 = sbr.rel (%p275) target = $region48
    $region47: #{unbounded_grid_locnet_forward.1} parent=5 // pred_region
      // Predicated region
      $region49: #{unbounded_grid_locnet_forward.1} parent=47 // pred_check
        %p278 = pneg %p35
      $region50: #{unbounded_grid_locnet_forward.1} parent=47 // pred_check_branch
        %280 = sbr.rel (%p278) target = $region52
      $region51: #{unbounded_grid_locnet_forward.1} parent=47 // pred_region
        %s281 = smul.u32 16, %s15
        %p282 = scmp.lt.s32.totalorder %s281, 31
        %s283 = scalar_select %p282, %s281, 31
        %s284 = smul.addr %s283, 4
        %s285 = smul.addr %s284, 8
        %s286 = scalar_lea.vmem %s0, %s285
        %s287 = smul.u32 16, %s15
      $region52: #{unbounded_grid_locnet_forward.1} parent=47 // pred_fallthru
        _
    $region48: #{unbounded_grid_locnet_forward.1} parent=5 // pred_fallthru
      _
    %p288 = scmp.le.s32.totalorder 1, %s15
    %p289 = scmp.lt.s32.totalorder %s15, 3
    %p290 = pnand %p288, %p289
    %p291 = pneg %p290
    // Predicated region
    $region53: #{unbounded_grid_locnet_forward.1} parent=5 // pred_check
      _
    $region54: #{unbounded_grid_locnet_forward.1} parent=5 // pred_check_branch
      %293 = sbr.rel (%p290) target = $region56
    $region55: #{unbounded_grid_locnet_forward.1} parent=5 // pred_region
      %s294 = ssub.s32 %s15, 1
      %s295 = smul.u32 16, %s20
      %p296 = scmp.lt.s32.totalorder %s295, 31
      %s297 = scalar_select %p296, %s295, 31
      %s298 = smul.addr %s297, 4
      %s299 = smul.addr %s298, 8
      %s300 = scalar_lea.vmem %s0, %s299
      %p301 = pneg %p41
      %p302 = pneg %p38
      %p303 = pneg %p62
      %p304 = pneg %p59
      %p305 = pneg %p83
      %p306 = pneg %p80
      %p307 = pneg %p104
      %p308 = pneg %p101
      %p309 = pneg %p125
      %p310 = pneg %p122
      %p311 = pneg %p146
      %p312 = pneg %p143
      %p313 = pneg %p167
      %p314 = pneg %p164
      %p315 = pneg %p188
      %p316 = pneg %p185
      %p317 = pneg %p209
      %p318 = pneg %p206
      %p319 = pneg %p235
      %p320 = pneg %p232
      %s321 = smul.u32 4, %s20
      %p322 = scmp.lt.s32.totalorder %s321, 7
      %s323 = scalar_select %p322, %s321, 7
      %s324 = smul.addr %s323, 8
      %s325 = scalar_lea.vmem %s9, %s324
      %s326 = smul.u32 16, %s20
      %p327 = scmp.lt.s32.totalorder %s326, 31
      %s328 = scalar_select %p327, %s326, 31
      %s329 = smul.addr %s328, 4
      %s330 = smul.addr %s329, 8
      %s331 = scalar_lea.vmem %s0, %s330
      %s332 = smul.u32 16, %s20
      %s333 = smul.u32 4, %s20
      %p334 = scmp.lt.s32.totalorder %s333, 7
      %s335 = scalar_select %p334, %s333, 7
      %s336 = smul.addr %s335, 8
      %s337 = scalar_lea.vmem %s9, %s336
      %s338 = smul.u32 4, %s20
      %v339 = vld [vmem:[%s331] sm:$0xff]
      %v340 = vld [vmem:[%s331 + $0x8] sm:$0xff]
      %v341 = vld [vmem:[%s331 + $0x10] sm:$0xff]
      %v342 = vld [vmem:[%s331 + $0x18] sm:$0xff]
      %v343 = vld [vmem:[%s331 + $0x20] sm:$0xff]
      %v344 = vld [vmem:[%s331 + $0x28] sm:$0xff]
      %v345 = vld [vmem:[%s331 + $0x30] sm:$0xff]
      %v346 = vld [vmem:[%s331 + $0x38] sm:$0xff]
      %v347 = vld [vmem:[%s331 + $0x40] sm:$0xff]
      %v348 = vld [vmem:[%s331 + $0x48] sm:$0xff]
      %v349 = vld [vmem:[%s331 + $0x50] sm:$0xff]
      %v350 = vld [vmem:[%s331 + $0x58] sm:$0xff]
      %v351 = vld [vmem:[%s331 + $0x60] sm:$0xff]
      %v352 = vld [vmem:[%s331 + $0x68] sm:$0xff]
      %v353 = vld [vmem:[%s331 + $0x70] sm:$0xff]
      %v354 = vld [vmem:[%s331 + $0x78] sm:$0xff]
      %v355 = vld [vmem:[%s331 + $0x80] sm:$0xff]
      %v356 = vld [vmem:[%s331 + $0x88] sm:$0xff]
      %v357 = vld [vmem:[%s331 + $0x90] sm:$0xff]
      %v358 = vld [vmem:[%s331 + $0x98] sm:$0xff]
      %v359 = vld [vmem:[%s331 + $0xa0] sm:$0xff]
      %v360 = vld [vmem:[%s331 + $0xa8] sm:$0xff]
      %v361 = vld [vmem:[%s331 + $0xb0] sm:$0xff]
      %v362 = vld [vmem:[%s331 + $0xb8] sm:$0xff]
      %v363 = vld [vmem:[%s331 + $0xc0] sm:$0xff]
      %v364 = vld [vmem:[%s331 + $0xc8] sm:$0xff]
      %v365 = vld [vmem:[%s331 + $0xd0] sm:$0xff]
      %v366 = vld [vmem:[%s331 + $0xd8] sm:$0xff]
      %v367 = vld [vmem:[%s331 + $0xe0] sm:$0xff]
      %v368 = vld [vmem:[%s331 + $0xe8] sm:$0xff]
      %v369 = vld [vmem:[%s331 + $0xf0] sm:$0xff]
      %v370 = vld [vmem:[%s331 + $0xf8] sm:$0xff]
      %v371 = vld [vmem:[%s331 + $0x100] sm:$0xff]
      %v372 = vld [vmem:[%s331 + $0x108] sm:$0xff]
      %v373 = vld [vmem:[%s331 + $0x110] sm:$0xff]
      %v374 = vld [vmem:[%s331 + $0x118] sm:$0xff]
      %v375 = vld [vmem:[%s331 + $0x120] sm:$0xff]
      %v376 = vld [vmem:[%s331 + $0x128] sm:$0xff]
      %v377 = vld [vmem:[%s331 + $0x130] sm:$0xff]
      %v378 = vld [vmem:[%s331 + $0x138] sm:$0xff]
      %v379 = vld [vmem:[%s331 + $0x140] sm:$0xff]
      %v380 = vld [vmem:[%s331 + $0x148] sm:$0xff]
      %v381 = vld [vmem:[%s331 + $0x150] sm:$0xff]
      %v382 = vld [vmem:[%s331 + $0x158] sm:$0xff]
      %v383 = vld [vmem:[%s331 + $0x160] sm:$0xff]
      %v384 = vld [vmem:[%s331 + $0x168] sm:$0xff]
      %v385 = vld [vmem:[%s331 + $0x170] sm:$0xff]
      %v386 = vld [vmem:[%s331 + $0x178] sm:$0xff]
      %v387 = vld [vmem:[%s331 + $0x180] sm:$0xff]
      %v388 = vld [vmem:[%s331 + $0x188] sm:$0xff]
      %v389 = vld [vmem:[%s331 + $0x190] sm:$0xff]
      %v390 = vld [vmem:[%s331 + $0x198] sm:$0xff]
      %v391 = vld [vmem:[%s331 + $0x1a0] sm:$0xff]
      %v392 = vld [vmem:[%s331 + $0x1a8] sm:$0xff]
      %v393 = vld [vmem:[%s331 + $0x1b0] sm:$0xff]
      %v394 = vld [vmem:[%s331 + $0x1b8] sm:$0xff]
      %v395 = vld [vmem:[%s331 + $0x1c0] sm:$0xff]
      %v396 = vld [vmem:[%s331 + $0x1c8] sm:$0xff]
      %v397 = vld [vmem:[%s331 + $0x1d0] sm:$0xff]
      %v398 = vld [vmem:[%s331 + $0x1d8] sm:$0xff]
      %v399 = vld [vmem:[%s331 + $0x1e0] sm:$0xff]
      %v400 = vld [vmem:[%s331 + $0x1e8] sm:$0xff]
      %v401 = vld [vmem:[%s331 + $0x1f0] sm:$0xff]
      %v402 = vld [vmem:[%s331 + $0x1f8] sm:$0xff]
      %v403 = vld [vmem:[%s1] sm:$0xff]
      %v404 = vld [vmem:[%s1 + $0x8] sm:$0xff]
      %v405 = vld [vmem:[%s1 + $0x10] sm:$0xff]
      %v406 = vld [vmem:[%s1 + $0x18] sm:$0xff]
      %v407 = vld [vmem:[%s1 + $0x20] sm:$0xff]
      %v408 = vld [vmem:[%s1 + $0x28] sm:$0xff]
      %v409 = vld [vmem:[%s1 + $0xc0] sm:$0xff]
      %v410 = vld [vmem:[%s1 + $0xc8] sm:$0xff]
      %v411 = vld [vmem:[%s1 + $0xd0] sm:$0xff]
      %v412 = vld [vmem:[%s1 + $0xd8] sm:$0xff]
      %v413 = vld [vmem:[%s1 + $0xe0] sm:$0xff]
      %v414 = vld [vmem:[%s1 + $0xe8] sm:$0xff]
      %v415 = vld [vmem:[%s1 + $0x180] sm:$0xff]
      %v416 = vld [vmem:[%s1 + $0x188] sm:$0xff]
      %v417 = vld [vmem:[%s1 + $0x190] sm:$0xff]
      %v418 = vld [vmem:[%s1 + $0x198] sm:$0xff]
      %v419 = vld [vmem:[%s1 + $0x1a0] sm:$0xff]
      %v420 = vld [vmem:[%s1 + $0x1a8] sm:$0xff]
      %v421 = vld [vmem:[%s1 + $0x240] sm:$0xff]
      %v422 = vld [vmem:[%s1 + $0x248] sm:$0xff]
      %v423 = vld [vmem:[%s1 + $0x250] sm:$0xff]
      %v424 = vld [vmem:[%s1 + $0x258] sm:$0xff]
      %v425 = vld [vmem:[%s1 + $0x260] sm:$0xff]
      %v426 = vld [vmem:[%s1 + $0x268] sm:$0xff]
      %v427 = vld [vmem:[%s1 + $0x300] sm:$0xff]
      %v428 = vld [vmem:[%s1 + $0x308] sm:$0xff]
      %v429 = vld [vmem:[%s1 + $0x310] sm:$0xff]
      %v430 = vld [vmem:[%s1 + $0x318] sm:$0xff]
      %v431 = vld [vmem:[%s1 + $0x320] sm:$0xff]
      %v432 = vld [vmem:[%s1 + $0x328] sm:$0xff]
      %v433 = vld [vmem:[%s1 + $0x3c0] sm:$0xff]
      %v434 = vld [vmem:[%s1 + $0x3c8] sm:$0xff]
      %v435 = vld [vmem:[%s1 + $0x3d0] sm:$0xff]
      %v436 = vld [vmem:[%s1 + $0x3d8] sm:$0xff]
      %v437 = vld [vmem:[%s1 + $0x3e0] sm:$0xff]
      %v438 = vld [vmem:[%s1 + $0x3e8] sm:$0xff]
      %v439 = vld [vmem:[%s1 + $0x480] sm:$0xff]
      %v440 = vld [vmem:[%s1 + $0x488] sm:$0xff]
      %v441 = vld [vmem:[%s1 + $0x490] sm:$0xff]
      %v442 = vld [vmem:[%s1 + $0x498] sm:$0xff]
      %v443 = vld [vmem:[%s1 + $0x4a0] sm:$0xff]
      %v444 = vld [vmem:[%s1 + $0x4a8] sm:$0xff]
      %v445 = vld [vmem:[%s1 + $0x540] sm:$0xff]
      %v446 = vld [vmem:[%s1 + $0x548] sm:$0xff]
      %v447 = vld [vmem:[%s1 + $0x550] sm:$0xff]
      %v448 = vld [vmem:[%s1 + $0x558] sm:$0xff]
      %v449 = vld [vmem:[%s1 + $0x560] sm:$0xff]
      %v450 = vld [vmem:[%s1 + $0x568] sm:$0xff]
      %v451 = vld [vmem:[%s1 + $0x600] sm:$0xff]
      %v452 = vld [vmem:[%s1 + $0x608] sm:$0xff]
      %v453 = vld [vmem:[%s1 + $0x610] sm:$0xff]
      %v454 = vld [vmem:[%s1 + $0x618] sm:$0xff]
      %v455 = vld [vmem:[%s1 + $0x620] sm:$0xff]
      %v456 = vld [vmem:[%s1 + $0x628] sm:$0xff]
      %v457 = vld [vmem:[%s1 + $0x6c0] sm:$0xff]
      %v458 = vld [vmem:[%s1 + $0x6c8] sm:$0xff]
      %v459 = vld [vmem:[%s1 + $0x6d0] sm:$0xff]
      %v460 = vld [vmem:[%s1 + $0x6d8] sm:$0xff]
      %v461 = vld [vmem:[%s1 + $0x6e0] sm:$0xff]
      %v462 = vld [vmem:[%s1 + $0x6e8] sm:$0xff]
      %v463 = vld [vmem:[%s1 + $0x780] sm:$0xff]
      %v464 = vld [vmem:[%s1 + $0x788] sm:$0xff]
      %v465 = vld [vmem:[%s1 + $0x790] sm:$0xff]
      %v466 = vld [vmem:[%s1 + $0x798] sm:$0xff]
      %v467 = vld [vmem:[%s1 + $0x7a0] sm:$0xff]
      %v468 = vld [vmem:[%s1 + $0x7a8] sm:$0xff]
      %v469 = vld [vmem:[%s1 + $0x840] sm:$0xff]
      %v470 = vld [vmem:[%s1 + $0x848] sm:$0xff]
      %v471 = vld [vmem:[%s1 + $0x850] sm:$0xff]
      %v472 = vld [vmem:[%s1 + $0x858] sm:$0xff]
      %v473 = vld [vmem:[%s1 + $0x860] sm:$0xff]
      %v474 = vld [vmem:[%s1 + $0x868] sm:$0xff]
      %v475 = vld [vmem:[%s1 + $0x900] sm:$0xff]
      %v476 = vld [vmem:[%s1 + $0x908] sm:$0xff]
      %v477 = vld [vmem:[%s1 + $0x910] sm:$0xff]
      %v478 = vld [vmem:[%s1 + $0x918] sm:$0xff]
      %v479 = vld [vmem:[%s1 + $0x920] sm:$0xff]
      %v480 = vld [vmem:[%s1 + $0x928] sm:$0xff]
      %v481 = vld [vmem:[%s1 + $0x9c0] sm:$0xff]
      %v482 = vld [vmem:[%s1 + $0x9c8] sm:$0xff]
      %v483 = vld [vmem:[%s1 + $0x9d0] sm:$0xff]
      %v484 = vld [vmem:[%s1 + $0x9d8] sm:$0xff]
      %v485 = vld [vmem:[%s1 + $0x9e0] sm:$0xff]
      %v486 = vld [vmem:[%s1 + $0x9e8] sm:$0xff]
      %v487 = vld [vmem:[%s1 + $0xa80] sm:$0xff]
      %v488 = vld [vmem:[%s1 + $0xa88] sm:$0xff]
      %v489 = vld [vmem:[%s1 + $0xa90] sm:$0xff]
      %v490 = vld [vmem:[%s1 + $0xa98] sm:$0xff]
      %v491 = vld [vmem:[%s1 + $0xaa0] sm:$0xff]
      %v492 = vld [vmem:[%s1 + $0xaa8] sm:$0xff]
      %v493 = vld [vmem:[%s1 + $0xb40] sm:$0xff]
      %v494 = vld [vmem:[%s1 + $0xb48] sm:$0xff]
      %v495 = vld [vmem:[%s1 + $0xb50] sm:$0xff]
      %v496 = vld [vmem:[%s1 + $0xb58] sm:$0xff]
      %v497 = vld [vmem:[%s1 + $0xb60] sm:$0xff]
      %v498 = vld [vmem:[%s1 + $0xb68] sm:$0xff]
      %v499 = vld [vmem:[%s1 + $0xc00] sm:$0xff]
      %v500 = vld [vmem:[%s1 + $0xc08] sm:$0xff]
      %v501 = vld [vmem:[%s1 + $0xc10] sm:$0xff]
      %v502 = vld [vmem:[%s1 + $0xc18] sm:$0xff]
      %v503 = vld [vmem:[%s1 + $0xc20] sm:$0xff]
      %v504 = vld [vmem:[%s1 + $0xc28] sm:$0xff]
      %v505 = vld [vmem:[%s1 + $0xcc0] sm:$0xff]
      %v506 = vld [vmem:[%s1 + $0xcc8] sm:$0xff]
      %v507 = vld [vmem:[%s1 + $0xcd0] sm:$0xff]
      %v508 = vld [vmem:[%s1 + $0xcd8] sm:$0xff]
      %v509 = vld [vmem:[%s1 + $0xce0] sm:$0xff]
      %v510 = vld [vmem:[%s1 + $0xce8] sm:$0xff]
      %v511 = vld [vmem:[%s1 + $0xd80] sm:$0xff]
      %v512 = vld [vmem:[%s1 + $0xd88] sm:$0xff]
      %v513 = vld [vmem:[%s1 + $0xd90] sm:$0xff]
      %v514 = vld [vmem:[%s1 + $0xd98] sm:$0xff]
      %v515 = vld [vmem:[%s1 + $0xda0] sm:$0xff]
      %v516 = vld [vmem:[%s1 + $0xda8] sm:$0xff]
      %v517 = vld [vmem:[%s1 + $0xe40] sm:$0xff]
      %v518 = vld [vmem:[%s1 + $0xe48] sm:$0xff]
      %v519 = vld [vmem:[%s1 + $0xe50] sm:$0xff]
      %v520 = vld [vmem:[%s1 + $0xe58] sm:$0xff]
      %v521 = vld [vmem:[%s1 + $0xe60] sm:$0xff]
      %v522 = vld [vmem:[%s1 + $0xe68] sm:$0xff]
      %v523 = vld [vmem:[%s1 + $0xf00] sm:$0xff]
      %v524 = vld [vmem:[%s1 + $0xf08] sm:$0xff]
      %v525 = vld [vmem:[%s1 + $0xf10] sm:$0xff]
      %v526 = vld [vmem:[%s1 + $0xf18] sm:$0xff]
      %v527 = vld [vmem:[%s1 + $0xf20] sm:$0xff]
      %v528 = vld [vmem:[%s1 + $0xf28] sm:$0xff]
      %v529 = vld [vmem:[%s1 + $0xfc0] sm:$0xff]
      %v530 = vld [vmem:[%s1 + $0xfc8] sm:$0xff]
      %v531 = vld [vmem:[%s1 + $0xfd0] sm:$0xff]
      %v532 = vld [vmem:[%s1 + $0xfd8] sm:$0xff]
      %v533 = vld [vmem:[%s1 + $0xfe0] sm:$0xff]
      %v534 = vld [vmem:[%s1 + $0xfe8] sm:$0xff]
      %v535 = vld [vmem:[%s1 + $0x1080] sm:$0xff]
      %v536 = vld [vmem:[%s1 + $0x1088] sm:$0xff]
      %v537 = vld [vmem:[%s1 + $0x1090] sm:$0xff]
      %v538 = vld [vmem:[%s1 + $0x1098] sm:$0xff]
      %v539 = vld [vmem:[%s1 + $0x10a0] sm:$0xff]
      %v540 = vld [vmem:[%s1 + $0x10a8] sm:$0xff]
      %v541 = vld [vmem:[%s1 + $0x1140] sm:$0xff]
      %v542 = vld [vmem:[%s1 + $0x1148] sm:$0xff]
      %v543 = vld [vmem:[%s1 + $0x1150] sm:$0xff]
      %v544 = vld [vmem:[%s1 + $0x1158] sm:$0xff]
      %v545 = vld [vmem:[%s1 + $0x1160] sm:$0xff]
      %v546 = vld [vmem:[%s1 + $0x1168] sm:$0xff]
      %v547 = vld [vmem:[%s1 + $0x1200] sm:$0xff]
      %v548 = vld [vmem:[%s1 + $0x1208] sm:$0xff]
      %v549 = vld [vmem:[%s1 + $0x1210] sm:$0xff]
      %v550 = vld [vmem:[%s1 + $0x1218] sm:$0xff]
      %v551 = vld [vmem:[%s1 + $0x1220] sm:$0xff]
      %v552 = vld [vmem:[%s1 + $0x1228] sm:$0xff]
      %v553 = vld [vmem:[%s1 + $0x12c0] sm:$0xff]
      %v554 = vld [vmem:[%s1 + $0x12c8] sm:$0xff]
      %v555 = vld [vmem:[%s1 + $0x12d0] sm:$0xff]
      %v556 = vld [vmem:[%s1 + $0x12d8] sm:$0xff]
      %v557 = vld [vmem:[%s1 + $0x12e0] sm:$0xff]
      %v558 = vld [vmem:[%s1 + $0x12e8] sm:$0xff]
      %v559 = vld [vmem:[%s1 + $0x1380] sm:$0xff]
      %v560 = vld [vmem:[%s1 + $0x1388] sm:$0xff]
      %v561 = vld [vmem:[%s1 + $0x1390] sm:$0xff]
      %v562 = vld [vmem:[%s1 + $0x1398] sm:$0xff]
      %v563 = vld [vmem:[%s1 + $0x13a0] sm:$0xff]
      %v564 = vld [vmem:[%s1 + $0x13a8] sm:$0xff]
      %v565 = vld [vmem:[%s1 + $0x1440] sm:$0xff]
      %v566 = vld [vmem:[%s1 + $0x1448] sm:$0xff]
      %v567 = vld [vmem:[%s1 + $0x1450] sm:$0xff]
      %v568 = vld [vmem:[%s1 + $0x1458] sm:$0xff]
      %v569 = vld [vmem:[%s1 + $0x1460] sm:$0xff]
      %v570 = vld [vmem:[%s1 + $0x1468] sm:$0xff]
      %v571 = vld [vmem:[%s1 + $0x1500] sm:$0xff]
      %v572 = vld [vmem:[%s1 + $0x1508] sm:$0xff]
      %v573 = vld [vmem:[%s1 + $0x1510] sm:$0xff]
      %v574 = vld [vmem:[%s1 + $0x1518] sm:$0xff]
      %v575 = vld [vmem:[%s1 + $0x1520] sm:$0xff]
      %v576 = vld [vmem:[%s1 + $0x1528] sm:$0xff]
      %v577 = vld [vmem:[%s1 + $0x15c0] sm:$0xff]
      %v578 = vld [vmem:[%s1 + $0x15c8] sm:$0xff]
      %v579 = vld [vmem:[%s1 + $0x15d0] sm:$0xff]
      %v580 = vld [vmem:[%s1 + $0x15d8] sm:$0xff]
      %v581 = vld [vmem:[%s1 + $0x15e0] sm:$0xff]
      %v582 = vld [vmem:[%s1 + $0x15e8] sm:$0xff]
      %v583 = vld [vmem:[%s1 + $0x1680] sm:$0xff]
      %v584 = vld [vmem:[%s1 + $0x1688] sm:$0xff]
      %v585 = vld [vmem:[%s1 + $0x1690] sm:$0xff]
      %v586 = vld [vmem:[%s1 + $0x1698] sm:$0xff]
      %v587 = vld [vmem:[%s1 + $0x16a0] sm:$0xff]
      %v588 = vld [vmem:[%s1 + $0x16a8] sm:$0xff]
      %v589 = vld [vmem:[%s1 + $0x1740] sm:$0xff]
      %v590 = vld [vmem:[%s1 + $0x1748] sm:$0xff]
      %v591 = vld [vmem:[%s1 + $0x1750] sm:$0xff]
      %v592 = vld [vmem:[%s1 + $0x1758] sm:$0xff]
      %v593 = vld [vmem:[%s1 + $0x1760] sm:$0xff]
      %v594 = vld [vmem:[%s1 + $0x1768] sm:$0xff]
      %v595 = vld [vmem:[%s1 + $0x1800] sm:$0xff]
      %v596 = vld [vmem:[%s1 + $0x1808] sm:$0xff]
      %v597 = vld [vmem:[%s1 + $0x1810] sm:$0xff]
      %v598 = vld [vmem:[%s1 + $0x1818] sm:$0xff]
      %v599 = vld [vmem:[%s1 + $0x1820] sm:$0xff]
      %v600 = vld [vmem:[%s1 + $0x1828] sm:$0xff]
      %v601 = vld [vmem:[%s1 + $0x18c0] sm:$0xff]
      %v602 = vld [vmem:[%s1 + $0x18c8] sm:$0xff]
      %v603 = vld [vmem:[%s1 + $0x18d0] sm:$0xff]
      %v604 = vld [vmem:[%s1 + $0x18d8] sm:$0xff]
      %v605 = vld [vmem:[%s1 + $0x18e0] sm:$0xff]
      %v606 = vld [vmem:[%s1 + $0x18e8] sm:$0xff]
      %v607 = vld [vmem:[%s1 + $0x1980] sm:$0xff]
      %v608 = vld [vmem:[%s1 + $0x1988] sm:$0xff]
      %v609 = vld [vmem:[%s1 + $0x1990] sm:$0xff]
      %v610 = vld [vmem:[%s1 + $0x1998] sm:$0xff]
      %v611 = vld [vmem:[%s1 + $0x19a0] sm:$0xff]
      %v612 = vld [vmem:[%s1 + $0x19a8] sm:$0xff]
      %v613 = vld [vmem:[%s1 + $0x1a40] sm:$0xff]
      %v614 = vld [vmem:[%s1 + $0x1a48] sm:$0xff]
      %v615 = vld [vmem:[%s1 + $0x1a50] sm:$0xff]
      %v616 = vld [vmem:[%s1 + $0x1a58] sm:$0xff]
      %v617 = vld [vmem:[%s1 + $0x1a60] sm:$0xff]
      %v618 = vld [vmem:[%s1 + $0x1a68] sm:$0xff]
      %v619 = vld [vmem:[%s1 + $0x1b00] sm:$0xff]
      %v620 = vld [vmem:[%s1 + $0x1b08] sm:$0xff]
      %v621 = vld [vmem:[%s1 + $0x1b10] sm:$0xff]
      %v622 = vld [vmem:[%s1 + $0x1b18] sm:$0xff]
      %v623 = vld [vmem:[%s1 + $0x1b20] sm:$0xff]
      %v624 = vld [vmem:[%s1 + $0x1b28] sm:$0xff]
      %v625 = vld [vmem:[%s1 + $0x1bc0] sm:$0xff]
      %v626 = vld [vmem:[%s1 + $0x1bc8] sm:$0xff]
      %v627 = vld [vmem:[%s1 + $0x1bd0] sm:$0xff]
      %v628 = vld [vmem:[%s1 + $0x1bd8] sm:$0xff]
      %v629 = vld [vmem:[%s1 + $0x1be0] sm:$0xff]
      %v630 = vld [vmem:[%s1 + $0x1be8] sm:$0xff]
      %v631 = vld [vmem:[%s1 + $0x1c80] sm:$0xff]
      %v632 = vld [vmem:[%s1 + $0x1c88] sm:$0xff]
      %v633 = vld [vmem:[%s1 + $0x1c90] sm:$0xff]
      %v634 = vld [vmem:[%s1 + $0x1c98] sm:$0xff]
      %v635 = vld [vmem:[%s1 + $0x1ca0] sm:$0xff]
      %v636 = vld [vmem:[%s1 + $0x1ca8] sm:$0xff]
      %v637 = vld [vmem:[%s1 + $0x1d40] sm:$0xff]
      %v638 = vld [vmem:[%s1 + $0x1d48] sm:$0xff]
      %v639 = vld [vmem:[%s1 + $0x1d50] sm:$0xff]
      %v640 = vld [vmem:[%s1 + $0x1d58] sm:$0xff]
      %v641 = vld [vmem:[%s1 + $0x1d60] sm:$0xff]
      %v642 = vld [vmem:[%s1 + $0x1d68] sm:$0xff]
      %v643 = vld [vmem:[%s1 + $0x1e00] sm:$0xff]
      %v644 = vld [vmem:[%s1 + $0x1e08] sm:$0xff]
      %v645 = vld [vmem:[%s1 + $0x1e10] sm:$0xff]
      %v646 = vld [vmem:[%s1 + $0x1e18] sm:$0xff]
      %v647 = vld [vmem:[%s1 + $0x1e20] sm:$0xff]
      %v648 = vld [vmem:[%s1 + $0x1e28] sm:$0xff]
      %v649 = vld [vmem:[%s1 + $0x1ec0] sm:$0xff]
      %v650 = vld [vmem:[%s1 + $0x1ec8] sm:$0xff]
      %v651 = vld [vmem:[%s1 + $0x1ed0] sm:$0xff]
      %v652 = vld [vmem:[%s1 + $0x1ed8] sm:$0xff]
      %v653 = vld [vmem:[%s1 + $0x1ee0] sm:$0xff]
      %v654 = vld [vmem:[%s1 + $0x1ee8] sm:$0xff]
      %v655 = vld [vmem:[%s1 + $0x1f80] sm:$0xff]
      %v656 = vld [vmem:[%s1 + $0x1f88] sm:$0xff]
      %v657 = vld [vmem:[%s1 + $0x1f90] sm:$0xff]
      %v658 = vld [vmem:[%s1 + $0x1f98] sm:$0xff]
      %v659 = vld [vmem:[%s1 + $0x1fa0] sm:$0xff]
      %v660 = vld [vmem:[%s1 + $0x1fa8] sm:$0xff]
      %v661 = vld [vmem:[%s1 + $0x2040] sm:$0xff]
      %v662 = vld [vmem:[%s1 + $0x2048] sm:$0xff]
      %v663 = vld [vmem:[%s1 + $0x2050] sm:$0xff]
      %v664 = vld [vmem:[%s1 + $0x2058] sm:$0xff]
      %v665 = vld [vmem:[%s1 + $0x2060] sm:$0xff]
      %v666 = vld [vmem:[%s1 + $0x2068] sm:$0xff]
      %v667 = vld [vmem:[%s1 + $0x2100] sm:$0xff]
      %v668 = vld [vmem:[%s1 + $0x2108] sm:$0xff]
      %v669 = vld [vmem:[%s1 + $0x2110] sm:$0xff]
      %v670 = vld [vmem:[%s1 + $0x2118] sm:$0xff]
      %v671 = vld [vmem:[%s1 + $0x2120] sm:$0xff]
      %v672 = vld [vmem:[%s1 + $0x2128] sm:$0xff]
      %v673 = vld [vmem:[%s1 + $0x21c0] sm:$0xff]
      %v674 = vld [vmem:[%s1 + $0x21c8] sm:$0xff]
      %v675 = vld [vmem:[%s1 + $0x21d0] sm:$0xff]
      %v676 = vld [vmem:[%s1 + $0x21d8] sm:$0xff]
      %v677 = vld [vmem:[%s1 + $0x21e0] sm:$0xff]
      %v678 = vld [vmem:[%s1 + $0x21e8] sm:$0xff]
      %v679 = vld [vmem:[%s1 + $0x2280] sm:$0xff]
      %v680 = vld [vmem:[%s1 + $0x2288] sm:$0xff]
      %v681 = vld [vmem:[%s1 + $0x2290] sm:$0xff]
      %v682 = vld [vmem:[%s1 + $0x2298] sm:$0xff]
      %v683 = vld [vmem:[%s1 + $0x22a0] sm:$0xff]
      %v684 = vld [vmem:[%s1 + $0x22a8] sm:$0xff]
      %v685 = vld [vmem:[%s1 + $0x2340] sm:$0xff]
      %v686 = vld [vmem:[%s1 + $0x2348] sm:$0xff]
      %v687 = vld [vmem:[%s1 + $0x2350] sm:$0xff]
      %v688 = vld [vmem:[%s1 + $0x2358] sm:$0xff]
      %v689 = vld [vmem:[%s1 + $0x2360] sm:$0xff]
      %v690 = vld [vmem:[%s1 + $0x2368] sm:$0xff]
      %v691 = vld [vmem:[%s1 + $0x2400] sm:$0xff]
      %v692 = vld [vmem:[%s1 + $0x2408] sm:$0xff]
      %v693 = vld [vmem:[%s1 + $0x2410] sm:$0xff]
      %v694 = vld [vmem:[%s1 + $0x2418] sm:$0xff]
      %v695 = vld [vmem:[%s1 + $0x2420] sm:$0xff]
      %v696 = vld [vmem:[%s1 + $0x2428] sm:$0xff]
      %v697 = vld [vmem:[%s1 + $0x24c0] sm:$0xff]
      %v698 = vld [vmem:[%s1 + $0x24c8] sm:$0xff]
      %v699 = vld [vmem:[%s1 + $0x24d0] sm:$0xff]
      %v700 = vld [vmem:[%s1 + $0x24d8] sm:$0xff]
      %v701 = vld [vmem:[%s1 + $0x24e0] sm:$0xff]
      %v702 = vld [vmem:[%s1 + $0x24e8] sm:$0xff]
      %v703 = vld [vmem:[%s1 + $0x2580] sm:$0xff]
      %v704 = vld [vmem:[%s1 + $0x2588] sm:$0xff]
      %v705 = vld [vmem:[%s1 + $0x2590] sm:$0xff]
      %v706 = vld [vmem:[%s1 + $0x2598] sm:$0xff]
      %v707 = vld [vmem:[%s1 + $0x25a0] sm:$0xff]
      %v708 = vld [vmem:[%s1 + $0x25a8] sm:$0xff]
      %v709 = vld [vmem:[%s1 + $0x2640] sm:$0xff]
      %v710 = vld [vmem:[%s1 + $0x2648] sm:$0xff]
      %v711 = vld [vmem:[%s1 + $0x2650] sm:$0xff]
      %v712 = vld [vmem:[%s1 + $0x2658] sm:$0xff]
      %v713 = vld [vmem:[%s1 + $0x2660] sm:$0xff]
      %v714 = vld [vmem:[%s1 + $0x2668] sm:$0xff]
      %v715 = vld [vmem:[%s1 + $0x2700] sm:$0xff]
      %v716 = vld [vmem:[%s1 + $0x2708] sm:$0xff]
      %v717 = vld [vmem:[%s1 + $0x2710] sm:$0xff]
      %v718 = vld [vmem:[%s1 + $0x2718] sm:$0xff]
      %v719 = vld [vmem:[%s1 + $0x2720] sm:$0xff]
      %v720 = vld [vmem:[%s1 + $0x2728] sm:$0xff]
      %v721 = vld [vmem:[%s1 + $0x27c0] sm:$0xff]
      %v722 = vld [vmem:[%s1 + $0x27c8] sm:$0xff]
      %v723 = vld [vmem:[%s1 + $0x27d0] sm:$0xff]
      %v724 = vld [vmem:[%s1 + $0x27d8] sm:$0xff]
      %v725 = vld [vmem:[%s1 + $0x27e0] sm:$0xff]
      %v726 = vld [vmem:[%s1 + $0x27e8] sm:$0xff]
      %v727 = vld [vmem:[%s1 + $0x2880] sm:$0xff]
      %v728 = vld [vmem:[%s1 + $0x2888] sm:$0xff]
      %v729 = vld [vmem:[%s1 + $0x2890] sm:$0xff]
      %v730 = vld [vmem:[%s1 + $0x2898] sm:$0xff]
      %v731 = vld [vmem:[%s1 + $0x28a0] sm:$0xff]
      %v732 = vld [vmem:[%s1 + $0x28a8] sm:$0xff]
      %v733 = vld [vmem:[%s1 + $0x2940] sm:$0xff]
      %v734 = vld [vmem:[%s1 + $0x2948] sm:$0xff]
      %v735 = vld [vmem:[%s1 + $0x2950] sm:$0xff]
      %v736 = vld [vmem:[%s1 + $0x2958] sm:$0xff]
      %v737 = vld [vmem:[%s1 + $0x2960] sm:$0xff]
      %v738 = vld [vmem:[%s1 + $0x2968] sm:$0xff]
      %v739 = vld [vmem:[%s1 + $0x2a00] sm:$0xff]
      %v740 = vld [vmem:[%s1 + $0x2a08] sm:$0xff]
      %v741 = vld [vmem:[%s1 + $0x2a10] sm:$0xff]
      %v742 = vld [vmem:[%s1 + $0x2a18] sm:$0xff]
      %v743 = vld [vmem:[%s1 + $0x2a20] sm:$0xff]
      %v744 = vld [vmem:[%s1 + $0x2a28] sm:$0xff]
      %v745 = vld [vmem:[%s1 + $0x2ac0] sm:$0xff]
      %v746 = vld [vmem:[%s1 + $0x2ac8] sm:$0xff]
      %v747 = vld [vmem:[%s1 + $0x2ad0] sm:$0xff]
      %v748 = vld [vmem:[%s1 + $0x2ad8] sm:$0xff]
      %v749 = vld [vmem:[%s1 + $0x2ae0] sm:$0xff]
      %v750 = vld [vmem:[%s1 + $0x2ae8] sm:$0xff]
      %v751 = vld [vmem:[%s1 + $0x2b80] sm:$0xff]
      %v752 = vld [vmem:[%s1 + $0x2b88] sm:$0xff]
      %v753 = vld [vmem:[%s1 + $0x2b90] sm:$0xff]
      %v754 = vld [vmem:[%s1 + $0x2b98] sm:$0xff]
      %v755 = vld [vmem:[%s1 + $0x2ba0] sm:$0xff]
      %v756 = vld [vmem:[%s1 + $0x2ba8] sm:$0xff]
      %v757 = vld [vmem:[%s1 + $0x2c40] sm:$0xff]
      %v758 = vld [vmem:[%s1 + $0x2c48] sm:$0xff]
      %v759 = vld [vmem:[%s1 + $0x2c50] sm:$0xff]
      %v760 = vld [vmem:[%s1 + $0x2c58] sm:$0xff]
      %v761 = vld [vmem:[%s1 + $0x2c60] sm:$0xff]
      %v762 = vld [vmem:[%s1 + $0x2c68] sm:$0xff]
      %v763 = vld [vmem:[%s1 + $0x2d00] sm:$0xff]
      %v764 = vld [vmem:[%s1 + $0x2d08] sm:$0xff]
      %v765 = vld [vmem:[%s1 + $0x2d10] sm:$0xff]
      %v766 = vld [vmem:[%s1 + $0x2d18] sm:$0xff]
      %v767 = vld [vmem:[%s1 + $0x2d20] sm:$0xff]
      %v768 = vld [vmem:[%s1 + $0x2d28] sm:$0xff]
      %v769 = vld [vmem:[%s1 + $0x2dc0] sm:$0xff]
      %v770 = vld [vmem:[%s1 + $0x2dc8] sm:$0xff]
      %v771 = vld [vmem:[%s1 + $0x2dd0] sm:$0xff]
      %v772 = vld [vmem:[%s1 + $0x2dd8] sm:$0xff]
      %v773 = vld [vmem:[%s1 + $0x2de0] sm:$0xff]
      %v774 = vld [vmem:[%s1 + $0x2de8] sm:$0xff]
      %v775 = vld [vmem:[%s1 + $0x2e80] sm:$0xff]
      %v776 = vld [vmem:[%s1 + $0x2e88] sm:$0xff]
      %v777 = vld [vmem:[%s1 + $0x2e90] sm:$0xff]
      %v778 = vld [vmem:[%s1 + $0x2e98] sm:$0xff]
      %v779 = vld [vmem:[%s1 + $0x2ea0] sm:$0xff]
      %v780 = vld [vmem:[%s1 + $0x2ea8] sm:$0xff]
      %v781 = vld [vmem:[%s1 + $0x2f40] sm:$0xff]
      %v782 = vld [vmem:[%s1 + $0x2f48] sm:$0xff]
      %v783 = vld [vmem:[%s1 + $0x2f50] sm:$0xff]
      %v784 = vld [vmem:[%s1 + $0x2f58] sm:$0xff]
      %v785 = vld [vmem:[%s1 + $0x2f60] sm:$0xff]
      %v786 = vld [vmem:[%s1 + $0x2f68] sm:$0xff]
      %787 = vmatprep.subr.mxu0 %v404
      %788 = vmatpush1.msra.mxu0 %v403
      %789 = vmatprep.subr.mxu0 %v410
      %790 = vmatpush1.msra.mxu0 %v409
      %791 = vmatprep.subr.mxu0 %v416
      %792 = vmatpush1.msra.mxu0 %v415
      %793 = vmatprep.subr.mxu0 %v422
      %794 = vmatpush1.msra.mxu0 %v421
      %795 = vmatprep.subr.mxu0 %v428
      %796 = vmatpush1.msra.mxu0 %v427
      %797 = vmatprep.subr.mxu0 %v434
      %798 = vmatpush1.msra.mxu0 %v433
      %799 = vmatprep.subr.mxu0 %v440
      %800 = vmatpush1.msra.mxu0 %v439
      %801 = vmatprep.subr.mxu0 %v446
      %802 = vmatpush1.msra.mxu0 %v445
      %803 = vmatprep.subr.mxu0 %v452
      %804 = vmatpush1.msra.mxu0 %v451
      %805 = vmatprep.subr.mxu0 %v458
      %806 = vmatpush1.msra.mxu0 %v457
      %807 = vmatprep.subr.mxu0 %v464
      %808 = vmatpush1.msra.mxu0 %v463
      %809 = vmatprep.subr.mxu0 %v470
      %810 = vmatpush1.msra.mxu0 %v469
      %811 = vmatprep.subr.mxu0 %v476
      %812 = vmatpush1.msra.mxu0 %v475
      %813 = vmatprep.subr.mxu0 %v482
      %814 = vmatpush1.msra.mxu0 %v481
      %815 = vmatprep.subr.mxu0 %v488
      %816 = vmatpush1.msra.mxu0 %v487
      %817 = vmatprep.subr.mxu0 %v494
      %818 = vmatpush1.msra.mxu0 %v493
      %819 = vmatprep.subr.mxu0 %v500
      %820 = vmatpush1.msra.mxu0 %v499
      %821 = vmatprep.subr.mxu0 %v506
      %822 = vmatpush1.msra.mxu0 %v505
      %823 = vmatprep.subr.mxu0 %v512
      %824 = vmatpush1.msra.mxu0 %v511
      %825 = vmatprep.subr.mxu0 %v518
      %826 = vmatpush1.msra.mxu0 %v517
      %827 = vmatprep.subr.mxu0 %v524
      %828 = vmatpush1.msra.mxu0 %v523
      %829 = vmatprep.subr.mxu0 %v530
      %830 = vmatpush1.msra.mxu0 %v529
      %831 = vmatprep.subr.mxu0 %v536
      %832 = vmatpush1.msra.mxu0 %v535
      %833 = vmatprep.subr.mxu0 %v542
      %834 = vmatpush1.msra.mxu0 %v541
      %835 = vmatprep.subr.mxu0 %v548
      %836 = vmatpush1.msra.mxu0 %v547
      %837 = vmatprep.subr.mxu0 %v554
      %838 = vmatpush1.msra.mxu0 %v553
      %839 = vmatprep.subr.mxu0 %v560
      %840 = vmatpush1.msra.mxu0 %v559
      %841 = vmatprep.subr.mxu0 %v566
      %842 = vmatpush1.msra.mxu0 %v565
      %843 = vmatprep.subr.mxu0 %v572
      %844 = vmatpush1.msra.mxu0 %v571
      %845 = vmatprep.subr.mxu0 %v578
      %846 = vmatpush1.msra.mxu0 %v577
      %847 = vmatprep.subr.mxu0 %v584
      %848 = vmatpush1.msra.mxu0 %v583
      %849 = vmatprep.subr.mxu0 %v590
      %850 = vmatpush1.msra.mxu0 %v589
      %851 = vmatprep.mubr.f32.mxu0 %v340
      %852 = vmatmul.mubr.f32.gmra.mrb[0].mxu0 %v339
      %v853 = vpop.f32.mrb[0].mxu0
      %v854 = vadd.f32 0.0, %v853
      %v855 = vpop.f32.mrb[0].mxu0
      %v856 = vadd.f32 0.0, %v855
      %857 = vmatprep.mubr.f32.mxu0 %v344
      %858 = vmatmul.mubr.f32.gmra.mrb[0].mxu0 %v343
      %v859 = vpop.f32.mrb[0].mxu0
      %v860 = vadd.f32 0.0, %v859
      %v861 = vpop.f32.mrb[0].mxu0
      %v862 = vadd.f32 0.0, %v861
      %863 = vmatprep.mubr.f32.mxu0 %v348
      %864 = vmatmul.mubr.f32.gmra.mrb[0].mxu0 %v347
      %v865 = vpop.f32.mrb[0].mxu0
      %v866 = vadd.f32 0.0, %v865
      %v867 = vpop.f32.mrb[0].mxu0
      %v868 = vadd.f32 0.0, %v867
      %869 = vmatprep.mubr.f32.mxu0 %v352
      %870 = vmatmul.mubr.f32.gmra.mrb[0].mxu0 %v351
      %v871 = vpop.f32.mrb[0].mxu0
      %v872 = vadd.f32 0.0, %v871
      %v873 = vpop.f32.mrb[0].mxu0
      %v874 = vadd.f32 0.0, %v873
      %875 = vmatprep.mubr.f32.mxu0 %v356
      %876 = vmatmul.mubr.f32.gmra.mrb[0].mxu0 %v355
      %v877 = vpop.f32.mrb[0].mxu0
      %v878 = vadd.f32 0.0, %v877
      %v879 = vpop.f32.mrb[0].mxu0
      %v880 = vadd.f32 0.0, %v879
      %881 = vmatprep.mubr.f32.mxu0 %v360
      %882 = vmatmul.mubr.f32.gmra.mrb[0].mxu0 %v359
      %v883 = vpop.f32.mrb[0].mxu0
      %v884 = vadd.f32 0.0, %v883
      %v885 = vpop.f32.mrb[0].mxu0
      %v886 = vadd.f32 0.0, %v885
      %887 = vmatprep.mubr.f32.mxu0 %v364
      %888 = vmatmul.mubr.f32.gmra.mrb[0].mxu0 %v363
      %v889 = vpop.f32.mrb[0].mxu0
      %v890 = vadd.f32 0.0, %v889
      %v891 = vpop.f32.mrb[0].mxu0
      %v892 = vadd.f32 0.0, %v891
      %893 = vmatprep.mubr.f32.mxu0 %v368
      %894 = vmatmul.mubr.f32.gmra.mrb[0].mxu0 %v367
      %v895 = vpop.f32.mrb[0].mxu0
      %v896 = vadd.f32 0.0, %v895
      %v897 = vpop.f32.mrb[0].mxu0
      %v898 = vadd.f32 0.0, %v897
      %899 = vmatprep.mubr.f32.mxu0 %v372
      %900 = vmatmul.mubr.f32.gmra.mrb[0].mxu0 %v371
      %v901 = vpop.f32.mrb[0].mxu0
      %v902 = vadd.f32 0.0, %v901
      %v903 = vpop.f32.mrb[0].mxu0
      %v904 = vadd.f32 0.0, %v903
      %905 = vmatprep.mubr.f32.mxu0 %v376
      %906 = vmatmul.mubr.f32.gmra.mrb[0].mxu0 %v375
      %v907 = vpop.f32.mrb[0].mxu0
      %v908 = vadd.f32 0.0, %v907
      %v909 = vpop.f32.mrb[0].mxu0
      %v910 = vadd.f32 0.0, %v909
      %911 = vmatprep.mubr.f32.mxu0 %v380
      %912 = vmatmul.mubr.f32.gmra.mrb[0].mxu0 %v379
      %v913 = vpop.f32.mrb[0].mxu0
      %v914 = vadd.f32 0.0, %v913
      %v915 = vpop.f32.mrb[0].mxu0
      %v916 = vadd.f32 0.0, %v915
      %917 = vmatprep.mubr.f32.mxu0 %v384
      %918 = vmatmul.mubr.f32.gmra.mrb[0].mxu0 %v383
      %v919 = vpop.f32.mrb[0].mxu0
      %v920 = vadd.f32 0.0, %v919
      %v921 = vpop.f32.mrb[0].mxu0
      %v922 = vadd.f32 0.0, %v921
      %923 = vmatprep.mubr.f32.mxu0 %v388
      %924 = vmatmul.mubr.f32.gmra.mrb[0].mxu0 %v387
      %v925 = vpop.f32.mrb[0].mxu0
      %v926 = vadd.f32 0.0, %v925
      %v927 = vpop.f32.mrb[0].mxu0
      %v928 = vadd.f32 0.0, %v927
      %929 = vmatprep.mubr.f32.mxu0 %v392
      %930 = vmatmul.mubr.f32.gmra.mrb[0].mxu0 %v391
      %v931 = vpop.f32.mrb[0].mxu0
      %v932 = vadd.f32 0.0, %v931
      %v933 = vpop.f32.mrb[0].mxu0
      %v934 = vadd.f32 0.0, %v933
      %935 = vmatprep.mubr.f32.mxu0 %v396
      %936 = vmatmul.mubr.f32.gmra.mrb[0].mxu0 %v395
      %v937 = vpop.f32.mrb[0].mxu0
      %v938 = vadd.f32 0.0, %v937
      %v939 = vpop.f32.mrb[0].mxu0
      %v940 = vadd.f32 0.0, %v939
      %941 = vmatprep.mubr.f32.mxu0 %v400
      %942 = vmatmul.mubr.f32.gmra.mrb[0].mxu0 %v399
      %v943 = vpop.f32.mrb[0].mxu0
      %v944 = vadd.f32 0.0, %v943
      %v945 = vpop.f32.mrb[0].mxu0
      %v946 = vadd.f32 0.0, %v945
      %947 = vdwg.mxu0
      %948 = vmatprep.subr.mxu0 %v596
      %949 = vmatpush1.msra.mxu0 %v595
      %950 = vmatprep.subr.mxu0 %v602
      %951 = vmatpush1.msra.mxu0 %v601
      %952 = vmatprep.subr.mxu0 %v608
      %953 = vmatpush1.msra.mxu0 %v607
      %954 = vmatprep.subr.mxu0 %v614
      %955 = vmatpush1.msra.mxu0 %v613
      %956 = vmatprep.subr.mxu0 %v620
      %957 = vmatpush1.msra.mxu0 %v619
      %958 = vmatprep.subr.mxu0 %v626
      %959 = vmatpush1.msra.mxu0 %v625
      %960 = vmatprep.subr.mxu0 %v632
      %961 = vmatpush1.msra.mxu0 %v631
      %962 = vmatprep.subr.mxu0 %v638
      %963 = vmatpush1.msra.mxu0 %v637
      %964 = vmatprep.subr.mxu0 %v644
      %965 = vmatpush1.msra.mxu0 %v643
      %966 = vmatprep.subr.mxu0 %v650
      %967 = vmatpush1.msra.mxu0 %v649
      %968 = vmatprep.subr.mxu0 %v656
      %969 = vmatpush1.msra.mxu0 %v655
      %970 = vmatprep.subr.mxu0 %v662
      %971 = vmatpush1.msra.mxu0 %v661
      %972 = vmatprep.subr.mxu0 %v668
      %973 = vmatpush1.msra.mxu0 %v667
      %974 = vmatprep.subr.mxu0 %v674
      %975 = vmatpush1.msra.mxu0 %v673
      %976 = vmatprep.subr.mxu0 %v680
      %977 = vmatpush1.msra.mxu0 %v679
      %978 = vmatprep.subr.mxu0 %v686
      %979 = vmatpush1.msra.mxu0 %v685
      %980 = vmatprep.subr.mxu0 %v692
      %981 = vmatpush1.msra.mxu0 %v691
      %982 = vmatprep.subr.mxu0 %v698
      %983 = vmatpush1.msra.mxu0 %v697
      %984 = vmatprep.subr.mxu0 %v704
      %985 = vmatpush1.msra.mxu0 %v703
      %986 = vmatprep.subr.mxu0 %v710
      %987 = vmatpush1.msra.mxu0 %v709
      %988 = vmatprep.subr.mxu0 %v716
      %989 = vmatpush1.msra.mxu0 %v715
      %990 = vmatprep.subr.mxu0 %v722
      %991 = vmatpush1.msra.mxu0 %v721
      %992 = vmatprep.subr.mxu0 %v728
      %993 = vmatpush1.msra.mxu0 %v727
      %994 = vmatprep.subr.mxu0 %v734
      %995 = vmatpush1.msra.mxu0 %v733
      %996 = vmatprep.subr.mxu0 %v740
      %997 = vmatpush1.msra.mxu0 %v739
      %998 = vmatprep.subr.mxu0 %v746
      %999 = vmatpush1.msra.mxu0 %v745
      %1000 = vmatprep.subr.mxu0 %v752
      %1001 = vmatpush1.msra.mxu0 %v751
      %1002 = vmatprep.subr.mxu0 %v758
      %1003 = vmatpush1.msra.mxu0 %v757
      %1004 = vmatprep.subr.mxu0 %v764
      %1005 = vmatpush1.msra.mxu0 %v763
      %1006 = vmatprep.subr.mxu0 %v770
      %1007 = vmatpush1.msra.mxu0 %v769
      %1008 = vmatprep.subr.mxu0 %v776
      %1009 = vmatpush1.msra.mxu0 %v775
      %1010 = vmatprep.subr.mxu0 %v782
      %1011 = vmatpush1.msra.mxu0 %v781
      %1012 = vmatprep.mubr.f32.mxu0 %v342
      %1013 = vmatmul.mubr.f32.gmra.mrb[0].mxu0 %v341
      %v1014 = vpop.f32.mrb[0].mxu0
      %v1015 = vadd.f32 %v854, %v1014
      %v1016 = vpop.f32.mrb[0].mxu0
      %v1017 = vadd.f32 %v856, %v1016
      %1018 = vmatprep.mubr.f32.mxu0 %v346
      %1019 = vmatmul.mubr.f32.gmra.mrb[0].mxu0 %v345
      %v1020 = vpop.f32.mrb[0].mxu0
      %v1021 = vadd.f32 %v860, %v1020
      %v1022 = vpop.f32.mrb[0].mxu0
      %v1023 = vadd.f32 %v862, %v1022
      %1024 = vmatprep.mubr.f32.mxu0 %v350
      %1025 = vmatmul.mubr.f32.gmra.mrb[0].mxu0 %v349
      %v1026 = vpop.f32.mrb[0].mxu0
      %v1027 = vadd.f32 %v866, %v1026
      %v1028 = vpop.f32.mrb[0].mxu0
      %v1029 = vadd.f32 %v868, %v1028
      %1030 = vmatprep.mubr.f32.mxu0 %v354
      %1031 = vmatmul.mubr.f32.gmra.mrb[0].mxu0 %v353
      %v1032 = vpop.f32.mrb[0].mxu0
      %v1033 = vadd.f32 %v872, %v1032
      %v1034 = vpop.f32.mrb[0].mxu0
      %v1035 = vadd.f32 %v874, %v1034
      %1036 = vmatprep.mubr.f32.mxu0 %v358
      %1037 = vmatmul.mubr.f32.gmra.mrb[0].mxu0 %v357
      %v1038 = vpop.f32.mrb[0].mxu0
      %v1039 = vadd.f32 %v878, %v1038
      %v1040 = vpop.f32.mrb[0].mxu0
      %v1041 = vadd.f32 %v880, %v1040
      %1042 = vmatprep.mubr.f32.mxu0 %v362
      %1043 = vmatmul.mubr.f32.gmra.mrb[0].mxu0 %v361
      %v1044 = vpop.f32.mrb[0].mxu0
      %v1045 = vadd.f32 %v884, %v1044
      %v1046 = vpop.f32.mrb[0].mxu0
      %v1047 = vadd.f32 %v886, %v1046
      %1048 = vmatprep.mubr.f32.mxu0 %v366
      %1049 = vmatmul.mubr.f32.gmra.mrb[0].mxu0 %v365
      %v1050 = vpop.f32.mrb[0].mxu0
      %v1051 = vadd.f32 %v890, %v1050
      %v1052 = vpop.f32.mrb[0].mxu0
      %v1053 = vadd.f32 %v892, %v1052
      %1054 = vmatprep.mubr.f32.mxu0 %v370
      %1055 = vmatmul.mubr.f32.gmra.mrb[0].mxu0 %v369
      %v1056 = vpop.f32.mrb[0].mxu0
      %v1057 = vadd.f32 %v896, %v1056
      %v1058 = vpop.f32.mrb[0].mxu0
      %v1059 = vadd.f32 %v898, %v1058
      %1060 = vmatprep.mubr.f32.mxu0 %v374
      %1061 = vmatmul.mubr.f32.gmra.mrb[0].mxu0 %v373
      %v1062 = vpop.f32.mrb[0].mxu0
      %v1063 = vadd.f32 %v902, %v1062
      %v1064 = vpop.f32.mrb[0].mxu0
      %v1065 = vadd.f32 %v904, %v1064
      %1066 = vmatprep.mubr.f32.mxu0 %v378
      %1067 = vmatmul.mubr.f32.gmra.mrb[0].mxu0 %v377
      %v1068 = vpop.f32.mrb[0].mxu0
      %v1069 = vadd.f32 %v908, %v1068
      %v1070 = vpop.f32.mrb[0].mxu0
      %v1071 = vadd.f32 %v910, %v1070
      %1072 = vmatprep.mubr.f32.mxu0 %v382
      %1073 = vmatmul.mubr.f32.gmra.mrb[0].mxu0 %v381
      %v1074 = vpop.f32.mrb[0].mxu0
      %v1075 = vadd.f32 %v914, %v1074
      %v1076 = vpop.f32.mrb[0].mxu0
      %v1077 = vadd.f32 %v916, %v1076
      %1078 = vmatprep.mubr.f32.mxu0 %v386
      %1079 = vmatmul.mubr.f32.gmra.mrb[0].mxu0 %v385
      %v1080 = vpop.f32.mrb[0].mxu0
      %v1081 = vadd.f32 %v920, %v1080
      %v1082 = vpop.f32.mrb[0].mxu0
      %v1083 = vadd.f32 %v922, %v1082
      %1084 = vmatprep.mubr.f32.mxu0 %v390
      %1085 = vmatmul.mubr.f32.gmra.mrb[0].mxu0 %v389
      %v1086 = vpop.f32.mrb[0].mxu0
      %v1087 = vadd.f32 %v926, %v1086
      %v1088 = vpop.f32.mrb[0].mxu0
      %v1089 = vadd.f32 %v928, %v1088
      %1090 = vmatprep.mubr.f32.mxu0 %v394
      %1091 = vmatmul.mubr.f32.gmra.mrb[0].mxu0 %v393
      %v1092 = vpop.f32.mrb[0].mxu0
      %v1093 = vadd.f32 %v932, %v1092
      %v1094 = vpop.f32.mrb[0].mxu0
      %v1095 = vadd.f32 %v934, %v1094
      %1096 = vmatprep.mubr.f32.mxu0 %v398
      %1097 = vmatmul.mubr.f32.gmra.mrb[0].mxu0 %v397
      %v1098 = vpop.f32.mrb[0].mxu0
      %v1099 = vadd.f32 %v938, %v1098
      %v1100 = vpop.f32.mrb[0].mxu0
      %v1101 = vadd.f32 %v940, %v1100
      %1102 = vmatprep.mubr.f32.mxu0 %v402
      %1103 = vmatmul.mubr.f32.gmra.mrb[0].mxu0 %v401
      %v1104 = vpop.f32.mrb[0].mxu0
      %v1105 = vadd.f32 %v944, %v1104
      %v1106 = vpop.f32.mrb[0].mxu0
      %v1107 = vadd.f32 %v946, %v1106
      %1108 = vdwg.mxu0
      %1109 = vmatprep.subr.mxu0 %v406
      %1110 = vmatpush1.msra.mxu0 %v405
      %1111 = vmatprep.subr.mxu0 %v412
      %1112 = vmatpush1.msra.mxu0 %v411
      %1113 = vmatprep.subr.mxu0 %v418
      %1114 = vmatpush1.msra.mxu0 %v417
      %1115 = vmatprep.subr.mxu0 %v424
      %1116 = vmatpush1.msra.mxu0 %v423
      %1117 = vmatprep.subr.mxu0 %v430
      %1118 = vmatpush1.msra.mxu0 %v429
      %1119 = vmatprep.subr.mxu0 %v436
      %1120 = vmatpush1.msra.mxu0 %v435
      %1121 = vmatprep.subr.mxu0 %v442
      %1122 = vmatpush1.msra.mxu0 %v441
      %1123 = vmatprep.subr.mxu0 %v448
      %1124 = vmatpush1.msra.mxu0 %v447
      %1125 = vmatprep.subr.mxu0 %v454
      %1126 = vmatpush1.msra.mxu0 %v453
      %1127 = vmatprep.subr.mxu0 %v460
      %1128 = vmatpush1.msra.mxu0 %v459
      %1129 = vmatprep.subr.mxu0 %v466
      %1130 = vmatpush1.msra.mxu0 %v465
      %1131 = vmatprep.subr.mxu0 %v472
      %1132 = vmatpush1.msra.mxu0 %v471
      %1133 = vmatprep.subr.mxu0 %v478
      %1134 = vmatpush1.msra.mxu0 %v477
      %1135 = vmatprep.subr.mxu0 %v484
      %1136 = vmatpush1.msra.mxu0 %v483
      %1137 = vmatprep.subr.mxu0 %v490
      %1138 = vmatpush1.msra.mxu0 %v489
      %1139 = vmatprep.subr.mxu0 %v496
      %1140 = vmatpush1.msra.mxu0 %v495
      %1141 = vmatprep.subr.mxu0 %v502
      %1142 = vmatpush1.msra.mxu0 %v501
      %1143 = vmatprep.subr.mxu0 %v508
      %1144 = vmatpush1.msra.mxu0 %v507
      %1145 = vmatprep.subr.mxu0 %v514
      %1146 = vmatpush1.msra.mxu0 %v513
      %1147 = vmatprep.subr.mxu0 %v520
      %1148 = vmatpush1.msra.mxu0 %v519
      %1149 = vmatprep.subr.mxu0 %v526
      %1150 = vmatpush1.msra.mxu0 %v525
      %1151 = vmatprep.subr.mxu0 %v532
      %1152 = vmatpush1.msra.mxu0 %v531
      %1153 = vmatprep.subr.mxu0 %v538
      %1154 = vmatpush1.msra.mxu0 %v537
      %1155 = vmatprep.subr.mxu0 %v544
      %1156 = vmatpush1.msra.mxu0 %v543
      %1157 = vmatprep.subr.mxu0 %v550
      %1158 = vmatpush1.msra.mxu0 %v549
      %1159 = vmatprep.subr.mxu0 %v556
      %1160 = vmatpush1.msra.mxu0 %v555
      %1161 = vmatprep.subr.mxu0 %v562
      %1162 = vmatpush1.msra.mxu0 %v561
      %1163 = vmatprep.subr.mxu0 %v568
      %1164 = vmatpush1.msra.mxu0 %v567
      %1165 = vmatprep.subr.mxu0 %v574
      %1166 = vmatpush1.msra.mxu0 %v573
      %1167 = vmatprep.subr.mxu0 %v580
      %1168 = vmatpush1.msra.mxu0 %v579
      %1169 = vmatprep.subr.mxu0 %v586
      %1170 = vmatpush1.msra.mxu0 %v585
      %1171 = vmatprep.subr.mxu0 %v592
      %1172 = vmatpush1.msra.mxu0 %v591
      %1173 = vmatprep.mubr.f32.mxu0 %v340
      %1174 = vmatmul.mubr.f32.gmra.mrb[0].mxu0 %v339
      %v1175 = vpop.f32.mrb[0].mxu0
      %v1176 = vadd.f32 0.0, %v1175
      %v1177 = vpop.f32.mrb[0].mxu0
      %v1178 = vadd.f32 0.0, %v1177
      %1179 = vmatprep.mubr.f32.mxu0 %v344
      %1180 = vmatmul.mubr.f32.gmra.mrb[0].mxu0 %v343
      %v1181 = vpop.f32.mrb[0].mxu0
      %v1182 = vadd.f32 0.0, %v1181
      %v1183 = vpop.f32.mrb[0].mxu0
      %v1184 = vadd.f32 0.0, %v1183
      %1185 = vmatprep.mubr.f32.mxu0 %v348
      %1186 = vmatmul.mubr.f32.gmra.mrb[0].mxu0 %v347
      %v1187 = vpop.f32.mrb[0].mxu0
      %v1188 = vadd.f32 0.0, %v1187
      %v1189 = vpop.f32.mrb[0].mxu0
      %v1190 = vadd.f32 0.0, %v1189
      %1191 = vmatprep.mubr.f32.mxu0 %v352
      %1192 = vmatmul.mubr.f32.gmra.mrb[0].mxu0 %v351
      %v1193 = vpop.f32.mrb[0].mxu0
      %v1194 = vadd.f32 0.0, %v1193
      %v1195 = vpop.f32.mrb[0].mxu0
      %v1196 = vadd.f32 0.0, %v1195
      %1197 = vmatprep.mubr.f32.mxu0 %v356
      %1198 = vmatmul.mubr.f32.gmra.mrb[0].mxu0 %v355
      %v1199 = vpop.f32.mrb[0].mxu0
      %v1200 = vadd.f32 0.0, %v1199
      %v1201 = vpop.f32.mrb[0].mxu0
      %v1202 = vadd.f32 0.0, %v1201
      %1203 = vmatprep.mubr.f32.mxu0 %v360
      %1204 = vmatmul.mubr.f32.gmra.mrb[0].mxu0 %v359
      %v1205 = vpop.f32.mrb[0].mxu0
      %v1206 = vadd.f32 0.0, %v1205
      %v1207 = vpop.f32.mrb[0].mxu0
      %v1208 = vadd.f32 0.0, %v1207
      %1209 = vmatprep.mubr.f32.mxu0 %v364
      %1210 = vmatmul.mubr.f32.gmra.mrb[0].mxu0 %v363
      %v1211 = vpop.f32.mrb[0].mxu0
      %v1212 = vadd.f32 0.0, %v1211
      %v1213 = vpop.f32.mrb[0].mxu0
      %v1214 = vadd.f32 0.0, %v1213
      %1215 = vmatprep.mubr.f32.mxu0 %v368
      %1216 = vmatmul.mubr.f32.gmra.mrb[0].mxu0 %v367
      %v1217 = vpop.f32.mrb[0].mxu0
      %v1218 = vadd.f32 0.0, %v1217
      %v1219 = vpop.f32.mrb[0].mxu0
      %v1220 = vadd.f32 0.0, %v1219
      %1221 = vmatprep.mubr.f32.mxu0 %v372
      %1222 = vmatmul.mubr.f32.gmra.mrb[0].mxu0 %v371
      %v1223 = vpop.f32.mrb[0].mxu0
      %v1224 = vadd.f32 0.0, %v1223
      %v1225 = vpop.f32.mrb[0].mxu0
      %v1226 = vadd.f32 0.0, %v1225
      %1227 = vmatprep.mubr.f32.mxu0 %v376
      %1228 = vmatmul.mubr.f32.gmra.mrb[0].mxu0 %v375
      %v1229 = vpop.f32.mrb[0].mxu0
      %v1230 = vadd.f32 0.0, %v1229
      %v1231 = vpop.f32.mrb[0].mxu0
      %v1232 = vadd.f32 0.0, %v1231
      %1233 = vmatprep.mubr.f32.mxu0 %v380
      %1234 = vmatmul.mubr.f32.gmra.mrb[0].mxu0 %v379
      %v1235 = vpop.f32.mrb[0].mxu0
      %v1236 = vadd.f32 0.0, %v1235
      %v1237 = vpop.f32.mrb[0].mxu0
      %v1238 = vadd.f32 0.0, %v1237
      %1239 = vmatprep.mubr.f32.mxu0 %v384
      %1240 = vmatmul.mubr.f32.gmra.mrb[0].mxu0 %v383
      %v1241 = vpop.f32.mrb[0].mxu0
      %v1242 = vadd.f32 0.0, %v1241
      %v1243 = vpop.f32.mrb[0].mxu0
      %v1244 = vadd.f32 0.0, %v1243
      %1245 = vmatprep.mubr.f32.mxu0 %v388
      %1246 = vmatmul.mubr.f32.gmra.mrb[0].mxu0 %v387
      %v1247 = vpop.f32.mrb[0].mxu0
      %v1248 = vadd.f32 0.0, %v1247
      %v1249 = vpop.f32.mrb[0].mxu0
      %v1250 = vadd.f32 0.0, %v1249
      %1251 = vmatprep.mubr.f32.mxu0 %v392
      %1252 = vmatmul.mubr.f32.gmra.mrb[0].mxu0 %v391
      %v1253 = vpop.f32.mrb[0].mxu0
      %v1254 = vadd.f32 0.0, %v1253
      %v1255 = vpop.f32.mrb[0].mxu0
      %v1256 = vadd.f32 0.0, %v1255
      %1257 = vmatprep.mubr.f32.mxu0 %v396
      %1258 = vmatmul.mubr.f32.gmra.mrb[0].mxu0 %v395
      %v1259 = vpop.f32.mrb[0].mxu0
      %v1260 = vadd.f32 0.0, %v1259
      %v1261 = vpop.f32.mrb[0].mxu0
      %v1262 = vadd.f32 0.0, %v1261
      %1263 = vmatprep.mubr.f32.mxu0 %v400
      %1264 = vmatmul.mubr.f32.gmra.mrb[0].mxu0 %v399
      %v1265 = vpop.f32.mrb[0].mxu0
      %v1266 = vadd.f32 0.0, %v1265
      %v1267 = vpop.f32.mrb[0].mxu0
      %v1268 = vadd.f32 0.0, %v1267
      %1269 = vdwg.mxu0
      %1270 = vmatprep.subr.mxu0 %v598
      %1271 = vmatpush1.msra.mxu0 %v597
      %1272 = vmatprep.subr.mxu0 %v604
      %1273 = vmatpush1.msra.mxu0 %v603
      %1274 = vmatprep.subr.mxu0 %v610
      %1275 = vmatpush1.msra.mxu0 %v609
      %1276 = vmatprep.subr.mxu0 %v616
      %1277 = vmatpush1.msra.mxu0 %v615
      %1278 = vmatprep.subr.mxu0 %v622
      %1279 = vmatpush1.msra.mxu0 %v621
      %1280 = vmatprep.subr.mxu0 %v628
      %1281 = vmatpush1.msra.mxu0 %v627
      %1282 = vmatprep.subr.mxu0 %v634
      %1283 = vmatpush1.msra.mxu0 %v633
      %1284 = vmatprep.subr.mxu0 %v640
      %1285 = vmatpush1.msra.mxu0 %v639
      %1286 = vmatprep.subr.mxu0 %v646
      %1287 = vmatpush1.msra.mxu0 %v645
      %1288 = vmatprep.subr.mxu0 %v652
      %1289 = vmatpush1.msra.mxu0 %v651
      %1290 = vmatprep.subr.mxu0 %v658
      %1291 = vmatpush1.msra.mxu0 %v657
      %1292 = vmatprep.subr.mxu0 %v664
      %1293 = vmatpush1.msra.mxu0 %v663
      %1294 = vmatprep.subr.mxu0 %v670
      %1295 = vmatpush1.msra.mxu0 %v669
      %1296 = vmatprep.subr.mxu0 %v676
      %1297 = vmatpush1.msra.mxu0 %v675
      %1298 = vmatprep.subr.mxu0 %v682
      %1299 = vmatpush1.msra.mxu0 %v681
      %1300 = vmatprep.subr.mxu0 %v688
      %1301 = vmatpush1.msra.mxu0 %v687
      %1302 = vmatprep.subr.mxu0 %v694
      %1303 = vmatpush1.msra.mxu0 %v693
      %1304 = vmatprep.subr.mxu0 %v700
      %1305 = vmatpush1.msra.mxu0 %v699
      %1306 = vmatprep.subr.mxu0 %v706
      %1307 = vmatpush1.msra.mxu0 %v705
      %1308 = vmatprep.subr.mxu0 %v712
      %1309 = vmatpush1.msra.mxu0 %v711
      %1310 = vmatprep.subr.mxu0 %v718
      %1311 = vmatpush1.msra.mxu0 %v717
      %1312 = vmatprep.subr.mxu0 %v724
      %1313 = vmatpush1.msra.mxu0 %v723
      %1314 = vmatprep.subr.mxu0 %v730
      %1315 = vmatpush1.msra.mxu0 %v729
      %1316 = vmatprep.subr.mxu0 %v736
      %1317 = vmatpush1.msra.mxu0 %v735
      %1318 = vmatprep.subr.mxu0 %v742
      %1319 = vmatpush1.msra.mxu0 %v741
      %1320 = vmatprep.subr.mxu0 %v748
      %1321 = vmatpush1.msra.mxu0 %v747
      %1322 = vmatprep.subr.mxu0 %v754
      %1323 = vmatpush1.msra.mxu0 %v753
      %1324 = vmatprep.subr.mxu0 %v760
      %1325 = vmatpush1.msra.mxu0 %v759
      %1326 = vmatprep.subr.mxu0 %v766
      %1327 = vmatpush1.msra.mxu0 %v765
      %1328 = vmatprep.subr.mxu0 %v772
      %1329 = vmatpush1.msra.mxu0 %v771
      %1330 = vmatprep.subr.mxu0 %v778
      %1331 = vmatpush1.msra.mxu0 %v777
      %1332 = vmatprep.subr.mxu0 %v784
      %1333 = vmatpush1.msra.mxu0 %v783
      %1334 = vmatprep.mubr.f32.mxu0 %v342
      %1335 = vmatmul.mubr.f32.gmra.mrb[0].mxu0 %v341
      %v1336 = vpop.f32.mrb[0].mxu0
      %v1337 = vadd.f32 %v1176, %v1336
      %v1338 = vpop.f32.mrb[0].mxu0
      %v1339 = vadd.f32 %v1178, %v1338
      %1340 = vmatprep.mubr.f32.mxu0 %v346
      %1341 = vmatmul.mubr.f32.gmra.mrb[0].mxu0 %v345
      %v1342 = vpop.f32.mrb[0].mxu0
      %v1343 = vadd.f32 %v1182, %v1342
      %v1344 = vpop.f32.mrb[0].mxu0
      %v1345 = vadd.f32 %v1184, %v1344
      %1346 = vmatprep.mubr.f32.mxu0 %v350
      %1347 = vmatmul.mubr.f32.gmra.mrb[0].mxu0 %v349
      %v1348 = vpop.f32.mrb[0].mxu0
      %v1349 = vadd.f32 %v1188, %v1348
      %v1350 = vpop.f32.mrb[0].mxu0
      %v1351 = vadd.f32 %v1190, %v1350
      %1352 = vmatprep.mubr.f32.mxu0 %v354
      %1353 = vmatmul.mubr.f32.gmra.mrb[0].mxu0 %v353
      %v1354 = vpop.f32.mrb[0].mxu0
      %v1355 = vadd.f32 %v1194, %v1354
      %v1356 = vpop.f32.mrb[0].mxu0
      %v1357 = vadd.f32 %v1196, %v1356
      %1358 = vmatprep.mubr.f32.mxu0 %v358
      %1359 = vmatmul.mubr.f32.gmra.mrb[0].mxu0 %v357
      %v1360 = vpop.f32.mrb[0].mxu0
      %v1361 = vadd.f32 %v1200, %v1360
      %v1362 = vpop.f32.mrb[0].mxu0
      %v1363 = vadd.f32 %v1202, %v1362
      %1364 = vmatprep.mubr.f32.mxu0 %v362
      %1365 = vmatmul.mubr.f32.gmra.mrb[0].mxu0 %v361
      %v1366 = vpop.f32.mrb[0].mxu0
      %v1367 = vadd.f32 %v1206, %v1366
      %v1368 = vpop.f32.mrb[0].mxu0
      %v1369 = vadd.f32 %v1208, %v1368
      %1370 = vmatprep.mubr.f32.mxu0 %v366
      %1371 = vmatmul.mubr.f32.gmra.mrb[0].mxu0 %v365
      %v1372 = vpop.f32.mrb[0].mxu0
      %v1373 = vadd.f32 %v1212, %v1372
      %v1374 = vpop.f32.mrb[0].mxu0
      %v1375 = vadd.f32 %v1214, %v1374
      %1376 = vmatprep.mubr.f32.mxu0 %v370
      %1377 = vmatmul.mubr.f32.gmra.mrb[0].mxu0 %v369
      %v1378 = vpop.f32.mrb[0].mxu0
      %v1379 = vadd.f32 %v1218, %v1378
      %v1380 = vpop.f32.mrb[0].mxu0
      %v1381 = vadd.f32 %v1220, %v1380
      %1382 = vmatprep.mubr.f32.mxu0 %v374
      %1383 = vmatmul.mubr.f32.gmra.mrb[0].mxu0 %v373
      %v1384 = vpop.f32.mrb[0].mxu0
      %v1385 = vadd.f32 %v1224, %v1384
      %v1386 = vpop.f32.mrb[0].mxu0
      %v1387 = vadd.f32 %v1226, %v1386
      %1388 = vmatprep.mubr.f32.mxu0 %v378
      %1389 = vmatmul.mubr.f32.gmra.mrb[0].mxu0 %v377
      %v1390 = vpop.f32.mrb[0].mxu0
      %v1391 = vadd.f32 %v1230, %v1390
      %v1392 = vpop.f32.mrb[0].mxu0
      %v1393 = vadd.f32 %v1232, %v1392
      %1394 = vmatprep.mubr.f32.mxu0 %v382
      %1395 = vmatmul.mubr.f32.gmra.mrb[0].mxu0 %v381
      %v1396 = vpop.f32.mrb[0].mxu0
      %v1397 = vadd.f32 %v1236, %v1396
      %v1398 = vpop.f32.mrb[0].mxu0
      %v1399 = vadd.f32 %v1238, %v1398
      %1400 = vmatprep.mubr.f32.mxu0 %v386
      %1401 = vmatmul.mubr.f32.gmra.mrb[0].mxu0 %v385
      %v1402 = vpop.f32.mrb[0].mxu0
      %v1403 = vadd.f32 %v1242, %v1402
      %v1404 = vpop.f32.mrb[0].mxu0
      %v1405 = vadd.f32 %v1244, %v1404
      %1406 = vmatprep.mubr.f32.mxu0 %v390
      %1407 = vmatmul.mubr.f32.gmra.mrb[0].mxu0 %v389
      %v1408 = vpop.f32.mrb[0].mxu0
      %v1409 = vadd.f32 %v1248, %v1408
      %v1410 = vpop.f32.mrb[0].mxu0
      %v1411 = vadd.f32 %v1250, %v1410
      %1412 = vmatprep.mubr.f32.mxu0 %v394
      %1413 = vmatmul.mubr.f32.gmra.mrb[0].mxu0 %v393
      %v1414 = vpop.f32.mrb[0].mxu0
      %v1415 = vadd.f32 %v1254, %v1414
      %v1416 = vpop.f32.mrb[0].mxu0
      %v1417 = vadd.f32 %v1256, %v1416
      %1418 = vmatprep.mubr.f32.mxu0 %v398
      %1419 = vmatmul.mubr.f32.gmra.mrb[0].mxu0 %v397
      %v1420 = vpop.f32.mrb[0].mxu0
      %v1421 = vadd.f32 %v1260, %v1420
      %v1422 = vpop.f32.mrb[0].mxu0
      %v1423 = vadd.f32 %v1262, %v1422
      %1424 = vmatprep.mubr.f32.mxu0 %v402
      %1425 = vmatmul.mubr.f32.gmra.mrb[0].mxu0 %v401
      %v1426 = vpop.f32.mrb[0].mxu0
      %v1427 = vadd.f32 %v1266, %v1426
      %v1428 = vpop.f32.mrb[0].mxu0
      %v1429 = vadd.f32 %v1268, %v1428
      %1430 = vdwg.mxu0
      %1431 = vmatprep.subr.mxu0 %v408
      %1432 = vmatpush1.msra.mxu0 %v407
      %1433 = vmatprep.subr.mxu0 %v414
      %1434 = vmatpush1.msra.mxu0 %v413
      %1435 = vmatprep.subr.mxu0 %v420
      %1436 = vmatpush1.msra.mxu0 %v419
      %1437 = vmatprep.subr.mxu0 %v426
      %1438 = vmatpush1.msra.mxu0 %v425
      %1439 = vmatprep.subr.mxu0 %v432
      %1440 = vmatpush1.msra.mxu0 %v431
      %1441 = vmatprep.subr.mxu0 %v438
      %1442 = vmatpush1.msra.mxu0 %v437
      %1443 = vmatprep.subr.mxu0 %v444
      %1444 = vmatpush1.msra.mxu0 %v443
      %1445 = vmatprep.subr.mxu0 %v450
      %1446 = vmatpush1.msra.mxu0 %v449
      %1447 = vmatprep.subr.mxu0 %v456
      %1448 = vmatpush1.msra.mxu0 %v455
      %1449 = vmatprep.subr.mxu0 %v462
      %1450 = vmatpush1.msra.mxu0 %v461
      %1451 = vmatprep.subr.mxu0 %v468
      %1452 = vmatpush1.msra.mxu0 %v467
      %1453 = vmatprep.subr.mxu0 %v474
      %1454 = vmatpush1.msra.mxu0 %v473
      %1455 = vmatprep.subr.mxu0 %v480
      %1456 = vmatpush1.msra.mxu0 %v479
      %1457 = vmatprep.subr.mxu0 %v486
      %1458 = vmatpush1.msra.mxu0 %v485
      %1459 = vmatprep.subr.mxu0 %v492
      %1460 = vmatpush1.msra.mxu0 %v491
      %1461 = vmatprep.subr.mxu0 %v498
      %1462 = vmatpush1.msra.mxu0 %v497
      %1463 = vmatprep.subr.mxu0 %v504
      %1464 = vmatpush1.msra.mxu0 %v503
      %1465 = vmatprep.subr.mxu0 %v510
      %1466 = vmatpush1.msra.mxu0 %v509
      %1467 = vmatprep.subr.mxu0 %v516
      %1468 = vmatpush1.msra.mxu0 %v515
      %1469 = vmatprep.subr.mxu0 %v522
      %1470 = vmatpush1.msra.mxu0 %v521
      %1471 = vmatprep.subr.mxu0 %v528
      %1472 = vmatpush1.msra.mxu0 %v527
      %1473 = vmatprep.subr.mxu0 %v534
      %1474 = vmatpush1.msra.mxu0 %v533
      %1475 = vmatprep.subr.mxu0 %v540
      %1476 = vmatpush1.msra.mxu0 %v539
      %1477 = vmatprep.subr.mxu0 %v546
      %1478 = vmatpush1.msra.mxu0 %v545
      %1479 = vmatprep.subr.mxu0 %v552
      %1480 = vmatpush1.msra.mxu0 %v551
      %1481 = vmatprep.subr.mxu0 %v558
      %1482 = vmatpush1.msra.mxu0 %v557
      %1483 = vmatprep.subr.mxu0 %v564
      %1484 = vmatpush1.msra.mxu0 %v563
      %1485 = vmatprep.subr.mxu0 %v570
      %1486 = vmatpush1.msra.mxu0 %v569
      %1487 = vmatprep.subr.mxu0 %v576
      %1488 = vmatpush1.msra.mxu0 %v575
      %1489 = vmatprep.subr.mxu0 %v582
      %1490 = vmatpush1.msra.mxu0 %v581
      %1491 = vmatprep.subr.mxu0 %v588
      %1492 = vmatpush1.msra.mxu0 %v587
      %1493 = vmatprep.subr.mxu0 %v594
      %1494 = vmatpush1.msra.mxu0 %v593
      %1495 = vmatprep.mubr.f32.mxu0 %v340
      %1496 = vmatmul.mubr.f32.gmra.mrb[0].mxu0 %v339
      %v1497 = vpop.f32.mrb[0].mxu0
      %v1498 = vadd.f32 0.0, %v1497
      %v1499 = vpop.f32.mrb[0].mxu0
      %v1500 = vadd.f32 0.0, %v1499
      %1501 = vmatprep.mubr.f32.mxu0 %v344
      %1502 = vmatmul.mubr.f32.gmra.mrb[0].mxu0 %v343
      %v1503 = vpop.f32.mrb[0].mxu0
      %v1504 = vadd.f32 0.0, %v1503
      %v1505 = vpop.f32.mrb[0].mxu0
      %v1506 = vadd.f32 0.0, %v1505
      %1507 = vmatprep.mubr.f32.mxu0 %v348
      %1508 = vmatmul.mubr.f32.gmra.mrb[0].mxu0 %v347
      %v1509 = vpop.f32.mrb[0].mxu0
      %v1510 = vadd.f32 0.0, %v1509
      %v1511 = vpop.f32.mrb[0].mxu0
      %v1512 = vadd.f32 0.0, %v1511
      %1513 = vmatprep.mubr.f32.mxu0 %v352
      %1514 = vmatmul.mubr.f32.gmra.mrb[0].mxu0 %v351
      %v1515 = vpop.f32.mrb[0].mxu0
      %v1516 = vadd.f32 0.0, %v1515
      %v1517 = vpop.f32.mrb[0].mxu0
      %v1518 = vadd.f32 0.0, %v1517
      %1519 = vmatprep.mubr.f32.mxu0 %v356
      %1520 = vmatmul.mubr.f32.gmra.mrb[0].mxu0 %v355
      %v1521 = vpop.f32.mrb[0].mxu0
      %v1522 = vadd.f32 0.0, %v1521
      %v1523 = vpop.f32.mrb[0].mxu0
      %v1524 = vadd.f32 0.0, %v1523
      %1525 = vmatprep.mubr.f32.mxu0 %v360
      %1526 = vmatmul.mubr.f32.gmra.mrb[0].mxu0 %v359
      %v1527 = vpop.f32.mrb[0].mxu0
      %v1528 = vadd.f32 0.0, %v1527
      %v1529 = vpop.f32.mrb[0].mxu0
      %v1530 = vadd.f32 0.0, %v1529
      %1531 = vmatprep.mubr.f32.mxu0 %v364
      %1532 = vmatmul.mubr.f32.gmra.mrb[0].mxu0 %v363
      %v1533 = vpop.f32.mrb[0].mxu0
      %v1534 = vadd.f32 0.0, %v1533
      %v1535 = vpop.f32.mrb[0].mxu0
      %v1536 = vadd.f32 0.0, %v1535
      %1537 = vmatprep.mubr.f32.mxu0 %v368
      %1538 = vmatmul.mubr.f32.gmra.mrb[0].mxu0 %v367
      %v1539 = vpop.f32.mrb[0].mxu0
      %v1540 = vadd.f32 0.0, %v1539
      %v1541 = vpop.f32.mrb[0].mxu0
      %v1542 = vadd.f32 0.0, %v1541
      %1543 = vmatprep.mubr.f32.mxu0 %v372
      %1544 = vmatmul.mubr.f32.gmra.mrb[0].mxu0 %v371
      %v1545 = vpop.f32.mrb[0].mxu0
      %v1546 = vadd.f32 0.0, %v1545
      %v1547 = vpop.f32.mrb[0].mxu0
      %v1548 = vadd.f32 0.0, %v1547
      %1549 = vmatprep.mubr.f32.mxu0 %v376
      %1550 = vmatmul.mubr.f32.gmra.mrb[0].mxu0 %v375
      %v1551 = vpop.f32.mrb[0].mxu0
      %v1552 = vadd.f32 0.0, %v1551
      %v1553 = vpop.f32.mrb[0].mxu0
      %v1554 = vadd.f32 0.0, %v1553
      %1555 = vmatprep.mubr.f32.mxu0 %v380
      %1556 = vmatmul.mubr.f32.gmra.mrb[0].mxu0 %v379
      %v1557 = vpop.f32.mrb[0].mxu0
      %v1558 = vadd.f32 0.0, %v1557
      %v1559 = vpop.f32.mrb[0].mxu0
      %v1560 = vadd.f32 0.0, %v1559
      %1561 = vmatprep.mubr.f32.mxu0 %v384
      %1562 = vmatmul.mubr.f32.gmra.mrb[0].mxu0 %v383
      %v1563 = vpop.f32.mrb[0].mxu0
      %v1564 = vadd.f32 0.0, %v1563
      %v1565 = vpop.f32.mrb[0].mxu0
      %v1566 = vadd.f32 0.0, %v1565
      %1567 = vmatprep.mubr.f32.mxu0 %v388
      %1568 = vmatmul.mubr.f32.gmra.mrb[0].mxu0 %v387
      %v1569 = vpop.f32.mrb[0].mxu0
      %v1570 = vadd.f32 0.0, %v1569
      %v1571 = vpop.f32.mrb[0].mxu0
      %v1572 = vadd.f32 0.0, %v1571
      %1573 = vmatprep.mubr.f32.mxu0 %v392
      %1574 = vmatmul.mubr.f32.gmra.mrb[0].mxu0 %v391
      %v1575 = vpop.f32.mrb[0].mxu0
      %v1576 = vadd.f32 0.0, %v1575
      %v1577 = vpop.f32.mrb[0].mxu0
      %v1578 = vadd.f32 0.0, %v1577
      %1579 = vmatprep.mubr.f32.mxu0 %v396
      %1580 = vmatmul.mubr.f32.gmra.mrb[0].mxu0 %v395
      %v1581 = vpop.f32.mrb[0].mxu0
      %v1582 = vadd.f32 0.0, %v1581
      %v1583 = vpop.f32.mrb[0].mxu0
      %v1584 = vadd.f32 0.0, %v1583
      %1585 = vmatprep.mubr.f32.mxu0 %v400
      %1586 = vmatmul.mubr.f32.gmra.mrb[0].mxu0 %v399
      %v1587 = vpop.f32.mrb[0].mxu0
      %v1588 = vadd.f32 0.0, %v1587
      %v1589 = vpop.f32.mrb[0].mxu0
      %v1590 = vadd.f32 0.0, %v1589
      %1591 = vdwg.mxu0
      %1592 = vmatprep.subr.mxu0 %v600
      %1593 = vmatpush1.msra.mxu0 %v599
      %1594 = vmatprep.subr.mxu0 %v606
      %1595 = vmatpush1.msra.mxu0 %v605
      %1596 = vmatprep.subr.mxu0 %v612
      %1597 = vmatpush1.msra.mxu0 %v611
      %1598 = vmatprep.subr.mxu0 %v618
      %1599 = vmatpush1.msra.mxu0 %v617
      %1600 = vmatprep.subr.mxu0 %v624
      %1601 = vmatpush1.msra.mxu0 %v623
      %1602 = vmatprep.subr.mxu0 %v630
      %1603 = vmatpush1.msra.mxu0 %v629
      %1604 = vmatprep.subr.mxu0 %v636
      %1605 = vmatpush1.msra.mxu0 %v635
      %1606 = vmatprep.subr.mxu0 %v642
      %1607 = vmatpush1.msra.mxu0 %v641
      %1608 = vmatprep.subr.mxu0 %v648
      %1609 = vmatpush1.msra.mxu0 %v647
      %1610 = vmatprep.subr.mxu0 %v654
      %1611 = vmatpush1.msra.mxu0 %v653
      %1612 = vmatprep.subr.mxu0 %v660
      %1613 = vmatpush1.msra.mxu0 %v659
      %1614 = vmatprep.subr.mxu0 %v666
      %1615 = vmatpush1.msra.mxu0 %v665
      %1616 = vmatprep.subr.mxu0 %v672
      %1617 = vmatpush1.msra.mxu0 %v671
      %1618 = vmatprep.subr.mxu0 %v678
      %1619 = vmatpush1.msra.mxu0 %v677
      %1620 = vmatprep.subr.mxu0 %v684
      %1621 = vmatpush1.msra.mxu0 %v683
      %1622 = vmatprep.subr.mxu0 %v690
      %1623 = vmatpush1.msra.mxu0 %v689
      %1624 = vmatprep.subr.mxu0 %v696
      %1625 = vmatpush1.msra.mxu0 %v695
      %1626 = vmatprep.subr.mxu0 %v702
      %1627 = vmatpush1.msra.mxu0 %v701
      %1628 = vmatprep.subr.mxu0 %v708
      %1629 = vmatpush1.msra.mxu0 %v707
      %1630 = vmatprep.subr.mxu0 %v714
      %1631 = vmatpush1.msra.mxu0 %v713
      %1632 = vmatprep.subr.mxu0 %v720
      %1633 = vmatpush1.msra.mxu0 %v719
      %1634 = vmatprep.subr.mxu0 %v726
      %1635 = vmatpush1.msra.mxu0 %v725
      %1636 = vmatprep.subr.mxu0 %v732
      %1637 = vmatpush1.msra.mxu0 %v731
      %1638 = vmatprep.subr.mxu0 %v738
      %1639 = vmatpush1.msra.mxu0 %v737
      %1640 = vmatprep.subr.mxu0 %v744
      %1641 = vmatpush1.msra.mxu0 %v743
      %1642 = vmatprep.subr.mxu0 %v750
      %1643 = vmatpush1.msra.mxu0 %v749
      %1644 = vmatprep.subr.mxu0 %v756
      %1645 = vmatpush1.msra.mxu0 %v755
      %1646 = vmatprep.subr.mxu0 %v762
      %1647 = vmatpush1.msra.mxu0 %v761
      %1648 = vmatprep.subr.mxu0 %v768
      %1649 = vmatpush1.msra.mxu0 %v767
      %1650 = vmatprep.subr.mxu0 %v774
      %1651 = vmatpush1.msra.mxu0 %v773
      %1652 = vmatprep.subr.mxu0 %v780
      %1653 = vmatpush1.msra.mxu0 %v779
      %1654 = vmatprep.subr.mxu0 %v786
      %1655 = vmatpush1.msra.mxu0 %v785
      %1656 = vmatprep.mubr.f32.mxu0 %v342
      %1657 = vmatmul.mubr.f32.gmra.mrb[0].mxu0 %v341
      %v1658 = vpop.f32.mrb[0].mxu0
      %v1659 = vadd.f32 %v1498, %v1658
      %v1660 = vpop.f32.mrb[0].mxu0
      %v1661 = vadd.f32 %v1500, %v1660
      %1662 = vmatprep.mubr.f32.mxu0 %v346
      %1663 = vmatmul.mubr.f32.gmra.mrb[0].mxu0 %v345
      %v1664 = vpop.f32.mrb[0].mxu0
      %v1665 = vadd.f32 %v1504, %v1664
      %v1666 = vpop.f32.mrb[0].mxu0
      %v1667 = vadd.f32 %v1506, %v1666
      %1668 = vmatprep.mubr.f32.mxu0 %v350
      %1669 = vmatmul.mubr.f32.gmra.mrb[0].mxu0 %v349
      %v1670 = vpop.f32.mrb[0].mxu0
      %v1671 = vadd.f32 %v1510, %v1670
      %v1672 = vpop.f32.mrb[0].mxu0
      %v1673 = vadd.f32 %v1512, %v1672
      %1674 = vmatprep.mubr.f32.mxu0 %v354
      %1675 = vmatmul.mubr.f32.gmra.mrb[0].mxu0 %v353
      %v1676 = vpop.f32.mrb[0].mxu0
      %v1677 = vadd.f32 %v1516, %v1676
      %v1678 = vpop.f32.mrb[0].mxu0
      %v1679 = vadd.f32 %v1518, %v1678
      %1680 = vmatprep.mubr.f32.mxu0 %v358
      %1681 = vmatmul.mubr.f32.gmra.mrb[0].mxu0 %v357
      %v1682 = vpop.f32.mrb[0].mxu0
      %v1683 = vadd.f32 %v1522, %v1682
      %v1684 = vpop.f32.mrb[0].mxu0
      %v1685 = vadd.f32 %v1524, %v1684
      %1686 = vmatprep.mubr.f32.mxu0 %v362
      %1687 = vmatmul.mubr.f32.gmra.mrb[0].mxu0 %v361
      %v1688 = vpop.f32.mrb[0].mxu0
      %v1689 = vadd.f32 %v1528, %v1688
      %v1690 = vpop.f32.mrb[0].mxu0
      %v1691 = vadd.f32 %v1530, %v1690
      %1692 = vmatprep.mubr.f32.mxu0 %v366
      %1693 = vmatmul.mubr.f32.gmra.mrb[0].mxu0 %v365
      %v1694 = vpop.f32.mrb[0].mxu0
      %v1695 = vadd.f32 %v1534, %v1694
      %v1696 = vpop.f32.mrb[0].mxu0
      %v1697 = vadd.f32 %v1536, %v1696
      %1698 = vmatprep.mubr.f32.mxu0 %v370
      %1699 = vmatmul.mubr.f32.gmra.mrb[0].mxu0 %v369
      %v1700 = vpop.f32.mrb[0].mxu0
      %v1701 = vadd.f32 %v1540, %v1700
      %v1702 = vpop.f32.mrb[0].mxu0
      %v1703 = vadd.f32 %v1542, %v1702
      %1704 = vmatprep.mubr.f32.mxu0 %v374
      %1705 = vmatmul.mubr.f32.gmra.mrb[0].mxu0 %v373
      %v1706 = vpop.f32.mrb[0].mxu0
      %v1707 = vadd.f32 %v1546, %v1706
      %v1708 = vpop.f32.mrb[0].mxu0
      %v1709 = vadd.f32 %v1548, %v1708
      %1710 = vmatprep.mubr.f32.mxu0 %v378
      %1711 = vmatmul.mubr.f32.gmra.mrb[0].mxu0 %v377
      %v1712 = vpop.f32.mrb[0].mxu0
      %v1713 = vadd.f32 %v1552, %v1712
      %v1714 = vpop.f32.mrb[0].mxu0
      %v1715 = vadd.f32 %v1554, %v1714
      %1716 = vmatprep.mubr.f32.mxu0 %v382
      %1717 = vmatmul.mubr.f32.gmra.mrb[0].mxu0 %v381
      %v1718 = vpop.f32.mrb[0].mxu0
      %v1719 = vadd.f32 %v1558, %v1718
      %v1720 = vpop.f32.mrb[0].mxu0
      %v1721 = vadd.f32 %v1560, %v1720
      %1722 = vmatprep.mubr.f32.mxu0 %v386
      %1723 = vmatmul.mubr.f32.gmra.mrb[0].mxu0 %v385
      %v1724 = vpop.f32.mrb[0].mxu0
      %v1725 = vadd.f32 %v1564, %v1724
      %v1726 = vpop.f32.mrb[0].mxu0
      %v1727 = vadd.f32 %v1566, %v1726
      %1728 = vmatprep.mubr.f32.mxu0 %v390
      %1729 = vmatmul.mubr.f32.gmra.mrb[0].mxu0 %v389
      %v1730 = vpop.f32.mrb[0].mxu0
      %v1731 = vadd.f32 %v1570, %v1730
      %v1732 = vpop.f32.mrb[0].mxu0
      %v1733 = vadd.f32 %v1572, %v1732
      %1734 = vmatprep.mubr.f32.mxu0 %v394
      %1735 = vmatmul.mubr.f32.gmra.mrb[0].mxu0 %v393
      %v1736 = vpop.f32.mrb[0].mxu0
      %v1737 = vadd.f32 %v1576, %v1736
      %v1738 = vpop.f32.mrb[0].mxu0
      %v1739 = vadd.f32 %v1578, %v1738
      %1740 = vmatprep.mubr.f32.mxu0 %v398
      %1741 = vmatmul.mubr.f32.gmra.mrb[0].mxu0 %v397
      %v1742 = vpop.f32.mrb[0].mxu0
      %v1743 = vadd.f32 %v1582, %v1742
      %v1744 = vpop.f32.mrb[0].mxu0
      %v1745 = vadd.f32 %v1584, %v1744
      %1746 = vmatprep.mubr.f32.mxu0 %v402
      %1747 = vmatmul.mubr.f32.gmra.mrb[0].mxu0 %v401
      %v1748 = vpop.f32.mrb[0].mxu0
      %v1749 = vadd.f32 %v1588, %v1748
      %v1750 = vpop.f32.mrb[0].mxu0
      %v1751 = vadd.f32 %v1590, %v1750
      %1752 = vdwg.mxu0
      %v1753 = vld [vmem:[%s1 + $0x30] sm:$0xff]
      %v1754 = vld [vmem:[%s1 + $0x38] sm:$0xff]
      %v1755 = vld [vmem:[%s1 + $0x40] sm:$0xff]
      %v1756 = vld [vmem:[%s1 + $0x48] sm:$0xff]
      %v1757 = vld [vmem:[%s1 + $0x50] sm:$0xff]
      %v1758 = vld [vmem:[%s1 + $0x58] sm:$0xff]
      %v1759 = vld [vmem:[%s1 + $0xf0] sm:$0xff]
      %v1760 = vld [vmem:[%s1 + $0xf8] sm:$0xff]
      %v1761 = vld [vmem:[%s1 + $0x100] sm:$0xff]
      %v1762 = vld [vmem:[%s1 + $0x108] sm:$0xff]
      %v1763 = vld [vmem:[%s1 + $0x110] sm:$0xff]
      %v1764 = vld [vmem:[%s1 + $0x118] sm:$0xff]
      %v1765 = vld [vmem:[%s1 + $0x1b0] sm:$0xff]
      %v1766 = vld [vmem:[%s1 + $0x1b8] sm:$0xff]
      %v1767 = vld [vmem:[%s1 + $0x1c0] sm:$0xff]
      %v1768 = vld [vmem:[%s1 + $0x1c8] sm:$0xff]
      %v1769 = vld [vmem:[%s1 + $0x1d0] sm:$0xff]
      %v1770 = vld [vmem:[%s1 + $0x1d8] sm:$0xff]
      %v1771 = vld [vmem:[%s1 + $0x270] sm:$0xff]
      %v1772 = vld [vmem:[%s1 + $0x278] sm:$0xff]
      %v1773 = vld [vmem:[%s1 + $0x280] sm:$0xff]
      %v1774 = vld [vmem:[%s1 + $0x288] sm:$0xff]
      %v1775 = vld [vmem:[%s1 + $0x290] sm:$0xff]
      %v1776 = vld [vmem:[%s1 + $0x298] sm:$0xff]
      %v1777 = vld [vmem:[%s1 + $0x330] sm:$0xff]
      %v1778 = vld [vmem:[%s1 + $0x338] sm:$0xff]
      %v1779 = vld [vmem:[%s1 + $0x340] sm:$0xff]
      %v1780 = vld [vmem:[%s1 + $0x348] sm:$0xff]
      %v1781 = vld [vmem:[%s1 + $0x350] sm:$0xff]
      %v1782 = vld [vmem:[%s1 + $0x358] sm:$0xff]
      %v1783 = vld [vmem:[%s1 + $0x3f0] sm:$0xff]
      %v1784 = vld [vmem:[%s1 + $0x3f8] sm:$0xff]
      %v1785 = vld [vmem:[%s1 + $0x400] sm:$0xff]
      %v1786 = vld [vmem:[%s1 + $0x408] sm:$0xff]
      %v1787 = vld [vmem:[%s1 + $0x410] sm:$0xff]
      %v1788 = vld [vmem:[%s1 + $0x418] sm:$0xff]
      %v1789 = vld [vmem:[%s1 + $0x4b0] sm:$0xff]
      %v1790 = vld [vmem:[%s1 + $0x4b8] sm:$0xff]
      %v1791 = vld [vmem:[%s1 + $0x4c0] sm:$0xff]
      %v1792 = vld [vmem:[%s1 + $0x4c8] sm:$0xff]
      %v1793 = vld [vmem:[%s1 + $0x4d0] sm:$0xff]
      %v1794 = vld [vmem:[%s1 + $0x4d8] sm:$0xff]
      %v1795 = vld [vmem:[%s1 + $0x570] sm:$0xff]
      %v1796 = vld [vmem:[%s1 + $0x578] sm:$0xff]
      %v1797 = vld [vmem:[%s1 + $0x580] sm:$0xff]
      %v1798 = vld [vmem:[%s1 + $0x588] sm:$0xff]
      %v1799 = vld [vmem:[%s1 + $0x590] sm:$0xff]
      %v1800 = vld [vmem:[%s1 + $0x598] sm:$0xff]
      %v1801 = vld [vmem:[%s1 + $0x630] sm:$0xff]
      %v1802 = vld [vmem:[%s1 + $0x638] sm:$0xff]
      %v1803 = vld [vmem:[%s1 + $0x640] sm:$0xff]
      %v1804 = vld [vmem:[%s1 + $0x648] sm:$0xff]
      %v1805 = vld [vmem:[%s1 + $0x650] sm:$0xff]
      %v1806 = vld [vmem:[%s1 + $0x658] sm:$0xff]
      %v1807 = vld [vmem:[%s1 + $0x6f0] sm:$0xff]
      %v1808 = vld [vmem:[%s1 + $0x6f8] sm:$0xff]
      %v1809 = vld [vmem:[%s1 + $0x700] sm:$0xff]
      %v1810 = vld [vmem:[%s1 + $0x708] sm:$0xff]
      %v1811 = vld [vmem:[%s1 + $0x710] sm:$0xff]
      %v1812 = vld [vmem:[%s1 + $0x718] sm:$0xff]
      %v1813 = vld [vmem:[%s1 + $0x7b0] sm:$0xff]
      %v1814 = vld [vmem:[%s1 + $0x7b8] sm:$0xff]
      %v1815 = vld [vmem:[%s1 + $0x7c0] sm:$0xff]
      %v1816 = vld [vmem:[%s1 + $0x7c8] sm:$0xff]
      %v1817 = vld [vmem:[%s1 + $0x7d0] sm:$0xff]
      %v1818 = vld [vmem:[%s1 + $0x7d8] sm:$0xff]
      %v1819 = vld [vmem:[%s1 + $0x870] sm:$0xff]
      %v1820 = vld [vmem:[%s1 + $0x878] sm:$0xff]
      %v1821 = vld [vmem:[%s1 + $0x880] sm:$0xff]
      %v1822 = vld [vmem:[%s1 + $0x888] sm:$0xff]
      %v1823 = vld [vmem:[%s1 + $0x890] sm:$0xff]
      %v1824 = vld [vmem:[%s1 + $0x898] sm:$0xff]
      %v1825 = vld [vmem:[%s1 + $0x930] sm:$0xff]
      %v1826 = vld [vmem:[%s1 + $0x938] sm:$0xff]
      %v1827 = vld [vmem:[%s1 + $0x940] sm:$0xff]
      %v1828 = vld [vmem:[%s1 + $0x948] sm:$0xff]
      %v1829 = vld [vmem:[%s1 + $0x950] sm:$0xff]
      %v1830 = vld [vmem:[%s1 + $0x958] sm:$0xff]
      %v1831 = vld [vmem:[%s1 + $0x9f0] sm:$0xff]
      %v1832 = vld [vmem:[%s1 + $0x9f8] sm:$0xff]
      %v1833 = vld [vmem:[%s1 + $0xa00] sm:$0xff]
      %v1834 = vld [vmem:[%s1 + $0xa08] sm:$0xff]
      %v1835 = vld [vmem:[%s1 + $0xa10] sm:$0xff]
      %v1836 = vld [vmem:[%s1 + $0xa18] sm:$0xff]
      %v1837 = vld [vmem:[%s1 + $0xab0] sm:$0xff]
      %v1838 = vld [vmem:[%s1 + $0xab8] sm:$0xff]
      %v1839 = vld [vmem:[%s1 + $0xac0] sm:$0xff]
      %v1840 = vld [vmem:[%s1 + $0xac8] sm:$0xff]
      %v1841 = vld [vmem:[%s1 + $0xad0] sm:$0xff]
      %v1842 = vld [vmem:[%s1 + $0xad8] sm:$0xff]
      %v1843 = vld [vmem:[%s1 + $0xb70] sm:$0xff]
      %v1844 = vld [vmem:[%s1 + $0xb78] sm:$0xff]
      %v1845 = vld [vmem:[%s1 + $0xb80] sm:$0xff]
      %v1846 = vld [vmem:[%s1 + $0xb88] sm:$0xff]
      %v1847 = vld [vmem:[%s1 + $0xb90] sm:$0xff]
      %v1848 = vld [vmem:[%s1 + $0xb98] sm:$0xff]
      %v1849 = vld [vmem:[%s1 + $0xc30] sm:$0xff]
      %v1850 = vld [vmem:[%s1 + $0xc38] sm:$0xff]
      %v1851 = vld [vmem:[%s1 + $0xc40] sm:$0xff]
      %v1852 = vld [vmem:[%s1 + $0xc48] sm:$0xff]
      %v1853 = vld [vmem:[%s1 + $0xc50] sm:$0xff]
      %v1854 = vld [vmem:[%s1 + $0xc58] sm:$0xff]
      %v1855 = vld [vmem:[%s1 + $0xcf0] sm:$0xff]
      %v1856 = vld [vmem:[%s1 + $0xcf8] sm:$0xff]
      %v1857 = vld [vmem:[%s1 + $0xd00] sm:$0xff]
      %v1858 = vld [vmem:[%s1 + $0xd08] sm:$0xff]
      %v1859 = vld [vmem:[%s1 + $0xd10] sm:$0xff]
      %v1860 = vld [vmem:[%s1 + $0xd18] sm:$0xff]
      %v1861 = vld [vmem:[%s1 + $0xdb0] sm:$0xff]
      %v1862 = vld [vmem:[%s1 + $0xdb8] sm:$0xff]
      %v1863 = vld [vmem:[%s1 + $0xdc0] sm:$0xff]
      %v1864 = vld [vmem:[%s1 + $0xdc8] sm:$0xff]
      %v1865 = vld [vmem:[%s1 + $0xdd0] sm:$0xff]
      %v1866 = vld [vmem:[%s1 + $0xdd8] sm:$0xff]
      %v1867 = vld [vmem:[%s1 + $0xe70] sm:$0xff]
      %v1868 = vld [vmem:[%s1 + $0xe78] sm:$0xff]
      %v1869 = vld [vmem:[%s1 + $0xe80] sm:$0xff]
      %v1870 = vld [vmem:[%s1 + $0xe88] sm:$0xff]
      %v1871 = vld [vmem:[%s1 + $0xe90] sm:$0xff]
      %v1872 = vld [vmem:[%s1 + $0xe98] sm:$0xff]
      %v1873 = vld [vmem:[%s1 + $0xf30] sm:$0xff]
      %v1874 = vld [vmem:[%s1 + $0xf38] sm:$0xff]
      %v1875 = vld [vmem:[%s1 + $0xf40] sm:$0xff]
      %v1876 = vld [vmem:[%s1 + $0xf48] sm:$0xff]
      %v1877 = vld [vmem:[%s1 + $0xf50] sm:$0xff]
      %v1878 = vld [vmem:[%s1 + $0xf58] sm:$0xff]
      %v1879 = vld [vmem:[%s1 + $0xff0] sm:$0xff]
      %v1880 = vld [vmem:[%s1 + $0xff8] sm:$0xff]
      %v1881 = vld [vmem:[%s1 + $0x1000] sm:$0xff]
      %v1882 = vld [vmem:[%s1 + $0x1008] sm:$0xff]
      %v1883 = vld [vmem:[%s1 + $0x1010] sm:$0xff]
      %v1884 = vld [vmem:[%s1 + $0x1018] sm:$0xff]
      %v1885 = vld [vmem:[%s1 + $0x10b0] sm:$0xff]
      %v1886 = vld [vmem:[%s1 + $0x10b8] sm:$0xff]
      %v1887 = vld [vmem:[%s1 + $0x10c0] sm:$0xff]
      %v1888 = vld [vmem:[%s1 + $0x10c8] sm:$0xff]
      %v1889 = vld [vmem:[%s1 + $0x10d0] sm:$0xff]
      %v1890 = vld [vmem:[%s1 + $0x10d8] sm:$0xff]
      %v1891 = vld [vmem:[%s1 + $0x1170] sm:$0xff]
      %v1892 = vld [vmem:[%s1 + $0x1178] sm:$0xff]
      %v1893 = vld [vmem:[%s1 + $0x1180] sm:$0xff]
      %v1894 = vld [vmem:[%s1 + $0x1188] sm:$0xff]
      %v1895 = vld [vmem:[%s1 + $0x1190] sm:$0xff]
      %v1896 = vld [vmem:[%s1 + $0x1198] sm:$0xff]
      %v1897 = vld [vmem:[%s1 + $0x1230] sm:$0xff]
      %v1898 = vld [vmem:[%s1 + $0x1238] sm:$0xff]
      %v1899 = vld [vmem:[%s1 + $0x1240] sm:$0xff]
      %v1900 = vld [vmem:[%s1 + $0x1248] sm:$0xff]
      %v1901 = vld [vmem:[%s1 + $0x1250] sm:$0xff]
      %v1902 = vld [vmem:[%s1 + $0x1258] sm:$0xff]
      %v1903 = vld [vmem:[%s1 + $0x12f0] sm:$0xff]
      %v1904 = vld [vmem:[%s1 + $0x12f8] sm:$0xff]
      %v1905 = vld [vmem:[%s1 + $0x1300] sm:$0xff]
      %v1906 = vld [vmem:[%s1 + $0x1308] sm:$0xff]
      %v1907 = vld [vmem:[%s1 + $0x1310] sm:$0xff]
      %v1908 = vld [vmem:[%s1 + $0x1318] sm:$0xff]
      %v1909 = vld [vmem:[%s1 + $0x13b0] sm:$0xff]
      %v1910 = vld [vmem:[%s1 + $0x13b8] sm:$0xff]
      %v1911 = vld [vmem:[%s1 + $0x13c0] sm:$0xff]
      %v1912 = vld [vmem:[%s1 + $0x13c8] sm:$0xff]
      %v1913 = vld [vmem:[%s1 + $0x13d0] sm:$0xff]
      %v1914 = vld [vmem:[%s1 + $0x13d8] sm:$0xff]
      %v1915 = vld [vmem:[%s1 + $0x1470] sm:$0xff]
      %v1916 = vld [vmem:[%s1 + $0x1478] sm:$0xff]
      %v1917 = vld [vmem:[%s1 + $0x1480] sm:$0xff]
      %v1918 = vld [vmem:[%s1 + $0x1488] sm:$0xff]
      %v1919 = vld [vmem:[%s1 + $0x1490] sm:$0xff]
      %v1920 = vld [vmem:[%s1 + $0x1498] sm:$0xff]
      %v1921 = vld [vmem:[%s1 + $0x1530] sm:$0xff]
      %v1922 = vld [vmem:[%s1 + $0x1538] sm:$0xff]
      %v1923 = vld [vmem:[%s1 + $0x1540] sm:$0xff]
      %v1924 = vld [vmem:[%s1 + $0x1548] sm:$0xff]
      %v1925 = vld [vmem:[%s1 + $0x1550] sm:$0xff]
      %v1926 = vld [vmem:[%s1 + $0x1558] sm:$0xff]
      %v1927 = vld [vmem:[%s1 + $0x15f0] sm:$0xff]
      %v1928 = vld [vmem:[%s1 + $0x15f8] sm:$0xff]
      %v1929 = vld [vmem:[%s1 + $0x1600] sm:$0xff]
      %v1930 = vld [vmem:[%s1 + $0x1608] sm:$0xff]
      %v1931 = vld [vmem:[%s1 + $0x1610] sm:$0xff]
      %v1932 = vld [vmem:[%s1 + $0x1618] sm:$0xff]
      %v1933 = vld [vmem:[%s1 + $0x16b0] sm:$0xff]
      %v1934 = vld [vmem:[%s1 + $0x16b8] sm:$0xff]
      %v1935 = vld [vmem:[%s1 + $0x16c0] sm:$0xff]
      %v1936 = vld [vmem:[%s1 + $0x16c8] sm:$0xff]
      %v1937 = vld [vmem:[%s1 + $0x16d0] sm:$0xff]
      %v1938 = vld [vmem:[%s1 + $0x16d8] sm:$0xff]
      %v1939 = vld [vmem:[%s1 + $0x1770] sm:$0xff]
      %v1940 = vld [vmem:[%s1 + $0x1778] sm:$0xff]
      %v1941 = vld [vmem:[%s1 + $0x1780] sm:$0xff]
      %v1942 = vld [vmem:[%s1 + $0x1788] sm:$0xff]
      %v1943 = vld [vmem:[%s1 + $0x1790] sm:$0xff]
      %v1944 = vld [vmem:[%s1 + $0x1798] sm:$0xff]
      %v1945 = vld [vmem:[%s1 + $0x1830] sm:$0xff]
      %v1946 = vld [vmem:[%s1 + $0x1838] sm:$0xff]
      %v1947 = vld [vmem:[%s1 + $0x1840] sm:$0xff]
      %v1948 = vld [vmem:[%s1 + $0x1848] sm:$0xff]
      %v1949 = vld [vmem:[%s1 + $0x1850] sm:$0xff]
      %v1950 = vld [vmem:[%s1 + $0x1858] sm:$0xff]
      %v1951 = vld [vmem:[%s1 + $0x18f0] sm:$0xff]
      %v1952 = vld [vmem:[%s1 + $0x18f8] sm:$0xff]
      %v1953 = vld [vmem:[%s1 + $0x1900] sm:$0xff]
      %v1954 = vld [vmem:[%s1 + $0x1908] sm:$0xff]
      %v1955 = vld [vmem:[%s1 + $0x1910] sm:$0xff]
      %v1956 = vld [vmem:[%s1 + $0x1918] sm:$0xff]
      %v1957 = vld [vmem:[%s1 + $0x19b0] sm:$0xff]
      %v1958 = vld [vmem:[%s1 + $0x19b8] sm:$0xff]
      %v1959 = vld [vmem:[%s1 + $0x19c0] sm:$0xff]
      %v1960 = vld [vmem:[%s1 + $0x19c8] sm:$0xff]
      %v1961 = vld [vmem:[%s1 + $0x19d0] sm:$0xff]
      %v1962 = vld [vmem:[%s1 + $0x19d8] sm:$0xff]
      %v1963 = vld [vmem:[%s1 + $0x1a70] sm:$0xff]
      %v1964 = vld [vmem:[%s1 + $0x1a78] sm:$0xff]
      %v1965 = vld [vmem:[%s1 + $0x1a80] sm:$0xff]
      %v1966 = vld [vmem:[%s1 + $0x1a88] sm:$0xff]
      %v1967 = vld [vmem:[%s1 + $0x1a90] sm:$0xff]
      %v1968 = vld [vmem:[%s1 + $0x1a98] sm:$0xff]
      %v1969 = vld [vmem:[%s1 + $0x1b30] sm:$0xff]
      %v1970 = vld [vmem:[%s1 + $0x1b38] sm:$0xff]
      %v1971 = vld [vmem:[%s1 + $0x1b40] sm:$0xff]
      %v1972 = vld [vmem:[%s1 + $0x1b48] sm:$0xff]
      %v1973 = vld [vmem:[%s1 + $0x1b50] sm:$0xff]
      %v1974 = vld [vmem:[%s1 + $0x1b58] sm:$0xff]
      %v1975 = vld [vmem:[%s1 + $0x1bf0] sm:$0xff]
      %v1976 = vld [vmem:[%s1 + $0x1bf8] sm:$0xff]
      %v1977 = vld [vmem:[%s1 + $0x1c00] sm:$0xff]
      %v1978 = vld [vmem:[%s1 + $0x1c08] sm:$0xff]
      %v1979 = vld [vmem:[%s1 + $0x1c10] sm:$0xff]
      %v1980 = vld [vmem:[%s1 + $0x1c18] sm:$0xff]
      %v1981 = vld [vmem:[%s1 + $0x1cb0] sm:$0xff]
      %v1982 = vld [vmem:[%s1 + $0x1cb8] sm:$0xff]
      %v1983 = vld [vmem:[%s1 + $0x1cc0] sm:$0xff]
      %v1984 = vld [vmem:[%s1 + $0x1cc8] sm:$0xff]
      %v1985 = vld [vmem:[%s1 + $0x1cd0] sm:$0xff]
      %v1986 = vld [vmem:[%s1 + $0x1cd8] sm:$0xff]
      %v1987 = vld [vmem:[%s1 + $0x1d70] sm:$0xff]
      %v1988 = vld [vmem:[%s1 + $0x1d78] sm:$0xff]
      %v1989 = vld [vmem:[%s1 + $0x1d80] sm:$0xff]
      %v1990 = vld [vmem:[%s1 + $0x1d88] sm:$0xff]
      %v1991 = vld [vmem:[%s1 + $0x1d90] sm:$0xff]
      %v1992 = vld [vmem:[%s1 + $0x1d98] sm:$0xff]
      %v1993 = vld [vmem:[%s1 + $0x1e30] sm:$0xff]
      %v1994 = vld [vmem:[%s1 + $0x1e38] sm:$0xff]
      %v1995 = vld [vmem:[%s1 + $0x1e40] sm:$0xff]
      %v1996 = vld [vmem:[%s1 + $0x1e48] sm:$0xff]
      %v1997 = vld [vmem:[%s1 + $0x1e50] sm:$0xff]
      %v1998 = vld [vmem:[%s1 + $0x1e58] sm:$0xff]
      %v1999 = vld [vmem:[%s1 + $0x1ef0] sm:$0xff]
      %v2000 = vld [vmem:[%s1 + $0x1ef8] sm:$0xff]
      %v2001 = vld [vmem:[%s1 + $0x1f00] sm:$0xff]
      %v2002 = vld [vmem:[%s1 + $0x1f08] sm:$0xff]
      %v2003 = vld [vmem:[%s1 + $0x1f10] sm:$0xff]
      %v2004 = vld [vmem:[%s1 + $0x1f18] sm:$0xff]
      %v2005 = vld [vmem:[%s1 + $0x1fb0] sm:$0xff]
      %v2006 = vld [vmem:[%s1 + $0x1fb8] sm:$0xff]
      %v2007 = vld [vmem:[%s1 + $0x1fc0] sm:$0xff]
      %v2008 = vld [vmem:[%s1 + $0x1fc8] sm:$0xff]
      %v2009 = vld [vmem:[%s1 + $0x1fd0] sm:$0xff]
      %v2010 = vld [vmem:[%s1 + $0x1fd8] sm:$0xff]
      %v2011 = vld [vmem:[%s1 + $0x2070] sm:$0xff]
      %v2012 = vld [vmem:[%s1 + $0x2078] sm:$0xff]
      %v2013 = vld [vmem:[%s1 + $0x2080] sm:$0xff]
      %v2014 = vld [vmem:[%s1 + $0x2088] sm:$0xff]
      %v2015 = vld [vmem:[%s1 + $0x2090] sm:$0xff]
      %v2016 = vld [vmem:[%s1 + $0x2098] sm:$0xff]
      %v2017 = vld [vmem:[%s1 + $0x2130] sm:$0xff]
      %v2018 = vld [vmem:[%s1 + $0x2138] sm:$0xff]
      %v2019 = vld [vmem:[%s1 + $0x2140] sm:$0xff]
      %v2020 = vld [vmem:[%s1 + $0x2148] sm:$0xff]
      %v2021 = vld [vmem:[%s1 + $0x2150] sm:$0xff]
      %v2022 = vld [vmem:[%s1 + $0x2158] sm:$0xff]
      %v2023 = vld [vmem:[%s1 + $0x21f0] sm:$0xff]
      %v2024 = vld [vmem:[%s1 + $0x21f8] sm:$0xff]
      %v2025 = vld [vmem:[%s1 + $0x2200] sm:$0xff]
      %v2026 = vld [vmem:[%s1 + $0x2208] sm:$0xff]
      %v2027 = vld [vmem:[%s1 + $0x2210] sm:$0xff]
      %v2028 = vld [vmem:[%s1 + $0x2218] sm:$0xff]
      %v2029 = vld [vmem:[%s1 + $0x22b0] sm:$0xff]
      %v2030 = vld [vmem:[%s1 + $0x22b8] sm:$0xff]
      %v2031 = vld [vmem:[%s1 + $0x22c0] sm:$0xff]
      %v2032 = vld [vmem:[%s1 + $0x22c8] sm:$0xff]
      %v2033 = vld [vmem:[%s1 + $0x22d0] sm:$0xff]
      %v2034 = vld [vmem:[%s1 + $0x22d8] sm:$0xff]
      %v2035 = vld [vmem:[%s1 + $0x2370] sm:$0xff]
      %v2036 = vld [vmem:[%s1 + $0x2378] sm:$0xff]
      %v2037 = vld [vmem:[%s1 + $0x2380] sm:$0xff]
      %v2038 = vld [vmem:[%s1 + $0x2388] sm:$0xff]
      %v2039 = vld [vmem:[%s1 + $0x2390] sm:$0xff]
      %v2040 = vld [vmem:[%s1 + $0x2398] sm:$0xff]
      %v2041 = vld [vmem:[%s1 + $0x2430] sm:$0xff]
      %v2042 = vld [vmem:[%s1 + $0x2438] sm:$0xff]
      %v2043 = vld [vmem:[%s1 + $0x2440] sm:$0xff]
      %v2044 = vld [vmem:[%s1 + $0x2448] sm:$0xff]
      %v2045 = vld [vmem:[%s1 + $0x2450] sm:$0xff]
      %v2046 = vld [vmem:[%s1 + $0x2458] sm:$0xff]
      %v2047 = vld [vmem:[%s1 + $0x24f0] sm:$0xff]
      %v2048 = vld [vmem:[%s1 + $0x24f8] sm:$0xff]
      %v2049 = vld [vmem:[%s1 + $0x2500] sm:$0xff]
      %v2050 = vld [vmem:[%s1 + $0x2508] sm:$0xff]
      %v2051 = vld [vmem:[%s1 + $0x2510] sm:$0xff]
      %v2052 = vld [vmem:[%s1 + $0x2518] sm:$0xff]
      %v2053 = vld [vmem:[%s1 + $0x25b0] sm:$0xff]
      %v2054 = vld [vmem:[%s1 + $0x25b8] sm:$0xff]
      %v2055 = vld [vmem:[%s1 + $0x25c0] sm:$0xff]
      %v2056 = vld [vmem:[%s1 + $0x25c8] sm:$0xff]
      %v2057 = vld [vmem:[%s1 + $0x25d0] sm:$0xff]
      %v2058 = vld [vmem:[%s1 + $0x25d8] sm:$0xff]
      %v2059 = vld [vmem:[%s1 + $0x2670] sm:$0xff]
      %v2060 = vld [vmem:[%s1 + $0x2678] sm:$0xff]
      %v2061 = vld [vmem:[%s1 + $0x2680] sm:$0xff]
      %v2062 = vld [vmem:[%s1 + $0x2688] sm:$0xff]
      %v2063 = vld [vmem:[%s1 + $0x2690] sm:$0xff]
      %v2064 = vld [vmem:[%s1 + $0x2698] sm:$0xff]
      %v2065 = vld [vmem:[%s1 + $0x2730] sm:$0xff]
      %v2066 = vld [vmem:[%s1 + $0x2738] sm:$0xff]
      %v2067 = vld [vmem:[%s1 + $0x2740] sm:$0xff]
      %v2068 = vld [vmem:[%s1 + $0x2748] sm:$0xff]
      %v2069 = vld [vmem:[%s1 + $0x2750] sm:$0xff]
      %v2070 = vld [vmem:[%s1 + $0x2758] sm:$0xff]
      %v2071 = vld [vmem:[%s1 + $0x27f0] sm:$0xff]
      %v2072 = vld [vmem:[%s1 + $0x27f8] sm:$0xff]
      %v2073 = vld [vmem:[%s1 + $0x2800] sm:$0xff]
      %v2074 = vld [vmem:[%s1 + $0x2808] sm:$0xff]
      %v2075 = vld [vmem:[%s1 + $0x2810] sm:$0xff]
      %v2076 = vld [vmem:[%s1 + $0x2818] sm:$0xff]
      %v2077 = vld [vmem:[%s1 + $0x28b0] sm:$0xff]
      %v2078 = vld [vmem:[%s1 + $0x28b8] sm:$0xff]
      %v2079 = vld [vmem:[%s1 + $0x28c0] sm:$0xff]
      %v2080 = vld [vmem:[%s1 + $0x28c8] sm:$0xff]
      %v2081 = vld [vmem:[%s1 + $0x28d0] sm:$0xff]
      %v2082 = vld [vmem:[%s1 + $0x28d8] sm:$0xff]
      %v2083 = vld [vmem:[%s1 + $0x2970] sm:$0xff]
      %v2084 = vld [vmem:[%s1 + $0x2978] sm:$0xff]
      %v2085 = vld [vmem:[%s1 + $0x2980] sm:$0xff]
      %v2086 = vld [vmem:[%s1 + $0x2988] sm:$0xff]
      %v2087 = vld [vmem:[%s1 + $0x2990] sm:$0xff]
      %v2088 = vld [vmem:[%s1 + $0x2998] sm:$0xff]
      %v2089 = vld [vmem:[%s1 + $0x2a30] sm:$0xff]
      %v2090 = vld [vmem:[%s1 + $0x2a38] sm:$0xff]
      %v2091 = vld [vmem:[%s1 + $0x2a40] sm:$0xff]
      %v2092 = vld [vmem:[%s1 + $0x2a48] sm:$0xff]
      %v2093 = vld [vmem:[%s1 + $0x2a50] sm:$0xff]
      %v2094 = vld [vmem:[%s1 + $0x2a58] sm:$0xff]
      %v2095 = vld [vmem:[%s1 + $0x2af0] sm:$0xff]
      %v2096 = vld [vmem:[%s1 + $0x2af8] sm:$0xff]
      %v2097 = vld [vmem:[%s1 + $0x2b00] sm:$0xff]
      %v2098 = vld [vmem:[%s1 + $0x2b08] sm:$0xff]
      %v2099 = vld [vmem:[%s1 + $0x2b10] sm:$0xff]
      %v2100 = vld [vmem:[%s1 + $0x2b18] sm:$0xff]
      %v2101 = vld [vmem:[%s1 + $0x2bb0] sm:$0xff]
      %v2102 = vld [vmem:[%s1 + $0x2bb8] sm:$0xff]
      %v2103 = vld [vmem:[%s1 + $0x2bc0] sm:$0xff]
      %v2104 = vld [vmem:[%s1 + $0x2bc8] sm:$0xff]
      %v2105 = vld [vmem:[%s1 + $0x2bd0] sm:$0xff]
      %v2106 = vld [vmem:[%s1 + $0x2bd8] sm:$0xff]
      %v2107 = vld [vmem:[%s1 + $0x2c70] sm:$0xff]
      %v2108 = vld [vmem:[%s1 + $0x2c78] sm:$0xff]
      %v2109 = vld [vmem:[%s1 + $0x2c80] sm:$0xff]
      %v2110 = vld [vmem:[%s1 + $0x2c88] sm:$0xff]
      %v2111 = vld [vmem:[%s1 + $0x2c90] sm:$0xff]
      %v2112 = vld [vmem:[%s1 + $0x2c98] sm:$0xff]
      %v2113 = vld [vmem:[%s1 + $0x2d30] sm:$0xff]
      %v2114 = vld [vmem:[%s1 + $0x2d38] sm:$0xff]
      %v2115 = vld [vmem:[%s1 + $0x2d40] sm:$0xff]
      %v2116 = vld [vmem:[%s1 + $0x2d48] sm:$0xff]
      %v2117 = vld [vmem:[%s1 + $0x2d50] sm:$0xff]
      %v2118 = vld [vmem:[%s1 + $0x2d58] sm:$0xff]
      %v2119 = vld [vmem:[%s1 + $0x2df0] sm:$0xff]
      %v2120 = vld [vmem:[%s1 + $0x2df8] sm:$0xff]
      %v2121 = vld [vmem:[%s1 + $0x2e00] sm:$0xff]
      %v2122 = vld [vmem:[%s1 + $0x2e08] sm:$0xff]
      %v2123 = vld [vmem:[%s1 + $0x2e10] sm:$0xff]
      %v2124 = vld [vmem:[%s1 + $0x2e18] sm:$0xff]
      %v2125 = vld [vmem:[%s1 + $0x2eb0] sm:$0xff]
      %v2126 = vld [vmem:[%s1 + $0x2eb8] sm:$0xff]
      %v2127 = vld [vmem:[%s1 + $0x2ec0] sm:$0xff]
      %v2128 = vld [vmem:[%s1 + $0x2ec8] sm:$0xff]
      %v2129 = vld [vmem:[%s1 + $0x2ed0] sm:$0xff]
      %v2130 = vld [vmem:[%s1 + $0x2ed8] sm:$0xff]
      %v2131 = vld [vmem:[%s1 + $0x2f70] sm:$0xff]
      %v2132 = vld [vmem:[%s1 + $0x2f78] sm:$0xff]
      %v2133 = vld [vmem:[%s1 + $0x2f80] sm:$0xff]
      %v2134 = vld [vmem:[%s1 + $0x2f88] sm:$0xff]
      %v2135 = vld [vmem:[%s1 + $0x2f90] sm:$0xff]
      %v2136 = vld [vmem:[%s1 + $0x2f98] sm:$0xff]
      %2137 = vmatprep.subr.mxu0 %v1754
      %2138 = vmatpush1.msra.mxu0 %v1753
      %2139 = vmatprep.subr.mxu0 %v1760
      %2140 = vmatpush1.msra.mxu0 %v1759
      %2141 = vmatprep.subr.mxu0 %v1766
      %2142 = vmatpush1.msra.mxu0 %v1765
      %2143 = vmatprep.subr.mxu0 %v1772
      %2144 = vmatpush1.msra.mxu0 %v1771
      %2145 = vmatprep.subr.mxu0 %v1778
      %2146 = vmatpush1.msra.mxu0 %v1777
      %2147 = vmatprep.subr.mxu0 %v1784
      %2148 = vmatpush1.msra.mxu0 %v1783
      %2149 = vmatprep.subr.mxu0 %v1790
      %2150 = vmatpush1.msra.mxu0 %v1789
      %2151 = vmatprep.subr.mxu0 %v1796
      %2152 = vmatpush1.msra.mxu0 %v1795
      %2153 = vmatprep.subr.mxu0 %v1802
      %2154 = vmatpush1.msra.mxu0 %v1801
      %2155 = vmatprep.subr.mxu0 %v1808
      %2156 = vmatpush1.msra.mxu0 %v1807
      %2157 = vmatprep.subr.mxu0 %v1814
      %2158 = vmatpush1.msra.mxu0 %v1813
      %2159 = vmatprep.subr.mxu0 %v1820
      %2160 = vmatpush1.msra.mxu0 %v1819
      %2161 = vmatprep.subr.mxu0 %v1826
      %2162 = vmatpush1.msra.mxu0 %v1825
      %2163 = vmatprep.subr.mxu0 %v1832
      %2164 = vmatpush1.msra.mxu0 %v1831
      %2165 = vmatprep.subr.mxu0 %v1838
      %2166 = vmatpush1.msra.mxu0 %v1837
      %2167 = vmatprep.subr.mxu0 %v1844
      %2168 = vmatpush1.msra.mxu0 %v1843
      %2169 = vmatprep.subr.mxu0 %v1850
      %2170 = vmatpush1.msra.mxu0 %v1849
      %2171 = vmatprep.subr.mxu0 %v1856
      %2172 = vmatpush1.msra.mxu0 %v1855
      %2173 = vmatprep.subr.mxu0 %v1862
      %2174 = vmatpush1.msra.mxu0 %v1861
      %2175 = vmatprep.subr.mxu0 %v1868
      %2176 = vmatpush1.msra.mxu0 %v1867
      %2177 = vmatprep.subr.mxu0 %v1874
      %2178 = vmatpush1.msra.mxu0 %v1873
      %2179 = vmatprep.subr.mxu0 %v1880
      %2180 = vmatpush1.msra.mxu0 %v1879
      %2181 = vmatprep.subr.mxu0 %v1886
      %2182 = vmatpush1.msra.mxu0 %v1885
      %2183 = vmatprep.subr.mxu0 %v1892
      %2184 = vmatpush1.msra.mxu0 %v1891
      %2185 = vmatprep.subr.mxu0 %v1898
      %2186 = vmatpush1.msra.mxu0 %v1897
      %2187 = vmatprep.subr.mxu0 %v1904
      %2188 = vmatpush1.msra.mxu0 %v1903
      %2189 = vmatprep.subr.mxu0 %v1910
      %2190 = vmatpush1.msra.mxu0 %v1909
      %2191 = vmatprep.subr.mxu0 %v1916
      %2192 = vmatpush1.msra.mxu0 %v1915
      %2193 = vmatprep.subr.mxu0 %v1922
      %2194 = vmatpush1.msra.mxu0 %v1921
      %2195 = vmatprep.subr.mxu0 %v1928
      %2196 = vmatpush1.msra.mxu0 %v1927
      %2197 = vmatprep.subr.mxu0 %v1934
      %2198 = vmatpush1.msra.mxu0 %v1933
      %2199 = vmatprep.subr.mxu0 %v1940
      %2200 = vmatpush1.msra.mxu0 %v1939
      %2201 = vmatprep.mubr.f32.mxu0 %v340
      %2202 = vmatmul.mubr.f32.gmra.mrb[0].mxu0 %v339
      %v2203 = vpop.f32.mrb[0].mxu0
      %v2204 = vadd.f32 0.0, %v2203
      %v2205 = vpop.f32.mrb[0].mxu0
      %v2206 = vadd.f32 0.0, %v2205
      %2207 = vmatprep.mubr.f32.mxu0 %v344
      %2208 = vmatmul.mubr.f32.gmra.mrb[0].mxu0 %v343
      %v2209 = vpop.f32.mrb[0].mxu0
      %v2210 = vadd.f32 0.0, %v2209
      %v2211 = vpop.f32.mrb[0].mxu0
      %v2212 = vadd.f32 0.0, %v2211
      %2213 = vmatprep.mubr.f32.mxu0 %v348
      %2214 = vmatmul.mubr.f32.gmra.mrb[0].mxu0 %v347
      %v2215 = vpop.f32.mrb[0].mxu0
      %v2216 = vadd.f32 0.0, %v2215
      %v2217 = vpop.f32.mrb[0].mxu0
      %v2218 = vadd.f32 0.0, %v2217
      %2219 = vmatprep.mubr.f32.mxu0 %v352
      %2220 = vmatmul.mubr.f32.gmra.mrb[0].mxu0 %v351
      %v2221 = vpop.f32.mrb[0].mxu0
      %v2222 = vadd.f32 0.0, %v2221
      %v2223 = vpop.f32.mrb[0].mxu0
      %v2224 = vadd.f32 0.0, %v2223
      %2225 = vmatprep.mubr.f32.mxu0 %v356
      %2226 = vmatmul.mubr.f32.gmra.mrb[0].mxu0 %v355
      %v2227 = vpop.f32.mrb[0].mxu0
      %v2228 = vadd.f32 0.0, %v2227
      %v2229 = vpop.f32.mrb[0].mxu0
      %v2230 = vadd.f32 0.0, %v2229
      %2231 = vmatprep.mubr.f32.mxu0 %v360
      %2232 = vmatmul.mubr.f32.gmra.mrb[0].mxu0 %v359
      %v2233 = vpop.f32.mrb[0].mxu0
      %v2234 = vadd.f32 0.0, %v2233
      %v2235 = vpop.f32.mrb[0].mxu0
      %v2236 = vadd.f32 0.0, %v2235
      %2237 = vmatprep.mubr.f32.mxu0 %v364
      %2238 = vmatmul.mubr.f32.gmra.mrb[0].mxu0 %v363
      %v2239 = vpop.f32.mrb[0].mxu0
      %v2240 = vadd.f32 0.0, %v2239
      %v2241 = vpop.f32.mrb[0].mxu0
      %v2242 = vadd.f32 0.0, %v2241
      %2243 = vmatprep.mubr.f32.mxu0 %v368
      %2244 = vmatmul.mubr.f32.gmra.mrb[0].mxu0 %v367
      %v2245 = vpop.f32.mrb[0].mxu0
      %v2246 = vadd.f32 0.0, %v2245
      %v2247 = vpop.f32.mrb[0].mxu0
      %v2248 = vadd.f32 0.0, %v2247
      %2249 = vmatprep.mubr.f32.mxu0 %v372
      %2250 = vmatmul.mubr.f32.gmra.mrb[0].mxu0 %v371
      %v2251 = vpop.f32.mrb[0].mxu0
      %v2252 = vadd.f32 0.0, %v2251
      %v2253 = vpop.f32.mrb[0].mxu0
      %v2254 = vadd.f32 0.0, %v2253
      %2255 = vmatprep.mubr.f32.mxu0 %v376
      %2256 = vmatmul.mubr.f32.gmra.mrb[0].mxu0 %v375
      %v2257 = vpop.f32.mrb[0].mxu0
      %v2258 = vadd.f32 0.0, %v2257
      %v2259 = vpop.f32.mrb[0].mxu0
      %v2260 = vadd.f32 0.0, %v2259
      %2261 = vmatprep.mubr.f32.mxu0 %v380
      %2262 = vmatmul.mubr.f32.gmra.mrb[0].mxu0 %v379
      %v2263 = vpop.f32.mrb[0].mxu0
      %v2264 = vadd.f32 0.0, %v2263
      %v2265 = vpop.f32.mrb[0].mxu0
      %v2266 = vadd.f32 0.0, %v2265
      %2267 = vmatprep.mubr.f32.mxu0 %v384
      %2268 = vmatmul.mubr.f32.gmra.mrb[0].mxu0 %v383
      %v2269 = vpop.f32.mrb[0].mxu0
      %v2270 = vadd.f32 0.0, %v2269
      %v2271 = vpop.f32.mrb[0].mxu0
      %v2272 = vadd.f32 0.0, %v2271
      %2273 = vmatprep.mubr.f32.mxu0 %v388
      %2274 = vmatmul.mubr.f32.gmra.mrb[0].mxu0 %v387
      %v2275 = vpop.f32.mrb[0].mxu0
      %v2276 = vadd.f32 0.0, %v2275
      %v2277 = vpop.f32.mrb[0].mxu0
      %v2278 = vadd.f32 0.0, %v2277
      %2279 = vmatprep.mubr.f32.mxu0 %v392
      %2280 = vmatmul.mubr.f32.gmra.mrb[0].mxu0 %v391
      %v2281 = vpop.f32.mrb[0].mxu0
      %v2282 = vadd.f32 0.0, %v2281
      %v2283 = vpop.f32.mrb[0].mxu0
      %v2284 = vadd.f32 0.0, %v2283
      %2285 = vmatprep.mubr.f32.mxu0 %v396
      %2286 = vmatmul.mubr.f32.gmra.mrb[0].mxu0 %v395
      %v2287 = vpop.f32.mrb[0].mxu0
      %v2288 = vadd.f32 0.0, %v2287
      %v2289 = vpop.f32.mrb[0].mxu0
      %v2290 = vadd.f32 0.0, %v2289
      %2291 = vmatprep.mubr.f32.mxu0 %v400
      %2292 = vmatmul.mubr.f32.gmra.mrb[0].mxu0 %v399
      %v2293 = vpop.f32.mrb[0].mxu0
      %v2294 = vadd.f32 0.0, %v2293
      %v2295 = vpop.f32.mrb[0].mxu0
      %v2296 = vadd.f32 0.0, %v2295
      %2297 = vdwg.mxu0
      %2298 = vmatprep.subr.mxu0 %v1946
      %2299 = vmatpush1.msra.mxu0 %v1945
      %2300 = vmatprep.subr.mxu0 %v1952
      %2301 = vmatpush1.msra.mxu0 %v1951
      %2302 = vmatprep.subr.mxu0 %v1958
      %2303 = vmatpush1.msra.mxu0 %v1957
      %2304 = vmatprep.subr.mxu0 %v1964
      %2305 = vmatpush1.msra.mxu0 %v1963
      %2306 = vmatprep.subr.mxu0 %v1970
      %2307 = vmatpush1.msra.mxu0 %v1969
      %2308 = vmatprep.subr.mxu0 %v1976
      %2309 = vmatpush1.msra.mxu0 %v1975
      %2310 = vmatprep.subr.mxu0 %v1982
      %2311 = vmatpush1.msra.mxu0 %v1981
      %2312 = vmatprep.subr.mxu0 %v1988
      %2313 = vmatpush1.msra.mxu0 %v1987
      %2314 = vmatprep.subr.mxu0 %v1994
      %2315 = vmatpush1.msra.mxu0 %v1993
      %2316 = vmatprep.subr.mxu0 %v2000
      %2317 = vmatpush1.msra.mxu0 %v1999
      %2318 = vmatprep.subr.mxu0 %v2006
      %2319 = vmatpush1.msra.mxu0 %v2005
      %2320 = vmatprep.subr.mxu0 %v2012
      %2321 = vmatpush1.msra.mxu0 %v2011
      %2322 = vmatprep.subr.mxu0 %v2018
      %2323 = vmatpush1.msra.mxu0 %v2017
      %2324 = vmatprep.subr.mxu0 %v2024
      %2325 = vmatpush1.msra.mxu0 %v2023
      %2326 = vmatprep.subr.mxu0 %v2030
      %2327 = vmatpush1.msra.mxu0 %v2029
      %2328 = vmatprep.subr.mxu0 %v2036
      %2329 = vmatpush1.msra.mxu0 %v2035
      %2330 = vmatprep.subr.mxu0 %v2042
      %2331 = vmatpush1.msra.mxu0 %v2041
      %2332 = vmatprep.subr.mxu0 %v2048
      %2333 = vmatpush1.msra.mxu0 %v2047
      %2334 = vmatprep.subr.mxu0 %v2054
      %2335 = vmatpush1.msra.mxu0 %v2053
      %2336 = vmatprep.subr.mxu0 %v2060
      %2337 = vmatpush1.msra.mxu0 %v2059
      %2338 = vmatprep.subr.mxu0 %v2066
      %2339 = vmatpush1.msra.mxu0 %v2065
      %2340 = vmatprep.subr.mxu0 %v2072
      %2341 = vmatpush1.msra.mxu0 %v2071
      %2342 = vmatprep.subr.mxu0 %v2078
      %2343 = vmatpush1.msra.mxu0 %v2077
      %2344 = vmatprep.subr.mxu0 %v2084
      %2345 = vmatpush1.msra.mxu0 %v2083
      %2346 = vmatprep.subr.mxu0 %v2090
      %2347 = vmatpush1.msra.mxu0 %v2089
      %2348 = vmatprep.subr.mxu0 %v2096
      %2349 = vmatpush1.msra.mxu0 %v2095
      %2350 = vmatprep.subr.mxu0 %v2102
      %2351 = vmatpush1.msra.mxu0 %v2101
      %2352 = vmatprep.subr.mxu0 %v2108
      %2353 = vmatpush1.msra.mxu0 %v2107
      %2354 = vmatprep.subr.mxu0 %v2114
      %2355 = vmatpush1.msra.mxu0 %v2113
      %2356 = vmatprep.subr.mxu0 %v2120
      %2357 = vmatpush1.msra.mxu0 %v2119
      %2358 = vmatprep.subr.mxu0 %v2126
      %2359 = vmatpush1.msra.mxu0 %v2125
      %2360 = vmatprep.subr.mxu0 %v2132
      %2361 = vmatpush1.msra.mxu0 %v2131
      %2362 = vmatprep.mubr.f32.mxu0 %v342
      %2363 = vmatmul.mubr.f32.gmra.mrb[0].mxu0 %v341
      %v2364 = vpop.f32.mrb[0].mxu0
      %v2365 = vadd.f32 %v2204, %v2364
      %v2366 = vpop.f32.mrb[0].mxu0
      %v2367 = vadd.f32 %v2206, %v2366
      %2368 = vmatprep.mubr.f32.mxu0 %v346
      %2369 = vmatmul.mubr.f32.gmra.mrb[0].mxu0 %v345
      %v2370 = vpop.f32.mrb[0].mxu0
      %v2371 = vadd.f32 %v2210, %v2370
      %v2372 = vpop.f32.mrb[0].mxu0
      %v2373 = vadd.f32 %v2212, %v2372
      %2374 = vmatprep.mubr.f32.mxu0 %v350
      %2375 = vmatmul.mubr.f32.gmra.mrb[0].mxu0 %v349
      %v2376 = vpop.f32.mrb[0].mxu0
      %v2377 = vadd.f32 %v2216, %v2376
      %v2378 = vpop.f32.mrb[0].mxu0
      %v2379 = vadd.f32 %v2218, %v2378
      %2380 = vmatprep.mubr.f32.mxu0 %v354
      %2381 = vmatmul.mubr.f32.gmra.mrb[0].mxu0 %v353
      %v2382 = vpop.f32.mrb[0].mxu0
      %v2383 = vadd.f32 %v2222, %v2382
      %v2384 = vpop.f32.mrb[0].mxu0
      %v2385 = vadd.f32 %v2224, %v2384
      %2386 = vmatprep.mubr.f32.mxu0 %v358
      %2387 = vmatmul.mubr.f32.gmra.mrb[0].mxu0 %v357
      %v2388 = vpop.f32.mrb[0].mxu0
      %v2389 = vadd.f32 %v2228, %v2388
      %v2390 = vpop.f32.mrb[0].mxu0
      %v2391 = vadd.f32 %v2230, %v2390
      %2392 = vmatprep.mubr.f32.mxu0 %v362
      %2393 = vmatmul.mubr.f32.gmra.mrb[0].mxu0 %v361
      %v2394 = vpop.f32.mrb[0].mxu0
      %v2395 = vadd.f32 %v2234, %v2394
      %v2396 = vpop.f32.mrb[0].mxu0
      %v2397 = vadd.f32 %v2236, %v2396
      %2398 = vmatprep.mubr.f32.mxu0 %v366
      %2399 = vmatmul.mubr.f32.gmra.mrb[0].mxu0 %v365
      %v2400 = vpop.f32.mrb[0].mxu0
      %v2401 = vadd.f32 %v2240, %v2400
      %v2402 = vpop.f32.mrb[0].mxu0
      %v2403 = vadd.f32 %v2242, %v2402
      %2404 = vmatprep.mubr.f32.mxu0 %v370
      %2405 = vmatmul.mubr.f32.gmra.mrb[0].mxu0 %v369
      %v2406 = vpop.f32.mrb[0].mxu0
      %v2407 = vadd.f32 %v2246, %v2406
      %v2408 = vpop.f32.mrb[0].mxu0
      %v2409 = vadd.f32 %v2248, %v2408
      %2410 = vmatprep.mubr.f32.mxu0 %v374
      %2411 = vmatmul.mubr.f32.gmra.mrb[0].mxu0 %v373
      %v2412 = vpop.f32.mrb[0].mxu0
      %v2413 = vadd.f32 %v2252, %v2412
      %v2414 = vpop.f32.mrb[0].mxu0
      %v2415 = vadd.f32 %v2254, %v2414
      %2416 = vmatprep.mubr.f32.mxu0 %v378
      %2417 = vmatmul.mubr.f32.gmra.mrb[0].mxu0 %v377
      %v2418 = vpop.f32.mrb[0].mxu0
      %v2419 = vadd.f32 %v2258, %v2418
      %v2420 = vpop.f32.mrb[0].mxu0
      %v2421 = vadd.f32 %v2260, %v2420
      %2422 = vmatprep.mubr.f32.mxu0 %v382
      %2423 = vmatmul.mubr.f32.gmra.mrb[0].mxu0 %v381
      %v2424 = vpop.f32.mrb[0].mxu0
      %v2425 = vadd.f32 %v2264, %v2424
      %v2426 = vpop.f32.mrb[0].mxu0
      %v2427 = vadd.f32 %v2266, %v2426
      %2428 = vmatprep.mubr.f32.mxu0 %v386
      %2429 = vmatmul.mubr.f32.gmra.mrb[0].mxu0 %v385
      %v2430 = vpop.f32.mrb[0].mxu0
      %v2431 = vadd.f32 %v2270, %v2430
      %v2432 = vpop.f32.mrb[0].mxu0
      %v2433 = vadd.f32 %v2272, %v2432
      %2434 = vmatprep.mubr.f32.mxu0 %v390
      %2435 = vmatmul.mubr.f32.gmra.mrb[0].mxu0 %v389
      %v2436 = vpop.f32.mrb[0].mxu0
      %v2437 = vadd.f32 %v2276, %v2436
      %v2438 = vpop.f32.mrb[0].mxu0
      %v2439 = vadd.f32 %v2278, %v2438
      %2440 = vmatprep.mubr.f32.mxu0 %v394
      %2441 = vmatmul.mubr.f32.gmra.mrb[0].mxu0 %v393
      %v2442 = vpop.f32.mrb[0].mxu0
      %v2443 = vadd.f32 %v2282, %v2442
      %v2444 = vpop.f32.mrb[0].mxu0
      %v2445 = vadd.f32 %v2284, %v2444
      %2446 = vmatprep.mubr.f32.mxu0 %v398
      %2447 = vmatmul.mubr.f32.gmra.mrb[0].mxu0 %v397
      %v2448 = vpop.f32.mrb[0].mxu0
      %v2449 = vadd.f32 %v2288, %v2448
      %v2450 = vpop.f32.mrb[0].mxu0
      %v2451 = vadd.f32 %v2290, %v2450
      %2452 = vmatprep.mubr.f32.mxu0 %v402
      %2453 = vmatmul.mubr.f32.gmra.mrb[0].mxu0 %v401
      %v2454 = vpop.f32.mrb[0].mxu0
      %v2455 = vadd.f32 %v2294, %v2454
      %v2456 = vpop.f32.mrb[0].mxu0
      %v2457 = vadd.f32 %v2296, %v2456
      %2458 = vdwg.mxu0
      %2459 = vmatprep.subr.mxu0 %v1756
      %2460 = vmatpush1.msra.mxu0 %v1755
      %2461 = vmatprep.subr.mxu0 %v1762
      %2462 = vmatpush1.msra.mxu0 %v1761
      %2463 = vmatprep.subr.mxu0 %v1768
      %2464 = vmatpush1.msra.mxu0 %v1767
      %2465 = vmatprep.subr.mxu0 %v1774
      %2466 = vmatpush1.msra.mxu0 %v1773
      %2467 = vmatprep.subr.mxu0 %v1780
      %2468 = vmatpush1.msra.mxu0 %v1779
      %2469 = vmatprep.subr.mxu0 %v1786
      %2470 = vmatpush1.msra.mxu0 %v1785
      %2471 = vmatprep.subr.mxu0 %v1792
      %2472 = vmatpush1.msra.mxu0 %v1791
      %2473 = vmatprep.subr.mxu0 %v1798
      %2474 = vmatpush1.msra.mxu0 %v1797
      %2475 = vmatprep.subr.mxu0 %v1804
      %2476 = vmatpush1.msra.mxu0 %v1803
      %2477 = vmatprep.subr.mxu0 %v1810
      %2478 = vmatpush1.msra.mxu0 %v1809
      %2479 = vmatprep.subr.mxu0 %v1816
      %2480 = vmatpush1.msra.mxu0 %v1815
      %2481 = vmatprep.subr.mxu0 %v1822
      %2482 = vmatpush1.msra.mxu0 %v1821
      %2483 = vmatprep.subr.mxu0 %v1828
      %2484 = vmatpush1.msra.mxu0 %v1827
      %2485 = vmatprep.subr.mxu0 %v1834
      %2486 = vmatpush1.msra.mxu0 %v1833
      %2487 = vmatprep.subr.mxu0 %v1840
      %2488 = vmatpush1.msra.mxu0 %v1839
      %2489 = vmatprep.subr.mxu0 %v1846
      %2490 = vmatpush1.msra.mxu0 %v1845
      %2491 = vmatprep.subr.mxu0 %v1852
      %2492 = vmatpush1.msra.mxu0 %v1851
      %2493 = vmatprep.subr.mxu0 %v1858
      %2494 = vmatpush1.msra.mxu0 %v1857
      %2495 = vmatprep.subr.mxu0 %v1864
      %2496 = vmatpush1.msra.mxu0 %v1863
      %2497 = vmatprep.subr.mxu0 %v1870
      %2498 = vmatpush1.msra.mxu0 %v1869
      %2499 = vmatprep.subr.mxu0 %v1876
      %2500 = vmatpush1.msra.mxu0 %v1875
      %2501 = vmatprep.subr.mxu0 %v1882
      %2502 = vmatpush1.msra.mxu0 %v1881
      %2503 = vmatprep.subr.mxu0 %v1888
      %2504 = vmatpush1.msra.mxu0 %v1887
      %2505 = vmatprep.subr.mxu0 %v1894
      %2506 = vmatpush1.msra.mxu0 %v1893
      %2507 = vmatprep.subr.mxu0 %v1900
      %2508 = vmatpush1.msra.mxu0 %v1899
      %2509 = vmatprep.subr.mxu0 %v1906
      %2510 = vmatpush1.msra.mxu0 %v1905
      %2511 = vmatprep.subr.mxu0 %v1912
      %2512 = vmatpush1.msra.mxu0 %v1911
      %2513 = vmatprep.subr.mxu0 %v1918
      %2514 = vmatpush1.msra.mxu0 %v1917
      %2515 = vmatprep.subr.mxu0 %v1924
      %2516 = vmatpush1.msra.mxu0 %v1923
      %2517 = vmatprep.subr.mxu0 %v1930
      %2518 = vmatpush1.msra.mxu0 %v1929
      %2519 = vmatprep.subr.mxu0 %v1936
      %2520 = vmatpush1.msra.mxu0 %v1935
      %2521 = vmatprep.subr.mxu0 %v1942
      %2522 = vmatpush1.msra.mxu0 %v1941
      %2523 = vmatprep.mubr.f32.mxu0 %v340
      %2524 = vmatmul.mubr.f32.gmra.mrb[0].mxu0 %v339
      %v2525 = vpop.f32.mrb[0].mxu0
      %v2526 = vadd.f32 0.0, %v2525
      %v2527 = vpop.f32.mrb[0].mxu0
      %v2528 = vadd.f32 0.0, %v2527
      %2529 = vmatprep.mubr.f32.mxu0 %v344
      %2530 = vmatmul.mubr.f32.gmra.mrb[0].mxu0 %v343
      %v2531 = vpop.f32.mrb[0].mxu0
      %v2532 = vadd.f32 0.0, %v2531
      %v2533 = vpop.f32.mrb[0].mxu0
      %v2534 = vadd.f32 0.0, %v2533
      %2535 = vmatprep.mubr.f32.mxu0 %v348
      %2536 = vmatmul.mubr.f32.gmra.mrb[0].mxu0 %v347
      %v2537 = vpop.f32.mrb[0].mxu0
      %v2538 = vadd.f32 0.0, %v2537
      %v2539 = vpop.f32.mrb[0].mxu0
      %v2540 = vadd.f32 0.0, %v2539
      %2541 = vmatprep.mubr.f32.mxu0 %v352
      %2542 = vmatmul.mubr.f32.gmra.mrb[0].mxu0 %v351
      %v2543 = vpop.f32.mrb[0].mxu0
      %v2544 = vadd.f32 0.0, %v2543
      %v2545 = vpop.f32.mrb[0].mxu0
      %v2546 = vadd.f32 0.0, %v2545
      %2547 = vmatprep.mubr.f32.mxu0 %v356
      %2548 = vmatmul.mubr.f32.gmra.mrb[0].mxu0 %v355
      %v2549 = vpop.f32.mrb[0].mxu0
      %v2550 = vadd.f32 0.0, %v2549
      %v2551 = vpop.f32.mrb[0].mxu0
      %v2552 = vadd.f32 0.0, %v2551
      %2553 = vmatprep.mubr.f32.mxu0 %v360
      %2554 = vmatmul.mubr.f32.gmra.mrb[0].mxu0 %v359
      %v2555 = vpop.f32.mrb[0].mxu0
      %v2556 = vadd.f32 0.0, %v2555
      %v2557 = vpop.f32.mrb[0].mxu0
      %v2558 = vadd.f32 0.0, %v2557
      %2559 = vmatprep.mubr.f32.mxu0 %v364
      %2560 = vmatmul.mubr.f32.gmra.mrb[0].mxu0 %v363
      %v2561 = vpop.f32.mrb[0].mxu0
      %v2562 = vadd.f32 0.0, %v2561
      %v2563 = vpop.f32.mrb[0].mxu0
      %v2564 = vadd.f32 0.0, %v2563
      %2565 = vmatprep.mubr.f32.mxu0 %v368
      %2566 = vmatmul.mubr.f32.gmra.mrb[0].mxu0 %v367
      %v2567 = vpop.f32.mrb[0].mxu0
      %v2568 = vadd.f32 0.0, %v2567
      %v2569 = vpop.f32.mrb[0].mxu0
      %v2570 = vadd.f32 0.0, %v2569
      %2571 = vmatprep.mubr.f32.mxu0 %v372
      %2572 = vmatmul.mubr.f32.gmra.mrb[0].mxu0 %v371
      %v2573 = vpop.f32.mrb[0].mxu0
      %v2574 = vadd.f32 0.0, %v2573
      %v2575 = vpop.f32.mrb[0].mxu0
      %v2576 = vadd.f32 0.0, %v2575
      %2577 = vmatprep.mubr.f32.mxu0 %v376
      %2578 = vmatmul.mubr.f32.gmra.mrb[0].mxu0 %v375
      %v2579 = vpop.f32.mrb[0].mxu0
      %v2580 = vadd.f32 0.0, %v2579
      %v2581 = vpop.f32.mrb[0].mxu0
      %v2582 = vadd.f32 0.0, %v2581
      %2583 = vmatprep.mubr.f32.mxu0 %v380
      %2584 = vmatmul.mubr.f32.gmra.mrb[0].mxu0 %v379
      %v2585 = vpop.f32.mrb[0].mxu0
      %v2586 = vadd.f32 0.0, %v2585
      %v2587 = vpop.f32.mrb[0].mxu0
      %v2588 = vadd.f32 0.0, %v2587
      %2589 = vmatprep.mubr.f32.mxu0 %v384
      %2590 = vmatmul.mubr.f32.gmra.mrb[0].mxu0 %v383
      %v2591 = vpop.f32.mrb[0].mxu0
      %v2592 = vadd.f32 0.0, %v2591
      %v2593 = vpop.f32.mrb[0].mxu0
      %v2594 = vadd.f32 0.0, %v2593
      %2595 = vmatprep.mubr.f32.mxu0 %v388
      %2596 = vmatmul.mubr.f32.gmra.mrb[0].mxu0 %v387
      %v2597 = vpop.f32.mrb[0].mxu0
      %v2598 = vadd.f32 0.0, %v2597
      %v2599 = vpop.f32.mrb[0].mxu0
      %v2600 = vadd.f32 0.0, %v2599
      %2601 = vmatprep.mubr.f32.mxu0 %v392
      %2602 = vmatmul.mubr.f32.gmra.mrb[0].mxu0 %v391
      %v2603 = vpop.f32.mrb[0].mxu0
      %v2604 = vadd.f32 0.0, %v2603
      %v2605 = vpop.f32.mrb[0].mxu0
      %v2606 = vadd.f32 0.0, %v2605
      %2607 = vmatprep.mubr.f32.mxu0 %v396
      %2608 = vmatmul.mubr.f32.gmra.mrb[0].mxu0 %v395
      %v2609 = vpop.f32.mrb[0].mxu0
      %v2610 = vadd.f32 0.0, %v2609
      %v2611 = vpop.f32.mrb[0].mxu0
      %v2612 = vadd.f32 0.0, %v2611
      %2613 = vmatprep.mubr.f32.mxu0 %v400
      %2614 = vmatmul.mubr.f32.gmra.mrb[0].mxu0 %v399
      %v2615 = vpop.f32.mrb[0].mxu0
      %v2616 = vadd.f32 0.0, %v2615
      %v2617 = vpop.f32.mrb[0].mxu0
      %v2618 = vadd.f32 0.0, %v2617
      %2619 = vdwg.mxu0
      %2620 = vmatprep.subr.mxu0 %v1948
      %2621 = vmatpush1.msra.mxu0 %v1947
      %2622 = vmatprep.subr.mxu0 %v1954
      %2623 = vmatpush1.msra.mxu0 %v1953
      %2624 = vmatprep.subr.mxu0 %v1960
      %2625 = vmatpush1.msra.mxu0 %v1959
      %2626 = vmatprep.subr.mxu0 %v1966
      %2627 = vmatpush1.msra.mxu0 %v1965
      %2628 = vmatprep.subr.mxu0 %v1972
      %2629 = vmatpush1.msra.mxu0 %v1971
      %2630 = vmatprep.subr.mxu0 %v1978
      %2631 = vmatpush1.msra.mxu0 %v1977
      %2632 = vmatprep.subr.mxu0 %v1984
      %2633 = vmatpush1.msra.mxu0 %v1983
      %2634 = vmatprep.subr.mxu0 %v1990
      %2635 = vmatpush1.msra.mxu0 %v1989
      %2636 = vmatprep.subr.mxu0 %v1996
      %2637 = vmatpush1.msra.mxu0 %v1995
      %2638 = vmatprep.subr.mxu0 %v2002
      %2639 = vmatpush1.msra.mxu0 %v2001
      %2640 = vmatprep.subr.mxu0 %v2008
      %2641 = vmatpush1.msra.mxu0 %v2007
      %2642 = vmatprep.subr.mxu0 %v2014
      %2643 = vmatpush1.msra.mxu0 %v2013
      %2644 = vmatprep.subr.mxu0 %v2020
      %2645 = vmatpush1.msra.mxu0 %v2019
      %2646 = vmatprep.subr.mxu0 %v2026
      %2647 = vmatpush1.msra.mxu0 %v2025
      %2648 = vmatprep.subr.mxu0 %v2032
      %2649 = vmatpush1.msra.mxu0 %v2031
      %2650 = vmatprep.subr.mxu0 %v2038
      %2651 = vmatpush1.msra.mxu0 %v2037
      %2652 = vmatprep.subr.mxu0 %v2044
      %2653 = vmatpush1.msra.mxu0 %v2043
      %2654 = vmatprep.subr.mxu0 %v2050
      %2655 = vmatpush1.msra.mxu0 %v2049
      %2656 = vmatprep.subr.mxu0 %v2056
      %2657 = vmatpush1.msra.mxu0 %v2055
      %2658 = vmatprep.subr.mxu0 %v2062
      %2659 = vmatpush1.msra.mxu0 %v2061
      %2660 = vmatprep.subr.mxu0 %v2068
      %2661 = vmatpush1.msra.mxu0 %v2067
      %2662 = vmatprep.subr.mxu0 %v2074
      %2663 = vmatpush1.msra.mxu0 %v2073
      %2664 = vmatprep.subr.mxu0 %v2080
      %2665 = vmatpush1.msra.mxu0 %v2079
      %2666 = vmatprep.subr.mxu0 %v2086
      %2667 = vmatpush1.msra.mxu0 %v2085
      %2668 = vmatprep.subr.mxu0 %v2092
      %2669 = vmatpush1.msra.mxu0 %v2091
      %2670 = vmatprep.subr.mxu0 %v2098
      %2671 = vmatpush1.msra.mxu0 %v2097
      %2672 = vmatprep.subr.mxu0 %v2104
      %2673 = vmatpush1.msra.mxu0 %v2103
      %2674 = vmatprep.subr.mxu0 %v2110
      %2675 = vmatpush1.msra.mxu0 %v2109
      %2676 = vmatprep.subr.mxu0 %v2116
      %2677 = vmatpush1.msra.mxu0 %v2115
      %2678 = vmatprep.subr.mxu0 %v2122
      %2679 = vmatpush1.msra.mxu0 %v2121
      %2680 = vmatprep.subr.mxu0 %v2128
      %2681 = vmatpush1.msra.mxu0 %v2127
      %2682 = vmatprep.subr.mxu0 %v2134
      %2683 = vmatpush1.msra.mxu0 %v2133
      %2684 = vmatprep.mubr.f32.mxu0 %v342
      %2685 = vmatmul.mubr.f32.gmra.mrb[0].mxu0 %v341
      %v2686 = vpop.f32.mrb[0].mxu0
      %v2687 = vadd.f32 %v2526, %v2686
      %v2688 = vpop.f32.mrb[0].mxu0
      %v2689 = vadd.f32 %v2528, %v2688
      %2690 = vmatprep.mubr.f32.mxu0 %v346
      %2691 = vmatmul.mubr.f32.gmra.mrb[0].mxu0 %v345
      %v2692 = vpop.f32.mrb[0].mxu0
      %v2693 = vadd.f32 %v2532, %v2692
      %v2694 = vpop.f32.mrb[0].mxu0
      %v2695 = vadd.f32 %v2534, %v2694
      %2696 = vmatprep.mubr.f32.mxu0 %v350
      %2697 = vmatmul.mubr.f32.gmra.mrb[0].mxu0 %v349
      %v2698 = vpop.f32.mrb[0].mxu0
      %v2699 = vadd.f32 %v2538, %v2698
      %v2700 = vpop.f32.mrb[0].mxu0
      %v2701 = vadd.f32 %v2540, %v2700
      %2702 = vmatprep.mubr.f32.mxu0 %v354
      %2703 = vmatmul.mubr.f32.gmra.mrb[0].mxu0 %v353
      %v2704 = vpop.f32.mrb[0].mxu0
      %v2705 = vadd.f32 %v2544, %v2704
      %v2706 = vpop.f32.mrb[0].mxu0
      %v2707 = vadd.f32 %v2546, %v2706
      %2708 = vmatprep.mubr.f32.mxu0 %v358
      %2709 = vmatmul.mubr.f32.gmra.mrb[0].mxu0 %v357
      %v2710 = vpop.f32.mrb[0].mxu0
      %v2711 = vadd.f32 %v2550, %v2710
      %v2712 = vpop.f32.mrb[0].mxu0
      %v2713 = vadd.f32 %v2552, %v2712
      %2714 = vmatprep.mubr.f32.mxu0 %v362
      %2715 = vmatmul.mubr.f32.gmra.mrb[0].mxu0 %v361
      %v2716 = vpop.f32.mrb[0].mxu0
      %v2717 = vadd.f32 %v2556, %v2716
      %v2718 = vpop.f32.mrb[0].mxu0
      %v2719 = vadd.f32 %v2558, %v2718
      %2720 = vmatprep.mubr.f32.mxu0 %v366
      %2721 = vmatmul.mubr.f32.gmra.mrb[0].mxu0 %v365
      %v2722 = vpop.f32.mrb[0].mxu0
      %v2723 = vadd.f32 %v2562, %v2722
      %v2724 = vpop.f32.mrb[0].mxu0
      %v2725 = vadd.f32 %v2564, %v2724
      %2726 = vmatprep.mubr.f32.mxu0 %v370
      %2727 = vmatmul.mubr.f32.gmra.mrb[0].mxu0 %v369
      %v2728 = vpop.f32.mrb[0].mxu0
      %v2729 = vadd.f32 %v2568, %v2728
      %v2730 = vpop.f32.mrb[0].mxu0
      %v2731 = vadd.f32 %v2570, %v2730
      %2732 = vmatprep.mubr.f32.mxu0 %v374
      %2733 = vmatmul.mubr.f32.gmra.mrb[0].mxu0 %v373
      %v2734 = vpop.f32.mrb[0].mxu0
      %v2735 = vadd.f32 %v2574, %v2734
      %v2736 = vpop.f32.mrb[0].mxu0
      %v2737 = vadd.f32 %v2576, %v2736
      %2738 = vmatprep.mubr.f32.mxu0 %v378
      %2739 = vmatmul.mubr.f32.gmra.mrb[0].mxu0 %v377
      %v2740 = vpop.f32.mrb[0].mxu0
      %v2741 = vadd.f32 %v2580, %v2740
      %v2742 = vpop.f32.mrb[0].mxu0
      %v2743 = vadd.f32 %v2582, %v2742
      %2744 = vmatprep.mubr.f32.mxu0 %v382
      %2745 = vmatmul.mubr.f32.gmra.mrb[0].mxu0 %v381
      %v2746 = vpop.f32.mrb[0].mxu0
      %v2747 = vadd.f32 %v2586, %v2746
      %v2748 = vpop.f32.mrb[0].mxu0
      %v2749 = vadd.f32 %v2588, %v2748
      %2750 = vmatprep.mubr.f32.mxu0 %v386
      %2751 = vmatmul.mubr.f32.gmra.mrb[0].mxu0 %v385
      %v2752 = vpop.f32.mrb[0].mxu0
      %v2753 = vadd.f32 %v2592, %v2752
      %v2754 = vpop.f32.mrb[0].mxu0
      %v2755 = vadd.f32 %v2594, %v2754
      %2756 = vmatprep.mubr.f32.mxu0 %v390
      %2757 = vmatmul.mubr.f32.gmra.mrb[0].mxu0 %v389
      %v2758 = vpop.f32.mrb[0].mxu0
      %v2759 = vadd.f32 %v2598, %v2758
      %v2760 = vpop.f32.mrb[0].mxu0
      %v2761 = vadd.f32 %v2600, %v2760
      %2762 = vmatprep.mubr.f32.mxu0 %v394
      %2763 = vmatmul.mubr.f32.gmra.mrb[0].mxu0 %v393
      %v2764 = vpop.f32.mrb[0].mxu0
      %v2765 = vadd.f32 %v2604, %v2764
      %v2766 = vpop.f32.mrb[0].mxu0
      %v2767 = vadd.f32 %v2606, %v2766
      %2768 = vmatprep.mubr.f32.mxu0 %v398
      %2769 = vmatmul.mubr.f32.gmra.mrb[0].mxu0 %v397
      %v2770 = vpop.f32.mrb[0].mxu0
      %v2771 = vadd.f32 %v2610, %v2770
      %v2772 = vpop.f32.mrb[0].mxu0
      %v2773 = vadd.f32 %v2612, %v2772
      %2774 = vmatprep.mubr.f32.mxu0 %v402
      %2775 = vmatmul.mubr.f32.gmra.mrb[0].mxu0 %v401
      %v2776 = vpop.f32.mrb[0].mxu0
      %v2777 = vadd.f32 %v2616, %v2776
      %v2778 = vpop.f32.mrb[0].mxu0
      %v2779 = vadd.f32 %v2618, %v2778
      %2780 = vdwg.mxu0
      %2781 = vmatprep.subr.mxu0 %v1758
      %2782 = vmatpush1.msra.mxu0 %v1757
      %2783 = vmatprep.subr.mxu0 %v1764
      %2784 = vmatpush1.msra.mxu0 %v1763
      %2785 = vmatprep.subr.mxu0 %v1770
      %2786 = vmatpush1.msra.mxu0 %v1769
      %2787 = vmatprep.subr.mxu0 %v1776
      %2788 = vmatpush1.msra.mxu0 %v1775
      %2789 = vmatprep.subr.mxu0 %v1782
      %2790 = vmatpush1.msra.mxu0 %v1781
      %2791 = vmatprep.subr.mxu0 %v1788
      %2792 = vmatpush1.msra.mxu0 %v1787
      %2793 = vmatprep.subr.mxu0 %v1794
      %2794 = vmatpush1.msra.mxu0 %v1793
      %2795 = vmatprep.subr.mxu0 %v1800
      %2796 = vmatpush1.msra.mxu0 %v1799
      %2797 = vmatprep.subr.mxu0 %v1806
      %2798 = vmatpush1.msra.mxu0 %v1805
      %2799 = vmatprep.subr.mxu0 %v1812
      %2800 = vmatpush1.msra.mxu0 %v1811
      %2801 = vmatprep.subr.mxu0 %v1818
      %2802 = vmatpush1.msra.mxu0 %v1817
      %2803 = vmatprep.subr.mxu0 %v1824
      %2804 = vmatpush1.msra.mxu0 %v1823
      %2805 = vmatprep.subr.mxu0 %v1830
      %2806 = vmatpush1.msra.mxu0 %v1829
      %2807 = vmatprep.subr.mxu0 %v1836
      %2808 = vmatpush1.msra.mxu0 %v1835
      %2809 = vmatprep.subr.mxu0 %v1842
      %2810 = vmatpush1.msra.mxu0 %v1841
      %2811 = vmatprep.subr.mxu0 %v1848
      %2812 = vmatpush1.msra.mxu0 %v1847
      %2813 = vmatprep.subr.mxu0 %v1854
      %2814 = vmatpush1.msra.mxu0 %v1853
      %2815 = vmatprep.subr.mxu0 %v1860
      %2816 = vmatpush1.msra.mxu0 %v1859
      %2817 = vmatprep.subr.mxu0 %v1866
      %2818 = vmatpush1.msra.mxu0 %v1865
      %2819 = vmatprep.subr.mxu0 %v1872
      %2820 = vmatpush1.msra.mxu0 %v1871
      %2821 = vmatprep.subr.mxu0 %v1878
      %2822 = vmatpush1.msra.mxu0 %v1877
      %2823 = vmatprep.subr.mxu0 %v1884
      %2824 = vmatpush1.msra.mxu0 %v1883
      %2825 = vmatprep.subr.mxu0 %v1890
      %2826 = vmatpush1.msra.mxu0 %v1889
      %2827 = vmatprep.subr.mxu0 %v1896
      %2828 = vmatpush1.msra.mxu0 %v1895
      %2829 = vmatprep.subr.mxu0 %v1902
      %2830 = vmatpush1.msra.mxu0 %v1901
      %2831 = vmatprep.subr.mxu0 %v1908
      %2832 = vmatpush1.msra.mxu0 %v1907
      %2833 = vmatprep.subr.mxu0 %v1914
      %2834 = vmatpush1.msra.mxu0 %v1913
      %2835 = vmatprep.subr.mxu0 %v1920
      %2836 = vmatpush1.msra.mxu0 %v1919
      %2837 = vmatprep.subr.mxu0 %v1926
      %2838 = vmatpush1.msra.mxu0 %v1925
      %2839 = vmatprep.subr.mxu0 %v1932
      %2840 = vmatpush1.msra.mxu0 %v1931
      %2841 = vmatprep.subr.mxu0 %v1938
      %2842 = vmatpush1.msra.mxu0 %v1937
      %2843 = vmatprep.subr.mxu0 %v1944
      %2844 = vmatpush1.msra.mxu0 %v1943
      %2845 = vmatprep.mubr.f32.mxu0 %v340
      %2846 = vmatmul.mubr.f32.gmra.mrb[0].mxu0 %v339
      %v2847 = vpop.f32.mrb[0].mxu0
      %v2848 = vadd.f32 0.0, %v2847
      %v2849 = vpop.f32.mrb[0].mxu0
      %v2850 = vadd.f32 0.0, %v2849
      %2851 = vmatprep.mubr.f32.mxu0 %v344
      %2852 = vmatmul.mubr.f32.gmra.mrb[0].mxu0 %v343
      %v2853 = vpop.f32.mrb[0].mxu0
      %v2854 = vadd.f32 0.0, %v2853
      %v2855 = vpop.f32.mrb[0].mxu0
      %v2856 = vadd.f32 0.0, %v2855
      %2857 = vmatprep.mubr.f32.mxu0 %v348
      %2858 = vmatmul.mubr.f32.gmra.mrb[0].mxu0 %v347
      %v2859 = vpop.f32.mrb[0].mxu0
      %v2860 = vadd.f32 0.0, %v2859
      %v2861 = vpop.f32.mrb[0].mxu0
      %v2862 = vadd.f32 0.0, %v2861
      %2863 = vmatprep.mubr.f32.mxu0 %v352
      %2864 = vmatmul.mubr.f32.gmra.mrb[0].mxu0 %v351
      %v2865 = vpop.f32.mrb[0].mxu0
      %v2866 = vadd.f32 0.0, %v2865
      %v2867 = vpop.f32.mrb[0].mxu0
      %v2868 = vadd.f32 0.0, %v2867
      %2869 = vmatprep.mubr.f32.mxu0 %v356
      %2870 = vmatmul.mubr.f32.gmra.mrb[0].mxu0 %v355
      %v2871 = vpop.f32.mrb[0].mxu0
      %v2872 = vadd.f32 0.0, %v2871
      %v2873 = vpop.f32.mrb[0].mxu0
      %v2874 = vadd.f32 0.0, %v2873
      %2875 = vmatprep.mubr.f32.mxu0 %v360
      %2876 = vmatmul.mubr.f32.gmra.mrb[0].mxu0 %v359
      %v2877 = vpop.f32.mrb[0].mxu0
      %v2878 = vadd.f32 0.0, %v2877
      %v2879 = vpop.f32.mrb[0].mxu0
      %v2880 = vadd.f32 0.0, %v2879
      %2881 = vmatprep.mubr.f32.mxu0 %v364
      %2882 = vmatmul.mubr.f32.gmra.mrb[0].mxu0 %v363
      %v2883 = vpop.f32.mrb[0].mxu0
      %v2884 = vadd.f32 0.0, %v2883
      %v2885 = vpop.f32.mrb[0].mxu0
      %v2886 = vadd.f32 0.0, %v2885
      %2887 = vmatprep.mubr.f32.mxu0 %v368
      %2888 = vmatmul.mubr.f32.gmra.mrb[0].mxu0 %v367
      %v2889 = vpop.f32.mrb[0].mxu0
      %v2890 = vadd.f32 0.0, %v2889
      %v2891 = vpop.f32.mrb[0].mxu0
      %v2892 = vadd.f32 0.0, %v2891
      %2893 = vmatprep.mubr.f32.mxu0 %v372
      %2894 = vmatmul.mubr.f32.gmra.mrb[0].mxu0 %v371
      %v2895 = vpop.f32.mrb[0].mxu0
      %v2896 = vadd.f32 0.0, %v2895
      %v2897 = vpop.f32.mrb[0].mxu0
      %v2898 = vadd.f32 0.0, %v2897
      %2899 = vmatprep.mubr.f32.mxu0 %v376
      %2900 = vmatmul.mubr.f32.gmra.mrb[0].mxu0 %v375
      %v2901 = vpop.f32.mrb[0].mxu0
      %v2902 = vadd.f32 0.0, %v2901
      %v2903 = vpop.f32.mrb[0].mxu0
      %v2904 = vadd.f32 0.0, %v2903
      %2905 = vmatprep.mubr.f32.mxu0 %v380
      %2906 = vmatmul.mubr.f32.gmra.mrb[0].mxu0 %v379
      %v2907 = vpop.f32.mrb[0].mxu0
      %v2908 = vadd.f32 0.0, %v2907
      %v2909 = vpop.f32.mrb[0].mxu0
      %v2910 = vadd.f32 0.0, %v2909
      %2911 = vmatprep.mubr.f32.mxu0 %v384
      %2912 = vmatmul.mubr.f32.gmra.mrb[0].mxu0 %v383
      %v2913 = vpop.f32.mrb[0].mxu0
      %v2914 = vadd.f32 0.0, %v2913
      %v2915 = vpop.f32.mrb[0].mxu0
      %v2916 = vadd.f32 0.0, %v2915
      %2917 = vmatprep.mubr.f32.mxu0 %v388
      %2918 = vmatmul.mubr.f32.gmra.mrb[0].mxu0 %v387
      %v2919 = vpop.f32.mrb[0].mxu0
      %v2920 = vadd.f32 0.0, %v2919
      %v2921 = vpop.f32.mrb[0].mxu0
      %v2922 = vadd.f32 0.0, %v2921
      %2923 = vmatprep.mubr.f32.mxu0 %v392
      %2924 = vmatmul.mubr.f32.gmra.mrb[0].mxu0 %v391
      %v2925 = vpop.f32.mrb[0].mxu0
      %v2926 = vadd.f32 0.0, %v2925
      %v2927 = vpop.f32.mrb[0].mxu0
      %v2928 = vadd.f32 0.0, %v2927
      %2929 = vmatprep.mubr.f32.mxu0 %v396
      %2930 = vmatmul.mubr.f32.gmra.mrb[0].mxu0 %v395
      %v2931 = vpop.f32.mrb[0].mxu0
      %v2932 = vadd.f32 0.0, %v2931
      %v2933 = vpop.f32.mrb[0].mxu0
      %v2934 = vadd.f32 0.0, %v2933
      %2935 = vmatprep.mubr.f32.mxu0 %v400
      %2936 = vmatmul.mubr.f32.gmra.mrb[0].mxu0 %v399
      %v2937 = vpop.f32.mrb[0].mxu0
      %v2938 = vadd.f32 0.0, %v2937
      %v2939 = vpop.f32.mrb[0].mxu0
      %v2940 = vadd.f32 0.0, %v2939
      %2941 = vdwg.mxu0
      %2942 = vmatprep.subr.mxu0 %v1950
      %2943 = vmatpush1.msra.mxu0 %v1949
      %2944 = vmatprep.subr.mxu0 %v1956
      %2945 = vmatpush1.msra.mxu0 %v1955
      %2946 = vmatprep.subr.mxu0 %v1962
      %2947 = vmatpush1.msra.mxu0 %v1961
      %2948 = vmatprep.subr.mxu0 %v1968
      %2949 = vmatpush1.msra.mxu0 %v1967
      %2950 = vmatprep.subr.mxu0 %v1974
      %2951 = vmatpush1.msra.mxu0 %v1973
      %2952 = vmatprep.subr.mxu0 %v1980
      %2953 = vmatpush1.msra.mxu0 %v1979
      %2954 = vmatprep.subr.mxu0 %v1986
      %2955 = vmatpush1.msra.mxu0 %v1985
      %2956 = vmatprep.subr.mxu0 %v1992
      %2957 = vmatpush1.msra.mxu0 %v1991
      %2958 = vmatprep.subr.mxu0 %v1998
      %2959 = vmatpush1.msra.mxu0 %v1997
      %2960 = vmatprep.subr.mxu0 %v2004
      %2961 = vmatpush1.msra.mxu0 %v2003
      %2962 = vmatprep.subr.mxu0 %v2010
      %2963 = vmatpush1.msra.mxu0 %v2009
      %2964 = vmatprep.subr.mxu0 %v2016
      %2965 = vmatpush1.msra.mxu0 %v2015
      %2966 = vmatprep.subr.mxu0 %v2022
      %2967 = vmatpush1.msra.mxu0 %v2021
      %2968 = vmatprep.subr.mxu0 %v2028
      %2969 = vmatpush1.msra.mxu0 %v2027
      %2970 = vmatprep.subr.mxu0 %v2034
      %2971 = vmatpush1.msra.mxu0 %v2033
      %2972 = vmatprep.subr.mxu0 %v2040
      %2973 = vmatpush1.msra.mxu0 %v2039
      %2974 = vmatprep.subr.mxu0 %v2046
      %2975 = vmatpush1.msra.mxu0 %v2045
      %2976 = vmatprep.subr.mxu0 %v2052
      %2977 = vmatpush1.msra.mxu0 %v2051
      %2978 = vmatprep.subr.mxu0 %v2058
      %2979 = vmatpush1.msra.mxu0 %v2057
      %2980 = vmatprep.subr.mxu0 %v2064
      %2981 = vmatpush1.msra.mxu0 %v2063
      %2982 = vmatprep.subr.mxu0 %v2070
      %2983 = vmatpush1.msra.mxu0 %v2069
      %2984 = vmatprep.subr.mxu0 %v2076
      %2985 = vmatpush1.msra.mxu0 %v2075
      %2986 = vmatprep.subr.mxu0 %v2082
      %2987 = vmatpush1.msra.mxu0 %v2081
      %2988 = vmatprep.subr.mxu0 %v2088
      %2989 = vmatpush1.msra.mxu0 %v2087
      %2990 = vmatprep.subr.mxu0 %v2094
      %2991 = vmatpush1.msra.mxu0 %v2093
      %2992 = vmatprep.subr.mxu0 %v2100
      %2993 = vmatpush1.msra.mxu0 %v2099
      %2994 = vmatprep.subr.mxu0 %v2106
      %2995 = vmatpush1.msra.mxu0 %v2105
      %2996 = vmatprep.subr.mxu0 %v2112
      %2997 = vmatpush1.msra.mxu0 %v2111
      %2998 = vmatprep.subr.mxu0 %v2118
      %2999 = vmatpush1.msra.mxu0 %v2117
      %3000 = vmatprep.subr.mxu0 %v2124
      %3001 = vmatpush1.msra.mxu0 %v2123
      %3002 = vmatprep.subr.mxu0 %v2130
      %3003 = vmatpush1.msra.mxu0 %v2129
      %3004 = vmatprep.subr.mxu0 %v2136
      %3005 = vmatpush1.msra.mxu0 %v2135
      %3006 = vmatprep.mubr.f32.mxu0 %v342
      %3007 = vmatmul.mubr.f32.gmra.mrb[0].mxu0 %v341
      %v3008 = vpop.f32.mrb[0].mxu0
      %v3009 = vadd.f32 %v2848, %v3008
      %v3010 = vpop.f32.mrb[0].mxu0
      %v3011 = vadd.f32 %v2850, %v3010
      %3012 = vmatprep.mubr.f32.mxu0 %v346
      %3013 = vmatmul.mubr.f32.gmra.mrb[0].mxu0 %v345
      %v3014 = vpop.f32.mrb[0].mxu0
      %v3015 = vadd.f32 %v2854, %v3014
      %v3016 = vpop.f32.mrb[0].mxu0
      %v3017 = vadd.f32 %v2856, %v3016
      %3018 = vmatprep.mubr.f32.mxu0 %v350
      %3019 = vmatmul.mubr.f32.gmra.mrb[0].mxu0 %v349
      %v3020 = vpop.f32.mrb[0].mxu0
      %v3021 = vadd.f32 %v2860, %v3020
      %v3022 = vpop.f32.mrb[0].mxu0
      %v3023 = vadd.f32 %v2862, %v3022
      %3024 = vmatprep.mubr.f32.mxu0 %v354
      %3025 = vmatmul.mubr.f32.gmra.mrb[0].mxu0 %v353
      %v3026 = vpop.f32.mrb[0].mxu0
      %v3027 = vadd.f32 %v2866, %v3026
      %v3028 = vpop.f32.mrb[0].mxu0
      %v3029 = vadd.f32 %v2868, %v3028
      %3030 = vmatprep.mubr.f32.mxu0 %v358
      %3031 = vmatmul.mubr.f32.gmra.mrb[0].mxu0 %v357
      %v3032 = vpop.f32.mrb[0].mxu0
      %v3033 = vadd.f32 %v2872, %v3032
      %v3034 = vpop.f32.mrb[0].mxu0
      %v3035 = vadd.f32 %v2874, %v3034
      %3036 = vmatprep.mubr.f32.mxu0 %v362
      %3037 = vmatmul.mubr.f32.gmra.mrb[0].mxu0 %v361
      %v3038 = vpop.f32.mrb[0].mxu0
      %v3039 = vadd.f32 %v2878, %v3038
      %v3040 = vpop.f32.mrb[0].mxu0
      %v3041 = vadd.f32 %v2880, %v3040
      %3042 = vmatprep.mubr.f32.mxu0 %v366
      %3043 = vmatmul.mubr.f32.gmra.mrb[0].mxu0 %v365
      %v3044 = vpop.f32.mrb[0].mxu0
      %v3045 = vadd.f32 %v2884, %v3044
      %v3046 = vpop.f32.mrb[0].mxu0
      %v3047 = vadd.f32 %v2886, %v3046
      %3048 = vmatprep.mubr.f32.mxu0 %v370
      %3049 = vmatmul.mubr.f32.gmra.mrb[0].mxu0 %v369
      %v3050 = vpop.f32.mrb[0].mxu0
      %v3051 = vadd.f32 %v2890, %v3050
      %v3052 = vpop.f32.mrb[0].mxu0
      %v3053 = vadd.f32 %v2892, %v3052
      %3054 = vmatprep.mubr.f32.mxu0 %v374
      %3055 = vmatmul.mubr.f32.gmra.mrb[0].mxu0 %v373
      %v3056 = vpop.f32.mrb[0].mxu0
      %v3057 = vadd.f32 %v2896, %v3056
      %v3058 = vpop.f32.mrb[0].mxu0
      %v3059 = vadd.f32 %v2898, %v3058
      %3060 = vmatprep.mubr.f32.mxu0 %v378
      %3061 = vmatmul.mubr.f32.gmra.mrb[0].mxu0 %v377
      %v3062 = vpop.f32.mrb[0].mxu0
      %v3063 = vadd.f32 %v2902, %v3062
      %v3064 = vpop.f32.mrb[0].mxu0
      %v3065 = vadd.f32 %v2904, %v3064
      %3066 = vmatprep.mubr.f32.mxu0 %v382
      %3067 = vmatmul.mubr.f32.gmra.mrb[0].mxu0 %v381
      %v3068 = vpop.f32.mrb[0].mxu0
      %v3069 = vadd.f32 %v2908, %v3068
      %v3070 = vpop.f32.mrb[0].mxu0
      %v3071 = vadd.f32 %v2910, %v3070
      %3072 = vmatprep.mubr.f32.mxu0 %v386
      %3073 = vmatmul.mubr.f32.gmra.mrb[0].mxu0 %v385
      %v3074 = vpop.f32.mrb[0].mxu0
      %v3075 = vadd.f32 %v2914, %v3074
      %v3076 = vpop.f32.mrb[0].mxu0
      %v3077 = vadd.f32 %v2916, %v3076
      %3078 = vmatprep.mubr.f32.mxu0 %v390
      %3079 = vmatmul.mubr.f32.gmra.mrb[0].mxu0 %v389
      %v3080 = vpop.f32.mrb[0].mxu0
      %v3081 = vadd.f32 %v2920, %v3080
      %v3082 = vpop.f32.mrb[0].mxu0
      %v3083 = vadd.f32 %v2922, %v3082
      %3084 = vmatprep.mubr.f32.mxu0 %v394
      %3085 = vmatmul.mubr.f32.gmra.mrb[0].mxu0 %v393
      %v3086 = vpop.f32.mrb[0].mxu0
      %v3087 = vadd.f32 %v2926, %v3086
      %v3088 = vpop.f32.mrb[0].mxu0
      %v3089 = vadd.f32 %v2928, %v3088
      %3090 = vmatprep.mubr.f32.mxu0 %v398
      %3091 = vmatmul.mubr.f32.gmra.mrb[0].mxu0 %v397
      %v3092 = vpop.f32.mrb[0].mxu0
      %v3093 = vadd.f32 %v2932, %v3092
      %v3094 = vpop.f32.mrb[0].mxu0
      %v3095 = vadd.f32 %v2934, %v3094
      %3096 = vmatprep.mubr.f32.mxu0 %v402
      %3097 = vmatmul.mubr.f32.gmra.mrb[0].mxu0 %v401
      %v3098 = vpop.f32.mrb[0].mxu0
      %v3099 = vadd.f32 %v2938, %v3098
      %v3100 = vpop.f32.mrb[0].mxu0
      %v3101 = vadd.f32 %v2940, %v3100
      %3102 = vdwg.mxu0
      %v3103 = vmax.f32 %v1015, %v2365
      %v3104 = vmax.f32 %v1017, %v2367
      %v3105 = vmax.f32 %v1337, %v2687
      %v3106 = vmax.f32 %v1339, %v2689
      %v3107 = vmax.f32 %v1659, %v3009
      %v3108 = vmax.f32 %v1661, %v3011
      %v3109 = vmax.f32 %v1021, %v2371
      %v3110 = vmax.f32 %v1023, %v2373
      %v3111 = vmax.f32 %v1343, %v2693
      %v3112 = vmax.f32 %v1345, %v2695
      %v3113 = vmax.f32 %v1665, %v3015
      %v3114 = vmax.f32 %v1667, %v3017
      %v3115 = vmax.f32 %v1027, %v2377
      %v3116 = vmax.f32 %v1029, %v2379
      %v3117 = vmax.f32 %v1349, %v2699
      %v3118 = vmax.f32 %v1351, %v2701
      %v3119 = vmax.f32 %v1671, %v3021
      %v3120 = vmax.f32 %v1673, %v3023
      %v3121 = vmax.f32 %v1033, %v2383
      %v3122 = vmax.f32 %v1035, %v2385
      %v3123 = vmax.f32 %v1355, %v2705
      %v3124 = vmax.f32 %v1357, %v2707
      %v3125 = vmax.f32 %v1677, %v3027
      %v3126 = vmax.f32 %v1679, %v3029
      %v3127 = vmax.f32 %v1039, %v2389
      %v3128 = vmax.f32 %v1041, %v2391
      %v3129 = vmax.f32 %v1361, %v2711
      %v3130 = vmax.f32 %v1363, %v2713
      %v3131 = vmax.f32 %v1683, %v3033
      %v3132 = vmax.f32 %v1685, %v3035
      %v3133 = vmax.f32 %v1045, %v2395
      %v3134 = vmax.f32 %v1047, %v2397
      %v3135 = vmax.f32 %v1367, %v2717
      %v3136 = vmax.f32 %v1369, %v2719
      %v3137 = vmax.f32 %v1689, %v3039
      %v3138 = vmax.f32 %v1691, %v3041
      %v3139 = vmax.f32 %v1051, %v2401
      %v3140 = vmax.f32 %v1053, %v2403
      %v3141 = vmax.f32 %v1373, %v2723
      %v3142 = vmax.f32 %v1375, %v2725
      %v3143 = vmax.f32 %v1695, %v3045
      %v3144 = vmax.f32 %v1697, %v3047
      %v3145 = vmax.f32 %v1057, %v2407
      %v3146 = vmax.f32 %v1059, %v2409
      %v3147 = vmax.f32 %v1379, %v2729
      %v3148 = vmax.f32 %v1381, %v2731
      %v3149 = vmax.f32 %v1701, %v3051
      %v3150 = vmax.f32 %v1703, %v3053
      %v3151 = vmax.f32 %v1063, %v2413
      %v3152 = vmax.f32 %v1065, %v2415
      %v3153 = vmax.f32 %v1385, %v2735
      %v3154 = vmax.f32 %v1387, %v2737
      %v3155 = vmax.f32 %v1707, %v3057
      %v3156 = vmax.f32 %v1709, %v3059
      %v3157 = vmax.f32 %v1069, %v2419
      %v3158 = vmax.f32 %v1071, %v2421
      %v3159 = vmax.f32 %v1391, %v2741
      %v3160 = vmax.f32 %v1393, %v2743
      %v3161 = vmax.f32 %v1713, %v3063
      %v3162 = vmax.f32 %v1715, %v3065
      %v3163 = vmax.f32 %v1075, %v2425
      %v3164 = vmax.f32 %v1077, %v2427
      %v3165 = vmax.f32 %v1397, %v2747
      %v3166 = vmax.f32 %v1399, %v2749
      %v3167 = vmax.f32 %v1719, %v3069
      %v3168 = vmax.f32 %v1721, %v3071
      %v3169 = vmax.f32 %v1081, %v2431
      %v3170 = vmax.f32 %v1083, %v2433
      %v3171 = vmax.f32 %v1403, %v2753
      %v3172 = vmax.f32 %v1405, %v2755
      %v3173 = vmax.f32 %v1725, %v3075
      %v3174 = vmax.f32 %v1727, %v3077
      %v3175 = vmax.f32 %v1087, %v2437
      %v3176 = vmax.f32 %v1089, %v2439
      %v3177 = vmax.f32 %v1409, %v2759
      %v3178 = vmax.f32 %v1411, %v2761
      %v3179 = vmax.f32 %v1731, %v3081
      %v3180 = vmax.f32 %v1733, %v3083
      %v3181 = vmax.f32 %v1093, %v2443
      %v3182 = vmax.f32 %v1095, %v2445
      %v3183 = vmax.f32 %v1415, %v2765
      %v3184 = vmax.f32 %v1417, %v2767
      %v3185 = vmax.f32 %v1737, %v3087
      %v3186 = vmax.f32 %v1739, %v3089
      %v3187 = vmax.f32 %v1099, %v2449
      %v3188 = vmax.f32 %v1101, %v2451
      %v3189 = vmax.f32 %v1421, %v2771
      %v3190 = vmax.f32 %v1423, %v2773
      %v3191 = vmax.f32 %v1743, %v3093
      %v3192 = vmax.f32 %v1745, %v3095
      %v3193 = vmax.f32 %v1105, %v2455
      %v3194 = vmax.f32 %v1107, %v2457
      %v3195 = vmax.f32 %v1427, %v2777
      %v3196 = vmax.f32 %v1429, %v2779
      %v3197 = vmax.f32 %v1749, %v3099
      %v3198 = vmax.f32 %v1751, %v3101
      %v3199 = vld [vmem:[%s1 + $0x60] sm:$0xff]
      %v3200 = vld [vmem:[%s1 + $0x68] sm:$0xff]
      %v3201 = vld [vmem:[%s1 + $0x70] sm:$0xff]
      %v3202 = vld [vmem:[%s1 + $0x78] sm:$0xff]
      %v3203 = vld [vmem:[%s1 + $0x80] sm:$0xff]
      %v3204 = vld [vmem:[%s1 + $0x88] sm:$0xff]
      %v3205 = vld [vmem:[%s1 + $0x120] sm:$0xff]
      %v3206 = vld [vmem:[%s1 + $0x128] sm:$0xff]
      %v3207 = vld [vmem:[%s1 + $0x130] sm:$0xff]
      %v3208 = vld [vmem:[%s1 + $0x138] sm:$0xff]
      %v3209 = vld [vmem:[%s1 + $0x140] sm:$0xff]
      %v3210 = vld [vmem:[%s1 + $0x148] sm:$0xff]
      %v3211 = vld [vmem:[%s1 + $0x1e0] sm:$0xff]
      %v3212 = vld [vmem:[%s1 + $0x1e8] sm:$0xff]
      %v3213 = vld [vmem:[%s1 + $0x1f0] sm:$0xff]
      %v3214 = vld [vmem:[%s1 + $0x1f8] sm:$0xff]
      %v3215 = vld [vmem:[%s1 + $0x200] sm:$0xff]
      %v3216 = vld [vmem:[%s1 + $0x208] sm:$0xff]
      %v3217 = vld [vmem:[%s1 + $0x2a0] sm:$0xff]
      %v3218 = vld [vmem:[%s1 + $0x2a8] sm:$0xff]
      %v3219 = vld [vmem:[%s1 + $0x2b0] sm:$0xff]
      %v3220 = vld [vmem:[%s1 + $0x2b8] sm:$0xff]
      %v3221 = vld [vmem:[%s1 + $0x2c0] sm:$0xff]
      %v3222 = vld [vmem:[%s1 + $0x2c8] sm:$0xff]
      %v3223 = vld [vmem:[%s1 + $0x360] sm:$0xff]
      %v3224 = vld [vmem:[%s1 + $0x368] sm:$0xff]
      %v3225 = vld [vmem:[%s1 + $0x370] sm:$0xff]
      %v3226 = vld [vmem:[%s1 + $0x378] sm:$0xff]
      %v3227 = vld [vmem:[%s1 + $0x380] sm:$0xff]
      %v3228 = vld [vmem:[%s1 + $0x388] sm:$0xff]
      %v3229 = vld [vmem:[%s1 + $0x420] sm:$0xff]
      %v3230 = vld [vmem:[%s1 + $0x428] sm:$0xff]
      %v3231 = vld [vmem:[%s1 + $0x430] sm:$0xff]
      %v3232 = vld [vmem:[%s1 + $0x438] sm:$0xff]
      %v3233 = vld [vmem:[%s1 + $0x440] sm:$0xff]
      %v3234 = vld [vmem:[%s1 + $0x448] sm:$0xff]
      %v3235 = vld [vmem:[%s1 + $0x4e0] sm:$0xff]
      %v3236 = vld [vmem:[%s1 + $0x4e8] sm:$0xff]
      %v3237 = vld [vmem:[%s1 + $0x4f0] sm:$0xff]
      %v3238 = vld [vmem:[%s1 + $0x4f8] sm:$0xff]
      %v3239 = vld [vmem:[%s1 + $0x500] sm:$0xff]
      %v3240 = vld [vmem:[%s1 + $0x508] sm:$0xff]
      %v3241 = vld [vmem:[%s1 + $0x5a0] sm:$0xff]
      %v3242 = vld [vmem:[%s1 + $0x5a8] sm:$0xff]
      %v3243 = vld [vmem:[%s1 + $0x5b0] sm:$0xff]
      %v3244 = vld [vmem:[%s1 + $0x5b8] sm:$0xff]
      %v3245 = vld [vmem:[%s1 + $0x5c0] sm:$0xff]
      %v3246 = vld [vmem:[%s1 + $0x5c8] sm:$0xff]
      %v3247 = vld [vmem:[%s1 + $0x660] sm:$0xff]
      %v3248 = vld [vmem:[%s1 + $0x668] sm:$0xff]
      %v3249 = vld [vmem:[%s1 + $0x670] sm:$0xff]
      %v3250 = vld [vmem:[%s1 + $0x678] sm:$0xff]
      %v3251 = vld [vmem:[%s1 + $0x680] sm:$0xff]
      %v3252 = vld [vmem:[%s1 + $0x688] sm:$0xff]
      %v3253 = vld [vmem:[%s1 + $0x720] sm:$0xff]
      %v3254 = vld [vmem:[%s1 + $0x728] sm:$0xff]
      %v3255 = vld [vmem:[%s1 + $0x730] sm:$0xff]
      %v3256 = vld [vmem:[%s1 + $0x738] sm:$0xff]
      %v3257 = vld [vmem:[%s1 + $0x740] sm:$0xff]
      %v3258 = vld [vmem:[%s1 + $0x748] sm:$0xff]
      %v3259 = vld [vmem:[%s1 + $0x7e0] sm:$0xff]
      %v3260 = vld [vmem:[%s1 + $0x7e8] sm:$0xff]
      %v3261 = vld [vmem:[%s1 + $0x7f0] sm:$0xff]
      %v3262 = vld [vmem:[%s1 + $0x7f8] sm:$0xff]
      %v3263 = vld [vmem:[%s1 + $0x800] sm:$0xff]
      %v3264 = vld [vmem:[%s1 + $0x808] sm:$0xff]
      %v3265 = vld [vmem:[%s1 + $0x8a0] sm:$0xff]
      %v3266 = vld [vmem:[%s1 + $0x8a8] sm:$0xff]
      %v3267 = vld [vmem:[%s1 + $0x8b0] sm:$0xff]
      %v3268 = vld [vmem:[%s1 + $0x8b8] sm:$0xff]
      %v3269 = vld [vmem:[%s1 + $0x8c0] sm:$0xff]
      %v3270 = vld [vmem:[%s1 + $0x8c8] sm:$0xff]
      %v3271 = vld [vmem:[%s1 + $0x960] sm:$0xff]
      %v3272 = vld [vmem:[%s1 + $0x968] sm:$0xff]
      %v3273 = vld [vmem:[%s1 + $0x970] sm:$0xff]
      %v3274 = vld [vmem:[%s1 + $0x978] sm:$0xff]
      %v3275 = vld [vmem:[%s1 + $0x980] sm:$0xff]
      %v3276 = vld [vmem:[%s1 + $0x988] sm:$0xff]
      %v3277 = vld [vmem:[%s1 + $0xa20] sm:$0xff]
      %v3278 = vld [vmem:[%s1 + $0xa28] sm:$0xff]
      %v3279 = vld [vmem:[%s1 + $0xa30] sm:$0xff]
      %v3280 = vld [vmem:[%s1 + $0xa38] sm:$0xff]
      %v3281 = vld [vmem:[%s1 + $0xa40] sm:$0xff]
      %v3282 = vld [vmem:[%s1 + $0xa48] sm:$0xff]
      %v3283 = vld [vmem:[%s1 + $0xae0] sm:$0xff]
      %v3284 = vld [vmem:[%s1 + $0xae8] sm:$0xff]
      %v3285 = vld [vmem:[%s1 + $0xaf0] sm:$0xff]
      %v3286 = vld [vmem:[%s1 + $0xaf8] sm:$0xff]
      %v3287 = vld [vmem:[%s1 + $0xb00] sm:$0xff]
      %v3288 = vld [vmem:[%s1 + $0xb08] sm:$0xff]
      %v3289 = vld [vmem:[%s1 + $0xba0] sm:$0xff]
      %v3290 = vld [vmem:[%s1 + $0xba8] sm:$0xff]
      %v3291 = vld [vmem:[%s1 + $0xbb0] sm:$0xff]
      %v3292 = vld [vmem:[%s1 + $0xbb8] sm:$0xff]
      %v3293 = vld [vmem:[%s1 + $0xbc0] sm:$0xff]
      %v3294 = vld [vmem:[%s1 + $0xbc8] sm:$0xff]
      %v3295 = vld [vmem:[%s1 + $0xc60] sm:$0xff]
      %v3296 = vld [vmem:[%s1 + $0xc68] sm:$0xff]
      %v3297 = vld [vmem:[%s1 + $0xc70] sm:$0xff]
      %v3298 = vld [vmem:[%s1 + $0xc78] sm:$0xff]
      %v3299 = vld [vmem:[%s1 + $0xc80] sm:$0xff]
      %v3300 = vld [vmem:[%s1 + $0xc88] sm:$0xff]
      %v3301 = vld [vmem:[%s1 + $0xd20] sm:$0xff]
      %v3302 = vld [vmem:[%s1 + $0xd28] sm:$0xff]
      %v3303 = vld [vmem:[%s1 + $0xd30] sm:$0xff]
      %v3304 = vld [vmem:[%s1 + $0xd38] sm:$0xff]
      %v3305 = vld [vmem:[%s1 + $0xd40] sm:$0xff]
      %v3306 = vld [vmem:[%s1 + $0xd48] sm:$0xff]
      %v3307 = vld [vmem:[%s1 + $0xde0] sm:$0xff]
      %v3308 = vld [vmem:[%s1 + $0xde8] sm:$0xff]
      %v3309 = vld [vmem:[%s1 + $0xdf0] sm:$0xff]
      %v3310 = vld [vmem:[%s1 + $0xdf8] sm:$0xff]
      %v3311 = vld [vmem:[%s1 + $0xe00] sm:$0xff]
      %v3312 = vld [vmem:[%s1 + $0xe08] sm:$0xff]
      %v3313 = vld [vmem:[%s1 + $0xea0] sm:$0xff]
      %v3314 = vld [vmem:[%s1 + $0xea8] sm:$0xff]
      %v3315 = vld [vmem:[%s1 + $0xeb0] sm:$0xff]
      %v3316 = vld [vmem:[%s1 + $0xeb8] sm:$0xff]
      %v3317 = vld [vmem:[%s1 + $0xec0] sm:$0xff]
      %v3318 = vld [vmem:[%s1 + $0xec8] sm:$0xff]
      %v3319 = vld [vmem:[%s1 + $0xf60] sm:$0xff]
      %v3320 = vld [vmem:[%s1 + $0xf68] sm:$0xff]
      %v3321 = vld [vmem:[%s1 + $0xf70] sm:$0xff]
      %v3322 = vld [vmem:[%s1 + $0xf78] sm:$0xff]
      %v3323 = vld [vmem:[%s1 + $0xf80] sm:$0xff]
      %v3324 = vld [vmem:[%s1 + $0xf88] sm:$0xff]
      %v3325 = vld [vmem:[%s1 + $0x1020] sm:$0xff]
      %v3326 = vld [vmem:[%s1 + $0x1028] sm:$0xff]
      %v3327 = vld [vmem:[%s1 + $0x1030] sm:$0xff]
      %v3328 = vld [vmem:[%s1 + $0x1038] sm:$0xff]
      %v3329 = vld [vmem:[%s1 + $0x1040] sm:$0xff]
      %v3330 = vld [vmem:[%s1 + $0x1048] sm:$0xff]
      %v3331 = vld [vmem:[%s1 + $0x10e0] sm:$0xff]
      %v3332 = vld [vmem:[%s1 + $0x10e8] sm:$0xff]
      %v3333 = vld [vmem:[%s1 + $0x10f0] sm:$0xff]
      %v3334 = vld [vmem:[%s1 + $0x10f8] sm:$0xff]
      %v3335 = vld [vmem:[%s1 + $0x1100] sm:$0xff]
      %v3336 = vld [vmem:[%s1 + $0x1108] sm:$0xff]
      %v3337 = vld [vmem:[%s1 + $0x11a0] sm:$0xff]
      %v3338 = vld [vmem:[%s1 + $0x11a8] sm:$0xff]
      %v3339 = vld [vmem:[%s1 + $0x11b0] sm:$0xff]
      %v3340 = vld [vmem:[%s1 + $0x11b8] sm:$0xff]
      %v3341 = vld [vmem:[%s1 + $0x11c0] sm:$0xff]
      %v3342 = vld [vmem:[%s1 + $0x11c8] sm:$0xff]
      %v3343 = vld [vmem:[%s1 + $0x1260] sm:$0xff]
      %v3344 = vld [vmem:[%s1 + $0x1268] sm:$0xff]
      %v3345 = vld [vmem:[%s1 + $0x1270] sm:$0xff]
      %v3346 = vld [vmem:[%s1 + $0x1278] sm:$0xff]
      %v3347 = vld [vmem:[%s1 + $0x1280] sm:$0xff]
      %v3348 = vld [vmem:[%s1 + $0x1288] sm:$0xff]
      %v3349 = vld [vmem:[%s1 + $0x1320] sm:$0xff]
      %v3350 = vld [vmem:[%s1 + $0x1328] sm:$0xff]
      %v3351 = vld [vmem:[%s1 + $0x1330] sm:$0xff]
      %v3352 = vld [vmem:[%s1 + $0x1338] sm:$0xff]
      %v3353 = vld [vmem:[%s1 + $0x1340] sm:$0xff]
      %v3354 = vld [vmem:[%s1 + $0x1348] sm:$0xff]
      %v3355 = vld [vmem:[%s1 + $0x13e0] sm:$0xff]
      %v3356 = vld [vmem:[%s1 + $0x13e8] sm:$0xff]
      %v3357 = vld [vmem:[%s1 + $0x13f0] sm:$0xff]
      %v3358 = vld [vmem:[%s1 + $0x13f8] sm:$0xff]
      %v3359 = vld [vmem:[%s1 + $0x1400] sm:$0xff]
      %v3360 = vld [vmem:[%s1 + $0x1408] sm:$0xff]
      %v3361 = vld [vmem:[%s1 + $0x14a0] sm:$0xff]
      %v3362 = vld [vmem:[%s1 + $0x14a8] sm:$0xff]
      %v3363 = vld [vmem:[%s1 + $0x14b0] sm:$0xff]
      %v3364 = vld [vmem:[%s1 + $0x14b8] sm:$0xff]
      %v3365 = vld [vmem:[%s1 + $0x14c0] sm:$0xff]
      %v3366 = vld [vmem:[%s1 + $0x14c8] sm:$0xff]
      %v3367 = vld [vmem:[%s1 + $0x1560] sm:$0xff]
      %v3368 = vld [vmem:[%s1 + $0x1568] sm:$0xff]
      %v3369 = vld [vmem:[%s1 + $0x1570] sm:$0xff]
      %v3370 = vld [vmem:[%s1 + $0x1578] sm:$0xff]
      %v3371 = vld [vmem:[%s1 + $0x1580] sm:$0xff]
      %v3372 = vld [vmem:[%s1 + $0x1588] sm:$0xff]
      %v3373 = vld [vmem:[%s1 + $0x1620] sm:$0xff]
      %v3374 = vld [vmem:[%s1 + $0x1628] sm:$0xff]
      %v3375 = vld [vmem:[%s1 + $0x1630] sm:$0xff]
      %v3376 = vld [vmem:[%s1 + $0x1638] sm:$0xff]
      %v3377 = vld [vmem:[%s1 + $0x1640] sm:$0xff]
      %v3378 = vld [vmem:[%s1 + $0x1648] sm:$0xff]
      %v3379 = vld [vmem:[%s1 + $0x16e0] sm:$0xff]
      %v3380 = vld [vmem:[%s1 + $0x16e8] sm:$0xff]
      %v3381 = vld [vmem:[%s1 + $0x16f0] sm:$0xff]
      %v3382 = vld [vmem:[%s1 + $0x16f8] sm:$0xff]
      %v3383 = vld [vmem:[%s1 + $0x1700] sm:$0xff]
      %v3384 = vld [vmem:[%s1 + $0x1708] sm:$0xff]
      %v3385 = vld [vmem:[%s1 + $0x17a0] sm:$0xff]
      %v3386 = vld [vmem:[%s1 + $0x17a8] sm:$0xff]
      %v3387 = vld [vmem:[%s1 + $0x17b0] sm:$0xff]
      %v3388 = vld [vmem:[%s1 + $0x17b8] sm:$0xff]
      %v3389 = vld [vmem:[%s1 + $0x17c0] sm:$0xff]
      %v3390 = vld [vmem:[%s1 + $0x17c8] sm:$0xff]
      %v3391 = vld [vmem:[%s1 + $0x1860] sm:$0xff]
      %v3392 = vld [vmem:[%s1 + $0x1868] sm:$0xff]
      %v3393 = vld [vmem:[%s1 + $0x1870] sm:$0xff]
      %v3394 = vld [vmem:[%s1 + $0x1878] sm:$0xff]
      %v3395 = vld [vmem:[%s1 + $0x1880] sm:$0xff]
      %v3396 = vld [vmem:[%s1 + $0x1888] sm:$0xff]
      %v3397 = vld [vmem:[%s1 + $0x1920] sm:$0xff]
      %v3398 = vld [vmem:[%s1 + $0x1928] sm:$0xff]
      %v3399 = vld [vmem:[%s1 + $0x1930] sm:$0xff]
      %v3400 = vld [vmem:[%s1 + $0x1938] sm:$0xff]
      %v3401 = vld [vmem:[%s1 + $0x1940] sm:$0xff]
      %v3402 = vld [vmem:[%s1 + $0x1948] sm:$0xff]
      %v3403 = vld [vmem:[%s1 + $0x19e0] sm:$0xff]
      %v3404 = vld [vmem:[%s1 + $0x19e8] sm:$0xff]
      %v3405 = vld [vmem:[%s1 + $0x19f0] sm:$0xff]
      %v3406 = vld [vmem:[%s1 + $0x19f8] sm:$0xff]
      %v3407 = vld [vmem:[%s1 + $0x1a00] sm:$0xff]
      %v3408 = vld [vmem:[%s1 + $0x1a08] sm:$0xff]
      %v3409 = vld [vmem:[%s1 + $0x1aa0] sm:$0xff]
      %v3410 = vld [vmem:[%s1 + $0x1aa8] sm:$0xff]
      %v3411 = vld [vmem:[%s1 + $0x1ab0] sm:$0xff]
      %v3412 = vld [vmem:[%s1 + $0x1ab8] sm:$0xff]
      %v3413 = vld [vmem:[%s1 + $0x1ac0] sm:$0xff]
      %v3414 = vld [vmem:[%s1 + $0x1ac8] sm:$0xff]
      %v3415 = vld [vmem:[%s1 + $0x1b60] sm:$0xff]
      %v3416 = vld [vmem:[%s1 + $0x1b68] sm:$0xff]
      %v3417 = vld [vmem:[%s1 + $0x1b70] sm:$0xff]
      %v3418 = vld [vmem:[%s1 + $0x1b78] sm:$0xff]
      %v3419 = vld [vmem:[%s1 + $0x1b80] sm:$0xff]
      %v3420 = vld [vmem:[%s1 + $0x1b88] sm:$0xff]
      %v3421 = vld [vmem:[%s1 + $0x1c20] sm:$0xff]
      %v3422 = vld [vmem:[%s1 + $0x1c28] sm:$0xff]
      %v3423 = vld [vmem:[%s1 + $0x1c30] sm:$0xff]
      %v3424 = vld [vmem:[%s1 + $0x1c38] sm:$0xff]
      %v3425 = vld [vmem:[%s1 + $0x1c40] sm:$0xff]
      %v3426 = vld [vmem:[%s1 + $0x1c48] sm:$0xff]
      %v3427 = vld [vmem:[%s1 + $0x1ce0] sm:$0xff]
      %v3428 = vld [vmem:[%s1 + $0x1ce8] sm:$0xff]
      %v3429 = vld [vmem:[%s1 + $0x1cf0] sm:$0xff]
      %v3430 = vld [vmem:[%s1 + $0x1cf8] sm:$0xff]
      %v3431 = vld [vmem:[%s1 + $0x1d00] sm:$0xff]
      %v3432 = vld [vmem:[%s1 + $0x1d08] sm:$0xff]
      %v3433 = vld [vmem:[%s1 + $0x1da0] sm:$0xff]
      %v3434 = vld [vmem:[%s1 + $0x1da8] sm:$0xff]
      %v3435 = vld [vmem:[%s1 + $0x1db0] sm:$0xff]
      %v3436 = vld [vmem:[%s1 + $0x1db8] sm:$0xff]
      %v3437 = vld [vmem:[%s1 + $0x1dc0] sm:$0xff]
      %v3438 = vld [vmem:[%s1 + $0x1dc8] sm:$0xff]
      %v3439 = vld [vmem:[%s1 + $0x1e60] sm:$0xff]
      %v3440 = vld [vmem:[%s1 + $0x1e68] sm:$0xff]
      %v3441 = vld [vmem:[%s1 + $0x1e70] sm:$0xff]
      %v3442 = vld [vmem:[%s1 + $0x1e78] sm:$0xff]
      %v3443 = vld [vmem:[%s1 + $0x1e80] sm:$0xff]
      %v3444 = vld [vmem:[%s1 + $0x1e88] sm:$0xff]
      %v3445 = vld [vmem:[%s1 + $0x1f20] sm:$0xff]
      %v3446 = vld [vmem:[%s1 + $0x1f28] sm:$0xff]
      %v3447 = vld [vmem:[%s1 + $0x1f30] sm:$0xff]
      %v3448 = vld [vmem:[%s1 + $0x1f38] sm:$0xff]
      %v3449 = vld [vmem:[%s1 + $0x1f40] sm:$0xff]
      %v3450 = vld [vmem:[%s1 + $0x1f48] sm:$0xff]
      %v3451 = vld [vmem:[%s1 + $0x1fe0] sm:$0xff]
      %v3452 = vld [vmem:[%s1 + $0x1fe8] sm:$0xff]
      %v3453 = vld [vmem:[%s1 + $0x1ff0] sm:$0xff]
      %v3454 = vld [vmem:[%s1 + $0x1ff8] sm:$0xff]
      %v3455 = vld [vmem:[%s1 + $0x2000] sm:$0xff]
      %v3456 = vld [vmem:[%s1 + $0x2008] sm:$0xff]
      %v3457 = vld [vmem:[%s1 + $0x20a0] sm:$0xff]
      %v3458 = vld [vmem:[%s1 + $0x20a8] sm:$0xff]
      %v3459 = vld [vmem:[%s1 + $0x20b0] sm:$0xff]
      %v3460 = vld [vmem:[%s1 + $0x20b8] sm:$0xff]
      %v3461 = vld [vmem:[%s1 + $0x20c0] sm:$0xff]
      %v3462 = vld [vmem:[%s1 + $0x20c8] sm:$0xff]
      %v3463 = vld [vmem:[%s1 + $0x2160] sm:$0xff]
      %v3464 = vld [vmem:[%s1 + $0x2168] sm:$0xff]
      %v3465 = vld [vmem:[%s1 + $0x2170] sm:$0xff]
      %v3466 = vld [vmem:[%s1 + $0x2178] sm:$0xff]
      %v3467 = vld [vmem:[%s1 + $0x2180] sm:$0xff]
      %v3468 = vld [vmem:[%s1 + $0x2188] sm:$0xff]
      %v3469 = vld [vmem:[%s1 + $0x2220] sm:$0xff]
      %v3470 = vld [vmem:[%s1 + $0x2228] sm:$0xff]
      %v3471 = vld [vmem:[%s1 + $0x2230] sm:$0xff]
      %v3472 = vld [vmem:[%s1 + $0x2238] sm:$0xff]
      %v3473 = vld [vmem:[%s1 + $0x2240] sm:$0xff]
      %v3474 = vld [vmem:[%s1 + $0x2248] sm:$0xff]
      %v3475 = vld [vmem:[%s1 + $0x22e0] sm:$0xff]
      %v3476 = vld [vmem:[%s1 + $0x22e8] sm:$0xff]
      %v3477 = vld [vmem:[%s1 + $0x22f0] sm:$0xff]
      %v3478 = vld [vmem:[%s1 + $0x22f8] sm:$0xff]
      %v3479 = vld [vmem:[%s1 + $0x2300] sm:$0xff]
      %v3480 = vld [vmem:[%s1 + $0x2308] sm:$0xff]
      %v3481 = vld [vmem:[%s1 + $0x23a0] sm:$0xff]
      %v3482 = vld [vmem:[%s1 + $0x23a8] sm:$0xff]
      %v3483 = vld [vmem:[%s1 + $0x23b0] sm:$0xff]
      %v3484 = vld [vmem:[%s1 + $0x23b8] sm:$0xff]
      %v3485 = vld [vmem:[%s1 + $0x23c0] sm:$0xff]
      %v3486 = vld [vmem:[%s1 + $0x23c8] sm:$0xff]
      %v3487 = vld [vmem:[%s1 + $0x2460] sm:$0xff]
      %v3488 = vld [vmem:[%s1 + $0x2468] sm:$0xff]
      %v3489 = vld [vmem:[%s1 + $0x2470] sm:$0xff]
      %v3490 = vld [vmem:[%s1 + $0x2478] sm:$0xff]
      %v3491 = vld [vmem:[%s1 + $0x2480] sm:$0xff]
      %v3492 = vld [vmem:[%s1 + $0x2488] sm:$0xff]
      %v3493 = vld [vmem:[%s1 + $0x2520] sm:$0xff]
      %v3494 = vld [vmem:[%s1 + $0x2528] sm:$0xff]
      %v3495 = vld [vmem:[%s1 + $0x2530] sm:$0xff]
      %v3496 = vld [vmem:[%s1 + $0x2538] sm:$0xff]
      %v3497 = vld [vmem:[%s1 + $0x2540] sm:$0xff]
      %v3498 = vld [vmem:[%s1 + $0x2548] sm:$0xff]
      %v3499 = vld [vmem:[%s1 + $0x25e0] sm:$0xff]
      %v3500 = vld [vmem:[%s1 + $0x25e8] sm:$0xff]
      %v3501 = vld [vmem:[%s1 + $0x25f0] sm:$0xff]
      %v3502 = vld [vmem:[%s1 + $0x25f8] sm:$0xff]
      %v3503 = vld [vmem:[%s1 + $0x2600] sm:$0xff]
      %v3504 = vld [vmem:[%s1 + $0x2608] sm:$0xff]
      %v3505 = vld [vmem:[%s1 + $0x26a0] sm:$0xff]
      %v3506 = vld [vmem:[%s1 + $0x26a8] sm:$0xff]
      %v3507 = vld [vmem:[%s1 + $0x26b0] sm:$0xff]
      %v3508 = vld [vmem:[%s1 + $0x26b8] sm:$0xff]
      %v3509 = vld [vmem:[%s1 + $0x26c0] sm:$0xff]
      %v3510 = vld [vmem:[%s1 + $0x26c8] sm:$0xff]
      %v3511 = vld [vmem:[%s1 + $0x2760] sm:$0xff]
      %v3512 = vld [vmem:[%s1 + $0x2768] sm:$0xff]
      %v3513 = vld [vmem:[%s1 + $0x2770] sm:$0xff]
      %v3514 = vld [vmem:[%s1 + $0x2778] sm:$0xff]
      %v3515 = vld [vmem:[%s1 + $0x2780] sm:$0xff]
      %v3516 = vld [vmem:[%s1 + $0x2788] sm:$0xff]
      %v3517 = vld [vmem:[%s1 + $0x2820] sm:$0xff]
      %v3518 = vld [vmem:[%s1 + $0x2828] sm:$0xff]
      %v3519 = vld [vmem:[%s1 + $0x2830] sm:$0xff]
      %v3520 = vld [vmem:[%s1 + $0x2838] sm:$0xff]
      %v3521 = vld [vmem:[%s1 + $0x2840] sm:$0xff]
      %v3522 = vld [vmem:[%s1 + $0x2848] sm:$0xff]
      %v3523 = vld [vmem:[%s1 + $0x28e0] sm:$0xff]
      %v3524 = vld [vmem:[%s1 + $0x28e8] sm:$0xff]
      %v3525 = vld [vmem:[%s1 + $0x28f0] sm:$0xff]
      %v3526 = vld [vmem:[%s1 + $0x28f8] sm:$0xff]
      %v3527 = vld [vmem:[%s1 + $0x2900] sm:$0xff]
      %v3528 = vld [vmem:[%s1 + $0x2908] sm:$0xff]
      %v3529 = vld [vmem:[%s1 + $0x29a0] sm:$0xff]
      %v3530 = vld [vmem:[%s1 + $0x29a8] sm:$0xff]
      %v3531 = vld [vmem:[%s1 + $0x29b0] sm:$0xff]
      %v3532 = vld [vmem:[%s1 + $0x29b8] sm:$0xff]
      %v3533 = vld [vmem:[%s1 + $0x29c0] sm:$0xff]
      %v3534 = vld [vmem:[%s1 + $0x29c8] sm:$0xff]
      %v3535 = vld [vmem:[%s1 + $0x2a60] sm:$0xff]
      %v3536 = vld [vmem:[%s1 + $0x2a68] sm:$0xff]
      %v3537 = vld [vmem:[%s1 + $0x2a70] sm:$0xff]
      %v3538 = vld [vmem:[%s1 + $0x2a78] sm:$0xff]
      %v3539 = vld [vmem:[%s1 + $0x2a80] sm:$0xff]
      %v3540 = vld [vmem:[%s1 + $0x2a88] sm:$0xff]
      %v3541 = vld [vmem:[%s1 + $0x2b20] sm:$0xff]
      %v3542 = vld [vmem:[%s1 + $0x2b28] sm:$0xff]
      %v3543 = vld [vmem:[%s1 + $0x2b30] sm:$0xff]
      %v3544 = vld [vmem:[%s1 + $0x2b38] sm:$0xff]
      %v3545 = vld [vmem:[%s1 + $0x2b40] sm:$0xff]
      %v3546 = vld [vmem:[%s1 + $0x2b48] sm:$0xff]
      %v3547 = vld [vmem:[%s1 + $0x2be0] sm:$0xff]
      %v3548 = vld [vmem:[%s1 + $0x2be8] sm:$0xff]
      %v3549 = vld [vmem:[%s1 + $0x2bf0] sm:$0xff]
      %v3550 = vld [vmem:[%s1 + $0x2bf8] sm:$0xff]
      %v3551 = vld [vmem:[%s1 + $0x2c00] sm:$0xff]
      %v3552 = vld [vmem:[%s1 + $0x2c08] sm:$0xff]
      %v3553 = vld [vmem:[%s1 + $0x2ca0] sm:$0xff]
      %v3554 = vld [vmem:[%s1 + $0x2ca8] sm:$0xff]
      %v3555 = vld [vmem:[%s1 + $0x2cb0] sm:$0xff]
      %v3556 = vld [vmem:[%s1 + $0x2cb8] sm:$0xff]
      %v3557 = vld [vmem:[%s1 + $0x2cc0] sm:$0xff]
      %v3558 = vld [vmem:[%s1 + $0x2cc8] sm:$0xff]
      %v3559 = vld [vmem:[%s1 + $0x2d60] sm:$0xff]
      %v3560 = vld [vmem:[%s1 + $0x2d68] sm:$0xff]
      %v3561 = vld [vmem:[%s1 + $0x2d70] sm:$0xff]
      %v3562 = vld [vmem:[%s1 + $0x2d78] sm:$0xff]
      %v3563 = vld [vmem:[%s1 + $0x2d80] sm:$0xff]
      %v3564 = vld [vmem:[%s1 + $0x2d88] sm:$0xff]
      %v3565 = vld [vmem:[%s1 + $0x2e20] sm:$0xff]
      %v3566 = vld [vmem:[%s1 + $0x2e28] sm:$0xff]
      %v3567 = vld [vmem:[%s1 + $0x2e30] sm:$0xff]
      %v3568 = vld [vmem:[%s1 + $0x2e38] sm:$0xff]
      %v3569 = vld [vmem:[%s1 + $0x2e40] sm:$0xff]
      %v3570 = vld [vmem:[%s1 + $0x2e48] sm:$0xff]
      %v3571 = vld [vmem:[%s1 + $0x2ee0] sm:$0xff]
      %v3572 = vld [vmem:[%s1 + $0x2ee8] sm:$0xff]
      %v3573 = vld [vmem:[%s1 + $0x2ef0] sm:$0xff]
      %v3574 = vld [vmem:[%s1 + $0x2ef8] sm:$0xff]
      %v3575 = vld [vmem:[%s1 + $0x2f00] sm:$0xff]
      %v3576 = vld [vmem:[%s1 + $0x2f08] sm:$0xff]
      %v3577 = vld [vmem:[%s1 + $0x2fa0] sm:$0xff]
      %v3578 = vld [vmem:[%s1 + $0x2fa8] sm:$0xff]
      %v3579 = vld [vmem:[%s1 + $0x2fb0] sm:$0xff]
      %v3580 = vld [vmem:[%s1 + $0x2fb8] sm:$0xff]
      %v3581 = vld [vmem:[%s1 + $0x2fc0] sm:$0xff]
      %v3582 = vld [vmem:[%s1 + $0x2fc8] sm:$0xff]
      %3583 = vmatprep.subr.mxu0 %v3200
      %3584 = vmatpush1.msra.mxu0 %v3199
      %3585 = vmatprep.subr.mxu0 %v3206
      %3586 = vmatpush1.msra.mxu0 %v3205
      %3587 = vmatprep.subr.mxu0 %v3212
      %3588 = vmatpush1.msra.mxu0 %v3211
      %3589 = vmatprep.subr.mxu0 %v3218
      %3590 = vmatpush1.msra.mxu0 %v3217
      %3591 = vmatprep.subr.mxu0 %v3224
      %3592 = vmatpush1.msra.mxu0 %v3223
      %3593 = vmatprep.subr.mxu0 %v3230
      %3594 = vmatpush1.msra.mxu0 %v3229
      %3595 = vmatprep.subr.mxu0 %v3236
      %3596 = vmatpush1.msra.mxu0 %v3235
      %3597 = vmatprep.subr.mxu0 %v3242
      %3598 = vmatpush1.msra.mxu0 %v3241
      %3599 = vmatprep.subr.mxu0 %v3248
      %3600 = vmatpush1.msra.mxu0 %v3247
      %3601 = vmatprep.subr.mxu0 %v3254
      %3602 = vmatpush1.msra.mxu0 %v3253
      %3603 = vmatprep.subr.mxu0 %v3260
      %3604 = vmatpush1.msra.mxu0 %v3259
      %3605 = vmatprep.subr.mxu0 %v3266
      %3606 = vmatpush1.msra.mxu0 %v3265
      %3607 = vmatprep.subr.mxu0 %v3272
      %3608 = vmatpush1.msra.mxu0 %v3271
      %3609 = vmatprep.subr.mxu0 %v3278
      %3610 = vmatpush1.msra.mxu0 %v3277
      %3611 = vmatprep.subr.mxu0 %v3284
      %3612 = vmatpush1.msra.mxu0 %v3283
      %3613 = vmatprep.subr.mxu0 %v3290
      %3614 = vmatpush1.msra.mxu0 %v3289
      %3615 = vmatprep.subr.mxu0 %v3296
      %3616 = vmatpush1.msra.mxu0 %v3295
      %3617 = vmatprep.subr.mxu0 %v3302
      %3618 = vmatpush1.msra.mxu0 %v3301
      %3619 = vmatprep.subr.mxu0 %v3308
      %3620 = vmatpush1.msra.mxu0 %v3307
      %3621 = vmatprep.subr.mxu0 %v3314
      %3622 = vmatpush1.msra.mxu0 %v3313
      %3623 = vmatprep.subr.mxu0 %v3320
      %3624 = vmatpush1.msra.mxu0 %v3319
      %3625 = vmatprep.subr.mxu0 %v3326
      %3626 = vmatpush1.msra.mxu0 %v3325
      %3627 = vmatprep.subr.mxu0 %v3332
      %3628 = vmatpush1.msra.mxu0 %v3331
      %3629 = vmatprep.subr.mxu0 %v3338
      %3630 = vmatpush1.msra.mxu0 %v3337
      %3631 = vmatprep.subr.mxu0 %v3344
      %3632 = vmatpush1.msra.mxu0 %v3343
      %3633 = vmatprep.subr.mxu0 %v3350
      %3634 = vmatpush1.msra.mxu0 %v3349
      %3635 = vmatprep.subr.mxu0 %v3356
      %3636 = vmatpush1.msra.mxu0 %v3355
      %3637 = vmatprep.subr.mxu0 %v3362
      %3638 = vmatpush1.msra.mxu0 %v3361
      %3639 = vmatprep.subr.mxu0 %v3368
      %3640 = vmatpush1.msra.mxu0 %v3367
      %3641 = vmatprep.subr.mxu0 %v3374
      %3642 = vmatpush1.msra.mxu0 %v3373
      %3643 = vmatprep.subr.mxu0 %v3380
      %3644 = vmatpush1.msra.mxu0 %v3379
      %3645 = vmatprep.subr.mxu0 %v3386
      %3646 = vmatpush1.msra.mxu0 %v3385
      %3647 = vmatprep.mubr.f32.mxu0 %v340
      %3648 = vmatmul.mubr.f32.gmra.mrb[0].mxu0 %v339
      %v3649 = vpop.f32.mrb[0].mxu0
      %v3650 = vadd.f32 0.0, %v3649
      %v3651 = vpop.f32.mrb[0].mxu0
      %v3652 = vadd.f32 0.0, %v3651
      %3653 = vmatprep.mubr.f32.mxu0 %v344
      %3654 = vmatmul.mubr.f32.gmra.mrb[0].mxu0 %v343
      %v3655 = vpop.f32.mrb[0].mxu0
      %v3656 = vadd.f32 0.0, %v3655
      %v3657 = vpop.f32.mrb[0].mxu0
      %v3658 = vadd.f32 0.0, %v3657
      %3659 = vmatprep.mubr.f32.mxu0 %v348
      %3660 = vmatmul.mubr.f32.gmra.mrb[0].mxu0 %v347
      %v3661 = vpop.f32.mrb[0].mxu0
      %v3662 = vadd.f32 0.0, %v3661
      %v3663 = vpop.f32.mrb[0].mxu0
      %v3664 = vadd.f32 0.0, %v3663
      %3665 = vmatprep.mubr.f32.mxu0 %v352
      %3666 = vmatmul.mubr.f32.gmra.mrb[0].mxu0 %v351
      %v3667 = vpop.f32.mrb[0].mxu0
      %v3668 = vadd.f32 0.0, %v3667
      %v3669 = vpop.f32.mrb[0].mxu0
      %v3670 = vadd.f32 0.0, %v3669
      %3671 = vmatprep.mubr.f32.mxu0 %v356
      %3672 = vmatmul.mubr.f32.gmra.mrb[0].mxu0 %v355
      %v3673 = vpop.f32.mrb[0].mxu0
      %v3674 = vadd.f32 0.0, %v3673
      %v3675 = vpop.f32.mrb[0].mxu0
      %v3676 = vadd.f32 0.0, %v3675
      %3677 = vmatprep.mubr.f32.mxu0 %v360
      %3678 = vmatmul.mubr.f32.gmra.mrb[0].mxu0 %v359
      %v3679 = vpop.f32.mrb[0].mxu0
      %v3680 = vadd.f32 0.0, %v3679
      %v3681 = vpop.f32.mrb[0].mxu0
      %v3682 = vadd.f32 0.0, %v3681
      %3683 = vmatprep.mubr.f32.mxu0 %v364
      %3684 = vmatmul.mubr.f32.gmra.mrb[0].mxu0 %v363
      %v3685 = vpop.f32.mrb[0].mxu0
      %v3686 = vadd.f32 0.0, %v3685
      %v3687 = vpop.f32.mrb[0].mxu0
      %v3688 = vadd.f32 0.0, %v3687
      %3689 = vmatprep.mubr.f32.mxu0 %v368
      %3690 = vmatmul.mubr.f32.gmra.mrb[0].mxu0 %v367
      %v3691 = vpop.f32.mrb[0].mxu0
      %v3692 = vadd.f32 0.0, %v3691
      %v3693 = vpop.f32.mrb[0].mxu0
      %v3694 = vadd.f32 0.0, %v3693
      %3695 = vmatprep.mubr.f32.mxu0 %v372
      %3696 = vmatmul.mubr.f32.gmra.mrb[0].mxu0 %v371
      %v3697 = vpop.f32.mrb[0].mxu0
      %v3698 = vadd.f32 0.0, %v3697
      %v3699 = vpop.f32.mrb[0].mxu0
      %v3700 = vadd.f32 0.0, %v3699
      %3701 = vmatprep.mubr.f32.mxu0 %v376
      %3702 = vmatmul.mubr.f32.gmra.mrb[0].mxu0 %v375
      %v3703 = vpop.f32.mrb[0].mxu0
      %v3704 = vadd.f32 0.0, %v3703
      %v3705 = vpop.f32.mrb[0].mxu0
      %v3706 = vadd.f32 0.0, %v3705
      %3707 = vmatprep.mubr.f32.mxu0 %v380
      %3708 = vmatmul.mubr.f32.gmra.mrb[0].mxu0 %v379
      %v3709 = vpop.f32.mrb[0].mxu0
      %v3710 = vadd.f32 0.0, %v3709
      %v3711 = vpop.f32.mrb[0].mxu0
      %v3712 = vadd.f32 0.0, %v3711
      %3713 = vmatprep.mubr.f32.mxu0 %v384
      %3714 = vmatmul.mubr.f32.gmra.mrb[0].mxu0 %v383
      %v3715 = vpop.f32.mrb[0].mxu0
      %v3716 = vadd.f32 0.0, %v3715
      %v3717 = vpop.f32.mrb[0].mxu0
      %v3718 = vadd.f32 0.0, %v3717
      %3719 = vmatprep.mubr.f32.mxu0 %v388
      %3720 = vmatmul.mubr.f32.gmra.mrb[0].mxu0 %v387
      %v3721 = vpop.f32.mrb[0].mxu0
      %v3722 = vadd.f32 0.0, %v3721
      %v3723 = vpop.f32.mrb[0].mxu0
      %v3724 = vadd.f32 0.0, %v3723
      %3725 = vmatprep.mubr.f32.mxu0 %v392
      %3726 = vmatmul.mubr.f32.gmra.mrb[0].mxu0 %v391
      %v3727 = vpop.f32.mrb[0].mxu0
      %v3728 = vadd.f32 0.0, %v3727
      %v3729 = vpop.f32.mrb[0].mxu0
      %v3730 = vadd.f32 0.0, %v3729
      %3731 = vmatprep.mubr.f32.mxu0 %v396
      %3732 = vmatmul.mubr.f32.gmra.mrb[0].mxu0 %v395
      %v3733 = vpop.f32.mrb[0].mxu0
      %v3734 = vadd.f32 0.0, %v3733
      %v3735 = vpop.f32.mrb[0].mxu0
      %v3736 = vadd.f32 0.0, %v3735
      %3737 = vmatprep.mubr.f32.mxu0 %v400
      %3738 = vmatmul.mubr.f32.gmra.mrb[0].mxu0 %v399
      %v3739 = vpop.f32.mrb[0].mxu0
      %v3740 = vadd.f32 0.0, %v3739
      %v3741 = vpop.f32.mrb[0].mxu0
      %v3742 = vadd.f32 0.0, %v3741
      %3743 = vdwg.mxu0
      %3744 = vmatprep.subr.mxu0 %v3392
      %3745 = vmatpush1.msra.mxu0 %v3391
      %3746 = vmatprep.subr.mxu0 %v3398
      %3747 = vmatpush1.msra.mxu0 %v3397
      %3748 = vmatprep.subr.mxu0 %v3404
      %3749 = vmatpush1.msra.mxu0 %v3403
      %3750 = vmatprep.subr.mxu0 %v3410
      %3751 = vmatpush1.msra.mxu0 %v3409
      %3752 = vmatprep.subr.mxu0 %v3416
      %3753 = vmatpush1.msra.mxu0 %v3415
      %3754 = vmatprep.subr.mxu0 %v3422
      %3755 = vmatpush1.msra.mxu0 %v3421
      %3756 = vmatprep.subr.mxu0 %v3428
      %3757 = vmatpush1.msra.mxu0 %v3427
      %3758 = vmatprep.subr.mxu0 %v3434
      %3759 = vmatpush1.msra.mxu0 %v3433
      %3760 = vmatprep.subr.mxu0 %v3440
      %3761 = vmatpush1.msra.mxu0 %v3439
      %3762 = vmatprep.subr.mxu0 %v3446
      %3763 = vmatpush1.msra.mxu0 %v3445
      %3764 = vmatprep.subr.mxu0 %v3452
      %3765 = vmatpush1.msra.mxu0 %v3451
      %3766 = vmatprep.subr.mxu0 %v3458
      %3767 = vmatpush1.msra.mxu0 %v3457
      %3768 = vmatprep.subr.mxu0 %v3464
      %3769 = vmatpush1.msra.mxu0 %v3463
      %3770 = vmatprep.subr.mxu0 %v3470
      %3771 = vmatpush1.msra.mxu0 %v3469
      %3772 = vmatprep.subr.mxu0 %v3476
      %3773 = vmatpush1.msra.mxu0 %v3475
      %3774 = vmatprep.subr.mxu0 %v3482
      %3775 = vmatpush1.msra.mxu0 %v3481
      %3776 = vmatprep.subr.mxu0 %v3488
      %3777 = vmatpush1.msra.mxu0 %v3487
      %3778 = vmatprep.subr.mxu0 %v3494
      %3779 = vmatpush1.msra.mxu0 %v3493
      %3780 = vmatprep.subr.mxu0 %v3500
      %3781 = vmatpush1.msra.mxu0 %v3499
      %3782 = vmatprep.subr.mxu0 %v3506
      %3783 = vmatpush1.msra.mxu0 %v3505
      %3784 = vmatprep.subr.mxu0 %v3512
      %3785 = vmatpush1.msra.mxu0 %v3511
      %3786 = vmatprep.subr.mxu0 %v3518
      %3787 = vmatpush1.msra.mxu0 %v3517
      %3788 = vmatprep.subr.mxu0 %v3524
      %3789 = vmatpush1.msra.mxu0 %v3523
      %3790 = vmatprep.subr.mxu0 %v3530
      %3791 = vmatpush1.msra.mxu0 %v3529
      %3792 = vmatprep.subr.mxu0 %v3536
      %3793 = vmatpush1.msra.mxu0 %v3535
      %3794 = vmatprep.subr.mxu0 %v3542
      %3795 = vmatpush1.msra.mxu0 %v3541
      %3796 = vmatprep.subr.mxu0 %v3548
      %3797 = vmatpush1.msra.mxu0 %v3547
      %3798 = vmatprep.subr.mxu0 %v3554
      %3799 = vmatpush1.msra.mxu0 %v3553
      %3800 = vmatprep.subr.mxu0 %v3560
      %3801 = vmatpush1.msra.mxu0 %v3559
      %3802 = vmatprep.subr.mxu0 %v3566
      %3803 = vmatpush1.msra.mxu0 %v3565
      %3804 = vmatprep.subr.mxu0 %v3572
      %3805 = vmatpush1.msra.mxu0 %v3571
      %3806 = vmatprep.subr.mxu0 %v3578
      %3807 = vmatpush1.msra.mxu0 %v3577
      %3808 = vmatprep.mubr.f32.mxu0 %v342
      %3809 = vmatmul.mubr.f32.gmra.mrb[0].mxu0 %v341
      %v3810 = vpop.f32.mrb[0].mxu0
      %v3811 = vadd.f32 %v3650, %v3810
      %v3812 = vpop.f32.mrb[0].mxu0
      %v3813 = vadd.f32 %v3652, %v3812
      %3814 = vmatprep.mubr.f32.mxu0 %v346
      %3815 = vmatmul.mubr.f32.gmra.mrb[0].mxu0 %v345
      %v3816 = vpop.f32.mrb[0].mxu0
      %v3817 = vadd.f32 %v3656, %v3816
      %v3818 = vpop.f32.mrb[0].mxu0
      %v3819 = vadd.f32 %v3658, %v3818
      %3820 = vmatprep.mubr.f32.mxu0 %v350
      %3821 = vmatmul.mubr.f32.gmra.mrb[0].mxu0 %v349
      %v3822 = vpop.f32.mrb[0].mxu0
      %v3823 = vadd.f32 %v3662, %v3822
      %v3824 = vpop.f32.mrb[0].mxu0
      %v3825 = vadd.f32 %v3664, %v3824
      %3826 = vmatprep.mubr.f32.mxu0 %v354
      %3827 = vmatmul.mubr.f32.gmra.mrb[0].mxu0 %v353
      %v3828 = vpop.f32.mrb[0].mxu0
      %v3829 = vadd.f32 %v3668, %v3828
      %v3830 = vpop.f32.mrb[0].mxu0
      %v3831 = vadd.f32 %v3670, %v3830
      %3832 = vmatprep.mubr.f32.mxu0 %v358
      %3833 = vmatmul.mubr.f32.gmra.mrb[0].mxu0 %v357
      %v3834 = vpop.f32.mrb[0].mxu0
      %v3835 = vadd.f32 %v3674, %v3834
      %v3836 = vpop.f32.mrb[0].mxu0
      %v3837 = vadd.f32 %v3676, %v3836
      %3838 = vmatprep.mubr.f32.mxu0 %v362
      %3839 = vmatmul.mubr.f32.gmra.mrb[0].mxu0 %v361
      %v3840 = vpop.f32.mrb[0].mxu0
      %v3841 = vadd.f32 %v3680, %v3840
      %v3842 = vpop.f32.mrb[0].mxu0
      %v3843 = vadd.f32 %v3682, %v3842
      %3844 = vmatprep.mubr.f32.mxu0 %v366
      %3845 = vmatmul.mubr.f32.gmra.mrb[0].mxu0 %v365
      %v3846 = vpop.f32.mrb[0].mxu0
      %v3847 = vadd.f32 %v3686, %v3846
      %v3848 = vpop.f32.mrb[0].mxu0
      %v3849 = vadd.f32 %v3688, %v3848
      %3850 = vmatprep.mubr.f32.mxu0 %v370
      %3851 = vmatmul.mubr.f32.gmra.mrb[0].mxu0 %v369
      %v3852 = vpop.f32.mrb[0].mxu0
      %v3853 = vadd.f32 %v3692, %v3852
      %v3854 = vpop.f32.mrb[0].mxu0
      %v3855 = vadd.f32 %v3694, %v3854
      %3856 = vmatprep.mubr.f32.mxu0 %v374
      %3857 = vmatmul.mubr.f32.gmra.mrb[0].mxu0 %v373
      %v3858 = vpop.f32.mrb[0].mxu0
      %v3859 = vadd.f32 %v3698, %v3858
      %v3860 = vpop.f32.mrb[0].mxu0
      %v3861 = vadd.f32 %v3700, %v3860
      %3862 = vmatprep.mubr.f32.mxu0 %v378
      %3863 = vmatmul.mubr.f32.gmra.mrb[0].mxu0 %v377
      %v3864 = vpop.f32.mrb[0].mxu0
      %v3865 = vadd.f32 %v3704, %v3864
      %v3866 = vpop.f32.mrb[0].mxu0
      %v3867 = vadd.f32 %v3706, %v3866
      %3868 = vmatprep.mubr.f32.mxu0 %v382
      %3869 = vmatmul.mubr.f32.gmra.mrb[0].mxu0 %v381
      %v3870 = vpop.f32.mrb[0].mxu0
      %v3871 = vadd.f32 %v3710, %v3870
      %v3872 = vpop.f32.mrb[0].mxu0
      %v3873 = vadd.f32 %v3712, %v3872
      %3874 = vmatprep.mubr.f32.mxu0 %v386
      %3875 = vmatmul.mubr.f32.gmra.mrb[0].mxu0 %v385
      %v3876 = vpop.f32.mrb[0].mxu0
      %v3877 = vadd.f32 %v3716, %v3876
      %v3878 = vpop.f32.mrb[0].mxu0
      %v3879 = vadd.f32 %v3718, %v3878
      %3880 = vmatprep.mubr.f32.mxu0 %v390
      %3881 = vmatmul.mubr.f32.gmra.mrb[0].mxu0 %v389
      %v3882 = vpop.f32.mrb[0].mxu0
      %v3883 = vadd.f32 %v3722, %v3882
      %v3884 = vpop.f32.mrb[0].mxu0
      %v3885 = vadd.f32 %v3724, %v3884
      %3886 = vmatprep.mubr.f32.mxu0 %v394
      %3887 = vmatmul.mubr.f32.gmra.mrb[0].mxu0 %v393
      %v3888 = vpop.f32.mrb[0].mxu0
      %v3889 = vadd.f32 %v3728, %v3888
      %v3890 = vpop.f32.mrb[0].mxu0
      %v3891 = vadd.f32 %v3730, %v3890
      %3892 = vmatprep.mubr.f32.mxu0 %v398
      %3893 = vmatmul.mubr.f32.gmra.mrb[0].mxu0 %v397
      %v3894 = vpop.f32.mrb[0].mxu0
      %v3895 = vadd.f32 %v3734, %v3894
      %v3896 = vpop.f32.mrb[0].mxu0
      %v3897 = vadd.f32 %v3736, %v3896
      %3898 = vmatprep.mubr.f32.mxu0 %v402
      %3899 = vmatmul.mubr.f32.gmra.mrb[0].mxu0 %v401
      %v3900 = vpop.f32.mrb[0].mxu0
      %v3901 = vadd.f32 %v3740, %v3900
      %v3902 = vpop.f32.mrb[0].mxu0
      %v3903 = vadd.f32 %v3742, %v3902
      %3904 = vdwg.mxu0
      %3905 = vmatprep.subr.mxu0 %v3202
      %3906 = vmatpush1.msra.mxu0 %v3201
      %3907 = vmatprep.subr.mxu0 %v3208
      %3908 = vmatpush1.msra.mxu0 %v3207
      %3909 = vmatprep.subr.mxu0 %v3214
      %3910 = vmatpush1.msra.mxu0 %v3213
      %3911 = vmatprep.subr.mxu0 %v3220
      %3912 = vmatpush1.msra.mxu0 %v3219
      %3913 = vmatprep.subr.mxu0 %v3226
      %3914 = vmatpush1.msra.mxu0 %v3225
      %3915 = vmatprep.subr.mxu0 %v3232
      %3916 = vmatpush1.msra.mxu0 %v3231
      %3917 = vmatprep.subr.mxu0 %v3238
      %3918 = vmatpush1.msra.mxu0 %v3237
      %3919 = vmatprep.subr.mxu0 %v3244
      %3920 = vmatpush1.msra.mxu0 %v3243
      %3921 = vmatprep.subr.mxu0 %v3250
      %3922 = vmatpush1.msra.mxu0 %v3249
      %3923 = vmatprep.subr.mxu0 %v3256
      %3924 = vmatpush1.msra.mxu0 %v3255
      %3925 = vmatprep.subr.mxu0 %v3262
      %3926 = vmatpush1.msra.mxu0 %v3261
      %3927 = vmatprep.subr.mxu0 %v3268
      %3928 = vmatpush1.msra.mxu0 %v3267
      %3929 = vmatprep.subr.mxu0 %v3274
      %3930 = vmatpush1.msra.mxu0 %v3273
      %3931 = vmatprep.subr.mxu0 %v3280
      %3932 = vmatpush1.msra.mxu0 %v3279
      %3933 = vmatprep.subr.mxu0 %v3286
      %3934 = vmatpush1.msra.mxu0 %v3285
      %3935 = vmatprep.subr.mxu0 %v3292
      %3936 = vmatpush1.msra.mxu0 %v3291
      %3937 = vmatprep.subr.mxu0 %v3298
      %3938 = vmatpush1.msra.mxu0 %v3297
      %3939 = vmatprep.subr.mxu0 %v3304
      %3940 = vmatpush1.msra.mxu0 %v3303
      %3941 = vmatprep.subr.mxu0 %v3310
      %3942 = vmatpush1.msra.mxu0 %v3309
      %3943 = vmatprep.subr.mxu0 %v3316
      %3944 = vmatpush1.msra.mxu0 %v3315
      %3945 = vmatprep.subr.mxu0 %v3322
      %3946 = vmatpush1.msra.mxu0 %v3321
      %3947 = vmatprep.subr.mxu0 %v3328
      %3948 = vmatpush1.msra.mxu0 %v3327
      %3949 = vmatprep.subr.mxu0 %v3334
      %3950 = vmatpush1.msra.mxu0 %v3333
      %3951 = vmatprep.subr.mxu0 %v3340
      %3952 = vmatpush1.msra.mxu0 %v3339
      %3953 = vmatprep.subr.mxu0 %v3346
      %3954 = vmatpush1.msra.mxu0 %v3345
      %3955 = vmatprep.subr.mxu0 %v3352
      %3956 = vmatpush1.msra.mxu0 %v3351
      %3957 = vmatprep.subr.mxu0 %v3358
      %3958 = vmatpush1.msra.mxu0 %v3357
      %3959 = vmatprep.subr.mxu0 %v3364
      %3960 = vmatpush1.msra.mxu0 %v3363
      %3961 = vmatprep.subr.mxu0 %v3370
      %3962 = vmatpush1.msra.mxu0 %v3369
      %3963 = vmatprep.subr.mxu0 %v3376
      %3964 = vmatpush1.msra.mxu0 %v3375
      %3965 = vmatprep.subr.mxu0 %v3382
      %3966 = vmatpush1.msra.mxu0 %v3381
      %3967 = vmatprep.subr.mxu0 %v3388
      %3968 = vmatpush1.msra.mxu0 %v3387
      %3969 = vmatprep.mubr.f32.mxu0 %v340
      %3970 = vmatmul.mubr.f32.gmra.mrb[0].mxu0 %v339
      %v3971 = vpop.f32.mrb[0].mxu0
      %v3972 = vadd.f32 0.0, %v3971
      %v3973 = vpop.f32.mrb[0].mxu0
      %v3974 = vadd.f32 0.0, %v3973
      %3975 = vmatprep.mubr.f32.mxu0 %v344
      %3976 = vmatmul.mubr.f32.gmra.mrb[0].mxu0 %v343
      %v3977 = vpop.f32.mrb[0].mxu0
      %v3978 = vadd.f32 0.0, %v3977
      %v3979 = vpop.f32.mrb[0].mxu0
      %v3980 = vadd.f32 0.0, %v3979
      %3981 = vmatprep.mubr.f32.mxu0 %v348
      %3982 = vmatmul.mubr.f32.gmra.mrb[0].mxu0 %v347
      %v3983 = vpop.f32.mrb[0].mxu0
      %v3984 = vadd.f32 0.0, %v3983
      %v3985 = vpop.f32.mrb[0].mxu0
      %v3986 = vadd.f32 0.0, %v3985
      %3987 = vmatprep.mubr.f32.mxu0 %v352
      %3988 = vmatmul.mubr.f32.gmra.mrb[0].mxu0 %v351
      %v3989 = vpop.f32.mrb[0].mxu0
      %v3990 = vadd.f32 0.0, %v3989
      %v3991 = vpop.f32.mrb[0].mxu0
      %v3992 = vadd.f32 0.0, %v3991
      %3993 = vmatprep.mubr.f32.mxu0 %v356
      %3994 = vmatmul.mubr.f32.gmra.mrb[0].mxu0 %v355
      %v3995 = vpop.f32.mrb[0].mxu0
      %v3996 = vadd.f32 0.0, %v3995
      %v3997 = vpop.f32.mrb[0].mxu0
      %v3998 = vadd.f32 0.0, %v3997
      %3999 = vmatprep.mubr.f32.mxu0 %v360
      %4000 = vmatmul.mubr.f32.gmra.mrb[0].mxu0 %v359
      %v4001 = vpop.f32.mrb[0].mxu0
      %v4002 = vadd.f32 0.0, %v4001
      %v4003 = vpop.f32.mrb[0].mxu0
      %v4004 = vadd.f32 0.0, %v4003
      %4005 = vmatprep.mubr.f32.mxu0 %v364
      %4006 = vmatmul.mubr.f32.gmra.mrb[0].mxu0 %v363
      %v4007 = vpop.f32.mrb[0].mxu0
      %v4008 = vadd.f32 0.0, %v4007
      %v4009 = vpop.f32.mrb[0].mxu0
      %v4010 = vadd.f32 0.0, %v4009
      %4011 = vmatprep.mubr.f32.mxu0 %v368
      %4012 = vmatmul.mubr.f32.gmra.mrb[0].mxu0 %v367
      %v4013 = vpop.f32.mrb[0].mxu0
      %v4014 = vadd.f32 0.0, %v4013
      %v4015 = vpop.f32.mrb[0].mxu0
      %v4016 = vadd.f32 0.0, %v4015
      %4017 = vmatprep.mubr.f32.mxu0 %v372
      %4018 = vmatmul.mubr.f32.gmra.mrb[0].mxu0 %v371
      %v4019 = vpop.f32.mrb[0].mxu0
      %v4020 = vadd.f32 0.0, %v4019
      %v4021 = vpop.f32.mrb[0].mxu0
      %v4022 = vadd.f32 0.0, %v4021
      %4023 = vmatprep.mubr.f32.mxu0 %v376
      %4024 = vmatmul.mubr.f32.gmra.mrb[0].mxu0 %v375
      %v4025 = vpop.f32.mrb[0].mxu0
      %v4026 = vadd.f32 0.0, %v4025
      %v4027 = vpop.f32.mrb[0].mxu0
      %v4028 = vadd.f32 0.0, %v4027
      %4029 = vmatprep.mubr.f32.mxu0 %v380
      %4030 = vmatmul.mubr.f32.gmra.mrb[0].mxu0 %v379
      %v4031 = vpop.f32.mrb[0].mxu0
      %v4032 = vadd.f32 0.0, %v4031
      %v4033 = vpop.f32.mrb[0].mxu0
      %v4034 = vadd.f32 0.0, %v4033
      %4035 = vmatprep.mubr.f32.mxu0 %v384
      %4036 = vmatmul.mubr.f32.gmra.mrb[0].mxu0 %v383
      %v4037 = vpop.f32.mrb[0].mxu0
      %v4038 = vadd.f32 0.0, %v4037
      %v4039 = vpop.f32.mrb[0].mxu0
      %v4040 = vadd.f32 0.0, %v4039
      %4041 = vmatprep.mubr.f32.mxu0 %v388
      %4042 = vmatmul.mubr.f32.gmra.mrb[0].mxu0 %v387
      %v4043 = vpop.f32.mrb[0].mxu0
      %v4044 = vadd.f32 0.0, %v4043
      %v4045 = vpop.f32.mrb[0].mxu0
      %v4046 = vadd.f32 0.0, %v4045
      %4047 = vmatprep.mubr.f32.mxu0 %v392
      %4048 = vmatmul.mubr.f32.gmra.mrb[0].mxu0 %v391
      %v4049 = vpop.f32.mrb[0].mxu0
      %v4050 = vadd.f32 0.0, %v4049
      %v4051 = vpop.f32.mrb[0].mxu0
      %v4052 = vadd.f32 0.0, %v4051
      %4053 = vmatprep.mubr.f32.mxu0 %v396
      %4054 = vmatmul.mubr.f32.gmra.mrb[0].mxu0 %v395
      %v4055 = vpop.f32.mrb[0].mxu0
      %v4056 = vadd.f32 0.0, %v4055
      %v4057 = vpop.f32.mrb[0].mxu0
      %v4058 = vadd.f32 0.0, %v4057
      %4059 = vmatprep.mubr.f32.mxu0 %v400
      %4060 = vmatmul.mubr.f32.gmra.mrb[0].mxu0 %v399
      %v4061 = vpop.f32.mrb[0].mxu0
      %v4062 = vadd.f32 0.0, %v4061
      %v4063 = vpop.f32.mrb[0].mxu0
      %v4064 = vadd.f32 0.0, %v4063
      %4065 = vdwg.mxu0
      %4066 = vmatprep.subr.mxu0 %v3394
      %4067 = vmatpush1.msra.mxu0 %v3393
      %4068 = vmatprep.subr.mxu0 %v3400
      %4069 = vmatpush1.msra.mxu0 %v3399
      %4070 = vmatprep.subr.mxu0 %v3406
      %4071 = vmatpush1.msra.mxu0 %v3405
      %4072 = vmatprep.subr.mxu0 %v3412
      %4073 = vmatpush1.msra.mxu0 %v3411
      %4074 = vmatprep.subr.mxu0 %v3418
      %4075 = vmatpush1.msra.mxu0 %v3417
      %4076 = vmatprep.subr.mxu0 %v3424
      %4077 = vmatpush1.msra.mxu0 %v3423
      %4078 = vmatprep.subr.mxu0 %v3430
      %4079 = vmatpush1.msra.mxu0 %v3429
      %4080 = vmatprep.subr.mxu0 %v3436
      %4081 = vmatpush1.msra.mxu0 %v3435
      %4082 = vmatprep.subr.mxu0 %v3442
      %4083 = vmatpush1.msra.mxu0 %v3441
      %4084 = vmatprep.subr.mxu0 %v3448
      %4085 = vmatpush1.msra.mxu0 %v3447
      %4086 = vmatprep.subr.mxu0 %v3454
      %4087 = vmatpush1.msra.mxu0 %v3453
      %4088 = vmatprep.subr.mxu0 %v3460
      %4089 = vmatpush1.msra.mxu0 %v3459
      %4090 = vmatprep.subr.mxu0 %v3466
      %4091 = vmatpush1.msra.mxu0 %v3465
      %4092 = vmatprep.subr.mxu0 %v3472
      %4093 = vmatpush1.msra.mxu0 %v3471
      %4094 = vmatprep.subr.mxu0 %v3478
      %4095 = vmatpush1.msra.mxu0 %v3477
      %4096 = vmatprep.subr.mxu0 %v3484
      %4097 = vmatpush1.msra.mxu0 %v3483
      %4098 = vmatprep.subr.mxu0 %v3490
      %4099 = vmatpush1.msra.mxu0 %v3489
      %4100 = vmatprep.subr.mxu0 %v3496
      %4101 = vmatpush1.msra.mxu0 %v3495
      %4102 = vmatprep.subr.mxu0 %v3502
      %4103 = vmatpush1.msra.mxu0 %v3501
      %4104 = vmatprep.subr.mxu0 %v3508
      %4105 = vmatpush1.msra.mxu0 %v3507
      %4106 = vmatprep.subr.mxu0 %v3514
      %4107 = vmatpush1.msra.mxu0 %v3513
      %4108 = vmatprep.subr.mxu0 %v3520
      %4109 = vmatpush1.msra.mxu0 %v3519
      %4110 = vmatprep.subr.mxu0 %v3526
      %4111 = vmatpush1.msra.mxu0 %v3525
      %4112 = vmatprep.subr.mxu0 %v3532
      %4113 = vmatpush1.msra.mxu0 %v3531
      %4114 = vmatprep.subr.mxu0 %v3538
      %4115 = vmatpush1.msra.mxu0 %v3537
      %4116 = vmatprep.subr.mxu0 %v3544
      %4117 = vmatpush1.msra.mxu0 %v3543
      %4118 = vmatprep.subr.mxu0 %v3550
      %4119 = vmatpush1.msra.mxu0 %v3549
      %4120 = vmatprep.subr.mxu0 %v3556
      %4121 = vmatpush1.msra.mxu0 %v3555
      %4122 = vmatprep.subr.mxu0 %v3562
      %4123 = vmatpush1.msra.mxu0 %v3561
      %4124 = vmatprep.subr.mxu0 %v3568
      %4125 = vmatpush1.msra.mxu0 %v3567
      %4126 = vmatprep.subr.mxu0 %v3574
      %4127 = vmatpush1.msra.mxu0 %v3573
      %4128 = vmatprep.subr.mxu0 %v3580
      %4129 = vmatpush1.msra.mxu0 %v3579
      %4130 = vmatprep.mubr.f32.mxu0 %v342
      %4131 = vmatmul.mubr.f32.gmra.mrb[0].mxu0 %v341
      %v4132 = vpop.f32.mrb[0].mxu0
      %v4133 = vadd.f32 %v3972, %v4132
      %v4134 = vpop.f32.mrb[0].mxu0
      %v4135 = vadd.f32 %v3974, %v4134
      %4136 = vmatprep.mubr.f32.mxu0 %v346
      %4137 = vmatmul.mubr.f32.gmra.mrb[0].mxu0 %v345
      %v4138 = vpop.f32.mrb[0].mxu0
      %v4139 = vadd.f32 %v3978, %v4138
      %v4140 = vpop.f32.mrb[0].mxu0
      %v4141 = vadd.f32 %v3980, %v4140
      %4142 = vmatprep.mubr.f32.mxu0 %v350
      %4143 = vmatmul.mubr.f32.gmra.mrb[0].mxu0 %v349
      %v4144 = vpop.f32.mrb[0].mxu0
      %v4145 = vadd.f32 %v3984, %v4144
      %v4146 = vpop.f32.mrb[0].mxu0
      %v4147 = vadd.f32 %v3986, %v4146
      %4148 = vmatprep.mubr.f32.mxu0 %v354
      %4149 = vmatmul.mubr.f32.gmra.mrb[0].mxu0 %v353
      %v4150 = vpop.f32.mrb[0].mxu0
      %v4151 = vadd.f32 %v3990, %v4150
      %v4152 = vpop.f32.mrb[0].mxu0
      %v4153 = vadd.f32 %v3992, %v4152
      %4154 = vmatprep.mubr.f32.mxu0 %v358
      %4155 = vmatmul.mubr.f32.gmra.mrb[0].mxu0 %v357
      %v4156 = vpop.f32.mrb[0].mxu0
      %v4157 = vadd.f32 %v3996, %v4156
      %v4158 = vpop.f32.mrb[0].mxu0
      %v4159 = vadd.f32 %v3998, %v4158
      %4160 = vmatprep.mubr.f32.mxu0 %v362
      %4161 = vmatmul.mubr.f32.gmra.mrb[0].mxu0 %v361
      %v4162 = vpop.f32.mrb[0].mxu0
      %v4163 = vadd.f32 %v4002, %v4162
      %v4164 = vpop.f32.mrb[0].mxu0
      %v4165 = vadd.f32 %v4004, %v4164
      %4166 = vmatprep.mubr.f32.mxu0 %v366
      %4167 = vmatmul.mubr.f32.gmra.mrb[0].mxu0 %v365
      %v4168 = vpop.f32.mrb[0].mxu0
      %v4169 = vadd.f32 %v4008, %v4168
      %v4170 = vpop.f32.mrb[0].mxu0
      %v4171 = vadd.f32 %v4010, %v4170
      %4172 = vmatprep.mubr.f32.mxu0 %v370
      %4173 = vmatmul.mubr.f32.gmra.mrb[0].mxu0 %v369
      %v4174 = vpop.f32.mrb[0].mxu0
      %v4175 = vadd.f32 %v4014, %v4174
      %v4176 = vpop.f32.mrb[0].mxu0
      %v4177 = vadd.f32 %v4016, %v4176
      %4178 = vmatprep.mubr.f32.mxu0 %v374
      %4179 = vmatmul.mubr.f32.gmra.mrb[0].mxu0 %v373
      %v4180 = vpop.f32.mrb[0].mxu0
      %v4181 = vadd.f32 %v4020, %v4180
      %v4182 = vpop.f32.mrb[0].mxu0
      %v4183 = vadd.f32 %v4022, %v4182
      %4184 = vmatprep.mubr.f32.mxu0 %v378
      %4185 = vmatmul.mubr.f32.gmra.mrb[0].mxu0 %v377
      %v4186 = vpop.f32.mrb[0].mxu0
      %v4187 = vadd.f32 %v4026, %v4186
      %v4188 = vpop.f32.mrb[0].mxu0
      %v4189 = vadd.f32 %v4028, %v4188
      %4190 = vmatprep.mubr.f32.mxu0 %v382
      %4191 = vmatmul.mubr.f32.gmra.mrb[0].mxu0 %v381
      %v4192 = vpop.f32.mrb[0].mxu0
      %v4193 = vadd.f32 %v4032, %v4192
      %v4194 = vpop.f32.mrb[0].mxu0
      %v4195 = vadd.f32 %v4034, %v4194
      %4196 = vmatprep.mubr.f32.mxu0 %v386
      %4197 = vmatmul.mubr.f32.gmra.mrb[0].mxu0 %v385
      %v4198 = vpop.f32.mrb[0].mxu0
      %v4199 = vadd.f32 %v4038, %v4198
      %v4200 = vpop.f32.mrb[0].mxu0
      %v4201 = vadd.f32 %v4040, %v4200
      %4202 = vmatprep.mubr.f32.mxu0 %v390
      %4203 = vmatmul.mubr.f32.gmra.mrb[0].mxu0 %v389
      %v4204 = vpop.f32.mrb[0].mxu0
      %v4205 = vadd.f32 %v4044, %v4204
      %v4206 = vpop.f32.mrb[0].mxu0
      %v4207 = vadd.f32 %v4046, %v4206
      %4208 = vmatprep.mubr.f32.mxu0 %v394
      %4209 = vmatmul.mubr.f32.gmra.mrb[0].mxu0 %v393
      %v4210 = vpop.f32.mrb[0].mxu0
      %v4211 = vadd.f32 %v4050, %v4210
      %v4212 = vpop.f32.mrb[0].mxu0
      %v4213 = vadd.f32 %v4052, %v4212
      %4214 = vmatprep.mubr.f32.mxu0 %v398
      %4215 = vmatmul.mubr.f32.gmra.mrb[0].mxu0 %v397
      %v4216 = vpop.f32.mrb[0].mxu0
      %v4217 = vadd.f32 %v4056, %v4216
      %v4218 = vpop.f32.mrb[0].mxu0
      %v4219 = vadd.f32 %v4058, %v4218
      %4220 = vmatprep.mubr.f32.mxu0 %v402
      %4221 = vmatmul.mubr.f32.gmra.mrb[0].mxu0 %v401
      %v4222 = vpop.f32.mrb[0].mxu0
      %v4223 = vadd.f32 %v4062, %v4222
      %v4224 = vpop.f32.mrb[0].mxu0
      %v4225 = vadd.f32 %v4064, %v4224
      %4226 = vdwg.mxu0
      %4227 = vmatprep.subr.mxu0 %v3204
      %4228 = vmatpush1.msra.mxu0 %v3203
      %4229 = vmatprep.subr.mxu0 %v3210
      %4230 = vmatpush1.msra.mxu0 %v3209
      %4231 = vmatprep.subr.mxu0 %v3216
      %4232 = vmatpush1.msra.mxu0 %v3215
      %4233 = vmatprep.subr.mxu0 %v3222
      %4234 = vmatpush1.msra.mxu0 %v3221
      %4235 = vmatprep.subr.mxu0 %v3228
      %4236 = vmatpush1.msra.mxu0 %v3227
      %4237 = vmatprep.subr.mxu0 %v3234
      %4238 = vmatpush1.msra.mxu0 %v3233
      %4239 = vmatprep.subr.mxu0 %v3240
      %4240 = vmatpush1.msra.mxu0 %v3239
      %4241 = vmatprep.subr.mxu0 %v3246
      %4242 = vmatpush1.msra.mxu0 %v3245
      %4243 = vmatprep.subr.mxu0 %v3252
      %4244 = vmatpush1.msra.mxu0 %v3251
      %4245 = vmatprep.subr.mxu0 %v3258
      %4246 = vmatpush1.msra.mxu0 %v3257
      %4247 = vmatprep.subr.mxu0 %v3264
      %4248 = vmatpush1.msra.mxu0 %v3263
      %4249 = vmatprep.subr.mxu0 %v3270
      %4250 = vmatpush1.msra.mxu0 %v3269
      %4251 = vmatprep.subr.mxu0 %v3276
      %4252 = vmatpush1.msra.mxu0 %v3275
      %4253 = vmatprep.subr.mxu0 %v3282
      %4254 = vmatpush1.msra.mxu0 %v3281
      %4255 = vmatprep.subr.mxu0 %v3288
      %4256 = vmatpush1.msra.mxu0 %v3287
      %4257 = vmatprep.subr.mxu0 %v3294
      %4258 = vmatpush1.msra.mxu0 %v3293
      %4259 = vmatprep.subr.mxu0 %v3300
      %4260 = vmatpush1.msra.mxu0 %v3299
      %4261 = vmatprep.subr.mxu0 %v3306
      %4262 = vmatpush1.msra.mxu0 %v3305
      %4263 = vmatprep.subr.mxu0 %v3312
      %4264 = vmatpush1.msra.mxu0 %v3311
      %4265 = vmatprep.subr.mxu0 %v3318
      %4266 = vmatpush1.msra.mxu0 %v3317
      %4267 = vmatprep.subr.mxu0 %v3324
      %4268 = vmatpush1.msra.mxu0 %v3323
      %4269 = vmatprep.subr.mxu0 %v3330
      %4270 = vmatpush1.msra.mxu0 %v3329
      %4271 = vmatprep.subr.mxu0 %v3336
      %4272 = vmatpush1.msra.mxu0 %v3335
      %4273 = vmatprep.subr.mxu0 %v3342
      %4274 = vmatpush1.msra.mxu0 %v3341
      %4275 = vmatprep.subr.mxu0 %v3348
      %4276 = vmatpush1.msra.mxu0 %v3347
      %4277 = vmatprep.subr.mxu0 %v3354
      %4278 = vmatpush1.msra.mxu0 %v3353
      %4279 = vmatprep.subr.mxu0 %v3360
      %4280 = vmatpush1.msra.mxu0 %v3359
      %4281 = vmatprep.subr.mxu0 %v3366
      %4282 = vmatpush1.msra.mxu0 %v3365
      %4283 = vmatprep.subr.mxu0 %v3372
      %4284 = vmatpush1.msra.mxu0 %v3371
      %4285 = vmatprep.subr.mxu0 %v3378
      %4286 = vmatpush1.msra.mxu0 %v3377
      %4287 = vmatprep.subr.mxu0 %v3384
      %4288 = vmatpush1.msra.mxu0 %v3383
      %4289 = vmatprep.subr.mxu0 %v3390
      %4290 = vmatpush1.msra.mxu0 %v3389
      %4291 = vmatprep.mubr.f32.mxu0 %v340
      %4292 = vmatmul.mubr.f32.gmra.mrb[0].mxu0 %v339
      %v4293 = vpop.f32.mrb[0].mxu0
      %v4294 = vadd.f32 0.0, %v4293
      %v4295 = vpop.f32.mrb[0].mxu0
      %v4296 = vadd.f32 0.0, %v4295
      %4297 = vmatprep.mubr.f32.mxu0 %v344
      %4298 = vmatmul.mubr.f32.gmra.mrb[0].mxu0 %v343
      %v4299 = vpop.f32.mrb[0].mxu0
      %v4300 = vadd.f32 0.0, %v4299
      %v4301 = vpop.f32.mrb[0].mxu0
      %v4302 = vadd.f32 0.0, %v4301
      %4303 = vmatprep.mubr.f32.mxu0 %v348
      %4304 = vmatmul.mubr.f32.gmra.mrb[0].mxu0 %v347
      %v4305 = vpop.f32.mrb[0].mxu0
      %v4306 = vadd.f32 0.0, %v4305
      %v4307 = vpop.f32.mrb[0].mxu0
      %v4308 = vadd.f32 0.0, %v4307
      %4309 = vmatprep.mubr.f32.mxu0 %v352
      %4310 = vmatmul.mubr.f32.gmra.mrb[0].mxu0 %v351
      %v4311 = vpop.f32.mrb[0].mxu0
      %v4312 = vadd.f32 0.0, %v4311
      %v4313 = vpop.f32.mrb[0].mxu0
      %v4314 = vadd.f32 0.0, %v4313
      %4315 = vmatprep.mubr.f32.mxu0 %v356
      %4316 = vmatmul.mubr.f32.gmra.mrb[0].mxu0 %v355
      %v4317 = vpop.f32.mrb[0].mxu0
      %v4318 = vadd.f32 0.0, %v4317
      %v4319 = vpop.f32.mrb[0].mxu0
      %v4320 = vadd.f32 0.0, %v4319
      %4321 = vmatprep.mubr.f32.mxu0 %v360
      %4322 = vmatmul.mubr.f32.gmra.mrb[0].mxu0 %v359
      %v4323 = vpop.f32.mrb[0].mxu0
      %v4324 = vadd.f32 0.0, %v4323
      %v4325 = vpop.f32.mrb[0].mxu0
      %v4326 = vadd.f32 0.0, %v4325
      %4327 = vmatprep.mubr.f32.mxu0 %v364
      %4328 = vmatmul.mubr.f32.gmra.mrb[0].mxu0 %v363
      %v4329 = vpop.f32.mrb[0].mxu0
      %v4330 = vadd.f32 0.0, %v4329
      %v4331 = vpop.f32.mrb[0].mxu0
      %v4332 = vadd.f32 0.0, %v4331
      %4333 = vmatprep.mubr.f32.mxu0 %v368
      %4334 = vmatmul.mubr.f32.gmra.mrb[0].mxu0 %v367
      %v4335 = vpop.f32.mrb[0].mxu0
      %v4336 = vadd.f32 0.0, %v4335
      %v4337 = vpop.f32.mrb[0].mxu0
      %v4338 = vadd.f32 0.0, %v4337
      %4339 = vmatprep.mubr.f32.mxu0 %v372
      %4340 = vmatmul.mubr.f32.gmra.mrb[0].mxu0 %v371
      %v4341 = vpop.f32.mrb[0].mxu0
      %v4342 = vadd.f32 0.0, %v4341
      %v4343 = vpop.f32.mrb[0].mxu0
      %v4344 = vadd.f32 0.0, %v4343
      %4345 = vmatprep.mubr.f32.mxu0 %v376
      %4346 = vmatmul.mubr.f32.gmra.mrb[0].mxu0 %v375
      %v4347 = vpop.f32.mrb[0].mxu0
      %v4348 = vadd.f32 0.0, %v4347
      %v4349 = vpop.f32.mrb[0].mxu0
      %v4350 = vadd.f32 0.0, %v4349
      %4351 = vmatprep.mubr.f32.mxu0 %v380
      %4352 = vmatmul.mubr.f32.gmra.mrb[0].mxu0 %v379
      %v4353 = vpop.f32.mrb[0].mxu0
      %v4354 = vadd.f32 0.0, %v4353
      %v4355 = vpop.f32.mrb[0].mxu0
      %v4356 = vadd.f32 0.0, %v4355
      %4357 = vmatprep.mubr.f32.mxu0 %v384
      %4358 = vmatmul.mubr.f32.gmra.mrb[0].mxu0 %v383
      %v4359 = vpop.f32.mrb[0].mxu0
      %v4360 = vadd.f32 0.0, %v4359
      %v4361 = vpop.f32.mrb[0].mxu0
      %v4362 = vadd.f32 0.0, %v4361
      %4363 = vmatprep.mubr.f32.mxu0 %v388
      %4364 = vmatmul.mubr.f32.gmra.mrb[0].mxu0 %v387
      %v4365 = vpop.f32.mrb[0].mxu0
      %v4366 = vadd.f32 0.0, %v4365
      %v4367 = vpop.f32.mrb[0].mxu0
      %v4368 = vadd.f32 0.0, %v4367
      %4369 = vmatprep.mubr.f32.mxu0 %v392
      %4370 = vmatmul.mubr.f32.gmra.mrb[0].mxu0 %v391
      %v4371 = vpop.f32.mrb[0].mxu0
      %v4372 = vadd.f32 0.0, %v4371
      %v4373 = vpop.f32.mrb[0].mxu0
      %v4374 = vadd.f32 0.0, %v4373
      %4375 = vmatprep.mubr.f32.mxu0 %v396
      %4376 = vmatmul.mubr.f32.gmra.mrb[0].mxu0 %v395
      %v4377 = vpop.f32.mrb[0].mxu0
      %v4378 = vadd.f32 0.0, %v4377
      %v4379 = vpop.f32.mrb[0].mxu0
      %v4380 = vadd.f32 0.0, %v4379
      %4381 = vmatprep.mubr.f32.mxu0 %v400
      %4382 = vmatmul.mubr.f32.gmra.mrb[0].mxu0 %v399
      %v4383 = vpop.f32.mrb[0].mxu0
      %v4384 = vadd.f32 0.0, %v4383
      %v4385 = vpop.f32.mrb[0].mxu0
      %v4386 = vadd.f32 0.0, %v4385
      %4387 = vdwg.mxu0
      %4388 = vmatprep.subr.mxu0 %v3396
      %4389 = vmatpush1.msra.mxu0 %v3395
      %4390 = vmatprep.subr.mxu0 %v3402
      %4391 = vmatpush1.msra.mxu0 %v3401
      %4392 = vmatprep.subr.mxu0 %v3408
      %4393 = vmatpush1.msra.mxu0 %v3407
      %4394 = vmatprep.subr.mxu0 %v3414
      %4395 = vmatpush1.msra.mxu0 %v3413
      %4396 = vmatprep.subr.mxu0 %v3420
      %4397 = vmatpush1.msra.mxu0 %v3419
      %4398 = vmatprep.subr.mxu0 %v3426
      %4399 = vmatpush1.msra.mxu0 %v3425
      %4400 = vmatprep.subr.mxu0 %v3432
      %4401 = vmatpush1.msra.mxu0 %v3431
      %4402 = vmatprep.subr.mxu0 %v3438
      %4403 = vmatpush1.msra.mxu0 %v3437
      %4404 = vmatprep.subr.mxu0 %v3444
      %4405 = vmatpush1.msra.mxu0 %v3443
      %4406 = vmatprep.subr.mxu0 %v3450
      %4407 = vmatpush1.msra.mxu0 %v3449
      %4408 = vmatprep.subr.mxu0 %v3456
      %4409 = vmatpush1.msra.mxu0 %v3455
      %4410 = vmatprep.subr.mxu0 %v3462
      %4411 = vmatpush1.msra.mxu0 %v3461
      %4412 = vmatprep.subr.mxu0 %v3468
      %4413 = vmatpush1.msra.mxu0 %v3467
      %4414 = vmatprep.subr.mxu0 %v3474
      %4415 = vmatpush1.msra.mxu0 %v3473
      %4416 = vmatprep.subr.mxu0 %v3480
      %4417 = vmatpush1.msra.mxu0 %v3479
      %4418 = vmatprep.subr.mxu0 %v3486
      %4419 = vmatpush1.msra.mxu0 %v3485
      %4420 = vmatprep.subr.mxu0 %v3492
      %4421 = vmatpush1.msra.mxu0 %v3491
      %4422 = vmatprep.subr.mxu0 %v3498
      %4423 = vmatpush1.msra.mxu0 %v3497
      %4424 = vmatprep.subr.mxu0 %v3504
      %4425 = vmatpush1.msra.mxu0 %v3503
      %4426 = vmatprep.subr.mxu0 %v3510
      %4427 = vmatpush1.msra.mxu0 %v3509
      %4428 = vmatprep.subr.mxu0 %v3516
      %4429 = vmatpush1.msra.mxu0 %v3515
      %4430 = vmatprep.subr.mxu0 %v3522
      %4431 = vmatpush1.msra.mxu0 %v3521
      %4432 = vmatprep.subr.mxu0 %v3528
      %4433 = vmatpush1.msra.mxu0 %v3527
      %4434 = vmatprep.subr.mxu0 %v3534
      %4435 = vmatpush1.msra.mxu0 %v3533
      %4436 = vmatprep.subr.mxu0 %v3540
      %4437 = vmatpush1.msra.mxu0 %v3539
      %4438 = vmatprep.subr.mxu0 %v3546
      %4439 = vmatpush1.msra.mxu0 %v3545
      %4440 = vmatprep.subr.mxu0 %v3552
      %4441 = vmatpush1.msra.mxu0 %v3551
      %4442 = vmatprep.subr.mxu0 %v3558
      %4443 = vmatpush1.msra.mxu0 %v3557
      %4444 = vmatprep.subr.mxu0 %v3564
      %4445 = vmatpush1.msra.mxu0 %v3563
      %4446 = vmatprep.subr.mxu0 %v3570
      %4447 = vmatpush1.msra.mxu0 %v3569
      %4448 = vmatprep.subr.mxu0 %v3576
      %4449 = vmatpush1.msra.mxu0 %v3575
      %4450 = vmatprep.subr.mxu0 %v3582
      %4451 = vmatpush1.msra.mxu0 %v3581
      %4452 = vmatprep.mubr.f32.mxu0 %v342
      %4453 = vmatmul.mubr.f32.gmra.mrb[0].mxu0 %v341
      %v4454 = vpop.f32.mrb[0].mxu0
      %v4455 = vadd.f32 %v4294, %v4454
      %v4456 = vpop.f32.mrb[0].mxu0
      %v4457 = vadd.f32 %v4296, %v4456
      %4458 = vmatprep.mubr.f32.mxu0 %v346
      %4459 = vmatmul.mubr.f32.gmra.mrb[0].mxu0 %v345
      %v4460 = vpop.f32.mrb[0].mxu0
      %v4461 = vadd.f32 %v4300, %v4460
      %v4462 = vpop.f32.mrb[0].mxu0
      %v4463 = vadd.f32 %v4302, %v4462
      %4464 = vmatprep.mubr.f32.mxu0 %v350
      %4465 = vmatmul.mubr.f32.gmra.mrb[0].mxu0 %v349
      %v4466 = vpop.f32.mrb[0].mxu0
      %v4467 = vadd.f32 %v4306, %v4466
      %v4468 = vpop.f32.mrb[0].mxu0
      %v4469 = vadd.f32 %v4308, %v4468
      %4470 = vmatprep.mubr.f32.mxu0 %v354
      %4471 = vmatmul.mubr.f32.gmra.mrb[0].mxu0 %v353
      %v4472 = vpop.f32.mrb[0].mxu0
      %v4473 = vadd.f32 %v4312, %v4472
      %v4474 = vpop.f32.mrb[0].mxu0
      %v4475 = vadd.f32 %v4314, %v4474
      %4476 = vmatprep.mubr.f32.mxu0 %v358
      %4477 = vmatmul.mubr.f32.gmra.mrb[0].mxu0 %v357
      %v4478 = vpop.f32.mrb[0].mxu0
      %v4479 = vadd.f32 %v4318, %v4478
      %v4480 = vpop.f32.mrb[0].mxu0
      %v4481 = vadd.f32 %v4320, %v4480
      %4482 = vmatprep.mubr.f32.mxu0 %v362
      %4483 = vmatmul.mubr.f32.gmra.mrb[0].mxu0 %v361
      %v4484 = vpop.f32.mrb[0].mxu0
      %v4485 = vadd.f32 %v4324, %v4484
      %v4486 = vpop.f32.mrb[0].mxu0
      %v4487 = vadd.f32 %v4326, %v4486
      %4488 = vmatprep.mubr.f32.mxu0 %v366
      %4489 = vmatmul.mubr.f32.gmra.mrb[0].mxu0 %v365
      %v4490 = vpop.f32.mrb[0].mxu0
      %v4491 = vadd.f32 %v4330, %v4490
      %v4492 = vpop.f32.mrb[0].mxu0
      %v4493 = vadd.f32 %v4332, %v4492
      %4494 = vmatprep.mubr.f32.mxu0 %v370
      %4495 = vmatmul.mubr.f32.gmra.mrb[0].mxu0 %v369
      %v4496 = vpop.f32.mrb[0].mxu0
      %v4497 = vadd.f32 %v4336, %v4496
      %v4498 = vpop.f32.mrb[0].mxu0
      %v4499 = vadd.f32 %v4338, %v4498
      %4500 = vmatprep.mubr.f32.mxu0 %v374
      %4501 = vmatmul.mubr.f32.gmra.mrb[0].mxu0 %v373
      %v4502 = vpop.f32.mrb[0].mxu0
      %v4503 = vadd.f32 %v4342, %v4502
      %v4504 = vpop.f32.mrb[0].mxu0
      %v4505 = vadd.f32 %v4344, %v4504
      %4506 = vmatprep.mubr.f32.mxu0 %v378
      %4507 = vmatmul.mubr.f32.gmra.mrb[0].mxu0 %v377
      %v4508 = vpop.f32.mrb[0].mxu0
      %v4509 = vadd.f32 %v4348, %v4508
      %v4510 = vpop.f32.mrb[0].mxu0
      %v4511 = vadd.f32 %v4350, %v4510
      %4512 = vmatprep.mubr.f32.mxu0 %v382
      %4513 = vmatmul.mubr.f32.gmra.mrb[0].mxu0 %v381
      %v4514 = vpop.f32.mrb[0].mxu0
      %v4515 = vadd.f32 %v4354, %v4514
      %v4516 = vpop.f32.mrb[0].mxu0
      %v4517 = vadd.f32 %v4356, %v4516
      %4518 = vmatprep.mubr.f32.mxu0 %v386
      %4519 = vmatmul.mubr.f32.gmra.mrb[0].mxu0 %v385
      %v4520 = vpop.f32.mrb[0].mxu0
      %v4521 = vadd.f32 %v4360, %v4520
      %v4522 = vpop.f32.mrb[0].mxu0
      %v4523 = vadd.f32 %v4362, %v4522
      %4524 = vmatprep.mubr.f32.mxu0 %v390
      %4525 = vmatmul.mubr.f32.gmra.mrb[0].mxu0 %v389
      %v4526 = vpop.f32.mrb[0].mxu0
      %v4527 = vadd.f32 %v4366, %v4526
      %v4528 = vpop.f32.mrb[0].mxu0
      %v4529 = vadd.f32 %v4368, %v4528
      %4530 = vmatprep.mubr.f32.mxu0 %v394
      %4531 = vmatmul.mubr.f32.gmra.mrb[0].mxu0 %v393
      %v4532 = vpop.f32.mrb[0].mxu0
      %v4533 = vadd.f32 %v4372, %v4532
      %v4534 = vpop.f32.mrb[0].mxu0
      %v4535 = vadd.f32 %v4374, %v4534
      %4536 = vmatprep.mubr.f32.mxu0 %v398
      %4537 = vmatmul.mubr.f32.gmra.mrb[0].mxu0 %v397
      %v4538 = vpop.f32.mrb[0].mxu0
      %v4539 = vadd.f32 %v4378, %v4538
      %v4540 = vpop.f32.mrb[0].mxu0
      %v4541 = vadd.f32 %v4380, %v4540
      %4542 = vmatprep.mubr.f32.mxu0 %v402
      %4543 = vmatmul.mubr.f32.gmra.mrb[0].mxu0 %v401
      %v4544 = vpop.f32.mrb[0].mxu0
      %v4545 = vadd.f32 %v4384, %v4544
      %v4546 = vpop.f32.mrb[0].mxu0
      %v4547 = vadd.f32 %v4386, %v4546
      %4548 = vdwg.mxu0
      %v4549 = vmax.f32 %v3103, %v3811
      %v4550 = vmax.f32 %v3104, %v3813
      %v4551 = vmax.f32 %v3105, %v4133
      %v4552 = vmax.f32 %v3106, %v4135
      %v4553 = vmax.f32 %v3107, %v4455
      %v4554 = vmax.f32 %v3108, %v4457
      %v4555 = vmax.f32 %v3109, %v3817
      %v4556 = vmax.f32 %v3110, %v3819
      %v4557 = vmax.f32 %v3111, %v4139
      %v4558 = vmax.f32 %v3112, %v4141
      %v4559 = vmax.f32 %v3113, %v4461
      %v4560 = vmax.f32 %v3114, %v4463
      %v4561 = vmax.f32 %v3115, %v3823
      %v4562 = vmax.f32 %v3116, %v3825
      %v4563 = vmax.f32 %v3117, %v4145
      %v4564 = vmax.f32 %v3118, %v4147
      %v4565 = vmax.f32 %v3119, %v4467
      %v4566 = vmax.f32 %v3120, %v4469
      %v4567 = vmax.f32 %v3121, %v3829
      %v4568 = vmax.f32 %v3122, %v3831
      %v4569 = vmax.f32 %v3123, %v4151
      %v4570 = vmax.f32 %v3124, %v4153
      %v4571 = vmax.f32 %v3125, %v4473
      %v4572 = vmax.f32 %v3126, %v4475
      %v4573 = vmax.f32 %v3127, %v3835
      %v4574 = vmax.f32 %v3128, %v3837
      %v4575 = vmax.f32 %v3129, %v4157
      %v4576 = vmax.f32 %v3130, %v4159
      %v4577 = vmax.f32 %v3131, %v4479
      %v4578 = vmax.f32 %v3132, %v4481
      %v4579 = vmax.f32 %v3133, %v3841
      %v4580 = vmax.f32 %v3134, %v3843
      %v4581 = vmax.f32 %v3135, %v4163
      %v4582 = vmax.f32 %v3136, %v4165
      %v4583 = vmax.f32 %v3137, %v4485
      %v4584 = vmax.f32 %v3138, %v4487
      %v4585 = vmax.f32 %v3139, %v3847
      %v4586 = vmax.f32 %v3140, %v3849
      %v4587 = vmax.f32 %v3141, %v4169
      %v4588 = vmax.f32 %v3142, %v4171
      %v4589 = vmax.f32 %v3143, %v4491
      %v4590 = vmax.f32 %v3144, %v4493
      %v4591 = vmax.f32 %v3145, %v3853
      %v4592 = vmax.f32 %v3146, %v3855
      %v4593 = vmax.f32 %v3147, %v4175
      %v4594 = vmax.f32 %v3148, %v4177
      %v4595 = vmax.f32 %v3149, %v4497
      %v4596 = vmax.f32 %v3150, %v4499
      %v4597 = vmax.f32 %v3151, %v3859
      %v4598 = vmax.f32 %v3152, %v3861
      %v4599 = vmax.f32 %v3153, %v4181
      %v4600 = vmax.f32 %v3154, %v4183
      %v4601 = vmax.f32 %v3155, %v4503
      %v4602 = vmax.f32 %v3156, %v4505
      %v4603 = vmax.f32 %v3157, %v3865
      %v4604 = vmax.f32 %v3158, %v3867
      %v4605 = vmax.f32 %v3159, %v4187
      %v4606 = vmax.f32 %v3160, %v4189
      %v4607 = vmax.f32 %v3161, %v4509
      %v4608 = vmax.f32 %v3162, %v4511
      %v4609 = vmax.f32 %v3163, %v3871
      %v4610 = vmax.f32 %v3164, %v3873
      %v4611 = vmax.f32 %v3165, %v4193
      %v4612 = vmax.f32 %v3166, %v4195
      %v4613 = vmax.f32 %v3167, %v4515
      %v4614 = vmax.f32 %v3168, %v4517
      %v4615 = vmax.f32 %v3169, %v3877
      %v4616 = vmax.f32 %v3170, %v3879
      %v4617 = vmax.f32 %v3171, %v4199
      %v4618 = vmax.f32 %v3172, %v4201
      %v4619 = vmax.f32 %v3173, %v4521
      %v4620 = vmax.f32 %v3174, %v4523
      %v4621 = vmax.f32 %v3175, %v3883
      %v4622 = vmax.f32 %v3176, %v3885
      %v4623 = vmax.f32 %v3177, %v4205
      %v4624 = vmax.f32 %v3178, %v4207
      %v4625 = vmax.f32 %v3179, %v4527
      %v4626 = vmax.f32 %v3180, %v4529
      %v4627 = vmax.f32 %v3181, %v3889
      %v4628 = vmax.f32 %v3182, %v3891
      %v4629 = vmax.f32 %v3183, %v4211
      %v4630 = vmax.f32 %v3184, %v4213
      %v4631 = vmax.f32 %v3185, %v4533
      %v4632 = vmax.f32 %v3186, %v4535
      %v4633 = vmax.f32 %v3187, %v3895
      %v4634 = vmax.f32 %v3188, %v3897
      %v4635 = vmax.f32 %v3189, %v4217
      %v4636 = vmax.f32 %v3190, %v4219
      %v4637 = vmax.f32 %v3191, %v4539
      %v4638 = vmax.f32 %v3192, %v4541
      %v4639 = vmax.f32 %v3193, %v3901
      %v4640 = vmax.f32 %v3194, %v3903
      %v4641 = vmax.f32 %v3195, %v4223
      %v4642 = vmax.f32 %v3196, %v4225
      %v4643 = vmax.f32 %v3197, %v4545
      %v4644 = vmax.f32 %v3198, %v4547
      %v4645 = vld [vmem:[%s1 + $0x90] sm:$0xff]
      %v4646 = vld [vmem:[%s1 + $0x98] sm:$0xff]
      %v4647 = vld [vmem:[%s1 + $0xa0] sm:$0xff]
      %v4648 = vld [vmem:[%s1 + $0xa8] sm:$0xff]
      %v4649 = vld [vmem:[%s1 + $0xb0] sm:$0xff]
      %v4650 = vld [vmem:[%s1 + $0xb8] sm:$0xff]
      %v4651 = vld [vmem:[%s1 + $0x150] sm:$0xff]
      %v4652 = vld [vmem:[%s1 + $0x158] sm:$0xff]
      %v4653 = vld [vmem:[%s1 + $0x160] sm:$0xff]
      %v4654 = vld [vmem:[%s1 + $0x168] sm:$0xff]
      %v4655 = vld [vmem:[%s1 + $0x170] sm:$0xff]
      %v4656 = vld [vmem:[%s1 + $0x178] sm:$0xff]
      %v4657 = vld [vmem:[%s1 + $0x210] sm:$0xff]
      %v4658 = vld [vmem:[%s1 + $0x218] sm:$0xff]
      %v4659 = vld [vmem:[%s1 + $0x220] sm:$0xff]
      %v4660 = vld [vmem:[%s1 + $0x228] sm:$0xff]
      %v4661 = vld [vmem:[%s1 + $0x230] sm:$0xff]
      %v4662 = vld [vmem:[%s1 + $0x238] sm:$0xff]
      %v4663 = vld [vmem:[%s1 + $0x2d0] sm:$0xff]
      %v4664 = vld [vmem:[%s1 + $0x2d8] sm:$0xff]
      %v4665 = vld [vmem:[%s1 + $0x2e0] sm:$0xff]
      %v4666 = vld [vmem:[%s1 + $0x2e8] sm:$0xff]
      %v4667 = vld [vmem:[%s1 + $0x2f0] sm:$0xff]
      %v4668 = vld [vmem:[%s1 + $0x2f8] sm:$0xff]
      %v4669 = vld [vmem:[%s1 + $0x390] sm:$0xff]
      %v4670 = vld [vmem:[%s1 + $0x398] sm:$0xff]
      %v4671 = vld [vmem:[%s1 + $0x3a0] sm:$0xff]
      %v4672 = vld [vmem:[%s1 + $0x3a8] sm:$0xff]
      %v4673 = vld [vmem:[%s1 + $0x3b0] sm:$0xff]
      %v4674 = vld [vmem:[%s1 + $0x3b8] sm:$0xff]
      %v4675 = vld [vmem:[%s1 + $0x450] sm:$0xff]
      %v4676 = vld [vmem:[%s1 + $0x458] sm:$0xff]
      %v4677 = vld [vmem:[%s1 + $0x460] sm:$0xff]
      %v4678 = vld [vmem:[%s1 + $0x468] sm:$0xff]
      %v4679 = vld [vmem:[%s1 + $0x470] sm:$0xff]
      %v4680 = vld [vmem:[%s1 + $0x478] sm:$0xff]
      %v4681 = vld [vmem:[%s1 + $0x510] sm:$0xff]
      %v4682 = vld [vmem:[%s1 + $0x518] sm:$0xff]
      %v4683 = vld [vmem:[%s1 + $0x520] sm:$0xff]
      %v4684 = vld [vmem:[%s1 + $0x528] sm:$0xff]
      %v4685 = vld [vmem:[%s1 + $0x530] sm:$0xff]
      %v4686 = vld [vmem:[%s1 + $0x538] sm:$0xff]
      %v4687 = vld [vmem:[%s1 + $0x5d0] sm:$0xff]
      %v4688 = vld [vmem:[%s1 + $0x5d8] sm:$0xff]
      %v4689 = vld [vmem:[%s1 + $0x5e0] sm:$0xff]
      %v4690 = vld [vmem:[%s1 + $0x5e8] sm:$0xff]
      %v4691 = vld [vmem:[%s1 + $0x5f0] sm:$0xff]
      %v4692 = vld [vmem:[%s1 + $0x5f8] sm:$0xff]
      %v4693 = vld [vmem:[%s1 + $0x690] sm:$0xff]
      %v4694 = vld [vmem:[%s1 + $0x698] sm:$0xff]
      %v4695 = vld [vmem:[%s1 + $0x6a0] sm:$0xff]
      %v4696 = vld [vmem:[%s1 + $0x6a8] sm:$0xff]
      %v4697 = vld [vmem:[%s1 + $0x6b0] sm:$0xff]
      %v4698 = vld [vmem:[%s1 + $0x6b8] sm:$0xff]
      %v4699 = vld [vmem:[%s1 + $0x750] sm:$0xff]
      %v4700 = vld [vmem:[%s1 + $0x758] sm:$0xff]
      %v4701 = vld [vmem:[%s1 + $0x760] sm:$0xff]
      %v4702 = vld [vmem:[%s1 + $0x768] sm:$0xff]
      %v4703 = vld [vmem:[%s1 + $0x770] sm:$0xff]
      %v4704 = vld [vmem:[%s1 + $0x778] sm:$0xff]
      %v4705 = vld [vmem:[%s1 + $0x810] sm:$0xff]
      %v4706 = vld [vmem:[%s1 + $0x818] sm:$0xff]
      %v4707 = vld [vmem:[%s1 + $0x820] sm:$0xff]
      %v4708 = vld [vmem:[%s1 + $0x828] sm:$0xff]
      %v4709 = vld [vmem:[%s1 + $0x830] sm:$0xff]
      %v4710 = vld [vmem:[%s1 + $0x838] sm:$0xff]
      %v4711 = vld [vmem:[%s1 + $0x8d0] sm:$0xff]
      %v4712 = vld [vmem:[%s1 + $0x8d8] sm:$0xff]
      %v4713 = vld [vmem:[%s1 + $0x8e0] sm:$0xff]
      %v4714 = vld [vmem:[%s1 + $0x8e8] sm:$0xff]
      %v4715 = vld [vmem:[%s1 + $0x8f0] sm:$0xff]
      %v4716 = vld [vmem:[%s1 + $0x8f8] sm:$0xff]
      %v4717 = vld [vmem:[%s1 + $0x990] sm:$0xff]
      %v4718 = vld [vmem:[%s1 + $0x998] sm:$0xff]
      %v4719 = vld [vmem:[%s1 + $0x9a0] sm:$0xff]
      %v4720 = vld [vmem:[%s1 + $0x9a8] sm:$0xff]
      %v4721 = vld [vmem:[%s1 + $0x9b0] sm:$0xff]
      %v4722 = vld [vmem:[%s1 + $0x9b8] sm:$0xff]
      %v4723 = vld [vmem:[%s1 + $0xa50] sm:$0xff]
      %v4724 = vld [vmem:[%s1 + $0xa58] sm:$0xff]
      %v4725 = vld [vmem:[%s1 + $0xa60] sm:$0xff]
      %v4726 = vld [vmem:[%s1 + $0xa68] sm:$0xff]
      %v4727 = vld [vmem:[%s1 + $0xa70] sm:$0xff]
      %v4728 = vld [vmem:[%s1 + $0xa78] sm:$0xff]
      %v4729 = vld [vmem:[%s1 + $0xb10] sm:$0xff]
      %v4730 = vld [vmem:[%s1 + $0xb18] sm:$0xff]
      %v4731 = vld [vmem:[%s1 + $0xb20] sm:$0xff]
      %v4732 = vld [vmem:[%s1 + $0xb28] sm:$0xff]
      %v4733 = vld [vmem:[%s1 + $0xb30] sm:$0xff]
      %v4734 = vld [vmem:[%s1 + $0xb38] sm:$0xff]
      %v4735 = vld [vmem:[%s1 + $0xbd0] sm:$0xff]
      %v4736 = vld [vmem:[%s1 + $0xbd8] sm:$0xff]
      %v4737 = vld [vmem:[%s1 + $0xbe0] sm:$0xff]
      %v4738 = vld [vmem:[%s1 + $0xbe8] sm:$0xff]
      %v4739 = vld [vmem:[%s1 + $0xbf0] sm:$0xff]
      %v4740 = vld [vmem:[%s1 + $0xbf8] sm:$0xff]
      %v4741 = vld [vmem:[%s1 + $0xc90] sm:$0xff]
      %v4742 = vld [vmem:[%s1 + $0xc98] sm:$0xff]
      %v4743 = vld [vmem:[%s1 + $0xca0] sm:$0xff]
      %v4744 = vld [vmem:[%s1 + $0xca8] sm:$0xff]
      %v4745 = vld [vmem:[%s1 + $0xcb0] sm:$0xff]
      %v4746 = vld [vmem:[%s1 + $0xcb8] sm:$0xff]
      %v4747 = vld [vmem:[%s1 + $0xd50] sm:$0xff]
      %v4748 = vld [vmem:[%s1 + $0xd58] sm:$0xff]
      %v4749 = vld [vmem:[%s1 + $0xd60] sm:$0xff]
      %v4750 = vld [vmem:[%s1 + $0xd68] sm:$0xff]
      %v4751 = vld [vmem:[%s1 + $0xd70] sm:$0xff]
      %v4752 = vld [vmem:[%s1 + $0xd78] sm:$0xff]
      %v4753 = vld [vmem:[%s1 + $0xe10] sm:$0xff]
      %v4754 = vld [vmem:[%s1 + $0xe18] sm:$0xff]
      %v4755 = vld [vmem:[%s1 + $0xe20] sm:$0xff]
      %v4756 = vld [vmem:[%s1 + $0xe28] sm:$0xff]
      %v4757 = vld [vmem:[%s1 + $0xe30] sm:$0xff]
      %v4758 = vld [vmem:[%s1 + $0xe38] sm:$0xff]
      %v4759 = vld [vmem:[%s1 + $0xed0] sm:$0xff]
      %v4760 = vld [vmem:[%s1 + $0xed8] sm:$0xff]
      %v4761 = vld [vmem:[%s1 + $0xee0] sm:$0xff]
      %v4762 = vld [vmem:[%s1 + $0xee8] sm:$0xff]
      %v4763 = vld [vmem:[%s1 + $0xef0] sm:$0xff]
      %v4764 = vld [vmem:[%s1 + $0xef8] sm:$0xff]
      %v4765 = vld [vmem:[%s1 + $0xf90] sm:$0xff]
      %v4766 = vld [vmem:[%s1 + $0xf98] sm:$0xff]
      %v4767 = vld [vmem:[%s1 + $0xfa0] sm:$0xff]
      %v4768 = vld [vmem:[%s1 + $0xfa8] sm:$0xff]
      %v4769 = vld [vmem:[%s1 + $0xfb0] sm:$0xff]
      %v4770 = vld [vmem:[%s1 + $0xfb8] sm:$0xff]
      %v4771 = vld [vmem:[%s1 + $0x1050] sm:$0xff]
      %v4772 = vld [vmem:[%s1 + $0x1058] sm:$0xff]
      %v4773 = vld [vmem:[%s1 + $0x1060] sm:$0xff]
      %v4774 = vld [vmem:[%s1 + $0x1068] sm:$0xff]
      %v4775 = vld [vmem:[%s1 + $0x1070] sm:$0xff]
      %v4776 = vld [vmem:[%s1 + $0x1078] sm:$0xff]
      %v4777 = vld [vmem:[%s1 + $0x1110] sm:$0xff]
      %v4778 = vld [vmem:[%s1 + $0x1118] sm:$0xff]
      %v4779 = vld [vmem:[%s1 + $0x1120] sm:$0xff]
      %v4780 = vld [vmem:[%s1 + $0x1128] sm:$0xff]
      %v4781 = vld [vmem:[%s1 + $0x1130] sm:$0xff]
      %v4782 = vld [vmem:[%s1 + $0x1138] sm:$0xff]
      %v4783 = vld [vmem:[%s1 + $0x11d0] sm:$0xff]
      %v4784 = vld [vmem:[%s1 + $0x11d8] sm:$0xff]
      %v4785 = vld [vmem:[%s1 + $0x11e0] sm:$0xff]
      %v4786 = vld [vmem:[%s1 + $0x11e8] sm:$0xff]
      %v4787 = vld [vmem:[%s1 + $0x11f0] sm:$0xff]
      %v4788 = vld [vmem:[%s1 + $0x11f8] sm:$0xff]
      %v4789 = vld [vmem:[%s1 + $0x1290] sm:$0xff]
      %v4790 = vld [vmem:[%s1 + $0x1298] sm:$0xff]
      %v4791 = vld [vmem:[%s1 + $0x12a0] sm:$0xff]
      %v4792 = vld [vmem:[%s1 + $0x12a8] sm:$0xff]
      %v4793 = vld [vmem:[%s1 + $0x12b0] sm:$0xff]
      %v4794 = vld [vmem:[%s1 + $0x12b8] sm:$0xff]
      %v4795 = vld [vmem:[%s1 + $0x1350] sm:$0xff]
      %v4796 = vld [vmem:[%s1 + $0x1358] sm:$0xff]
      %v4797 = vld [vmem:[%s1 + $0x1360] sm:$0xff]
      %v4798 = vld [vmem:[%s1 + $0x1368] sm:$0xff]
      %v4799 = vld [vmem:[%s1 + $0x1370] sm:$0xff]
      %v4800 = vld [vmem:[%s1 + $0x1378] sm:$0xff]
      %v4801 = vld [vmem:[%s1 + $0x1410] sm:$0xff]
      %v4802 = vld [vmem:[%s1 + $0x1418] sm:$0xff]
      %v4803 = vld [vmem:[%s1 + $0x1420] sm:$0xff]
      %v4804 = vld [vmem:[%s1 + $0x1428] sm:$0xff]
      %v4805 = vld [vmem:[%s1 + $0x1430] sm:$0xff]
      %v4806 = vld [vmem:[%s1 + $0x1438] sm:$0xff]
      %v4807 = vld [vmem:[%s1 + $0x14d0] sm:$0xff]
      %v4808 = vld [vmem:[%s1 + $0x14d8] sm:$0xff]
      %v4809 = vld [vmem:[%s1 + $0x14e0] sm:$0xff]
      %v4810 = vld [vmem:[%s1 + $0x14e8] sm:$0xff]
      %v4811 = vld [vmem:[%s1 + $0x14f0] sm:$0xff]
      %v4812 = vld [vmem:[%s1 + $0x14f8] sm:$0xff]
      %v4813 = vld [vmem:[%s1 + $0x1590] sm:$0xff]
      %v4814 = vld [vmem:[%s1 + $0x1598] sm:$0xff]
      %v4815 = vld [vmem:[%s1 + $0x15a0] sm:$0xff]
      %v4816 = vld [vmem:[%s1 + $0x15a8] sm:$0xff]
      %v4817 = vld [vmem:[%s1 + $0x15b0] sm:$0xff]
      %v4818 = vld [vmem:[%s1 + $0x15b8] sm:$0xff]
      %v4819 = vld [vmem:[%s1 + $0x1650] sm:$0xff]
      %v4820 = vld [vmem:[%s1 + $0x1658] sm:$0xff]
      %v4821 = vld [vmem:[%s1 + $0x1660] sm:$0xff]
      %v4822 = vld [vmem:[%s1 + $0x1668] sm:$0xff]
      %v4823 = vld [vmem:[%s1 + $0x1670] sm:$0xff]
      %v4824 = vld [vmem:[%s1 + $0x1678] sm:$0xff]
      %v4825 = vld [vmem:[%s1 + $0x1710] sm:$0xff]
      %v4826 = vld [vmem:[%s1 + $0x1718] sm:$0xff]
      %v4827 = vld [vmem:[%s1 + $0x1720] sm:$0xff]
      %v4828 = vld [vmem:[%s1 + $0x1728] sm:$0xff]
      %v4829 = vld [vmem:[%s1 + $0x1730] sm:$0xff]
      %v4830 = vld [vmem:[%s1 + $0x1738] sm:$0xff]
      %v4831 = vld [vmem:[%s1 + $0x17d0] sm:$0xff]
      %v4832 = vld [vmem:[%s1 + $0x17d8] sm:$0xff]
      %v4833 = vld [vmem:[%s1 + $0x17e0] sm:$0xff]
      %v4834 = vld [vmem:[%s1 + $0x17e8] sm:$0xff]
      %v4835 = vld [vmem:[%s1 + $0x17f0] sm:$0xff]
      %v4836 = vld [vmem:[%s1 + $0x17f8] sm:$0xff]
      %v4837 = vld [vmem:[%s1 + $0x1890] sm:$0xff]
      %v4838 = vld [vmem:[%s1 + $0x1898] sm:$0xff]
      %v4839 = vld [vmem:[%s1 + $0x18a0] sm:$0xff]
      %v4840 = vld [vmem:[%s1 + $0x18a8] sm:$0xff]
      %v4841 = vld [vmem:[%s1 + $0x18b0] sm:$0xff]
      %v4842 = vld [vmem:[%s1 + $0x18b8] sm:$0xff]
      %v4843 = vld [vmem:[%s1 + $0x1950] sm:$0xff]
      %v4844 = vld [vmem:[%s1 + $0x1958] sm:$0xff]
      %v4845 = vld [vmem:[%s1 + $0x1960] sm:$0xff]
      %v4846 = vld [vmem:[%s1 + $0x1968] sm:$0xff]
      %v4847 = vld [vmem:[%s1 + $0x1970] sm:$0xff]
      %v4848 = vld [vmem:[%s1 + $0x1978] sm:$0xff]
      %v4849 = vld [vmem:[%s1 + $0x1a10] sm:$0xff]
      %v4850 = vld [vmem:[%s1 + $0x1a18] sm:$0xff]
      %v4851 = vld [vmem:[%s1 + $0x1a20] sm:$0xff]
      %v4852 = vld [vmem:[%s1 + $0x1a28] sm:$0xff]
      %v4853 = vld [vmem:[%s1 + $0x1a30] sm:$0xff]
      %v4854 = vld [vmem:[%s1 + $0x1a38] sm:$0xff]
      %v4855 = vld [vmem:[%s1 + $0x1ad0] sm:$0xff]
      %v4856 = vld [vmem:[%s1 + $0x1ad8] sm:$0xff]
      %v4857 = vld [vmem:[%s1 + $0x1ae0] sm:$0xff]
      %v4858 = vld [vmem:[%s1 + $0x1ae8] sm:$0xff]
      %v4859 = vld [vmem:[%s1 + $0x1af0] sm:$0xff]
      %v4860 = vld [vmem:[%s1 + $0x1af8] sm:$0xff]
      %v4861 = vld [vmem:[%s1 + $0x1b90] sm:$0xff]
      %v4862 = vld [vmem:[%s1 + $0x1b98] sm:$0xff]
      %v4863 = vld [vmem:[%s1 + $0x1ba0] sm:$0xff]
      %v4864 = vld [vmem:[%s1 + $0x1ba8] sm:$0xff]
      %v4865 = vld [vmem:[%s1 + $0x1bb0] sm:$0xff]
      %v4866 = vld [vmem:[%s1 + $0x1bb8] sm:$0xff]
      %v4867 = vld [vmem:[%s1 + $0x1c50] sm:$0xff]
      %v4868 = vld [vmem:[%s1 + $0x1c58] sm:$0xff]
      %v4869 = vld [vmem:[%s1 + $0x1c60] sm:$0xff]
      %v4870 = vld [vmem:[%s1 + $0x1c68] sm:$0xff]
      %v4871 = vld [vmem:[%s1 + $0x1c70] sm:$0xff]
      %v4872 = vld [vmem:[%s1 + $0x1c78] sm:$0xff]
      %v4873 = vld [vmem:[%s1 + $0x1d10] sm:$0xff]
      %v4874 = vld [vmem:[%s1 + $0x1d18] sm:$0xff]
      %v4875 = vld [vmem:[%s1 + $0x1d20] sm:$0xff]
      %v4876 = vld [vmem:[%s1 + $0x1d28] sm:$0xff]
      %v4877 = vld [vmem:[%s1 + $0x1d30] sm:$0xff]
      %v4878 = vld [vmem:[%s1 + $0x1d38] sm:$0xff]
      %v4879 = vld [vmem:[%s1 + $0x1dd0] sm:$0xff]
      %v4880 = vld [vmem:[%s1 + $0x1dd8] sm:$0xff]
      %v4881 = vld [vmem:[%s1 + $0x1de0] sm:$0xff]
      %v4882 = vld [vmem:[%s1 + $0x1de8] sm:$0xff]
      %v4883 = vld [vmem:[%s1 + $0x1df0] sm:$0xff]
      %v4884 = vld [vmem:[%s1 + $0x1df8] sm:$0xff]
      %v4885 = vld [vmem:[%s1 + $0x1e90] sm:$0xff]
      %v4886 = vld [vmem:[%s1 + $0x1e98] sm:$0xff]
      %v4887 = vld [vmem:[%s1 + $0x1ea0] sm:$0xff]
      %v4888 = vld [vmem:[%s1 + $0x1ea8] sm:$0xff]
      %v4889 = vld [vmem:[%s1 + $0x1eb0] sm:$0xff]
      %v4890 = vld [vmem:[%s1 + $0x1eb8] sm:$0xff]
      %v4891 = vld [vmem:[%s1 + $0x1f50] sm:$0xff]
      %v4892 = vld [vmem:[%s1 + $0x1f58] sm:$0xff]
      %v4893 = vld [vmem:[%s1 + $0x1f60] sm:$0xff]
      %v4894 = vld [vmem:[%s1 + $0x1f68] sm:$0xff]
      %v4895 = vld [vmem:[%s1 + $0x1f70] sm:$0xff]
      %v4896 = vld [vmem:[%s1 + $0x1f78] sm:$0xff]
      %v4897 = vld [vmem:[%s1 + $0x2010] sm:$0xff]
      %v4898 = vld [vmem:[%s1 + $0x2018] sm:$0xff]
      %v4899 = vld [vmem:[%s1 + $0x2020] sm:$0xff]
      %v4900 = vld [vmem:[%s1 + $0x2028] sm:$0xff]
      %v4901 = vld [vmem:[%s1 + $0x2030] sm:$0xff]
      %v4902 = vld [vmem:[%s1 + $0x2038] sm:$0xff]
      %v4903 = vld [vmem:[%s1 + $0x20d0] sm:$0xff]
      %v4904 = vld [vmem:[%s1 + $0x20d8] sm:$0xff]
      %v4905 = vld [vmem:[%s1 + $0x20e0] sm:$0xff]
      %v4906 = vld [vmem:[%s1 + $0x20e8] sm:$0xff]
      %v4907 = vld [vmem:[%s1 + $0x20f0] sm:$0xff]
      %v4908 = vld [vmem:[%s1 + $0x20f8] sm:$0xff]
      %v4909 = vld [vmem:[%s1 + $0x2190] sm:$0xff]
      %v4910 = vld [vmem:[%s1 + $0x2198] sm:$0xff]
      %v4911 = vld [vmem:[%s1 + $0x21a0] sm:$0xff]
      %v4912 = vld [vmem:[%s1 + $0x21a8] sm:$0xff]
      %v4913 = vld [vmem:[%s1 + $0x21b0] sm:$0xff]
      %v4914 = vld [vmem:[%s1 + $0x21b8] sm:$0xff]
      %v4915 = vld [vmem:[%s1 + $0x2250] sm:$0xff]
      %v4916 = vld [vmem:[%s1 + $0x2258] sm:$0xff]
      %v4917 = vld [vmem:[%s1 + $0x2260] sm:$0xff]
      %v4918 = vld [vmem:[%s1 + $0x2268] sm:$0xff]
      %v4919 = vld [vmem:[%s1 + $0x2270] sm:$0xff]
      %v4920 = vld [vmem:[%s1 + $0x2278] sm:$0xff]
      %v4921 = vld [vmem:[%s1 + $0x2310] sm:$0xff]
      %v4922 = vld [vmem:[%s1 + $0x2318] sm:$0xff]
      %v4923 = vld [vmem:[%s1 + $0x2320] sm:$0xff]
      %v4924 = vld [vmem:[%s1 + $0x2328] sm:$0xff]
      %v4925 = vld [vmem:[%s1 + $0x2330] sm:$0xff]
      %v4926 = vld [vmem:[%s1 + $0x2338] sm:$0xff]
      %v4927 = vld [vmem:[%s1 + $0x23d0] sm:$0xff]
      %v4928 = vld [vmem:[%s1 + $0x23d8] sm:$0xff]
      %v4929 = vld [vmem:[%s1 + $0x23e0] sm:$0xff]
      %v4930 = vld [vmem:[%s1 + $0x23e8] sm:$0xff]
      %v4931 = vld [vmem:[%s1 + $0x23f0] sm:$0xff]
      %v4932 = vld [vmem:[%s1 + $0x23f8] sm:$0xff]
      %v4933 = vld [vmem:[%s1 + $0x2490] sm:$0xff]
      %v4934 = vld [vmem:[%s1 + $0x2498] sm:$0xff]
      %v4935 = vld [vmem:[%s1 + $0x24a0] sm:$0xff]
      %v4936 = vld [vmem:[%s1 + $0x24a8] sm:$0xff]
      %v4937 = vld [vmem:[%s1 + $0x24b0] sm:$0xff]
      %v4938 = vld [vmem:[%s1 + $0x24b8] sm:$0xff]
      %v4939 = vld [vmem:[%s1 + $0x2550] sm:$0xff]
      %v4940 = vld [vmem:[%s1 + $0x2558] sm:$0xff]
      %v4941 = vld [vmem:[%s1 + $0x2560] sm:$0xff]
      %v4942 = vld [vmem:[%s1 + $0x2568] sm:$0xff]
      %v4943 = vld [vmem:[%s1 + $0x2570] sm:$0xff]
      %v4944 = vld [vmem:[%s1 + $0x2578] sm:$0xff]
      %v4945 = vld [vmem:[%s1 + $0x2610] sm:$0xff]
      %v4946 = vld [vmem:[%s1 + $0x2618] sm:$0xff]
      %v4947 = vld [vmem:[%s1 + $0x2620] sm:$0xff]
      %v4948 = vld [vmem:[%s1 + $0x2628] sm:$0xff]
      %v4949 = vld [vmem:[%s1 + $0x2630] sm:$0xff]
      %v4950 = vld [vmem:[%s1 + $0x2638] sm:$0xff]
      %v4951 = vld [vmem:[%s1 + $0x26d0] sm:$0xff]
      %v4952 = vld [vmem:[%s1 + $0x26d8] sm:$0xff]
      %v4953 = vld [vmem:[%s1 + $0x26e0] sm:$0xff]
      %v4954 = vld [vmem:[%s1 + $0x26e8] sm:$0xff]
      %v4955 = vld [vmem:[%s1 + $0x26f0] sm:$0xff]
      %v4956 = vld [vmem:[%s1 + $0x26f8] sm:$0xff]
      %v4957 = vld [vmem:[%s1 + $0x2790] sm:$0xff]
      %v4958 = vld [vmem:[%s1 + $0x2798] sm:$0xff]
      %v4959 = vld [vmem:[%s1 + $0x27a0] sm:$0xff]
      %v4960 = vld [vmem:[%s1 + $0x27a8] sm:$0xff]
      %v4961 = vld [vmem:[%s1 + $0x27b0] sm:$0xff]
      %v4962 = vld [vmem:[%s1 + $0x27b8] sm:$0xff]
      %v4963 = vld [vmem:[%s1 + $0x2850] sm:$0xff]
      %v4964 = vld [vmem:[%s1 + $0x2858] sm:$0xff]
      %v4965 = vld [vmem:[%s1 + $0x2860] sm:$0xff]
      %v4966 = vld [vmem:[%s1 + $0x2868] sm:$0xff]
      %v4967 = vld [vmem:[%s1 + $0x2870] sm:$0xff]
      %v4968 = vld [vmem:[%s1 + $0x2878] sm:$0xff]
      %v4969 = vld [vmem:[%s1 + $0x2910] sm:$0xff]
      %v4970 = vld [vmem:[%s1 + $0x2918] sm:$0xff]
      %v4971 = vld [vmem:[%s1 + $0x2920] sm:$0xff]
      %v4972 = vld [vmem:[%s1 + $0x2928] sm:$0xff]
      %v4973 = vld [vmem:[%s1 + $0x2930] sm:$0xff]
      %v4974 = vld [vmem:[%s1 + $0x2938] sm:$0xff]
      %v4975 = vld [vmem:[%s1 + $0x29d0] sm:$0xff]
      %v4976 = vld [vmem:[%s1 + $0x29d8] sm:$0xff]
      %v4977 = vld [vmem:[%s1 + $0x29e0] sm:$0xff]
      %v4978 = vld [vmem:[%s1 + $0x29e8] sm:$0xff]
      %v4979 = vld [vmem:[%s1 + $0x29f0] sm:$0xff]
      %v4980 = vld [vmem:[%s1 + $0x29f8] sm:$0xff]
      %v4981 = vld [vmem:[%s1 + $0x2a90] sm:$0xff]
      %v4982 = vld [vmem:[%s1 + $0x2a98] sm:$0xff]
      %v4983 = vld [vmem:[%s1 + $0x2aa0] sm:$0xff]
      %v4984 = vld [vmem:[%s1 + $0x2aa8] sm:$0xff]
      %v4985 = vld [vmem:[%s1 + $0x2ab0] sm:$0xff]
      %v4986 = vld [vmem:[%s1 + $0x2ab8] sm:$0xff]
      %v4987 = vld [vmem:[%s1 + $0x2b50] sm:$0xff]
      %v4988 = vld [vmem:[%s1 + $0x2b58] sm:$0xff]
      %v4989 = vld [vmem:[%s1 + $0x2b60] sm:$0xff]
      %v4990 = vld [vmem:[%s1 + $0x2b68] sm:$0xff]
      %v4991 = vld [vmem:[%s1 + $0x2b70] sm:$0xff]
      %v4992 = vld [vmem:[%s1 + $0x2b78] sm:$0xff]
      %v4993 = vld [vmem:[%s1 + $0x2c10] sm:$0xff]
      %v4994 = vld [vmem:[%s1 + $0x2c18] sm:$0xff]
      %v4995 = vld [vmem:[%s1 + $0x2c20] sm:$0xff]
      %v4996 = vld [vmem:[%s1 + $0x2c28] sm:$0xff]
      %v4997 = vld [vmem:[%s1 + $0x2c30] sm:$0xff]
      %v4998 = vld [vmem:[%s1 + $0x2c38] sm:$0xff]
      %v4999 = vld [vmem:[%s1 + $0x2cd0] sm:$0xff]
      %v5000 = vld [vmem:[%s1 + $0x2cd8] sm:$0xff]
      %v5001 = vld [vmem:[%s1 + $0x2ce0] sm:$0xff]
      %v5002 = vld [vmem:[%s1 + $0x2ce8] sm:$0xff]
      %v5003 = vld [vmem:[%s1 + $0x2cf0] sm:$0xff]
      %v5004 = vld [vmem:[%s1 + $0x2cf8] sm:$0xff]
      %v5005 = vld [vmem:[%s1 + $0x2d90] sm:$0xff]
      %v5006 = vld [vmem:[%s1 + $0x2d98] sm:$0xff]
      %v5007 = vld [vmem:[%s1 + $0x2da0] sm:$0xff]
      %v5008 = vld [vmem:[%s1 + $0x2da8] sm:$0xff]
      %v5009 = vld [vmem:[%s1 + $0x2db0] sm:$0xff]
      %v5010 = vld [vmem:[%s1 + $0x2db8] sm:$0xff]
      %v5011 = vld [vmem:[%s1 + $0x2e50] sm:$0xff]
      %v5012 = vld [vmem:[%s1 + $0x2e58] sm:$0xff]
      %v5013 = vld [vmem:[%s1 + $0x2e60] sm:$0xff]
      %v5014 = vld [vmem:[%s1 + $0x2e68] sm:$0xff]
      %v5015 = vld [vmem:[%s1 + $0x2e70] sm:$0xff]
      %v5016 = vld [vmem:[%s1 + $0x2e78] sm:$0xff]
      %v5017 = vld [vmem:[%s1 + $0x2f10] sm:$0xff]
      %v5018 = vld [vmem:[%s1 + $0x2f18] sm:$0xff]
      %v5019 = vld [vmem:[%s1 + $0x2f20] sm:$0xff]
      %v5020 = vld [vmem:[%s1 + $0x2f28] sm:$0xff]
      %v5021 = vld [vmem:[%s1 + $0x2f30] sm:$0xff]
      %v5022 = vld [vmem:[%s1 + $0x2f38] sm:$0xff]
      %v5023 = vld [vmem:[%s1 + $0x2fd0] sm:$0xff]
      %v5024 = vld [vmem:[%s1 + $0x2fd8] sm:$0xff]
      %v5025 = vld [vmem:[%s1 + $0x2fe0] sm:$0xff]
      %v5026 = vld [vmem:[%s1 + $0x2fe8] sm:$0xff]
      %v5027 = vld [vmem:[%s1 + $0x2ff0] sm:$0xff]
      %v5028 = vld [vmem:[%s1 + $0x2ff8] sm:$0xff]
      %5029 = vmatprep.subr.mxu0 %v4646
      %5030 = vmatpush1.msra.mxu0 %v4645
      %5031 = vmatprep.subr.mxu0 %v4652
      %5032 = vmatpush1.msra.mxu0 %v4651
      %5033 = vmatprep.subr.mxu0 %v4658
      %5034 = vmatpush1.msra.mxu0 %v4657
      %5035 = vmatprep.subr.mxu0 %v4664
      %5036 = vmatpush1.msra.mxu0 %v4663
      %5037 = vmatprep.subr.mxu0 %v4670
      %5038 = vmatpush1.msra.mxu0 %v4669
      %5039 = vmatprep.subr.mxu0 %v4676
      %5040 = vmatpush1.msra.mxu0 %v4675
      %5041 = vmatprep.subr.mxu0 %v4682
      %5042 = vmatpush1.msra.mxu0 %v4681
      %5043 = vmatprep.subr.mxu0 %v4688
      %5044 = vmatpush1.msra.mxu0 %v4687
      %5045 = vmatprep.subr.mxu0 %v4694
      %5046 = vmatpush1.msra.mxu0 %v4693
      %5047 = vmatprep.subr.mxu0 %v4700
      %5048 = vmatpush1.msra.mxu0 %v4699
      %5049 = vmatprep.subr.mxu0 %v4706
      %5050 = vmatpush1.msra.mxu0 %v4705
      %5051 = vmatprep.subr.mxu0 %v4712
      %5052 = vmatpush1.msra.mxu0 %v4711
      %5053 = vmatprep.subr.mxu0 %v4718
      %5054 = vmatpush1.msra.mxu0 %v4717
      %5055 = vmatprep.subr.mxu0 %v4724
      %5056 = vmatpush1.msra.mxu0 %v4723
      %5057 = vmatprep.subr.mxu0 %v4730
      %5058 = vmatpush1.msra.mxu0 %v4729
      %5059 = vmatprep.subr.mxu0 %v4736
      %5060 = vmatpush1.msra.mxu0 %v4735
      %5061 = vmatprep.subr.mxu0 %v4742
      %5062 = vmatpush1.msra.mxu0 %v4741
      %5063 = vmatprep.subr.mxu0 %v4748
      %5064 = vmatpush1.msra.mxu0 %v4747
      %5065 = vmatprep.subr.mxu0 %v4754
      %5066 = vmatpush1.msra.mxu0 %v4753
      %5067 = vmatprep.subr.mxu0 %v4760
      %5068 = vmatpush1.msra.mxu0 %v4759
      %5069 = vmatprep.subr.mxu0 %v4766
      %5070 = vmatpush1.msra.mxu0 %v4765
      %5071 = vmatprep.subr.mxu0 %v4772
      %5072 = vmatpush1.msra.mxu0 %v4771
      %5073 = vmatprep.subr.mxu0 %v4778
      %5074 = vmatpush1.msra.mxu0 %v4777
      %5075 = vmatprep.subr.mxu0 %v4784
      %5076 = vmatpush1.msra.mxu0 %v4783
      %5077 = vmatprep.subr.mxu0 %v4790
      %5078 = vmatpush1.msra.mxu0 %v4789
      %5079 = vmatprep.subr.mxu0 %v4796
      %5080 = vmatpush1.msra.mxu0 %v4795
      %5081 = vmatprep.subr.mxu0 %v4802
      %5082 = vmatpush1.msra.mxu0 %v4801
      %5083 = vmatprep.subr.mxu0 %v4808
      %5084 = vmatpush1.msra.mxu0 %v4807
      %5085 = vmatprep.subr.mxu0 %v4814
      %5086 = vmatpush1.msra.mxu0 %v4813
      %5087 = vmatprep.subr.mxu0 %v4820
      %5088 = vmatpush1.msra.mxu0 %v4819
      %5089 = vmatprep.subr.mxu0 %v4826
      %5090 = vmatpush1.msra.mxu0 %v4825
      %5091 = vmatprep.subr.mxu0 %v4832
      %5092 = vmatpush1.msra.mxu0 %v4831
      %5093 = vmatprep.mubr.f32.mxu0 %v340
      %5094 = vmatmul.mubr.f32.gmra.mrb[0].mxu0 %v339
      %v5095 = vpop.f32.mrb[0].mxu0
      %v5096 = vadd.f32 0.0, %v5095
      %v5097 = vpop.f32.mrb[0].mxu0
      %v5098 = vadd.f32 0.0, %v5097
      %5099 = vmatprep.mubr.f32.mxu0 %v344
      %5100 = vmatmul.mubr.f32.gmra.mrb[0].mxu0 %v343
      %v5101 = vpop.f32.mrb[0].mxu0
      %v5102 = vadd.f32 0.0, %v5101
      %v5103 = vpop.f32.mrb[0].mxu0
      %v5104 = vadd.f32 0.0, %v5103
      %5105 = vmatprep.mubr.f32.mxu0 %v348
      %5106 = vmatmul.mubr.f32.gmra.mrb[0].mxu0 %v347
      %v5107 = vpop.f32.mrb[0].mxu0
      %v5108 = vadd.f32 0.0, %v5107
      %v5109 = vpop.f32.mrb[0].mxu0
      %v5110 = vadd.f32 0.0, %v5109
      %5111 = vmatprep.mubr.f32.mxu0 %v352
      %5112 = vmatmul.mubr.f32.gmra.mrb[0].mxu0 %v351
      %v5113 = vpop.f32.mrb[0].mxu0
      %v5114 = vadd.f32 0.0, %v5113
      %v5115 = vpop.f32.mrb[0].mxu0
      %v5116 = vadd.f32 0.0, %v5115
      %5117 = vmatprep.mubr.f32.mxu0 %v356
      %5118 = vmatmul.mubr.f32.gmra.mrb[0].mxu0 %v355
      %v5119 = vpop.f32.mrb[0].mxu0
      %v5120 = vadd.f32 0.0, %v5119
      %v5121 = vpop.f32.mrb[0].mxu0
      %v5122 = vadd.f32 0.0, %v5121
      %5123 = vmatprep.mubr.f32.mxu0 %v360
      %5124 = vmatmul.mubr.f32.gmra.mrb[0].mxu0 %v359
      %v5125 = vpop.f32.mrb[0].mxu0
      %v5126 = vadd.f32 0.0, %v5125
      %v5127 = vpop.f32.mrb[0].mxu0
      %v5128 = vadd.f32 0.0, %v5127
      %5129 = vmatprep.mubr.f32.mxu0 %v364
      %5130 = vmatmul.mubr.f32.gmra.mrb[0].mxu0 %v363
      %v5131 = vpop.f32.mrb[0].mxu0
      %v5132 = vadd.f32 0.0, %v5131
      %v5133 = vpop.f32.mrb[0].mxu0
      %v5134 = vadd.f32 0.0, %v5133
      %5135 = vmatprep.mubr.f32.mxu0 %v368
      %5136 = vmatmul.mubr.f32.gmra.mrb[0].mxu0 %v367
      %v5137 = vpop.f32.mrb[0].mxu0
      %v5138 = vadd.f32 0.0, %v5137
      %v5139 = vpop.f32.mrb[0].mxu0
      %v5140 = vadd.f32 0.0, %v5139
      %5141 = vmatprep.mubr.f32.mxu0 %v372
      %5142 = vmatmul.mubr.f32.gmra.mrb[0].mxu0 %v371
      %v5143 = vpop.f32.mrb[0].mxu0
      %v5144 = vadd.f32 0.0, %v5143
      %v5145 = vpop.f32.mrb[0].mxu0
      %v5146 = vadd.f32 0.0, %v5145
      %5147 = vmatprep.mubr.f32.mxu0 %v376
      %5148 = vmatmul.mubr.f32.gmra.mrb[0].mxu0 %v375
      %v5149 = vpop.f32.mrb[0].mxu0
      %v5150 = vadd.f32 0.0, %v5149
      %v5151 = vpop.f32.mrb[0].mxu0
      %v5152 = vadd.f32 0.0, %v5151
      %5153 = vmatprep.mubr.f32.mxu0 %v380
      %5154 = vmatmul.mubr.f32.gmra.mrb[0].mxu0 %v379
      %v5155 = vpop.f32.mrb[0].mxu0
      %v5156 = vadd.f32 0.0, %v5155
      %v5157 = vpop.f32.mrb[0].mxu0
      %v5158 = vadd.f32 0.0, %v5157
      %5159 = vmatprep.mubr.f32.mxu0 %v384
      %5160 = vmatmul.mubr.f32.gmra.mrb[0].mxu0 %v383
      %v5161 = vpop.f32.mrb[0].mxu0
      %v5162 = vadd.f32 0.0, %v5161
      %v5163 = vpop.f32.mrb[0].mxu0
      %v5164 = vadd.f32 0.0, %v5163
      %5165 = vmatprep.mubr.f32.mxu0 %v388
      %5166 = vmatmul.mubr.f32.gmra.mrb[0].mxu0 %v387
      %v5167 = vpop.f32.mrb[0].mxu0
      %v5168 = vadd.f32 0.0, %v5167
      %v5169 = vpop.f32.mrb[0].mxu0
      %v5170 = vadd.f32 0.0, %v5169
      %5171 = vmatprep.mubr.f32.mxu0 %v392
      %5172 = vmatmul.mubr.f32.gmra.mrb[0].mxu0 %v391
      %v5173 = vpop.f32.mrb[0].mxu0
      %v5174 = vadd.f32 0.0, %v5173
      %v5175 = vpop.f32.mrb[0].mxu0
      %v5176 = vadd.f32 0.0, %v5175
      %5177 = vmatprep.mubr.f32.mxu0 %v396
      %5178 = vmatmul.mubr.f32.gmra.mrb[0].mxu0 %v395
      %v5179 = vpop.f32.mrb[0].mxu0
      %v5180 = vadd.f32 0.0, %v5179
      %v5181 = vpop.f32.mrb[0].mxu0
      %v5182 = vadd.f32 0.0, %v5181
      %5183 = vmatprep.mubr.f32.mxu0 %v400
      %5184 = vmatmul.mubr.f32.gmra.mrb[0].mxu0 %v399
      %v5185 = vpop.f32.mrb[0].mxu0
      %v5186 = vadd.f32 0.0, %v5185
      %v5187 = vpop.f32.mrb[0].mxu0
      %v5188 = vadd.f32 0.0, %v5187
      %5189 = vdwg.mxu0
      %5190 = vmatprep.subr.mxu0 %v4838
      %5191 = vmatpush1.msra.mxu0 %v4837
      %5192 = vmatprep.subr.mxu0 %v4844
      %5193 = vmatpush1.msra.mxu0 %v4843
      %5194 = vmatprep.subr.mxu0 %v4850
      %5195 = vmatpush1.msra.mxu0 %v4849
      %5196 = vmatprep.subr.mxu0 %v4856
      %5197 = vmatpush1.msra.mxu0 %v4855
      %5198 = vmatprep.subr.mxu0 %v4862
      %5199 = vmatpush1.msra.mxu0 %v4861
      %5200 = vmatprep.subr.mxu0 %v4868
      %5201 = vmatpush1.msra.mxu0 %v4867
      %5202 = vmatprep.subr.mxu0 %v4874
      %5203 = vmatpush1.msra.mxu0 %v4873
      %5204 = vmatprep.subr.mxu0 %v4880
      %5205 = vmatpush1.msra.mxu0 %v4879
      %5206 = vmatprep.subr.mxu0 %v4886
      %5207 = vmatpush1.msra.mxu0 %v4885
      %5208 = vmatprep.subr.mxu0 %v4892
      %5209 = vmatpush1.msra.mxu0 %v4891
      %5210 = vmatprep.subr.mxu0 %v4898
      %5211 = vmatpush1.msra.mxu0 %v4897
      %5212 = vmatprep.subr.mxu0 %v4904
      %5213 = vmatpush1.msra.mxu0 %v4903
      %5214 = vmatprep.subr.mxu0 %v4910
      %5215 = vmatpush1.msra.mxu0 %v4909
      %5216 = vmatprep.subr.mxu0 %v4916
      %5217 = vmatpush1.msra.mxu0 %v4915
      %5218 = vmatprep.subr.mxu0 %v4922
      %5219 = vmatpush1.msra.mxu0 %v4921
      %5220 = vmatprep.subr.mxu0 %v4928
      %5221 = vmatpush1.msra.mxu0 %v4927
      %5222 = vmatprep.subr.mxu0 %v4934
      %5223 = vmatpush1.msra.mxu0 %v4933
      %5224 = vmatprep.subr.mxu0 %v4940
      %5225 = vmatpush1.msra.mxu0 %v4939
      %5226 = vmatprep.subr.mxu0 %v4946
      %5227 = vmatpush1.msra.mxu0 %v4945
      %5228 = vmatprep.subr.mxu0 %v4952
      %5229 = vmatpush1.msra.mxu0 %v4951
      %5230 = vmatprep.subr.mxu0 %v4958
      %5231 = vmatpush1.msra.mxu0 %v4957
      %5232 = vmatprep.subr.mxu0 %v4964
      %5233 = vmatpush1.msra.mxu0 %v4963
      %5234 = vmatprep.subr.mxu0 %v4970
      %5235 = vmatpush1.msra.mxu0 %v4969
      %5236 = vmatprep.subr.mxu0 %v4976
      %5237 = vmatpush1.msra.mxu0 %v4975
      %5238 = vmatprep.subr.mxu0 %v4982
      %5239 = vmatpush1.msra.mxu0 %v4981
      %5240 = vmatprep.subr.mxu0 %v4988
      %5241 = vmatpush1.msra.mxu0 %v4987
      %5242 = vmatprep.subr.mxu0 %v4994
      %5243 = vmatpush1.msra.mxu0 %v4993
      %5244 = vmatprep.subr.mxu0 %v5000
      %5245 = vmatpush1.msra.mxu0 %v4999
      %5246 = vmatprep.subr.mxu0 %v5006
      %5247 = vmatpush1.msra.mxu0 %v5005
      %5248 = vmatprep.subr.mxu0 %v5012
      %5249 = vmatpush1.msra.mxu0 %v5011
      %5250 = vmatprep.subr.mxu0 %v5018
      %5251 = vmatpush1.msra.mxu0 %v5017
      %5252 = vmatprep.subr.mxu0 %v5024
      %5253 = vmatpush1.msra.mxu0 %v5023
      %5254 = vmatprep.mubr.f32.mxu0 %v342
      %5255 = vmatmul.mubr.f32.gmra.mrb[0].mxu0 %v341
      %v5256 = vpop.f32.mrb[0].mxu0
      %v5257 = vadd.f32 %v5096, %v5256
      %v5258 = vpop.f32.mrb[0].mxu0
      %v5259 = vadd.f32 %v5098, %v5258
      %5260 = vmatprep.mubr.f32.mxu0 %v346
      %5261 = vmatmul.mubr.f32.gmra.mrb[0].mxu0 %v345
      %v5262 = vpop.f32.mrb[0].mxu0
      %v5263 = vadd.f32 %v5102, %v5262
      %v5264 = vpop.f32.mrb[0].mxu0
      %v5265 = vadd.f32 %v5104, %v5264
      %5266 = vmatprep.mubr.f32.mxu0 %v350
      %5267 = vmatmul.mubr.f32.gmra.mrb[0].mxu0 %v349
      %v5268 = vpop.f32.mrb[0].mxu0
      %v5269 = vadd.f32 %v5108, %v5268
      %v5270 = vpop.f32.mrb[0].mxu0
      %v5271 = vadd.f32 %v5110, %v5270
      %5272 = vmatprep.mubr.f32.mxu0 %v354
      %5273 = vmatmul.mubr.f32.gmra.mrb[0].mxu0 %v353
      %v5274 = vpop.f32.mrb[0].mxu0
      %v5275 = vadd.f32 %v5114, %v5274
      %v5276 = vpop.f32.mrb[0].mxu0
      %v5277 = vadd.f32 %v5116, %v5276
      %5278 = vmatprep.mubr.f32.mxu0 %v358
      %5279 = vmatmul.mubr.f32.gmra.mrb[0].mxu0 %v357
      %v5280 = vpop.f32.mrb[0].mxu0
      %v5281 = vadd.f32 %v5120, %v5280
      %v5282 = vpop.f32.mrb[0].mxu0
      %v5283 = vadd.f32 %v5122, %v5282
      %5284 = vmatprep.mubr.f32.mxu0 %v362
      %5285 = vmatmul.mubr.f32.gmra.mrb[0].mxu0 %v361
      %v5286 = vpop.f32.mrb[0].mxu0
      %v5287 = vadd.f32 %v5126, %v5286
      %v5288 = vpop.f32.mrb[0].mxu0
      %v5289 = vadd.f32 %v5128, %v5288
      %5290 = vmatprep.mubr.f32.mxu0 %v366
      %5291 = vmatmul.mubr.f32.gmra.mrb[0].mxu0 %v365
      %v5292 = vpop.f32.mrb[0].mxu0
      %v5293 = vadd.f32 %v5132, %v5292
      %v5294 = vpop.f32.mrb[0].mxu0
      %v5295 = vadd.f32 %v5134, %v5294
      %5296 = vmatprep.mubr.f32.mxu0 %v370
      %5297 = vmatmul.mubr.f32.gmra.mrb[0].mxu0 %v369
      %v5298 = vpop.f32.mrb[0].mxu0
      %v5299 = vadd.f32 %v5138, %v5298
      %v5300 = vpop.f32.mrb[0].mxu0
      %v5301 = vadd.f32 %v5140, %v5300
      %5302 = vmatprep.mubr.f32.mxu0 %v374
      %5303 = vmatmul.mubr.f32.gmra.mrb[0].mxu0 %v373
      %v5304 = vpop.f32.mrb[0].mxu0
      %v5305 = vadd.f32 %v5144, %v5304
      %v5306 = vpop.f32.mrb[0].mxu0
      %v5307 = vadd.f32 %v5146, %v5306
      %5308 = vmatprep.mubr.f32.mxu0 %v378
      %5309 = vmatmul.mubr.f32.gmra.mrb[0].mxu0 %v377
      %v5310 = vpop.f32.mrb[0].mxu0
      %v5311 = vadd.f32 %v5150, %v5310
      %v5312 = vpop.f32.mrb[0].mxu0
      %v5313 = vadd.f32 %v5152, %v5312
      %5314 = vmatprep.mubr.f32.mxu0 %v382
      %5315 = vmatmul.mubr.f32.gmra.mrb[0].mxu0 %v381
      %v5316 = vpop.f32.mrb[0].mxu0
      %v5317 = vadd.f32 %v5156, %v5316
      %v5318 = vpop.f32.mrb[0].mxu0
      %v5319 = vadd.f32 %v5158, %v5318
      %5320 = vmatprep.mubr.f32.mxu0 %v386
      %5321 = vmatmul.mubr.f32.gmra.mrb[0].mxu0 %v385
      %v5322 = vpop.f32.mrb[0].mxu0
      %v5323 = vadd.f32 %v5162, %v5322
      %v5324 = vpop.f32.mrb[0].mxu0
      %v5325 = vadd.f32 %v5164, %v5324
      %5326 = vmatprep.mubr.f32.mxu0 %v390
      %5327 = vmatmul.mubr.f32.gmra.mrb[0].mxu0 %v389
      %v5328 = vpop.f32.mrb[0].mxu0
      %v5329 = vadd.f32 %v5168, %v5328
      %v5330 = vpop.f32.mrb[0].mxu0
      %v5331 = vadd.f32 %v5170, %v5330
      %5332 = vmatprep.mubr.f32.mxu0 %v394
      %5333 = vmatmul.mubr.f32.gmra.mrb[0].mxu0 %v393
      %v5334 = vpop.f32.mrb[0].mxu0
      %v5335 = vadd.f32 %v5174, %v5334
      %v5336 = vpop.f32.mrb[0].mxu0
      %v5337 = vadd.f32 %v5176, %v5336
      %5338 = vmatprep.mubr.f32.mxu0 %v398
      %5339 = vmatmul.mubr.f32.gmra.mrb[0].mxu0 %v397
      %v5340 = vpop.f32.mrb[0].mxu0
      %v5341 = vadd.f32 %v5180, %v5340
      %v5342 = vpop.f32.mrb[0].mxu0
      %v5343 = vadd.f32 %v5182, %v5342
      %5344 = vmatprep.mubr.f32.mxu0 %v402
      %5345 = vmatmul.mubr.f32.gmra.mrb[0].mxu0 %v401
      %v5346 = vpop.f32.mrb[0].mxu0
      %v5347 = vadd.f32 %v5186, %v5346
      %v5348 = vpop.f32.mrb[0].mxu0
      %v5349 = vadd.f32 %v5188, %v5348
      %5350 = vdwg.mxu0
      %5351 = vmatprep.subr.mxu0 %v4648
      %5352 = vmatpush1.msra.mxu0 %v4647
      %5353 = vmatprep.subr.mxu0 %v4654
      %5354 = vmatpush1.msra.mxu0 %v4653
      %5355 = vmatprep.subr.mxu0 %v4660
      %5356 = vmatpush1.msra.mxu0 %v4659
      %5357 = vmatprep.subr.mxu0 %v4666
      %5358 = vmatpush1.msra.mxu0 %v4665
      %5359 = vmatprep.subr.mxu0 %v4672
      %5360 = vmatpush1.msra.mxu0 %v4671
      %5361 = vmatprep.subr.mxu0 %v4678
      %5362 = vmatpush1.msra.mxu0 %v4677
      %5363 = vmatprep.subr.mxu0 %v4684
      %5364 = vmatpush1.msra.mxu0 %v4683
      %5365 = vmatprep.subr.mxu0 %v4690
      %5366 = vmatpush1.msra.mxu0 %v4689
      %5367 = vmatprep.subr.mxu0 %v4696
      %5368 = vmatpush1.msra.mxu0 %v4695
      %5369 = vmatprep.subr.mxu0 %v4702
      %5370 = vmatpush1.msra.mxu0 %v4701
      %5371 = vmatprep.subr.mxu0 %v4708
      %5372 = vmatpush1.msra.mxu0 %v4707
      %5373 = vmatprep.subr.mxu0 %v4714
      %5374 = vmatpush1.msra.mxu0 %v4713
      %5375 = vmatprep.subr.mxu0 %v4720
      %5376 = vmatpush1.msra.mxu0 %v4719
      %5377 = vmatprep.subr.mxu0 %v4726
      %5378 = vmatpush1.msra.mxu0 %v4725
      %5379 = vmatprep.subr.mxu0 %v4732
      %5380 = vmatpush1.msra.mxu0 %v4731
      %5381 = vmatprep.subr.mxu0 %v4738
      %5382 = vmatpush1.msra.mxu0 %v4737
      %5383 = vmatprep.subr.mxu0 %v4744
      %5384 = vmatpush1.msra.mxu0 %v4743
      %5385 = vmatprep.subr.mxu0 %v4750
      %5386 = vmatpush1.msra.mxu0 %v4749
      %5387 = vmatprep.subr.mxu0 %v4756
      %5388 = vmatpush1.msra.mxu0 %v4755
      %5389 = vmatprep.subr.mxu0 %v4762
      %5390 = vmatpush1.msra.mxu0 %v4761
      %5391 = vmatprep.subr.mxu0 %v4768
      %5392 = vmatpush1.msra.mxu0 %v4767
      %5393 = vmatprep.subr.mxu0 %v4774
      %5394 = vmatpush1.msra.mxu0 %v4773
      %5395 = vmatprep.subr.mxu0 %v4780
      %5396 = vmatpush1.msra.mxu0 %v4779
      %5397 = vmatprep.subr.mxu0 %v4786
      %5398 = vmatpush1.msra.mxu0 %v4785
      %5399 = vmatprep.subr.mxu0 %v4792
      %5400 = vmatpush1.msra.mxu0 %v4791
      %5401 = vmatprep.subr.mxu0 %v4798
      %5402 = vmatpush1.msra.mxu0 %v4797
      %5403 = vmatprep.subr.mxu0 %v4804
      %5404 = vmatpush1.msra.mxu0 %v4803
      %5405 = vmatprep.subr.mxu0 %v4810
      %5406 = vmatpush1.msra.mxu0 %v4809
      %5407 = vmatprep.subr.mxu0 %v4816
      %5408 = vmatpush1.msra.mxu0 %v4815
      %5409 = vmatprep.subr.mxu0 %v4822
      %5410 = vmatpush1.msra.mxu0 %v4821
      %5411 = vmatprep.subr.mxu0 %v4828
      %5412 = vmatpush1.msra.mxu0 %v4827
      %5413 = vmatprep.subr.mxu0 %v4834
      %5414 = vmatpush1.msra.mxu0 %v4833
      %5415 = vmatprep.mubr.f32.mxu0 %v340
      %5416 = vmatmul.mubr.f32.gmra.mrb[0].mxu0 %v339
      %v5417 = vpop.f32.mrb[0].mxu0
      %v5418 = vadd.f32 0.0, %v5417
      %v5419 = vpop.f32.mrb[0].mxu0
      %v5420 = vadd.f32 0.0, %v5419
      %5421 = vmatprep.mubr.f32.mxu0 %v344
      %5422 = vmatmul.mubr.f32.gmra.mrb[0].mxu0 %v343
      %v5423 = vpop.f32.mrb[0].mxu0
      %v5424 = vadd.f32 0.0, %v5423
      %v5425 = vpop.f32.mrb[0].mxu0
      %v5426 = vadd.f32 0.0, %v5425
      %5427 = vmatprep.mubr.f32.mxu0 %v348
      %5428 = vmatmul.mubr.f32.gmra.mrb[0].mxu0 %v347
      %v5429 = vpop.f32.mrb[0].mxu0
      %v5430 = vadd.f32 0.0, %v5429
      %v5431 = vpop.f32.mrb[0].mxu0
      %v5432 = vadd.f32 0.0, %v5431
      %5433 = vmatprep.mubr.f32.mxu0 %v352
      %5434 = vmatmul.mubr.f32.gmra.mrb[0].mxu0 %v351
      %v5435 = vpop.f32.mrb[0].mxu0
      %v5436 = vadd.f32 0.0, %v5435
      %v5437 = vpop.f32.mrb[0].mxu0
      %v5438 = vadd.f32 0.0, %v5437
      %5439 = vmatprep.mubr.f32.mxu0 %v356
      %5440 = vmatmul.mubr.f32.gmra.mrb[0].mxu0 %v355
      %v5441 = vpop.f32.mrb[0].mxu0
      %v5442 = vadd.f32 0.0, %v5441
      %v5443 = vpop.f32.mrb[0].mxu0
      %v5444 = vadd.f32 0.0, %v5443
      %5445 = vmatprep.mubr.f32.mxu0 %v360
      %5446 = vmatmul.mubr.f32.gmra.mrb[0].mxu0 %v359
      %v5447 = vpop.f32.mrb[0].mxu0
      %v5448 = vadd.f32 0.0, %v5447
      %v5449 = vpop.f32.mrb[0].mxu0
      %v5450 = vadd.f32 0.0, %v5449
      %5451 = vmatprep.mubr.f32.mxu0 %v364
      %5452 = vmatmul.mubr.f32.gmra.mrb[0].mxu0 %v363
      %v5453 = vpop.f32.mrb[0].mxu0
      %v5454 = vadd.f32 0.0, %v5453
      %v5455 = vpop.f32.mrb[0].mxu0
      %v5456 = vadd.f32 0.0, %v5455
      %5457 = vmatprep.mubr.f32.mxu0 %v368
      %5458 = vmatmul.mubr.f32.gmra.mrb[0].mxu0 %v367
      %v5459 = vpop.f32.mrb[0].mxu0
      %v5460 = vadd.f32 0.0, %v5459
      %v5461 = vpop.f32.mrb[0].mxu0
      %v5462 = vadd.f32 0.0, %v5461
      %5463 = vmatprep.mubr.f32.mxu0 %v372
      %5464 = vmatmul.mubr.f32.gmra.mrb[0].mxu0 %v371
      %v5465 = vpop.f32.mrb[0].mxu0
      %v5466 = vadd.f32 0.0, %v5465
      %v5467 = vpop.f32.mrb[0].mxu0
      %v5468 = vadd.f32 0.0, %v5467
      %5469 = vmatprep.mubr.f32.mxu0 %v376
      %5470 = vmatmul.mubr.f32.gmra.mrb[0].mxu0 %v375
      %v5471 = vpop.f32.mrb[0].mxu0
      %v5472 = vadd.f32 0.0, %v5471
      %v5473 = vpop.f32.mrb[0].mxu0
      %v5474 = vadd.f32 0.0, %v5473
      %5475 = vmatprep.mubr.f32.mxu0 %v380
      %5476 = vmatmul.mubr.f32.gmra.mrb[0].mxu0 %v379
      %v5477 = vpop.f32.mrb[0].mxu0
      %v5478 = vadd.f32 0.0, %v5477
      %v5479 = vpop.f32.mrb[0].mxu0
      %v5480 = vadd.f32 0.0, %v5479
      %5481 = vmatprep.mubr.f32.mxu0 %v384
      %5482 = vmatmul.mubr.f32.gmra.mrb[0].mxu0 %v383
      %v5483 = vpop.f32.mrb[0].mxu0
      %v5484 = vadd.f32 0.0, %v5483
      %v5485 = vpop.f32.mrb[0].mxu0
      %v5486 = vadd.f32 0.0, %v5485
      %5487 = vmatprep.mubr.f32.mxu0 %v388
      %5488 = vmatmul.mubr.f32.gmra.mrb[0].mxu0 %v387
      %v5489 = vpop.f32.mrb[0].mxu0
      %v5490 = vadd.f32 0.0, %v5489
      %v5491 = vpop.f32.mrb[0].mxu0
      %v5492 = vadd.f32 0.0, %v5491
      %5493 = vmatprep.mubr.f32.mxu0 %v392
      %5494 = vmatmul.mubr.f32.gmra.mrb[0].mxu0 %v391
      %v5495 = vpop.f32.mrb[0].mxu0
      %v5496 = vadd.f32 0.0, %v5495
      %v5497 = vpop.f32.mrb[0].mxu0
      %v5498 = vadd.f32 0.0, %v5497
      %5499 = vmatprep.mubr.f32.mxu0 %v396
      %5500 = vmatmul.mubr.f32.gmra.mrb[0].mxu0 %v395
      %v5501 = vpop.f32.mrb[0].mxu0
      %v5502 = vadd.f32 0.0, %v5501
      %v5503 = vpop.f32.mrb[0].mxu0
      %v5504 = vadd.f32 0.0, %v5503
      %5505 = vmatprep.mubr.f32.mxu0 %v400
      %5506 = vmatmul.mubr.f32.gmra.mrb[0].mxu0 %v399
      %v5507 = vpop.f32.mrb[0].mxu0
      %v5508 = vadd.f32 0.0, %v5507
      %v5509 = vpop.f32.mrb[0].mxu0
      %v5510 = vadd.f32 0.0, %v5509
      %5511 = vdwg.mxu0
      %5512 = vmatprep.subr.mxu0 %v4840
      %5513 = vmatpush1.msra.mxu0 %v4839
      %5514 = vmatprep.subr.mxu0 %v4846
      %5515 = vmatpush1.msra.mxu0 %v4845
      %5516 = vmatprep.subr.mxu0 %v4852
      %5517 = vmatpush1.msra.mxu0 %v4851
      %5518 = vmatprep.subr.mxu0 %v4858
      %5519 = vmatpush1.msra.mxu0 %v4857
      %5520 = vmatprep.subr.mxu0 %v4864
      %5521 = vmatpush1.msra.mxu0 %v4863
      %5522 = vmatprep.subr.mxu0 %v4870
      %5523 = vmatpush1.msra.mxu0 %v4869
      %5524 = vmatprep.subr.mxu0 %v4876
      %5525 = vmatpush1.msra.mxu0 %v4875
      %5526 = vmatprep.subr.mxu0 %v4882
      %5527 = vmatpush1.msra.mxu0 %v4881
      %5528 = vmatprep.subr.mxu0 %v4888
      %5529 = vmatpush1.msra.mxu0 %v4887
      %5530 = vmatprep.subr.mxu0 %v4894
      %5531 = vmatpush1.msra.mxu0 %v4893
      %5532 = vmatprep.subr.mxu0 %v4900
      %5533 = vmatpush1.msra.mxu0 %v4899
      %5534 = vmatprep.subr.mxu0 %v4906
      %5535 = vmatpush1.msra.mxu0 %v4905
      %5536 = vmatprep.subr.mxu0 %v4912
      %5537 = vmatpush1.msra.mxu0 %v4911
      %5538 = vmatprep.subr.mxu0 %v4918
      %5539 = vmatpush1.msra.mxu0 %v4917
      %5540 = vmatprep.subr.mxu0 %v4924
      %5541 = vmatpush1.msra.mxu0 %v4923
      %5542 = vmatprep.subr.mxu0 %v4930
      %5543 = vmatpush1.msra.mxu0 %v4929
      %5544 = vmatprep.subr.mxu0 %v4936
      %5545 = vmatpush1.msra.mxu0 %v4935
      %5546 = vmatprep.subr.mxu0 %v4942
      %5547 = vmatpush1.msra.mxu0 %v4941
      %5548 = vmatprep.subr.mxu0 %v4948
      %5549 = vmatpush1.msra.mxu0 %v4947
      %5550 = vmatprep.subr.mxu0 %v4954
      %5551 = vmatpush1.msra.mxu0 %v4953
      %5552 = vmatprep.subr.mxu0 %v4960
      %5553 = vmatpush1.msra.mxu0 %v4959
      %5554 = vmatprep.subr.mxu0 %v4966
      %5555 = vmatpush1.msra.mxu0 %v4965
      %5556 = vmatprep.subr.mxu0 %v4972
      %5557 = vmatpush1.msra.mxu0 %v4971
      %5558 = vmatprep.subr.mxu0 %v4978
      %5559 = vmatpush1.msra.mxu0 %v4977
      %5560 = vmatprep.subr.mxu0 %v4984
      %5561 = vmatpush1.msra.mxu0 %v4983
      %5562 = vmatprep.subr.mxu0 %v4990
      %5563 = vmatpush1.msra.mxu0 %v4989
      %5564 = vmatprep.subr.mxu0 %v4996
      %5565 = vmatpush1.msra.mxu0 %v4995
      %5566 = vmatprep.subr.mxu0 %v5002
      %5567 = vmatpush1.msra.mxu0 %v5001
      %5568 = vmatprep.subr.mxu0 %v5008
      %5569 = vmatpush1.msra.mxu0 %v5007
      %5570 = vmatprep.subr.mxu0 %v5014
      %5571 = vmatpush1.msra.mxu0 %v5013
      %5572 = vmatprep.subr.mxu0 %v5020
      %5573 = vmatpush1.msra.mxu0 %v5019
      %5574 = vmatprep.subr.mxu0 %v5026
      %5575 = vmatpush1.msra.mxu0 %v5025
      %5576 = vmatprep.mubr.f32.mxu0 %v342
      %5577 = vmatmul.mubr.f32.gmra.mrb[0].mxu0 %v341
      %v5578 = vpop.f32.mrb[0].mxu0
      %v5579 = vadd.f32 %v5418, %v5578
      %v5580 = vpop.f32.mrb[0].mxu0
      %v5581 = vadd.f32 %v5420, %v5580
      %5582 = vmatprep.mubr.f32.mxu0 %v346
      %5583 = vmatmul.mubr.f32.gmra.mrb[0].mxu0 %v345
      %v5584 = vpop.f32.mrb[0].mxu0
      %v5585 = vadd.f32 %v5424, %v5584
      %v5586 = vpop.f32.mrb[0].mxu0
      %v5587 = vadd.f32 %v5426, %v5586
      %5588 = vmatprep.mubr.f32.mxu0 %v350
      %5589 = vmatmul.mubr.f32.gmra.mrb[0].mxu0 %v349
      %v5590 = vpop.f32.mrb[0].mxu0
      %v5591 = vadd.f32 %v5430, %v5590
      %v5592 = vpop.f32.mrb[0].mxu0
      %v5593 = vadd.f32 %v5432, %v5592
      %5594 = vmatprep.mubr.f32.mxu0 %v354
      %5595 = vmatmul.mubr.f32.gmra.mrb[0].mxu0 %v353
      %v5596 = vpop.f32.mrb[0].mxu0
      %v5597 = vadd.f32 %v5436, %v5596
      %v5598 = vpop.f32.mrb[0].mxu0
      %v5599 = vadd.f32 %v5438, %v5598
      %5600 = vmatprep.mubr.f32.mxu0 %v358
      %5601 = vmatmul.mubr.f32.gmra.mrb[0].mxu0 %v357
      %v5602 = vpop.f32.mrb[0].mxu0
      %v5603 = vadd.f32 %v5442, %v5602
      %v5604 = vpop.f32.mrb[0].mxu0
      %v5605 = vadd.f32 %v5444, %v5604
      %5606 = vmatprep.mubr.f32.mxu0 %v362
      %5607 = vmatmul.mubr.f32.gmra.mrb[0].mxu0 %v361
      %v5608 = vpop.f32.mrb[0].mxu0
      %v5609 = vadd.f32 %v5448, %v5608
      %v5610 = vpop.f32.mrb[0].mxu0
      %v5611 = vadd.f32 %v5450, %v5610
      %5612 = vmatprep.mubr.f32.mxu0 %v366
      %5613 = vmatmul.mubr.f32.gmra.mrb[0].mxu0 %v365
      %v5614 = vpop.f32.mrb[0].mxu0
      %v5615 = vadd.f32 %v5454, %v5614
      %v5616 = vpop.f32.mrb[0].mxu0
      %v5617 = vadd.f32 %v5456, %v5616
      %5618 = vmatprep.mubr.f32.mxu0 %v370
      %5619 = vmatmul.mubr.f32.gmra.mrb[0].mxu0 %v369
      %v5620 = vpop.f32.mrb[0].mxu0
      %v5621 = vadd.f32 %v5460, %v5620
      %v5622 = vpop.f32.mrb[0].mxu0
      %v5623 = vadd.f32 %v5462, %v5622
      %5624 = vmatprep.mubr.f32.mxu0 %v374
      %5625 = vmatmul.mubr.f32.gmra.mrb[0].mxu0 %v373
      %v5626 = vpop.f32.mrb[0].mxu0
      %v5627 = vadd.f32 %v5466, %v5626
      %v5628 = vpop.f32.mrb[0].mxu0
      %v5629 = vadd.f32 %v5468, %v5628
      %5630 = vmatprep.mubr.f32.mxu0 %v378
      %5631 = vmatmul.mubr.f32.gmra.mrb[0].mxu0 %v377
      %v5632 = vpop.f32.mrb[0].mxu0
      %v5633 = vadd.f32 %v5472, %v5632
      %v5634 = vpop.f32.mrb[0].mxu0
      %v5635 = vadd.f32 %v5474, %v5634
      %5636 = vmatprep.mubr.f32.mxu0 %v382
      %5637 = vmatmul.mubr.f32.gmra.mrb[0].mxu0 %v381
      %v5638 = vpop.f32.mrb[0].mxu0
      %v5639 = vadd.f32 %v5478, %v5638
      %v5640 = vpop.f32.mrb[0].mxu0
      %v5641 = vadd.f32 %v5480, %v5640
      %5642 = vmatprep.mubr.f32.mxu0 %v386
      %5643 = vmatmul.mubr.f32.gmra.mrb[0].mxu0 %v385
      %v5644 = vpop.f32.mrb[0].mxu0
      %v5645 = vadd.f32 %v5484, %v5644
      %v5646 = vpop.f32.mrb[0].mxu0
      %v5647 = vadd.f32 %v5486, %v5646
      %5648 = vmatprep.mubr.f32.mxu0 %v390
      %5649 = vmatmul.mubr.f32.gmra.mrb[0].mxu0 %v389
      %v5650 = vpop.f32.mrb[0].mxu0
      %v5651 = vadd.f32 %v5490, %v5650
      %v5652 = vpop.f32.mrb[0].mxu0
      %v5653 = vadd.f32 %v5492, %v5652
      %5654 = vmatprep.mubr.f32.mxu0 %v394
      %5655 = vmatmul.mubr.f32.gmra.mrb[0].mxu0 %v393
      %v5656 = vpop.f32.mrb[0].mxu0
      %v5657 = vadd.f32 %v5496, %v5656
      %v5658 = vpop.f32.mrb[0].mxu0
      %v5659 = vadd.f32 %v5498, %v5658
      %5660 = vmatprep.mubr.f32.mxu0 %v398
      %5661 = vmatmul.mubr.f32.gmra.mrb[0].mxu0 %v397
      %v5662 = vpop.f32.mrb[0].mxu0
      %v5663 = vadd.f32 %v5502, %v5662
      %v5664 = vpop.f32.mrb[0].mxu0
      %v5665 = vadd.f32 %v5504, %v5664
      %5666 = vmatprep.mubr.f32.mxu0 %v402
      %5667 = vmatmul.mubr.f32.gmra.mrb[0].mxu0 %v401
      %v5668 = vpop.f32.mrb[0].mxu0
      %v5669 = vadd.f32 %v5508, %v5668
      %v5670 = vpop.f32.mrb[0].mxu0
      %v5671 = vadd.f32 %v5510, %v5670
      %5672 = vdwg.mxu0
      %5673 = vmatprep.subr.mxu0 %v4650
      %5674 = vmatpush1.msra.mxu0 %v4649
      %5675 = vmatprep.subr.mxu0 %v4656
      %5676 = vmatpush1.msra.mxu0 %v4655
      %5677 = vmatprep.subr.mxu0 %v4662
      %5678 = vmatpush1.msra.mxu0 %v4661
      %5679 = vmatprep.subr.mxu0 %v4668
      %5680 = vmatpush1.msra.mxu0 %v4667
      %5681 = vmatprep.subr.mxu0 %v4674
      %5682 = vmatpush1.msra.mxu0 %v4673
      %5683 = vmatprep.subr.mxu0 %v4680
      %5684 = vmatpush1.msra.mxu0 %v4679
      %5685 = vmatprep.subr.mxu0 %v4686
      %5686 = vmatpush1.msra.mxu0 %v4685
      %5687 = vmatprep.subr.mxu0 %v4692
      %5688 = vmatpush1.msra.mxu0 %v4691
      %5689 = vmatprep.subr.mxu0 %v4698
      %5690 = vmatpush1.msra.mxu0 %v4697
      %5691 = vmatprep.subr.mxu0 %v4704
      %5692 = vmatpush1.msra.mxu0 %v4703
      %5693 = vmatprep.subr.mxu0 %v4710
      %5694 = vmatpush1.msra.mxu0 %v4709
      %5695 = vmatprep.subr.mxu0 %v4716
      %5696 = vmatpush1.msra.mxu0 %v4715
      %5697 = vmatprep.subr.mxu0 %v4722
      %5698 = vmatpush1.msra.mxu0 %v4721
      %5699 = vmatprep.subr.mxu0 %v4728
      %5700 = vmatpush1.msra.mxu0 %v4727
      %5701 = vmatprep.subr.mxu0 %v4734
      %5702 = vmatpush1.msra.mxu0 %v4733
      %5703 = vmatprep.subr.mxu0 %v4740
      %5704 = vmatpush1.msra.mxu0 %v4739
      %5705 = vmatprep.subr.mxu0 %v4746
      %5706 = vmatpush1.msra.mxu0 %v4745
      %5707 = vmatprep.subr.mxu0 %v4752
      %5708 = vmatpush1.msra.mxu0 %v4751
      %5709 = vmatprep.subr.mxu0 %v4758
      %5710 = vmatpush1.msra.mxu0 %v4757
      %5711 = vmatprep.subr.mxu0 %v4764
      %5712 = vmatpush1.msra.mxu0 %v4763
      %5713 = vmatprep.subr.mxu0 %v4770
      %5714 = vmatpush1.msra.mxu0 %v4769
      %5715 = vmatprep.subr.mxu0 %v4776
      %5716 = vmatpush1.msra.mxu0 %v4775
      %5717 = vmatprep.subr.mxu0 %v4782
      %5718 = vmatpush1.msra.mxu0 %v4781
      %5719 = vmatprep.subr.mxu0 %v4788
      %5720 = vmatpush1.msra.mxu0 %v4787
      %5721 = vmatprep.subr.mxu0 %v4794
      %5722 = vmatpush1.msra.mxu0 %v4793
      %5723 = vmatprep.subr.mxu0 %v4800
      %5724 = vmatpush1.msra.mxu0 %v4799
      %5725 = vmatprep.subr.mxu0 %v4806
      %5726 = vmatpush1.msra.mxu0 %v4805
      %5727 = vmatprep.subr.mxu0 %v4812
      %5728 = vmatpush1.msra.mxu0 %v4811
      %5729 = vmatprep.subr.mxu0 %v4818
      %5730 = vmatpush1.msra.mxu0 %v4817
      %5731 = vmatprep.subr.mxu0 %v4824
      %5732 = vmatpush1.msra.mxu0 %v4823
      %5733 = vmatprep.subr.mxu0 %v4830
      %5734 = vmatpush1.msra.mxu0 %v4829
      %5735 = vmatprep.subr.mxu0 %v4836
      %5736 = vmatpush1.msra.mxu0 %v4835
      %5737 = vmatprep.mubr.f32.mxu0 %v340
      %5738 = vmatmul.mubr.f32.gmra.mrb[0].mxu0 %v339
      %v5739 = vpop.f32.mrb[0].mxu0
      %v5740 = vadd.f32 0.0, %v5739
      %v5741 = vpop.f32.mrb[0].mxu0
      %v5742 = vadd.f32 0.0, %v5741
      %5743 = vmatprep.mubr.f32.mxu0 %v344
      %5744 = vmatmul.mubr.f32.gmra.mrb[0].mxu0 %v343
      %v5745 = vpop.f32.mrb[0].mxu0
      %v5746 = vadd.f32 0.0, %v5745
      %v5747 = vpop.f32.mrb[0].mxu0
      %v5748 = vadd.f32 0.0, %v5747
      %5749 = vmatprep.mubr.f32.mxu0 %v348
      %5750 = vmatmul.mubr.f32.gmra.mrb[0].mxu0 %v347
      %v5751 = vpop.f32.mrb[0].mxu0
      %v5752 = vadd.f32 0.0, %v5751
      %v5753 = vpop.f32.mrb[0].mxu0
      %v5754 = vadd.f32 0.0, %v5753
      %5755 = vmatprep.mubr.f32.mxu0 %v352
      %5756 = vmatmul.mubr.f32.gmra.mrb[0].mxu0 %v351
      %v5757 = vpop.f32.mrb[0].mxu0
      %v5758 = vadd.f32 0.0, %v5757
      %v5759 = vpop.f32.mrb[0].mxu0
      %v5760 = vadd.f32 0.0, %v5759
      %5761 = vmatprep.mubr.f32.mxu0 %v356
      %5762 = vmatmul.mubr.f32.gmra.mrb[0].mxu0 %v355
      %v5763 = vpop.f32.mrb[0].mxu0
      %v5764 = vadd.f32 0.0, %v5763
      %v5765 = vpop.f32.mrb[0].mxu0
      %v5766 = vadd.f32 0.0, %v5765
      %5767 = vmatprep.mubr.f32.mxu0 %v360
      %5768 = vmatmul.mubr.f32.gmra.mrb[0].mxu0 %v359
      %v5769 = vpop.f32.mrb[0].mxu0
      %v5770 = vadd.f32 0.0, %v5769
      %v5771 = vpop.f32.mrb[0].mxu0
      %v5772 = vadd.f32 0.0, %v5771
      %5773 = vmatprep.mubr.f32.mxu0 %v364
      %5774 = vmatmul.mubr.f32.gmra.mrb[0].mxu0 %v363
      %v5775 = vpop.f32.mrb[0].mxu0
      %v5776 = vadd.f32 0.0, %v5775
      %v5777 = vpop.f32.mrb[0].mxu0
      %v5778 = vadd.f32 0.0, %v5777
      %5779 = vmatprep.mubr.f32.mxu0 %v368
      %5780 = vmatmul.mubr.f32.gmra.mrb[0].mxu0 %v367
      %v5781 = vpop.f32.mrb[0].mxu0
      %v5782 = vadd.f32 0.0, %v5781
      %v5783 = vpop.f32.mrb[0].mxu0
      %v5784 = vadd.f32 0.0, %v5783
      %5785 = vmatprep.mubr.f32.mxu0 %v372
      %5786 = vmatmul.mubr.f32.gmra.mrb[0].mxu0 %v371
      %v5787 = vpop.f32.mrb[0].mxu0
      %v5788 = vadd.f32 0.0, %v5787
      %v5789 = vpop.f32.mrb[0].mxu0
      %v5790 = vadd.f32 0.0, %v5789
      %5791 = vmatprep.mubr.f32.mxu0 %v376
      %5792 = vmatmul.mubr.f32.gmra.mrb[0].mxu0 %v375
      %v5793 = vpop.f32.mrb[0].mxu0
      %v5794 = vadd.f32 0.0, %v5793
      %v5795 = vpop.f32.mrb[0].mxu0
      %v5796 = vadd.f32 0.0, %v5795
      %5797 = vmatprep.mubr.f32.mxu0 %v380
      %5798 = vmatmul.mubr.f32.gmra.mrb[0].mxu0 %v379
      %v5799 = vpop.f32.mrb[0].mxu0
      %v5800 = vadd.f32 0.0, %v5799
      %v5801 = vpop.f32.mrb[0].mxu0
      %v5802 = vadd.f32 0.0, %v5801
      %5803 = vmatprep.mubr.f32.mxu0 %v384
      %5804 = vmatmul.mubr.f32.gmra.mrb[0].mxu0 %v383
      %v5805 = vpop.f32.mrb[0].mxu0
      %v5806 = vadd.f32 0.0, %v5805
      %v5807 = vpop.f32.mrb[0].mxu0
      %v5808 = vadd.f32 0.0, %v5807
      %5809 = vmatprep.mubr.f32.mxu0 %v388
      %5810 = vmatmul.mubr.f32.gmra.mrb[0].mxu0 %v387
      %v5811 = vpop.f32.mrb[0].mxu0
      %v5812 = vadd.f32 0.0, %v5811
      %v5813 = vpop.f32.mrb[0].mxu0
      %v5814 = vadd.f32 0.0, %v5813
      %5815 = vmatprep.mubr.f32.mxu0 %v392
      %5816 = vmatmul.mubr.f32.gmra.mrb[0].mxu0 %v391
      %v5817 = vpop.f32.mrb[0].mxu0
      %v5818 = vadd.f32 0.0, %v5817
      %v5819 = vpop.f32.mrb[0].mxu0
      %v5820 = vadd.f32 0.0, %v5819
      %5821 = vmatprep.mubr.f32.mxu0 %v396
      %5822 = vmatmul.mubr.f32.gmra.mrb[0].mxu0 %v395
      %v5823 = vpop.f32.mrb[0].mxu0
      %v5824 = vadd.f32 0.0, %v5823
      %v5825 = vpop.f32.mrb[0].mxu0
      %v5826 = vadd.f32 0.0, %v5825
      %5827 = vmatprep.mubr.f32.mxu0 %v400
      %5828 = vmatmul.mubr.f32.gmra.mrb[0].mxu0 %v399
      %v5829 = vpop.f32.mrb[0].mxu0
      %v5830 = vadd.f32 0.0, %v5829
      %v5831 = vpop.f32.mrb[0].mxu0
      %v5832 = vadd.f32 0.0, %v5831
      %5833 = vdwg.mxu0
      %5834 = vmatprep.subr.mxu0 %v4842
      %5835 = vmatpush1.msra.mxu0 %v4841
      %5836 = vmatprep.subr.mxu0 %v4848
      %5837 = vmatpush1.msra.mxu0 %v4847
      %5838 = vmatprep.subr.mxu0 %v4854
      %5839 = vmatpush1.msra.mxu0 %v4853
      %5840 = vmatprep.subr.mxu0 %v4860
      %5841 = vmatpush1.msra.mxu0 %v4859
      %5842 = vmatprep.subr.mxu0 %v4866
      %5843 = vmatpush1.msra.mxu0 %v4865
      %5844 = vmatprep.subr.mxu0 %v4872
      %5845 = vmatpush1.msra.mxu0 %v4871
      %5846 = vmatprep.subr.mxu0 %v4878
      %5847 = vmatpush1.msra.mxu0 %v4877
      %5848 = vmatprep.subr.mxu0 %v4884
      %5849 = vmatpush1.msra.mxu0 %v4883
      %5850 = vmatprep.subr.mxu0 %v4890
      %5851 = vmatpush1.msra.mxu0 %v4889
      %5852 = vmatprep.subr.mxu0 %v4896
      %5853 = vmatpush1.msra.mxu0 %v4895
      %5854 = vmatprep.subr.mxu0 %v4902
      %5855 = vmatpush1.msra.mxu0 %v4901
      %5856 = vmatprep.subr.mxu0 %v4908
      %5857 = vmatpush1.msra.mxu0 %v4907
      %5858 = vmatprep.subr.mxu0 %v4914
      %5859 = vmatpush1.msra.mxu0 %v4913
      %5860 = vmatprep.subr.mxu0 %v4920
      %5861 = vmatpush1.msra.mxu0 %v4919
      %5862 = vmatprep.subr.mxu0 %v4926
      %5863 = vmatpush1.msra.mxu0 %v4925
      %5864 = vmatprep.subr.mxu0 %v4932
      %5865 = vmatpush1.msra.mxu0 %v4931
      %5866 = vmatprep.subr.mxu0 %v4938
      %5867 = vmatpush1.msra.mxu0 %v4937
      %5868 = vmatprep.subr.mxu0 %v4944
      %5869 = vmatpush1.msra.mxu0 %v4943
      %5870 = vmatprep.subr.mxu0 %v4950
      %5871 = vmatpush1.msra.mxu0 %v4949
      %5872 = vmatprep.subr.mxu0 %v4956
      %5873 = vmatpush1.msra.mxu0 %v4955
      %5874 = vmatprep.subr.mxu0 %v4962
      %5875 = vmatpush1.msra.mxu0 %v4961
      %5876 = vmatprep.subr.mxu0 %v4968
      %5877 = vmatpush1.msra.mxu0 %v4967
      %5878 = vmatprep.subr.mxu0 %v4974
      %5879 = vmatpush1.msra.mxu0 %v4973
      %5880 = vmatprep.subr.mxu0 %v4980
      %5881 = vmatpush1.msra.mxu0 %v4979
      %5882 = vmatprep.subr.mxu0 %v4986
      %5883 = vmatpush1.msra.mxu0 %v4985
      %5884 = vmatprep.subr.mxu0 %v4992
      %5885 = vmatpush1.msra.mxu0 %v4991
      %5886 = vmatprep.subr.mxu0 %v4998
      %5887 = vmatpush1.msra.mxu0 %v4997
      %5888 = vmatprep.subr.mxu0 %v5004
      %5889 = vmatpush1.msra.mxu0 %v5003
      %5890 = vmatprep.subr.mxu0 %v5010
      %5891 = vmatpush1.msra.mxu0 %v5009
      %5892 = vmatprep.subr.mxu0 %v5016
      %5893 = vmatpush1.msra.mxu0 %v5015
      %5894 = vmatprep.subr.mxu0 %v5022
      %5895 = vmatpush1.msra.mxu0 %v5021
      %5896 = vmatprep.subr.mxu0 %v5028
      %5897 = vmatpush1.msra.mxu0 %v5027
      %5898 = vmatprep.mubr.f32.mxu0 %v342
      %5899 = vmatmul.mubr.f32.gmra.mrb[0].mxu0 %v341
      %v5900 = vpop.f32.mrb[0].mxu0
      %v5901 = vadd.f32 %v5740, %v5900
      %v5902 = vpop.f32.mrb[0].mxu0
      %v5903 = vadd.f32 %v5742, %v5902
      %5904 = vmatprep.mubr.f32.mxu0 %v346
      %5905 = vmatmul.mubr.f32.gmra.mrb[0].mxu0 %v345
      %v5906 = vpop.f32.mrb[0].mxu0
      %v5907 = vadd.f32 %v5746, %v5906
      %v5908 = vpop.f32.mrb[0].mxu0
      %v5909 = vadd.f32 %v5748, %v5908
      %5910 = vmatprep.mubr.f32.mxu0 %v350
      %5911 = vmatmul.mubr.f32.gmra.mrb[0].mxu0 %v349
      %v5912 = vpop.f32.mrb[0].mxu0
      %v5913 = vadd.f32 %v5752, %v5912
      %v5914 = vpop.f32.mrb[0].mxu0
      %v5915 = vadd.f32 %v5754, %v5914
      %5916 = vmatprep.mubr.f32.mxu0 %v354
      %5917 = vmatmul.mubr.f32.gmra.mrb[0].mxu0 %v353
      %v5918 = vpop.f32.mrb[0].mxu0
      %v5919 = vadd.f32 %v5758, %v5918
      %v5920 = vpop.f32.mrb[0].mxu0
      %v5921 = vadd.f32 %v5760, %v5920
      %5922 = vmatprep.mubr.f32.mxu0 %v358
      %5923 = vmatmul.mubr.f32.gmra.mrb[0].mxu0 %v357
      %v5924 = vpop.f32.mrb[0].mxu0
      %v5925 = vadd.f32 %v5764, %v5924
      %v5926 = vpop.f32.mrb[0].mxu0
      %v5927 = vadd.f32 %v5766, %v5926
      %5928 = vmatprep.mubr.f32.mxu0 %v362
      %5929 = vmatmul.mubr.f32.gmra.mrb[0].mxu0 %v361
      %v5930 = vpop.f32.mrb[0].mxu0
      %v5931 = vadd.f32 %v5770, %v5930
      %v5932 = vpop.f32.mrb[0].mxu0
      %v5933 = vadd.f32 %v5772, %v5932
      %5934 = vmatprep.mubr.f32.mxu0 %v366
      %5935 = vmatmul.mubr.f32.gmra.mrb[0].mxu0 %v365
      %v5936 = vpop.f32.mrb[0].mxu0
      %v5937 = vadd.f32 %v5776, %v5936
      %v5938 = vpop.f32.mrb[0].mxu0
      %v5939 = vadd.f32 %v5778, %v5938
      %5940 = vmatprep.mubr.f32.mxu0 %v370
      %5941 = vmatmul.mubr.f32.gmra.mrb[0].mxu0 %v369
      %v5942 = vpop.f32.mrb[0].mxu0
      %v5943 = vadd.f32 %v5782, %v5942
      %v5944 = vpop.f32.mrb[0].mxu0
      %v5945 = vadd.f32 %v5784, %v5944
      %5946 = vmatprep.mubr.f32.mxu0 %v374
      %5947 = vmatmul.mubr.f32.gmra.mrb[0].mxu0 %v373
      %v5948 = vpop.f32.mrb[0].mxu0
      %v5949 = vadd.f32 %v5788, %v5948
      %v5950 = vpop.f32.mrb[0].mxu0
      %v5951 = vadd.f32 %v5790, %v5950
      %5952 = vmatprep.mubr.f32.mxu0 %v378
      %5953 = vmatmul.mubr.f32.gmra.mrb[0].mxu0 %v377
      %v5954 = vpop.f32.mrb[0].mxu0
      %v5955 = vadd.f32 %v5794, %v5954
      %v5956 = vpop.f32.mrb[0].mxu0
      %v5957 = vadd.f32 %v5796, %v5956
      %5958 = vmatprep.mubr.f32.mxu0 %v382
      %5959 = vmatmul.mubr.f32.gmra.mrb[0].mxu0 %v381
      %v5960 = vpop.f32.mrb[0].mxu0
      %v5961 = vadd.f32 %v5800, %v5960
      %v5962 = vpop.f32.mrb[0].mxu0
      %v5963 = vadd.f32 %v5802, %v5962
      %5964 = vmatprep.mubr.f32.mxu0 %v386
      %5965 = vmatmul.mubr.f32.gmra.mrb[0].mxu0 %v385
      %v5966 = vpop.f32.mrb[0].mxu0
      %v5967 = vadd.f32 %v5806, %v5966
      %v5968 = vpop.f32.mrb[0].mxu0
      %v5969 = vadd.f32 %v5808, %v5968
      %5970 = vmatprep.mubr.f32.mxu0 %v390
      %5971 = vmatmul.mubr.f32.gmra.mrb[0].mxu0 %v389
      %v5972 = vpop.f32.mrb[0].mxu0
      %v5973 = vadd.f32 %v5812, %v5972
      %v5974 = vpop.f32.mrb[0].mxu0
      %v5975 = vadd.f32 %v5814, %v5974
      %5976 = vmatprep.mubr.f32.mxu0 %v394
      %5977 = vmatmul.mubr.f32.gmra.mrb[0].mxu0 %v393
      %v5978 = vpop.f32.mrb[0].mxu0
      %v5979 = vadd.f32 %v5818, %v5978
      %v5980 = vpop.f32.mrb[0].mxu0
      %v5981 = vadd.f32 %v5820, %v5980
      %5982 = vmatprep.mubr.f32.mxu0 %v398
      %5983 = vmatmul.mubr.f32.gmra.mrb[0].mxu0 %v397
      %v5984 = vpop.f32.mrb[0].mxu0
      %v5985 = vadd.f32 %v5824, %v5984
      %v5986 = vpop.f32.mrb[0].mxu0
      %v5987 = vadd.f32 %v5826, %v5986
      %5988 = vmatprep.mubr.f32.mxu0 %v402
      %5989 = vmatmul.mubr.f32.gmra.mrb[0].mxu0 %v401
      %v5990 = vpop.f32.mrb[0].mxu0
      %v5991 = vadd.f32 %v5830, %v5990
      %v5992 = vpop.f32.mrb[0].mxu0
      %v5993 = vadd.f32 %v5832, %v5992
      %5994 = vdwg.mxu0
      %v5995 = vmax.f32 %v4549, %v5257
      %v5996 = vmax.f32 %v4550, %v5259
      %v5997 = vmax.f32 %v4551, %v5579
      %v5998 = vmax.f32 %v4552, %v5581
      %v5999 = vmax.f32 %v4553, %v5901
      %v6000 = vmax.f32 %v4554, %v5903
      %v6001 = vmax.f32 %v4555, %v5263
      %v6002 = vmax.f32 %v4556, %v5265
      %v6003 = vmax.f32 %v4557, %v5585
      %v6004 = vmax.f32 %v4558, %v5587
      %v6005 = vmax.f32 %v4559, %v5907
      %v6006 = vmax.f32 %v4560, %v5909
      %v6007 = vmax.f32 %v4561, %v5269
      %v6008 = vmax.f32 %v4562, %v5271
      %v6009 = vmax.f32 %v4563, %v5591
      %v6010 = vmax.f32 %v4564, %v5593
      %v6011 = vmax.f32 %v4565, %v5913
      %v6012 = vmax.f32 %v4566, %v5915
      %v6013 = vmax.f32 %v4567, %v5275
      %v6014 = vmax.f32 %v4568, %v5277
      %v6015 = vmax.f32 %v4569, %v5597
      %v6016 = vmax.f32 %v4570, %v5599
      %v6017 = vmax.f32 %v4571, %v5919
      %v6018 = vmax.f32 %v4572, %v5921
      %v6019 = vmax.f32 %v4573, %v5281
      %v6020 = vmax.f32 %v4574, %v5283
      %v6021 = vmax.f32 %v4575, %v5603
      %v6022 = vmax.f32 %v4576, %v5605
      %v6023 = vmax.f32 %v4577, %v5925
      %v6024 = vmax.f32 %v4578, %v5927
      %v6025 = vmax.f32 %v4579, %v5287
      %v6026 = vmax.f32 %v4580, %v5289
      %v6027 = vmax.f32 %v4581, %v5609
      %v6028 = vmax.f32 %v4582, %v5611
      %v6029 = vmax.f32 %v4583, %v5931
      %v6030 = vmax.f32 %v4584, %v5933
      %v6031 = vmax.f32 %v4585, %v5293
      %v6032 = vmax.f32 %v4586, %v5295
      %v6033 = vmax.f32 %v4587, %v5615
      %v6034 = vmax.f32 %v4588, %v5617
      %v6035 = vmax.f32 %v4589, %v5937
      %v6036 = vmax.f32 %v4590, %v5939
      %v6037 = vmax.f32 %v4591, %v5299
      %v6038 = vmax.f32 %v4592, %v5301
      %v6039 = vmax.f32 %v4593, %v5621
      %v6040 = vmax.f32 %v4594, %v5623
      %v6041 = vmax.f32 %v4595, %v5943
      %v6042 = vmax.f32 %v4596, %v5945
      %v6043 = vmax.f32 %v4597, %v5305
      %v6044 = vmax.f32 %v4598, %v5307
      %v6045 = vmax.f32 %v4599, %v5627
      %v6046 = vmax.f32 %v4600, %v5629
      %v6047 = vmax.f32 %v4601, %v5949
      %v6048 = vmax.f32 %v4602, %v5951
      %v6049 = vmax.f32 %v4603, %v5311
      %v6050 = vmax.f32 %v4604, %v5313
      %v6051 = vmax.f32 %v4605, %v5633
      %v6052 = vmax.f32 %v4606, %v5635
      %v6053 = vmax.f32 %v4607, %v5955
      %v6054 = vmax.f32 %v4608, %v5957
      %v6055 = vmax.f32 %v4609, %v5317
      %v6056 = vmax.f32 %v4610, %v5319
      %v6057 = vmax.f32 %v4611, %v5639
      %v6058 = vmax.f32 %v4612, %v5641
      %v6059 = vmax.f32 %v4613, %v5961
      %v6060 = vmax.f32 %v4614, %v5963
      %v6061 = vmax.f32 %v4615, %v5323
      %v6062 = vmax.f32 %v4616, %v5325
      %v6063 = vmax.f32 %v4617, %v5645
      %v6064 = vmax.f32 %v4618, %v5647
      %v6065 = vmax.f32 %v4619, %v5967
      %v6066 = vmax.f32 %v4620, %v5969
      %v6067 = vmax.f32 %v4621, %v5329
      %v6068 = vmax.f32 %v4622, %v5331
      %v6069 = vmax.f32 %v4623, %v5651
      %v6070 = vmax.f32 %v4624, %v5653
      %v6071 = vmax.f32 %v4625, %v5973
      %v6072 = vmax.f32 %v4626, %v5975
      %v6073 = vmax.f32 %v4627, %v5335
      %v6074 = vmax.f32 %v4628, %v5337
      %v6075 = vmax.f32 %v4629, %v5657
      %v6076 = vmax.f32 %v4630, %v5659
      %v6077 = vmax.f32 %v4631, %v5979
      %v6078 = vmax.f32 %v4632, %v5981
      %v6079 = vmax.f32 %v4633, %v5341
      %v6080 = vmax.f32 %v4634, %v5343
      %v6081 = vmax.f32 %v4635, %v5663
      %v6082 = vmax.f32 %v4636, %v5665
      %v6083 = vmax.f32 %v4637, %v5985
      %v6084 = vmax.f32 %v4638, %v5987
      %v6085 = vmax.f32 %v4639, %v5347
      %v6086 = vmax.f32 %v4640, %v5349
      %v6087 = vmax.f32 %v4641, %v5669
      %v6088 = vmax.f32 %v4642, %v5671
      %v6089 = vmax.f32 %v4643, %v5991
      %v6090 = vmax.f32 %v4644, %v5993
      %v6091 = vld [vmem:[%s2] sm:$0x3f]
      %v6093 = vlaneseq
      %v6094 = vshrl.u32 %v6093, 7
      %v6095 = vsub.s32 0, %v6094
      %v6096 = vrot.slane %v6091, %v6095
      %v6097 = vlaneseq
      %v6098 = vshrl.u32 %v6097, 7
      %v6099 = vsub.s32 1, %v6098
      %v6100 = vrot.slane %v6091, %v6099
      %v6101 = vlaneseq
      %v6102 = vshrl.u32 %v6101, 7
      %v6103 = vsub.s32 2, %v6102
      %v6104 = vrot.slane %v6091, %v6103
      %v6105 = vlaneseq
      %v6106 = vshrl.u32 %v6105, 7
      %v6107 = vsub.s32 3, %v6106
      %v6108 = vrot.slane %v6091, %v6107
      %v6109 = vlaneseq
      %v6110 = vshrl.u32 %v6109, 7
      %v6111 = vsub.s32 4, %v6110
      %v6112 = vrot.slane %v6091, %v6111
      %v6113 = vlaneseq
      %v6114 = vshrl.u32 %v6113, 7
      %v6115 = vsub.s32 5, %v6114
      %v6116 = vrot.slane %v6091, %v6115
      %v6123 = vadd.f32 %v5995, %v6096
      %v6124 = vadd.f32 %v5996, %v6100
      %v6125 = vadd.f32 %v5997, %v6104
      %v6126 = vadd.f32 %v5998, %v6108
      %v6127 = vadd.f32 %v5999, %v6112
      %v6128 = vadd.f32 %v6000, %v6116
      %v6129 = vadd.f32 %v6001, %v6096
      %v6130 = vadd.f32 %v6002, %v6100
      %v6131 = vadd.f32 %v6003, %v6104
      %v6132 = vadd.f32 %v6004, %v6108
      %v6133 = vadd.f32 %v6005, %v6112
      %v6134 = vadd.f32 %v6006, %v6116
      %v6135 = vadd.f32 %v6007, %v6096
      %v6136 = vadd.f32 %v6008, %v6100
      %v6137 = vadd.f32 %v6009, %v6104
      %v6138 = vadd.f32 %v6010, %v6108
      %v6139 = vadd.f32 %v6011, %v6112
      %v6140 = vadd.f32 %v6012, %v6116
      %v6141 = vadd.f32 %v6013, %v6096
      %v6142 = vadd.f32 %v6014, %v6100
      %v6143 = vadd.f32 %v6015, %v6104
      %v6144 = vadd.f32 %v6016, %v6108
      %v6145 = vadd.f32 %v6017, %v6112
      %v6146 = vadd.f32 %v6018, %v6116
      %v6147 = vadd.f32 %v6019, %v6096
      %v6148 = vadd.f32 %v6020, %v6100
      %v6149 = vadd.f32 %v6021, %v6104
      %v6150 = vadd.f32 %v6022, %v6108
      %v6151 = vadd.f32 %v6023, %v6112
      %v6152 = vadd.f32 %v6024, %v6116
      %v6153 = vadd.f32 %v6025, %v6096
      %v6154 = vadd.f32 %v6026, %v6100
      %v6155 = vadd.f32 %v6027, %v6104
      %v6156 = vadd.f32 %v6028, %v6108
      %v6157 = vadd.f32 %v6029, %v6112
      %v6158 = vadd.f32 %v6030, %v6116
      %v6159 = vadd.f32 %v6031, %v6096
      %v6160 = vadd.f32 %v6032, %v6100
      %v6161 = vadd.f32 %v6033, %v6104
      %v6162 = vadd.f32 %v6034, %v6108
      %v6163 = vadd.f32 %v6035, %v6112
      %v6164 = vadd.f32 %v6036, %v6116
      %v6165 = vadd.f32 %v6037, %v6096
      %v6166 = vadd.f32 %v6038, %v6100
      %v6167 = vadd.f32 %v6039, %v6104
      %v6168 = vadd.f32 %v6040, %v6108
      %v6169 = vadd.f32 %v6041, %v6112
      %v6170 = vadd.f32 %v6042, %v6116
      %v6171 = vadd.f32 %v6043, %v6096
      %v6172 = vadd.f32 %v6044, %v6100
      %v6173 = vadd.f32 %v6045, %v6104
      %v6174 = vadd.f32 %v6046, %v6108
      %v6175 = vadd.f32 %v6047, %v6112
      %v6176 = vadd.f32 %v6048, %v6116
      %v6177 = vadd.f32 %v6049, %v6096
      %v6178 = vadd.f32 %v6050, %v6100
      %v6179 = vadd.f32 %v6051, %v6104
      %v6180 = vadd.f32 %v6052, %v6108
      %v6181 = vadd.f32 %v6053, %v6112
      %v6182 = vadd.f32 %v6054, %v6116
      %v6183 = vadd.f32 %v6055, %v6096
      %v6184 = vadd.f32 %v6056, %v6100
      %v6185 = vadd.f32 %v6057, %v6104
      %v6186 = vadd.f32 %v6058, %v6108
      %v6187 = vadd.f32 %v6059, %v6112
      %v6188 = vadd.f32 %v6060, %v6116
      %v6189 = vadd.f32 %v6061, %v6096
      %v6190 = vadd.f32 %v6062, %v6100
      %v6191 = vadd.f32 %v6063, %v6104
      %v6192 = vadd.f32 %v6064, %v6108
      %v6193 = vadd.f32 %v6065, %v6112
      %v6194 = vadd.f32 %v6066, %v6116
      %v6195 = vadd.f32 %v6067, %v6096
      %v6196 = vadd.f32 %v6068, %v6100
      %v6197 = vadd.f32 %v6069, %v6104
      %v6198 = vadd.f32 %v6070, %v6108
      %v6199 = vadd.f32 %v6071, %v6112
      %v6200 = vadd.f32 %v6072, %v6116
      %v6201 = vadd.f32 %v6073, %v6096
      %v6202 = vadd.f32 %v6074, %v6100
      %v6203 = vadd.f32 %v6075, %v6104
      %v6204 = vadd.f32 %v6076, %v6108
      %v6205 = vadd.f32 %v6077, %v6112
      %v6206 = vadd.f32 %v6078, %v6116
      %v6207 = vadd.f32 %v6079, %v6096
      %v6208 = vadd.f32 %v6080, %v6100
      %v6209 = vadd.f32 %v6081, %v6104
      %v6210 = vadd.f32 %v6082, %v6108
      %v6211 = vadd.f32 %v6083, %v6112
      %v6212 = vadd.f32 %v6084, %v6116
      %v6213 = vadd.f32 %v6085, %v6096
      %v6214 = vadd.f32 %v6086, %v6100
      %v6215 = vadd.f32 %v6087, %v6104
      %v6216 = vadd.f32 %v6088, %v6108
      %v6217 = vadd.f32 %v6089, %v6112
      %v6218 = vadd.f32 %v6090, %v6116
      %v6219 = vmax.f32 %v6123, 0.0
      %v6220 = vmax.f32 %v6124, 0.0
      %v6221 = vmax.f32 %v6125, 0.0
      %v6222 = vmax.f32 %v6126, 0.0
      %v6223 = vmax.f32 %v6127, 0.0
      %v6224 = vmax.f32 %v6128, 0.0
      %v6225 = vmax.f32 %v6129, 0.0
      %v6226 = vmax.f32 %v6130, 0.0
      %v6227 = vmax.f32 %v6131, 0.0
      %v6228 = vmax.f32 %v6132, 0.0
      %v6229 = vmax.f32 %v6133, 0.0
      %v6230 = vmax.f32 %v6134, 0.0
      %v6231 = vmax.f32 %v6135, 0.0
      %v6232 = vmax.f32 %v6136, 0.0
      %v6233 = vmax.f32 %v6137, 0.0
      %v6234 = vmax.f32 %v6138, 0.0
      %v6235 = vmax.f32 %v6139, 0.0
      %v6236 = vmax.f32 %v6140, 0.0
      %v6237 = vmax.f32 %v6141, 0.0
      %v6238 = vmax.f32 %v6142, 0.0
      %v6239 = vmax.f32 %v6143, 0.0
      %v6240 = vmax.f32 %v6144, 0.0
      %v6241 = vmax.f32 %v6145, 0.0
      %v6242 = vmax.f32 %v6146, 0.0
      %v6243 = vmax.f32 %v6147, 0.0
      %v6244 = vmax.f32 %v6148, 0.0
      %v6245 = vmax.f32 %v6149, 0.0
      %v6246 = vmax.f32 %v6150, 0.0
      %v6247 = vmax.f32 %v6151, 0.0
      %v6248 = vmax.f32 %v6152, 0.0
      %v6249 = vmax.f32 %v6153, 0.0
      %v6250 = vmax.f32 %v6154, 0.0
      %v6251 = vmax.f32 %v6155, 0.0
      %v6252 = vmax.f32 %v6156, 0.0
      %v6253 = vmax.f32 %v6157, 0.0
      %v6254 = vmax.f32 %v6158, 0.0
      %v6255 = vmax.f32 %v6159, 0.0
      %v6256 = vmax.f32 %v6160, 0.0
      %v6257 = vmax.f32 %v6161, 0.0
      %v6258 = vmax.f32 %v6162, 0.0
      %v6259 = vmax.f32 %v6163, 0.0
      %v6260 = vmax.f32 %v6164, 0.0
      %v6261 = vmax.f32 %v6165, 0.0
      %v6262 = vmax.f32 %v6166, 0.0
      %v6263 = vmax.f32 %v6167, 0.0
      %v6264 = vmax.f32 %v6168, 0.0
      %v6265 = vmax.f32 %v6169, 0.0
      %v6266 = vmax.f32 %v6170, 0.0
      %v6267 = vmax.f32 %v6171, 0.0
      %v6268 = vmax.f32 %v6172, 0.0
      %v6269 = vmax.f32 %v6173, 0.0
      %v6270 = vmax.f32 %v6174, 0.0
      %v6271 = vmax.f32 %v6175, 0.0
      %v6272 = vmax.f32 %v6176, 0.0
      %v6273 = vmax.f32 %v6177, 0.0
      %v6274 = vmax.f32 %v6178, 0.0
      %v6275 = vmax.f32 %v6179, 0.0
      %v6276 = vmax.f32 %v6180, 0.0
      %v6277 = vmax.f32 %v6181, 0.0
      %v6278 = vmax.f32 %v6182, 0.0
      %v6279 = vmax.f32 %v6183, 0.0
      %v6280 = vmax.f32 %v6184, 0.0
      %v6281 = vmax.f32 %v6185, 0.0
      %v6282 = vmax.f32 %v6186, 0.0
      %v6283 = vmax.f32 %v6187, 0.0
      %v6284 = vmax.f32 %v6188, 0.0
      %v6285 = vmax.f32 %v6189, 0.0
      %v6286 = vmax.f32 %v6190, 0.0
      %v6287 = vmax.f32 %v6191, 0.0
      %v6288 = vmax.f32 %v6192, 0.0
      %v6289 = vmax.f32 %v6193, 0.0
      %v6290 = vmax.f32 %v6194, 0.0
      %v6291 = vmax.f32 %v6195, 0.0
      %v6292 = vmax.f32 %v6196, 0.0
      %v6293 = vmax.f32 %v6197, 0.0
      %v6294 = vmax.f32 %v6198, 0.0
      %v6295 = vmax.f32 %v6199, 0.0
      %v6296 = vmax.f32 %v6200, 0.0
      %v6297 = vmax.f32 %v6201, 0.0
      %v6298 = vmax.f32 %v6202, 0.0
      %v6299 = vmax.f32 %v6203, 0.0
      %v6300 = vmax.f32 %v6204, 0.0
      %v6301 = vmax.f32 %v6205, 0.0
      %v6302 = vmax.f32 %v6206, 0.0
      %v6303 = vmax.f32 %v6207, 0.0
      %v6304 = vmax.f32 %v6208, 0.0
      %v6305 = vmax.f32 %v6209, 0.0
      %v6306 = vmax.f32 %v6210, 0.0
      %v6307 = vmax.f32 %v6211, 0.0
      %v6308 = vmax.f32 %v6212, 0.0
      %v6309 = vmax.f32 %v6213, 0.0
      %v6310 = vmax.f32 %v6214, 0.0
      %v6311 = vmax.f32 %v6215, 0.0
      %v6312 = vmax.f32 %v6216, 0.0
      %v6313 = vmax.f32 %v6217, 0.0
      %v6314 = vmax.f32 %v6218, 0.0
      %v6315 = vld [vmem:[%s3] sm:$0xff]
      %v6316 = vld [vmem:[%s3 + $0x20] sm:$0xff]
      %v6317 = vld [vmem:[%s3 + $0x40] sm:$0xff]
      %v6318 = vld [vmem:[%s3 + $0x60] sm:$0xff]
      %v6319 = vld [vmem:[%s3 + $0x80] sm:$0xff]
      %v6320 = vld [vmem:[%s3 + $0xa0] sm:$0xff]
      %v6321 = vld [vmem:[%s3 + $0xc0] sm:$0xff]
      %v6322 = vld [vmem:[%s3 + $0xe0] sm:$0xff]
      %v6323 = vld [vmem:[%s3 + $0x100] sm:$0xff]
      %v6324 = vld [vmem:[%s3 + $0x120] sm:$0xff]
      %v6325 = vld [vmem:[%s3 + $0x140] sm:$0xff]
      %v6326 = vld [vmem:[%s3 + $0x160] sm:$0xff]
      %v6327 = vld [vmem:[%s3 + $0x180] sm:$0xff]
      %v6328 = vld [vmem:[%s3 + $0x1a0] sm:$0xff]
      %v6329 = vld [vmem:[%s3 + $0x1c0] sm:$0xff]
      %v6330 = vld [vmem:[%s3 + $0x1e0] sm:$0xff]
      %v6331 = vld [vmem:[%s3 + $0x200] sm:$0xff]
      %v6332 = vld [vmem:[%s3 + $0x220] sm:$0xff]
      %v6333 = vld [vmem:[%s3 + $0x240] sm:$0xff]
      %v6334 = vld [vmem:[%s3 + $0x260] sm:$0xff]
      %v6335 = vld [vmem:[%s3 + $0x280] sm:$0xff]
      %v6336 = vld [vmem:[%s3 + $0x2a0] sm:$0xff]
      %v6337 = vld [vmem:[%s3 + $0x2c0] sm:$0xff]
      %v6338 = vld [vmem:[%s3 + $0x2e0] sm:$0xff]
      %v6339 = vld [vmem:[%s3 + $0x300] sm:$0xff]
      %v6340 = vld [vmem:[%s3 + $0x320] sm:$0xff]
      %v6341 = vld [vmem:[%s3 + $0x340] sm:$0xff]
      %v6342 = vld [vmem:[%s3 + $0x360] sm:$0xff]
      %v6343 = vld [vmem:[%s3 + $0x380] sm:$0xff]
      %v6344 = vld [vmem:[%s3 + $0x3a0] sm:$0xff]
      %v6345 = vld [vmem:[%s3 + $0x3c0] sm:$0xff]
      %v6346 = vld [vmem:[%s3 + $0x3e0] sm:$0xff]
      %v6347 = vld [vmem:[%s3 + $0x400] sm:$0xff]
      %v6348 = vld [vmem:[%s3 + $0x420] sm:$0xff]
      %v6349 = vld [vmem:[%s3 + $0x440] sm:$0xff]
      %v6350 = vld [vmem:[%s3 + $0x460] sm:$0xff]
      %v6351 = vld [vmem:[%s3 + $0x480] sm:$0xff]
      %v6352 = vld [vmem:[%s3 + $0x4a0] sm:$0xff]
      %v6353 = vld [vmem:[%s3 + $0x4c0] sm:$0xff]
      %v6354 = vld [vmem:[%s3 + $0x4e0] sm:$0xff]
      %v6355 = vld [vmem:[%s3 + $0x500] sm:$0xff]
      %v6356 = vld [vmem:[%s3 + $0x520] sm:$0xff]
      %v6357 = vld [vmem:[%s3 + $0x540] sm:$0xff]
      %v6358 = vld [vmem:[%s3 + $0x560] sm:$0xff]
      %v6359 = vld [vmem:[%s3 + $0x580] sm:$0xff]
      %v6360 = vld [vmem:[%s3 + $0x5a0] sm:$0xff]
      %v6361 = vld [vmem:[%s3 + $0x5c0] sm:$0xff]
      %v6362 = vld [vmem:[%s3 + $0x5e0] sm:$0xff]
      %v6363 = vld [vmem:[%s3 + $0x600] sm:$0xff]
      %v6364 = vld [vmem:[%s3 + $0x620] sm:$0xff]
      %v6365 = vld [vmem:[%s3 + $0x640] sm:$0xff]
      %v6366 = vld [vmem:[%s3 + $0x660] sm:$0xff]
      %v6367 = vld [vmem:[%s3 + $0x680] sm:$0xff]
      %v6368 = vld [vmem:[%s3 + $0x6a0] sm:$0xff]
      %v6369 = vld [vmem:[%s3 + $0x6c0] sm:$0xff]
      %v6370 = vld [vmem:[%s3 + $0x6e0] sm:$0xff]
      %v6371 = vld [vmem:[%s3 + $0x700] sm:$0xff]
      %v6372 = vld [vmem:[%s3 + $0x720] sm:$0xff]
      %v6373 = vld [vmem:[%s3 + $0x740] sm:$0xff]
      %v6374 = vld [vmem:[%s3 + $0x760] sm:$0xff]
      %v6375 = vld [vmem:[%s3 + $0x780] sm:$0xff]
      %v6376 = vld [vmem:[%s3 + $0x7a0] sm:$0xff]
      %v6377 = vld [vmem:[%s3 + $0x7c0] sm:$0xff]
      %v6378 = vld [vmem:[%s3 + $0x7e0] sm:$0xff]
      %v6379 = vld [vmem:[%s3 + $0x800] sm:$0xff]
      %v6380 = vld [vmem:[%s3 + $0x820] sm:$0xff]
      %v6381 = vld [vmem:[%s3 + $0x840] sm:$0xff]
      %v6382 = vld [vmem:[%s3 + $0x860] sm:$0xff]
      %v6383 = vld [vmem:[%s3 + $0x880] sm:$0xff]
      %v6384 = vld [vmem:[%s3 + $0x8a0] sm:$0xff]
      %v6385 = vld [vmem:[%s3 + $0x8c0] sm:$0xff]
      %v6386 = vld [vmem:[%s3 + $0x8e0] sm:$0xff]
      %v6387 = vld [vmem:[%s3 + $0x900] sm:$0xff]
      %v6388 = vld [vmem:[%s3 + $0x920] sm:$0xff]
      %v6389 = vld [vmem:[%s3 + $0x940] sm:$0xff]
      %v6390 = vld [vmem:[%s3 + $0x960] sm:$0xff]
      %v6391 = vld [vmem:[%s3 + $0x980] sm:$0xff]
      %v6392 = vld [vmem:[%s3 + $0x9a0] sm:$0xff]
      %v6393 = vld [vmem:[%s3 + $0x9c0] sm:$0xff]
      %v6394 = vld [vmem:[%s3 + $0x9e0] sm:$0xff]
      %v6395 = vld [vmem:[%s3 + $0xa00] sm:$0xff]
      %v6396 = vld [vmem:[%s3 + $0xa20] sm:$0xff]
      %v6397 = vld [vmem:[%s3 + $0xa40] sm:$0xff]
      %v6398 = vld [vmem:[%s3 + $0xa60] sm:$0xff]
      %v6399 = vld [vmem:[%s3 + $0xa80] sm:$0xff]
      %v6400 = vld [vmem:[%s3 + $0xaa0] sm:$0xff]
      %v6401 = vld [vmem:[%s3 + $0xac0] sm:$0xff]
      %v6402 = vld [vmem:[%s3 + $0xae0] sm:$0xff]
      %v6403 = vld [vmem:[%s3 + $0xb00] sm:$0xff]
      %v6404 = vld [vmem:[%s3 + $0xb20] sm:$0xff]
      %v6405 = vld [vmem:[%s3 + $0xb40] sm:$0xff]
      %v6406 = vld [vmem:[%s3 + $0xb60] sm:$0xff]
      %v6407 = vld [vmem:[%s3 + $0xb80] sm:$0xff]
      %v6408 = vld [vmem:[%s3 + $0xba0] sm:$0xff]
      %v6409 = vld [vmem:[%s3 + $0xbc0] sm:$0xff]
      %v6410 = vld [vmem:[%s3 + $0xbe0] sm:$0xff]
      %6411 = vmatprep.subr.mxu0 0.0
      %6412 = vmatpush1.msra.mxu0 %v6315
      %6413 = vmatprep.subr.mxu0 0.0
      %6414 = vmatpush1.msra.mxu0 %v6316
      %6415 = vmatprep.subr.mxu0 0.0
      %6416 = vmatpush1.msra.mxu0 %v6317
      %6417 = vmatprep.subr.mxu0 0.0
      %6418 = vmatpush1.msra.mxu0 %v6318
      %6419 = vmatprep.subr.mxu0 0.0
      %6420 = vmatpush1.msra.mxu0 %v6319
      %6421 = vmatprep.subr.mxu0 0.0
      %6422 = vmatpush1.msra.mxu0 %v6320
      %6423 = vmatprep.subr.mxu0 0.0
      %6424 = vmatpush1.msra.mxu0 %v6321
      %6425 = vmatprep.subr.mxu0 0.0
      %6426 = vmatpush1.msra.mxu0 %v6322
      %6427 = vmatprep.subr.mxu0 0.0
      %6428 = vmatpush1.msra.mxu0 %v6323
      %6429 = vmatprep.subr.mxu0 0.0
      %6430 = vmatpush1.msra.mxu0 %v6324
      %6431 = vmatprep.subr.mxu0 0.0
      %6432 = vmatpush1.msra.mxu0 %v6325
      %6433 = vmatprep.subr.mxu0 0.0
      %6434 = vmatpush1.msra.mxu0 %v6326
      %6435 = vmatprep.subr.mxu0 0.0
      %6436 = vmatpush1.msra.mxu0 %v6327
      %6437 = vmatprep.subr.mxu0 0.0
      %6438 = vmatpush1.msra.mxu0 %v6328
      %6439 = vmatprep.subr.mxu0 0.0
      %6440 = vmatpush1.msra.mxu0 %v6329
      %6441 = vmatprep.subr.mxu0 0.0
      %6442 = vmatpush1.msra.mxu0 %v6330
      %6443 = vmatprep.subr.mxu0 0.0
      %6444 = vmatpush1.msra.mxu0 %v6331
      %6445 = vmatprep.subr.mxu0 0.0
      %6446 = vmatpush1.msra.mxu0 %v6332
      %6447 = vmatprep.subr.mxu0 0.0
      %6448 = vmatpush1.msra.mxu0 %v6333
      %6449 = vmatprep.subr.mxu0 0.0
      %6450 = vmatpush1.msra.mxu0 %v6334
      %6451 = vmatprep.subr.mxu0 0.0
      %6452 = vmatpush1.msra.mxu0 %v6335
      %6453 = vmatprep.subr.mxu0 0.0
      %6454 = vmatpush1.msra.mxu0 %v6336
      %6455 = vmatprep.subr.mxu0 0.0
      %6456 = vmatpush1.msra.mxu0 %v6337
      %6457 = vmatprep.subr.mxu0 0.0
      %6458 = vmatpush1.msra.mxu0 %v6338
      %6459 = vmatprep.subr.mxu0 0.0
      %6460 = vmatpush1.msra.mxu0 %v6339
      %6461 = vmatprep.subr.mxu0 0.0
      %6462 = vmatpush1.msra.mxu0 %v6340
      %6463 = vmatprep.subr.mxu0 0.0
      %6464 = vmatpush1.msra.mxu0 %v6341
      %6465 = vmatprep.subr.mxu0 0.0
      %6466 = vmatpush1.msra.mxu0 %v6342
      %6467 = vmatprep.subr.mxu0 0.0
      %6468 = vmatpush1.msra.mxu0 %v6343
      %6469 = vmatprep.subr.mxu0 0.0
      %6470 = vmatpush1.msra.mxu0 %v6344
      %6471 = vmatprep.subr.mxu0 0.0
      %6472 = vmatpush1.msra.mxu0 %v6345
      %6473 = vmatprep.subr.mxu0 0.0
      %6474 = vmatpush1.msra.mxu0 %v6346
      %6475 = vmatprep.mubr.f32.mxu0 %v6220
      %6476 = vmatmul.mubr.f32.gmra.mrb[0].mxu0 %v6219
      %v6477 = vpop.f32.mrb[0].mxu0
      %v6478 = vadd.f32 0.0, %v6477
      %v6479 = vpop.f32.mrb[0].mxu0
      %6480 = vmatprep.mubr.f32.mxu0 %v6226
      %6481 = vmatmul.mubr.f32.gmra.mrb[0].mxu0 %v6225
      %v6482 = vpop.f32.mrb[0].mxu0
      %v6483 = vadd.f32 0.0, %v6482
      %v6484 = vpop.f32.mrb[0].mxu0
      %6485 = vmatprep.mubr.f32.mxu0 %v6232
      %6486 = vmatmul.mubr.f32.gmra.mrb[0].mxu0 %v6231
      %v6487 = vpop.f32.mrb[0].mxu0
      %v6488 = vadd.f32 0.0, %v6487
      %v6489 = vpop.f32.mrb[0].mxu0
      %6490 = vmatprep.mubr.f32.mxu0 %v6238
      %6491 = vmatmul.mubr.f32.gmra.mrb[0].mxu0 %v6237
      %v6492 = vpop.f32.mrb[0].mxu0
      %v6493 = vadd.f32 0.0, %v6492
      %v6494 = vpop.f32.mrb[0].mxu0
      %6495 = vmatprep.mubr.f32.mxu0 %v6244
      %6496 = vmatmul.mubr.f32.gmra.mrb[0].mxu0 %v6243
      %v6497 = vpop.f32.mrb[0].mxu0
      %v6498 = vadd.f32 0.0, %v6497
      %v6499 = vpop.f32.mrb[0].mxu0
      %6500 = vmatprep.mubr.f32.mxu0 %v6250
      %6501 = vmatmul.mubr.f32.gmra.mrb[0].mxu0 %v6249
      %v6502 = vpop.f32.mrb[0].mxu0
      %v6503 = vadd.f32 0.0, %v6502
      %v6504 = vpop.f32.mrb[0].mxu0
      %6505 = vmatprep.mubr.f32.mxu0 %v6256
      %6506 = vmatmul.mubr.f32.gmra.mrb[0].mxu0 %v6255
      %v6507 = vpop.f32.mrb[0].mxu0
      %v6508 = vadd.f32 0.0, %v6507
      %v6509 = vpop.f32.mrb[0].mxu0
      %6510 = vmatprep.mubr.f32.mxu0 %v6262
      %6511 = vmatmul.mubr.f32.gmra.mrb[0].mxu0 %v6261
      %v6512 = vpop.f32.mrb[0].mxu0
      %v6513 = vadd.f32 0.0, %v6512
      %v6514 = vpop.f32.mrb[0].mxu0
      %6515 = vmatprep.mubr.f32.mxu0 %v6268
      %6516 = vmatmul.mubr.f32.gmra.mrb[0].mxu0 %v6267
      %v6517 = vpop.f32.mrb[0].mxu0
      %v6518 = vadd.f32 0.0, %v6517
      %v6519 = vpop.f32.mrb[0].mxu0
      %6520 = vmatprep.mubr.f32.mxu0 %v6274
      %6521 = vmatmul.mubr.f32.gmra.mrb[0].mxu0 %v6273
      %v6522 = vpop.f32.mrb[0].mxu0
      %v6523 = vadd.f32 0.0, %v6522
      %v6524 = vpop.f32.mrb[0].mxu0
      %6525 = vmatprep.mubr.f32.mxu0 %v6280
      %6526 = vmatmul.mubr.f32.gmra.mrb[0].mxu0 %v6279
      %v6527 = vpop.f32.mrb[0].mxu0
      %v6528 = vadd.f32 0.0, %v6527
      %v6529 = vpop.f32.mrb[0].mxu0
      %6530 = vmatprep.mubr.f32.mxu0 %v6286
      %6531 = vmatmul.mubr.f32.gmra.mrb[0].mxu0 %v6285
      %v6532 = vpop.f32.mrb[0].mxu0
      %v6533 = vadd.f32 0.0, %v6532
      %v6534 = vpop.f32.mrb[0].mxu0
      %6535 = vmatprep.mubr.f32.mxu0 %v6292
      %6536 = vmatmul.mubr.f32.gmra.mrb[0].mxu0 %v6291
      %v6537 = vpop.f32.mrb[0].mxu0
      %v6538 = vadd.f32 0.0, %v6537
      %v6539 = vpop.f32.mrb[0].mxu0
      %6540 = vmatprep.mubr.f32.mxu0 %v6298
      %6541 = vmatmul.mubr.f32.gmra.mrb[0].mxu0 %v6297
      %v6542 = vpop.f32.mrb[0].mxu0
      %v6543 = vadd.f32 0.0, %v6542
      %v6544 = vpop.f32.mrb[0].mxu0
      %6545 = vmatprep.mubr.f32.mxu0 %v6304
      %6546 = vmatmul.mubr.f32.gmra.mrb[0].mxu0 %v6303
      %v6547 = vpop.f32.mrb[0].mxu0
      %v6548 = vadd.f32 0.0, %v6547
      %v6549 = vpop.f32.mrb[0].mxu0
      %6550 = vmatprep.mubr.f32.mxu0 %v6310
      %6551 = vmatmul.mubr.f32.gmra.mrb[0].mxu0 %v6309
      %v6552 = vpop.f32.mrb[0].mxu0
      %v6553 = vadd.f32 0.0, %v6552
      %v6554 = vpop.f32.mrb[0].mxu0
      %6555 = vdwg.mxu0
      %6556 = vmatprep.subr.mxu0 0.0
      %6557 = vmatpush1.msra.mxu0 %v6347
      %6558 = vmatprep.subr.mxu0 0.0
      %6559 = vmatpush1.msra.mxu0 %v6348
      %6560 = vmatprep.subr.mxu0 0.0
      %6561 = vmatpush1.msra.mxu0 %v6349
      %6562 = vmatprep.subr.mxu0 0.0
      %6563 = vmatpush1.msra.mxu0 %v6350
      %6564 = vmatprep.subr.mxu0 0.0
      %6565 = vmatpush1.msra.mxu0 %v6351
      %6566 = vmatprep.subr.mxu0 0.0
      %6567 = vmatpush1.msra.mxu0 %v6352
      %6568 = vmatprep.subr.mxu0 0.0
      %6569 = vmatpush1.msra.mxu0 %v6353
      %6570 = vmatprep.subr.mxu0 0.0
      %6571 = vmatpush1.msra.mxu0 %v6354
      %6572 = vmatprep.subr.mxu0 0.0
      %6573 = vmatpush1.msra.mxu0 %v6355
      %6574 = vmatprep.subr.mxu0 0.0
      %6575 = vmatpush1.msra.mxu0 %v6356
      %6576 = vmatprep.subr.mxu0 0.0
      %6577 = vmatpush1.msra.mxu0 %v6357
      %6578 = vmatprep.subr.mxu0 0.0
      %6579 = vmatpush1.msra.mxu0 %v6358
      %6580 = vmatprep.subr.mxu0 0.0
      %6581 = vmatpush1.msra.mxu0 %v6359
      %6582 = vmatprep.subr.mxu0 0.0
      %6583 = vmatpush1.msra.mxu0 %v6360
      %6584 = vmatprep.subr.mxu0 0.0
      %6585 = vmatpush1.msra.mxu0 %v6361
      %6586 = vmatprep.subr.mxu0 0.0
      %6587 = vmatpush1.msra.mxu0 %v6362
      %6588 = vmatprep.subr.mxu0 0.0
      %6589 = vmatpush1.msra.mxu0 %v6363
      %6590 = vmatprep.subr.mxu0 0.0
      %6591 = vmatpush1.msra.mxu0 %v6364
      %6592 = vmatprep.subr.mxu0 0.0
      %6593 = vmatpush1.msra.mxu0 %v6365
      %6594 = vmatprep.subr.mxu0 0.0
      %6595 = vmatpush1.msra.mxu0 %v6366
      %6596 = vmatprep.subr.mxu0 0.0
      %6597 = vmatpush1.msra.mxu0 %v6367
      %6598 = vmatprep.subr.mxu0 0.0
      %6599 = vmatpush1.msra.mxu0 %v6368
      %6600 = vmatprep.subr.mxu0 0.0
      %6601 = vmatpush1.msra.mxu0 %v6369
      %6602 = vmatprep.subr.mxu0 0.0
      %6603 = vmatpush1.msra.mxu0 %v6370
      %6604 = vmatprep.subr.mxu0 0.0
      %6605 = vmatpush1.msra.mxu0 %v6371
      %6606 = vmatprep.subr.mxu0 0.0
      %6607 = vmatpush1.msra.mxu0 %v6372
      %6608 = vmatprep.subr.mxu0 0.0
      %6609 = vmatpush1.msra.mxu0 %v6373
      %6610 = vmatprep.subr.mxu0 0.0
      %6611 = vmatpush1.msra.mxu0 %v6374
      %6612 = vmatprep.subr.mxu0 0.0
      %6613 = vmatpush1.msra.mxu0 %v6375
      %6614 = vmatprep.subr.mxu0 0.0
      %6615 = vmatpush1.msra.mxu0 %v6376
      %6616 = vmatprep.subr.mxu0 0.0
      %6617 = vmatpush1.msra.mxu0 %v6377
      %6618 = vmatprep.subr.mxu0 0.0
      %6619 = vmatpush1.msra.mxu0 %v6378
      %6620 = vmatprep.mubr.f32.mxu0 %v6222
      %6621 = vmatmul.mubr.f32.gmra.mrb[0].mxu0 %v6221
      %v6622 = vpop.f32.mrb[0].mxu0
      %v6623 = vadd.f32 %v6478, %v6622
      %v6624 = vpop.f32.mrb[0].mxu0
      %6625 = vmatprep.mubr.f32.mxu0 %v6228
      %6626 = vmatmul.mubr.f32.gmra.mrb[0].mxu0 %v6227
      %v6627 = vpop.f32.mrb[0].mxu0
      %v6628 = vadd.f32 %v6483, %v6627
      %v6629 = vpop.f32.mrb[0].mxu0
      %6630 = vmatprep.mubr.f32.mxu0 %v6234
      %6631 = vmatmul.mubr.f32.gmra.mrb[0].mxu0 %v6233
      %v6632 = vpop.f32.mrb[0].mxu0
      %v6633 = vadd.f32 %v6488, %v6632
      %v6634 = vpop.f32.mrb[0].mxu0
      %6635 = vmatprep.mubr.f32.mxu0 %v6240
      %6636 = vmatmul.mubr.f32.gmra.mrb[0].mxu0 %v6239
      %v6637 = vpop.f32.mrb[0].mxu0
      %v6638 = vadd.f32 %v6493, %v6637
      %v6639 = vpop.f32.mrb[0].mxu0
      %6640 = vmatprep.mubr.f32.mxu0 %v6246
      %6641 = vmatmul.mubr.f32.gmra.mrb[0].mxu0 %v6245
      %v6642 = vpop.f32.mrb[0].mxu0
      %v6643 = vadd.f32 %v6498, %v6642
      %v6644 = vpop.f32.mrb[0].mxu0
      %6645 = vmatprep.mubr.f32.mxu0 %v6252
      %6646 = vmatmul.mubr.f32.gmra.mrb[0].mxu0 %v6251
      %v6647 = vpop.f32.mrb[0].mxu0
      %v6648 = vadd.f32 %v6503, %v6647
      %v6649 = vpop.f32.mrb[0].mxu0
      %6650 = vmatprep.mubr.f32.mxu0 %v6258
      %6651 = vmatmul.mubr.f32.gmra.mrb[0].mxu0 %v6257
      %v6652 = vpop.f32.mrb[0].mxu0
      %v6653 = vadd.f32 %v6508, %v6652
      %v6654 = vpop.f32.mrb[0].mxu0
      %6655 = vmatprep.mubr.f32.mxu0 %v6264
      %6656 = vmatmul.mubr.f32.gmra.mrb[0].mxu0 %v6263
      %v6657 = vpop.f32.mrb[0].mxu0
      %v6658 = vadd.f32 %v6513, %v6657
      %v6659 = vpop.f32.mrb[0].mxu0
      %6660 = vmatprep.mubr.f32.mxu0 %v6270
      %6661 = vmatmul.mubr.f32.gmra.mrb[0].mxu0 %v6269
      %v6662 = vpop.f32.mrb[0].mxu0
      %v6663 = vadd.f32 %v6518, %v6662
      %v6664 = vpop.f32.mrb[0].mxu0
      %6665 = vmatprep.mubr.f32.mxu0 %v6276
      %6666 = vmatmul.mubr.f32.gmra.mrb[0].mxu0 %v6275
      %v6667 = vpop.f32.mrb[0].mxu0
      %v6668 = vadd.f32 %v6523, %v6667
      %v6669 = vpop.f32.mrb[0].mxu0
      %6670 = vmatprep.mubr.f32.mxu0 %v6282
      %6671 = vmatmul.mubr.f32.gmra.mrb[0].mxu0 %v6281
      %v6672 = vpop.f32.mrb[0].mxu0
      %v6673 = vadd.f32 %v6528, %v6672
      %v6674 = vpop.f32.mrb[0].mxu0
      %6675 = vmatprep.mubr.f32.mxu0 %v6288
      %6676 = vmatmul.mubr.f32.gmra.mrb[0].mxu0 %v6287
      %v6677 = vpop.f32.mrb[0].mxu0
      %v6678 = vadd.f32 %v6533, %v6677
      %v6679 = vpop.f32.mrb[0].mxu0
      %6680 = vmatprep.mubr.f32.mxu0 %v6294
      %6681 = vmatmul.mubr.f32.gmra.mrb[0].mxu0 %v6293
      %v6682 = vpop.f32.mrb[0].mxu0
      %v6683 = vadd.f32 %v6538, %v6682
      %v6684 = vpop.f32.mrb[0].mxu0
      %6685 = vmatprep.mubr.f32.mxu0 %v6300
      %6686 = vmatmul.mubr.f32.gmra.mrb[0].mxu0 %v6299
      %v6687 = vpop.f32.mrb[0].mxu0
      %v6688 = vadd.f32 %v6543, %v6687
      %v6689 = vpop.f32.mrb[0].mxu0
      %6690 = vmatprep.mubr.f32.mxu0 %v6306
      %6691 = vmatmul.mubr.f32.gmra.mrb[0].mxu0 %v6305
      %v6692 = vpop.f32.mrb[0].mxu0
      %v6693 = vadd.f32 %v6548, %v6692
      %v6694 = vpop.f32.mrb[0].mxu0
      %6695 = vmatprep.mubr.f32.mxu0 %v6312
      %6696 = vmatmul.mubr.f32.gmra.mrb[0].mxu0 %v6311
      %v6697 = vpop.f32.mrb[0].mxu0
      %v6698 = vadd.f32 %v6553, %v6697
      %v6699 = vpop.f32.mrb[0].mxu0
      %6700 = vdwg.mxu0
      %6701 = vmatprep.subr.mxu0 0.0
      %6702 = vmatpush1.msra.mxu0 %v6379
      %6703 = vmatprep.subr.mxu0 0.0
      %6704 = vmatpush1.msra.mxu0 %v6380
      %6705 = vmatprep.subr.mxu0 0.0
      %6706 = vmatpush1.msra.mxu0 %v6381
      %6707 = vmatprep.subr.mxu0 0.0
      %6708 = vmatpush1.msra.mxu0 %v6382
      %6709 = vmatprep.subr.mxu0 0.0
      %6710 = vmatpush1.msra.mxu0 %v6383
      %6711 = vmatprep.subr.mxu0 0.0
      %6712 = vmatpush1.msra.mxu0 %v6384
      %6713 = vmatprep.subr.mxu0 0.0
      %6714 = vmatpush1.msra.mxu0 %v6385
      %6715 = vmatprep.subr.mxu0 0.0
      %6716 = vmatpush1.msra.mxu0 %v6386
      %6717 = vmatprep.subr.mxu0 0.0
      %6718 = vmatpush1.msra.mxu0 %v6387
      %6719 = vmatprep.subr.mxu0 0.0
      %6720 = vmatpush1.msra.mxu0 %v6388
      %6721 = vmatprep.subr.mxu0 0.0
      %6722 = vmatpush1.msra.mxu0 %v6389
      %6723 = vmatprep.subr.mxu0 0.0
      %6724 = vmatpush1.msra.mxu0 %v6390
      %6725 = vmatprep.subr.mxu0 0.0
      %6726 = vmatpush1.msra.mxu0 %v6391
      %6727 = vmatprep.subr.mxu0 0.0
      %6728 = vmatpush1.msra.mxu0 %v6392
      %6729 = vmatprep.subr.mxu0 0.0
      %6730 = vmatpush1.msra.mxu0 %v6393
      %6731 = vmatprep.subr.mxu0 0.0
      %6732 = vmatpush1.msra.mxu0 %v6394
      %6733 = vmatprep.subr.mxu0 0.0
      %6734 = vmatpush1.msra.mxu0 %v6395
      %6735 = vmatprep.subr.mxu0 0.0
      %6736 = vmatpush1.msra.mxu0 %v6396
      %6737 = vmatprep.subr.mxu0 0.0
      %6738 = vmatpush1.msra.mxu0 %v6397
      %6739 = vmatprep.subr.mxu0 0.0
      %6740 = vmatpush1.msra.mxu0 %v6398
      %6741 = vmatprep.subr.mxu0 0.0
      %6742 = vmatpush1.msra.mxu0 %v6399
      %6743 = vmatprep.subr.mxu0 0.0
      %6744 = vmatpush1.msra.mxu0 %v6400
      %6745 = vmatprep.subr.mxu0 0.0
      %6746 = vmatpush1.msra.mxu0 %v6401
      %6747 = vmatprep.subr.mxu0 0.0
      %6748 = vmatpush1.msra.mxu0 %v6402
      %6749 = vmatprep.subr.mxu0 0.0
      %6750 = vmatpush1.msra.mxu0 %v6403
      %6751 = vmatprep.subr.mxu0 0.0
      %6752 = vmatpush1.msra.mxu0 %v6404
      %6753 = vmatprep.subr.mxu0 0.0
      %6754 = vmatpush1.msra.mxu0 %v6405
      %6755 = vmatprep.subr.mxu0 0.0
      %6756 = vmatpush1.msra.mxu0 %v6406
      %6757 = vmatprep.subr.mxu0 0.0
      %6758 = vmatpush1.msra.mxu0 %v6407
      %6759 = vmatprep.subr.mxu0 0.0
      %6760 = vmatpush1.msra.mxu0 %v6408
      %6761 = vmatprep.subr.mxu0 0.0
      %6762 = vmatpush1.msra.mxu0 %v6409
      %6763 = vmatprep.subr.mxu0 0.0
      %6764 = vmatpush1.msra.mxu0 %v6410
      %6765 = vmatprep.mubr.f32.mxu0 %v6224
      %6766 = vmatmul.mubr.f32.gmra.mrb[0].mxu0 %v6223
      %v6767 = vpop.f32.mrb[0].mxu0
      %v6768 = vadd.f32 %v6623, %v6767
      %v6769 = vpop.f32.mrb[0].mxu0
      %6770 = vmatprep.mubr.f32.mxu0 %v6230
      %6771 = vmatmul.mubr.f32.gmra.mrb[0].mxu0 %v6229
      %v6772 = vpop.f32.mrb[0].mxu0
      %v6773 = vadd.f32 %v6628, %v6772
      %v6774 = vpop.f32.mrb[0].mxu0
      %6775 = vmatprep.mubr.f32.mxu0 %v6236
      %6776 = vmatmul.mubr.f32.gmra.mrb[0].mxu0 %v6235
      %v6777 = vpop.f32.mrb[0].mxu0
      %v6778 = vadd.f32 %v6633, %v6777
      %v6779 = vpop.f32.mrb[0].mxu0
      %6780 = vmatprep.mubr.f32.mxu0 %v6242
      %6781 = vmatmul.mubr.f32.gmra.mrb[0].mxu0 %v6241
      %v6782 = vpop.f32.mrb[0].mxu0
      %v6783 = vadd.f32 %v6638, %v6782
      %v6784 = vpop.f32.mrb[0].mxu0
      %6785 = vmatprep.mubr.f32.mxu0 %v6248
      %6786 = vmatmul.mubr.f32.gmra.mrb[0].mxu0 %v6247
      %v6787 = vpop.f32.mrb[0].mxu0
      %v6788 = vadd.f32 %v6643, %v6787
      %v6789 = vpop.f32.mrb[0].mxu0
      %6790 = vmatprep.mubr.f32.mxu0 %v6254
      %6791 = vmatmul.mubr.f32.gmra.mrb[0].mxu0 %v6253
      %v6792 = vpop.f32.mrb[0].mxu0
      %v6793 = vadd.f32 %v6648, %v6792
      %v6794 = vpop.f32.mrb[0].mxu0
      %6795 = vmatprep.mubr.f32.mxu0 %v6260
      %6796 = vmatmul.mubr.f32.gmra.mrb[0].mxu0 %v6259
      %v6797 = vpop.f32.mrb[0].mxu0
      %v6798 = vadd.f32 %v6653, %v6797
      %v6799 = vpop.f32.mrb[0].mxu0
      %6800 = vmatprep.mubr.f32.mxu0 %v6266
      %6801 = vmatmul.mubr.f32.gmra.mrb[0].mxu0 %v6265
      %v6802 = vpop.f32.mrb[0].mxu0
      %v6803 = vadd.f32 %v6658, %v6802
      %v6804 = vpop.f32.mrb[0].mxu0
      %6805 = vmatprep.mubr.f32.mxu0 %v6272
      %6806 = vmatmul.mubr.f32.gmra.mrb[0].mxu0 %v6271
      %v6807 = vpop.f32.mrb[0].mxu0
      %v6808 = vadd.f32 %v6663, %v6807
      %v6809 = vpop.f32.mrb[0].mxu0
      %6810 = vmatprep.mubr.f32.mxu0 %v6278
      %6811 = vmatmul.mubr.f32.gmra.mrb[0].mxu0 %v6277
      %v6812 = vpop.f32.mrb[0].mxu0
      %v6813 = vadd.f32 %v6668, %v6812
      %v6814 = vpop.f32.mrb[0].mxu0
      %6815 = vmatprep.mubr.f32.mxu0 %v6284
      %6816 = vmatmul.mubr.f32.gmra.mrb[0].mxu0 %v6283
      %v6817 = vpop.f32.mrb[0].mxu0
      %v6818 = vadd.f32 %v6673, %v6817
      %v6819 = vpop.f32.mrb[0].mxu0
      %6820 = vmatprep.mubr.f32.mxu0 %v6290
      %6821 = vmatmul.mubr.f32.gmra.mrb[0].mxu0 %v6289
      %v6822 = vpop.f32.mrb[0].mxu0
      %v6823 = vadd.f32 %v6678, %v6822
      %v6824 = vpop.f32.mrb[0].mxu0
      %6825 = vmatprep.mubr.f32.mxu0 %v6296
      %6826 = vmatmul.mubr.f32.gmra.mrb[0].mxu0 %v6295
      %v6827 = vpop.f32.mrb[0].mxu0
      %v6828 = vadd.f32 %v6683, %v6827
      %v6829 = vpop.f32.mrb[0].mxu0
      %6830 = vmatprep.mubr.f32.mxu0 %v6302
      %6831 = vmatmul.mubr.f32.gmra.mrb[0].mxu0 %v6301
      %v6832 = vpop.f32.mrb[0].mxu0
      %v6833 = vadd.f32 %v6688, %v6832
      %v6834 = vpop.f32.mrb[0].mxu0
      %6835 = vmatprep.mubr.f32.mxu0 %v6308
      %6836 = vmatmul.mubr.f32.gmra.mrb[0].mxu0 %v6307
      %v6837 = vpop.f32.mrb[0].mxu0
      %v6838 = vadd.f32 %v6693, %v6837
      %v6839 = vpop.f32.mrb[0].mxu0
      %6840 = vmatprep.mubr.f32.mxu0 %v6314
      %6841 = vmatmul.mubr.f32.gmra.mrb[0].mxu0 %v6313
      %v6842 = vpop.f32.mrb[0].mxu0
      %v6843 = vadd.f32 %v6698, %v6842
      %v6844 = vpop.f32.mrb[0].mxu0
      %6845 = vdwg.mxu0
      %v6846 = vld [vmem:[%s3 + $0x8] sm:$0xff]
      %v6847 = vld [vmem:[%s3 + $0x28] sm:$0xff]
      %v6848 = vld [vmem:[%s3 + $0x48] sm:$0xff]
      %v6849 = vld [vmem:[%s3 + $0x68] sm:$0xff]
      %v6850 = vld [vmem:[%s3 + $0x88] sm:$0xff]
      %v6851 = vld [vmem:[%s3 + $0xa8] sm:$0xff]
      %v6852 = vld [vmem:[%s3 + $0xc8] sm:$0xff]
      %v6853 = vld [vmem:[%s3 + $0xe8] sm:$0xff]
      %v6854 = vld [vmem:[%s3 + $0x108] sm:$0xff]
      %v6855 = vld [vmem:[%s3 + $0x128] sm:$0xff]
      %v6856 = vld [vmem:[%s3 + $0x148] sm:$0xff]
      %v6857 = vld [vmem:[%s3 + $0x168] sm:$0xff]
      %v6858 = vld [vmem:[%s3 + $0x188] sm:$0xff]
      %v6859 = vld [vmem:[%s3 + $0x1a8] sm:$0xff]
      %v6860 = vld [vmem:[%s3 + $0x1c8] sm:$0xff]
      %v6861 = vld [vmem:[%s3 + $0x1e8] sm:$0xff]
      %v6862 = vld [vmem:[%s3 + $0x208] sm:$0xff]
      %v6863 = vld [vmem:[%s3 + $0x228] sm:$0xff]
      %v6864 = vld [vmem:[%s3 + $0x248] sm:$0xff]
      %v6865 = vld [vmem:[%s3 + $0x268] sm:$0xff]
      %v6866 = vld [vmem:[%s3 + $0x288] sm:$0xff]
      %v6867 = vld [vmem:[%s3 + $0x2a8] sm:$0xff]
      %v6868 = vld [vmem:[%s3 + $0x2c8] sm:$0xff]
      %v6869 = vld [vmem:[%s3 + $0x2e8] sm:$0xff]
      %v6870 = vld [vmem:[%s3 + $0x308] sm:$0xff]
      %v6871 = vld [vmem:[%s3 + $0x328] sm:$0xff]
      %v6872 = vld [vmem:[%s3 + $0x348] sm:$0xff]
      %v6873 = vld [vmem:[%s3 + $0x368] sm:$0xff]
      %v6874 = vld [vmem:[%s3 + $0x388] sm:$0xff]
      %v6875 = vld [vmem:[%s3 + $0x3a8] sm:$0xff]
      %v6876 = vld [vmem:[%s3 + $0x3c8] sm:$0xff]
      %v6877 = vld [vmem:[%s3 + $0x3e8] sm:$0xff]
      %v6878 = vld [vmem:[%s3 + $0x408] sm:$0xff]
      %v6879 = vld [vmem:[%s3 + $0x428] sm:$0xff]
      %v6880 = vld [vmem:[%s3 + $0x448] sm:$0xff]
      %v6881 = vld [vmem:[%s3 + $0x468] sm:$0xff]
      %v6882 = vld [vmem:[%s3 + $0x488] sm:$0xff]
      %v6883 = vld [vmem:[%s3 + $0x4a8] sm:$0xff]
      %v6884 = vld [vmem:[%s3 + $0x4c8] sm:$0xff]
      %v6885 = vld [vmem:[%s3 + $0x4e8] sm:$0xff]
      %v6886 = vld [vmem:[%s3 + $0x508] sm:$0xff]
      %v6887 = vld [vmem:[%s3 + $0x528] sm:$0xff]
      %v6888 = vld [vmem:[%s3 + $0x548] sm:$0xff]
      %v6889 = vld [vmem:[%s3 + $0x568] sm:$0xff]
      %v6890 = vld [vmem:[%s3 + $0x588] sm:$0xff]
      %v6891 = vld [vmem:[%s3 + $0x5a8] sm:$0xff]
      %v6892 = vld [vmem:[%s3 + $0x5c8] sm:$0xff]
      %v6893 = vld [vmem:[%s3 + $0x5e8] sm:$0xff]
      %v6894 = vld [vmem:[%s3 + $0x608] sm:$0xff]
      %v6895 = vld [vmem:[%s3 + $0x628] sm:$0xff]
      %v6896 = vld [vmem:[%s3 + $0x648] sm:$0xff]
      %v6897 = vld [vmem:[%s3 + $0x668] sm:$0xff]
      %v6898 = vld [vmem:[%s3 + $0x688] sm:$0xff]
      %v6899 = vld [vmem:[%s3 + $0x6a8] sm:$0xff]
      %v6900 = vld [vmem:[%s3 + $0x6c8] sm:$0xff]
      %v6901 = vld [vmem:[%s3 + $0x6e8] sm:$0xff]
      %v6902 = vld [vmem:[%s3 + $0x708] sm:$0xff]
      %v6903 = vld [vmem:[%s3 + $0x728] sm:$0xff]
      %v6904 = vld [vmem:[%s3 + $0x748] sm:$0xff]
      %v6905 = vld [vmem:[%s3 + $0x768] sm:$0xff]
      %v6906 = vld [vmem:[%s3 + $0x788] sm:$0xff]
      %v6907 = vld [vmem:[%s3 + $0x7a8] sm:$0xff]
      %v6908 = vld [vmem:[%s3 + $0x7c8] sm:$0xff]
      %v6909 = vld [vmem:[%s3 + $0x7e8] sm:$0xff]
      %v6910 = vld [vmem:[%s3 + $0x808] sm:$0xff]
      %v6911 = vld [vmem:[%s3 + $0x828] sm:$0xff]
      %v6912 = vld [vmem:[%s3 + $0x848] sm:$0xff]
      %v6913 = vld [vmem:[%s3 + $0x868] sm:$0xff]
      %v6914 = vld [vmem:[%s3 + $0x888] sm:$0xff]
      %v6915 = vld [vmem:[%s3 + $0x8a8] sm:$0xff]
      %v6916 = vld [vmem:[%s3 + $0x8c8] sm:$0xff]
      %v6917 = vld [vmem:[%s3 + $0x8e8] sm:$0xff]
      %v6918 = vld [vmem:[%s3 + $0x908] sm:$0xff]
      %v6919 = vld [vmem:[%s3 + $0x928] sm:$0xff]
      %v6920 = vld [vmem:[%s3 + $0x948] sm:$0xff]
      %v6921 = vld [vmem:[%s3 + $0x968] sm:$0xff]
      %v6922 = vld [vmem:[%s3 + $0x988] sm:$0xff]
      %v6923 = vld [vmem:[%s3 + $0x9a8] sm:$0xff]
      %v6924 = vld [vmem:[%s3 + $0x9c8] sm:$0xff]
      %v6925 = vld [vmem:[%s3 + $0x9e8] sm:$0xff]
      %v6926 = vld [vmem:[%s3 + $0xa08] sm:$0xff]
      %v6927 = vld [vmem:[%s3 + $0xa28] sm:$0xff]
      %v6928 = vld [vmem:[%s3 + $0xa48] sm:$0xff]
      %v6929 = vld [vmem:[%s3 + $0xa68] sm:$0xff]
      %v6930 = vld [vmem:[%s3 + $0xa88] sm:$0xff]
      %v6931 = vld [vmem:[%s3 + $0xaa8] sm:$0xff]
      %v6932 = vld [vmem:[%s3 + $0xac8] sm:$0xff]
      %v6933 = vld [vmem:[%s3 + $0xae8] sm:$0xff]
      %v6934 = vld [vmem:[%s3 + $0xb08] sm:$0xff]
      %v6935 = vld [vmem:[%s3 + $0xb28] sm:$0xff]
      %v6936 = vld [vmem:[%s3 + $0xb48] sm:$0xff]
      %v6937 = vld [vmem:[%s3 + $0xb68] sm:$0xff]
      %v6938 = vld [vmem:[%s3 + $0xb88] sm:$0xff]
      %v6939 = vld [vmem:[%s3 + $0xba8] sm:$0xff]
      %v6940 = vld [vmem:[%s3 + $0xbc8] sm:$0xff]
      %v6941 = vld [vmem:[%s3 + $0xbe8] sm:$0xff]
      %6942 = vmatprep.subr.mxu0 0.0
      %6943 = vmatpush1.msra.mxu0 %v6846
      %6944 = vmatprep.subr.mxu0 0.0
      %6945 = vmatpush1.msra.mxu0 %v6847
      %6946 = vmatprep.subr.mxu0 0.0
      %6947 = vmatpush1.msra.mxu0 %v6848
      %6948 = vmatprep.subr.mxu0 0.0
      %6949 = vmatpush1.msra.mxu0 %v6849
      %6950 = vmatprep.subr.mxu0 0.0
      %6951 = vmatpush1.msra.mxu0 %v6850
      %6952 = vmatprep.subr.mxu0 0.0
      %6953 = vmatpush1.msra.mxu0 %v6851
      %6954 = vmatprep.subr.mxu0 0.0
      %6955 = vmatpush1.msra.mxu0 %v6852
      %6956 = vmatprep.subr.mxu0 0.0
      %6957 = vmatpush1.msra.mxu0 %v6853
      %6958 = vmatprep.subr.mxu0 0.0
      %6959 = vmatpush1.msra.mxu0 %v6854
      %6960 = vmatprep.subr.mxu0 0.0
      %6961 = vmatpush1.msra.mxu0 %v6855
      %6962 = vmatprep.subr.mxu0 0.0
      %6963 = vmatpush1.msra.mxu0 %v6856
      %6964 = vmatprep.subr.mxu0 0.0
      %6965 = vmatpush1.msra.mxu0 %v6857
      %6966 = vmatprep.subr.mxu0 0.0
      %6967 = vmatpush1.msra.mxu0 %v6858
      %6968 = vmatprep.subr.mxu0 0.0
      %6969 = vmatpush1.msra.mxu0 %v6859
      %6970 = vmatprep.subr.mxu0 0.0
      %6971 = vmatpush1.msra.mxu0 %v6860
      %6972 = vmatprep.subr.mxu0 0.0
      %6973 = vmatpush1.msra.mxu0 %v6861
      %6974 = vmatprep.subr.mxu0 0.0
      %6975 = vmatpush1.msra.mxu0 %v6862
      %6976 = vmatprep.subr.mxu0 0.0
      %6977 = vmatpush1.msra.mxu0 %v6863
      %6978 = vmatprep.subr.mxu0 0.0
      %6979 = vmatpush1.msra.mxu0 %v6864
      %6980 = vmatprep.subr.mxu0 0.0
      %6981 = vmatpush1.msra.mxu0 %v6865
      %6982 = vmatprep.subr.mxu0 0.0
      %6983 = vmatpush1.msra.mxu0 %v6866
      %6984 = vmatprep.subr.mxu0 0.0
      %6985 = vmatpush1.msra.mxu0 %v6867
      %6986 = vmatprep.subr.mxu0 0.0
      %6987 = vmatpush1.msra.mxu0 %v6868
      %6988 = vmatprep.subr.mxu0 0.0
      %6989 = vmatpush1.msra.mxu0 %v6869
      %6990 = vmatprep.subr.mxu0 0.0
      %6991 = vmatpush1.msra.mxu0 %v6870
      %6992 = vmatprep.subr.mxu0 0.0
      %6993 = vmatpush1.msra.mxu0 %v6871
      %6994 = vmatprep.subr.mxu0 0.0
      %6995 = vmatpush1.msra.mxu0 %v6872
      %6996 = vmatprep.subr.mxu0 0.0
      %6997 = vmatpush1.msra.mxu0 %v6873
      %6998 = vmatprep.subr.mxu0 0.0
      %6999 = vmatpush1.msra.mxu0 %v6874
      %7000 = vmatprep.subr.mxu0 0.0
      %7001 = vmatpush1.msra.mxu0 %v6875
      %7002 = vmatprep.subr.mxu0 0.0
      %7003 = vmatpush1.msra.mxu0 %v6876
      %7004 = vmatprep.subr.mxu0 0.0
      %7005 = vmatpush1.msra.mxu0 %v6877
      %7006 = vmatprep.mubr.f32.mxu0 %v6220
      %7007 = vmatmul.mubr.f32.gmra.mrb[0].mxu0 %v6219
      %v7008 = vpop.f32.mrb[0].mxu0
      %v7009 = vadd.f32 0.0, %v7008
      %v7010 = vpop.f32.mrb[0].mxu0
      %7011 = vmatprep.mubr.f32.mxu0 %v6226
      %7012 = vmatmul.mubr.f32.gmra.mrb[0].mxu0 %v6225
      %v7013 = vpop.f32.mrb[0].mxu0
      %v7014 = vadd.f32 0.0, %v7013
      %v7015 = vpop.f32.mrb[0].mxu0
      %7016 = vmatprep.mubr.f32.mxu0 %v6232
      %7017 = vmatmul.mubr.f32.gmra.mrb[0].mxu0 %v6231
      %v7018 = vpop.f32.mrb[0].mxu0
      %v7019 = vadd.f32 0.0, %v7018
      %v7020 = vpop.f32.mrb[0].mxu0
      %7021 = vmatprep.mubr.f32.mxu0 %v6238
      %7022 = vmatmul.mubr.f32.gmra.mrb[0].mxu0 %v6237
      %v7023 = vpop.f32.mrb[0].mxu0
      %v7024 = vadd.f32 0.0, %v7023
      %v7025 = vpop.f32.mrb[0].mxu0
      %7026 = vmatprep.mubr.f32.mxu0 %v6244
      %7027 = vmatmul.mubr.f32.gmra.mrb[0].mxu0 %v6243
      %v7028 = vpop.f32.mrb[0].mxu0
      %v7029 = vadd.f32 0.0, %v7028
      %v7030 = vpop.f32.mrb[0].mxu0
      %7031 = vmatprep.mubr.f32.mxu0 %v6250
      %7032 = vmatmul.mubr.f32.gmra.mrb[0].mxu0 %v6249
      %v7033 = vpop.f32.mrb[0].mxu0
      %v7034 = vadd.f32 0.0, %v7033
      %v7035 = vpop.f32.mrb[0].mxu0
      %7036 = vmatprep.mubr.f32.mxu0 %v6256
      %7037 = vmatmul.mubr.f32.gmra.mrb[0].mxu0 %v6255
      %v7038 = vpop.f32.mrb[0].mxu0
      %v7039 = vadd.f32 0.0, %v7038
      %v7040 = vpop.f32.mrb[0].mxu0
      %7041 = vmatprep.mubr.f32.mxu0 %v6262
      %7042 = vmatmul.mubr.f32.gmra.mrb[0].mxu0 %v6261
      %v7043 = vpop.f32.mrb[0].mxu0
      %v7044 = vadd.f32 0.0, %v7043
      %v7045 = vpop.f32.mrb[0].mxu0
      %7046 = vmatprep.mubr.f32.mxu0 %v6268
      %7047 = vmatmul.mubr.f32.gmra.mrb[0].mxu0 %v6267
      %v7048 = vpop.f32.mrb[0].mxu0
      %v7049 = vadd.f32 0.0, %v7048
      %v7050 = vpop.f32.mrb[0].mxu0
      %7051 = vmatprep.mubr.f32.mxu0 %v6274
      %7052 = vmatmul.mubr.f32.gmra.mrb[0].mxu0 %v6273
      %v7053 = vpop.f32.mrb[0].mxu0
      %v7054 = vadd.f32 0.0, %v7053
      %v7055 = vpop.f32.mrb[0].mxu0
      %7056 = vmatprep.mubr.f32.mxu0 %v6280
      %7057 = vmatmul.mubr.f32.gmra.mrb[0].mxu0 %v6279
      %v7058 = vpop.f32.mrb[0].mxu0
      %v7059 = vadd.f32 0.0, %v7058
      %v7060 = vpop.f32.mrb[0].mxu0
      %7061 = vmatprep.mubr.f32.mxu0 %v6286
      %7062 = vmatmul.mubr.f32.gmra.mrb[0].mxu0 %v6285
      %v7063 = vpop.f32.mrb[0].mxu0
      %v7064 = vadd.f32 0.0, %v7063
      %v7065 = vpop.f32.mrb[0].mxu0
      %7066 = vmatprep.mubr.f32.mxu0 %v6292
      %7067 = vmatmul.mubr.f32.gmra.mrb[0].mxu0 %v6291
      %v7068 = vpop.f32.mrb[0].mxu0
      %v7069 = vadd.f32 0.0, %v7068
      %v7070 = vpop.f32.mrb[0].mxu0
      %7071 = vmatprep.mubr.f32.mxu0 %v6298
      %7072 = vmatmul.mubr.f32.gmra.mrb[0].mxu0 %v6297
      %v7073 = vpop.f32.mrb[0].mxu0
      %v7074 = vadd.f32 0.0, %v7073
      %v7075 = vpop.f32.mrb[0].mxu0
      %7076 = vmatprep.mubr.f32.mxu0 %v6304
      %7077 = vmatmul.mubr.f32.gmra.mrb[0].mxu0 %v6303
      %v7078 = vpop.f32.mrb[0].mxu0
      %v7079 = vadd.f32 0.0, %v7078
      %v7080 = vpop.f32.mrb[0].mxu0
      %7081 = vmatprep.mubr.f32.mxu0 %v6310
      %7082 = vmatmul.mubr.f32.gmra.mrb[0].mxu0 %v6309
      %v7083 = vpop.f32.mrb[0].mxu0
      %v7084 = vadd.f32 0.0, %v7083
      %v7085 = vpop.f32.mrb[0].mxu0
      %7086 = vdwg.mxu0
      %7087 = vmatprep.subr.mxu0 0.0
      %7088 = vmatpush1.msra.mxu0 %v6878
      %7089 = vmatprep.subr.mxu0 0.0
      %7090 = vmatpush1.msra.mxu0 %v6879
      %7091 = vmatprep.subr.mxu0 0.0
      %7092 = vmatpush1.msra.mxu0 %v6880
      %7093 = vmatprep.subr.mxu0 0.0
      %7094 = vmatpush1.msra.mxu0 %v6881
      %7095 = vmatprep.subr.mxu0 0.0
      %7096 = vmatpush1.msra.mxu0 %v6882
      %7097 = vmatprep.subr.mxu0 0.0
      %7098 = vmatpush1.msra.mxu0 %v6883
      %7099 = vmatprep.subr.mxu0 0.0
      %7100 = vmatpush1.msra.mxu0 %v6884
      %7101 = vmatprep.subr.mxu0 0.0
      %7102 = vmatpush1.msra.mxu0 %v6885
      %7103 = vmatprep.subr.mxu0 0.0
      %7104 = vmatpush1.msra.mxu0 %v6886
      %7105 = vmatprep.subr.mxu0 0.0
      %7106 = vmatpush1.msra.mxu0 %v6887
      %7107 = vmatprep.subr.mxu0 0.0
      %7108 = vmatpush1.msra.mxu0 %v6888
      %7109 = vmatprep.subr.mxu0 0.0
      %7110 = vmatpush1.msra.mxu0 %v6889
      %7111 = vmatprep.subr.mxu0 0.0
      %7112 = vmatpush1.msra.mxu0 %v6890
      %7113 = vmatprep.subr.mxu0 0.0
      %7114 = vmatpush1.msra.mxu0 %v6891
      %7115 = vmatprep.subr.mxu0 0.0
      %7116 = vmatpush1.msra.mxu0 %v6892
      %7117 = vmatprep.subr.mxu0 0.0
      %7118 = vmatpush1.msra.mxu0 %v6893
      %7119 = vmatprep.subr.mxu0 0.0
      %7120 = vmatpush1.msra.mxu0 %v6894
      %7121 = vmatprep.subr.mxu0 0.0
      %7122 = vmatpush1.msra.mxu0 %v6895
      %7123 = vmatprep.subr.mxu0 0.0
      %7124 = vmatpush1.msra.mxu0 %v6896
      %7125 = vmatprep.subr.mxu0 0.0
      %7126 = vmatpush1.msra.mxu0 %v6897
      %7127 = vmatprep.subr.mxu0 0.0
      %7128 = vmatpush1.msra.mxu0 %v6898
      %7129 = vmatprep.subr.mxu0 0.0
      %7130 = vmatpush1.msra.mxu0 %v6899
      %7131 = vmatprep.subr.mxu0 0.0
      %7132 = vmatpush1.msra.mxu0 %v6900
      %7133 = vmatprep.subr.mxu0 0.0
      %7134 = vmatpush1.msra.mxu0 %v6901
      %7135 = vmatprep.subr.mxu0 0.0
      %7136 = vmatpush1.msra.mxu0 %v6902
      %7137 = vmatprep.subr.mxu0 0.0
      %7138 = vmatpush1.msra.mxu0 %v6903
      %7139 = vmatprep.subr.mxu0 0.0
      %7140 = vmatpush1.msra.mxu0 %v6904
      %7141 = vmatprep.subr.mxu0 0.0
      %7142 = vmatpush1.msra.mxu0 %v6905
      %7143 = vmatprep.subr.mxu0 0.0
      %7144 = vmatpush1.msra.mxu0 %v6906
      %7145 = vmatprep.subr.mxu0 0.0
      %7146 = vmatpush1.msra.mxu0 %v6907
      %7147 = vmatprep.subr.mxu0 0.0
      %7148 = vmatpush1.msra.mxu0 %v6908
      %7149 = vmatprep.subr.mxu0 0.0
      %7150 = vmatpush1.msra.mxu0 %v6909
      %7151 = vmatprep.mubr.f32.mxu0 %v6222
      %7152 = vmatmul.mubr.f32.gmra.mrb[0].mxu0 %v6221
      %v7153 = vpop.f32.mrb[0].mxu0
      %v7154 = vadd.f32 %v7009, %v7153
      %v7155 = vpop.f32.mrb[0].mxu0
      %7156 = vmatprep.mubr.f32.mxu0 %v6228
      %7157 = vmatmul.mubr.f32.gmra.mrb[0].mxu0 %v6227
      %v7158 = vpop.f32.mrb[0].mxu0
      %v7159 = vadd.f32 %v7014, %v7158
      %v7160 = vpop.f32.mrb[0].mxu0
      %7161 = vmatprep.mubr.f32.mxu0 %v6234
      %7162 = vmatmul.mubr.f32.gmra.mrb[0].mxu0 %v6233
      %v7163 = vpop.f32.mrb[0].mxu0
      %v7164 = vadd.f32 %v7019, %v7163
      %v7165 = vpop.f32.mrb[0].mxu0
      %7166 = vmatprep.mubr.f32.mxu0 %v6240
      %7167 = vmatmul.mubr.f32.gmra.mrb[0].mxu0 %v6239
      %v7168 = vpop.f32.mrb[0].mxu0
      %v7169 = vadd.f32 %v7024, %v7168
      %v7170 = vpop.f32.mrb[0].mxu0
      %7171 = vmatprep.mubr.f32.mxu0 %v6246
      %7172 = vmatmul.mubr.f32.gmra.mrb[0].mxu0 %v6245
      %v7173 = vpop.f32.mrb[0].mxu0
      %v7174 = vadd.f32 %v7029, %v7173
      %v7175 = vpop.f32.mrb[0].mxu0
      %7176 = vmatprep.mubr.f32.mxu0 %v6252
      %7177 = vmatmul.mubr.f32.gmra.mrb[0].mxu0 %v6251
      %v7178 = vpop.f32.mrb[0].mxu0
      %v7179 = vadd.f32 %v7034, %v7178
      %v7180 = vpop.f32.mrb[0].mxu0
      %7181 = vmatprep.mubr.f32.mxu0 %v6258
      %7182 = vmatmul.mubr.f32.gmra.mrb[0].mxu0 %v6257
      %v7183 = vpop.f32.mrb[0].mxu0
      %v7184 = vadd.f32 %v7039, %v7183
      %v7185 = vpop.f32.mrb[0].mxu0
      %7186 = vmatprep.mubr.f32.mxu0 %v6264
      %7187 = vmatmul.mubr.f32.gmra.mrb[0].mxu0 %v6263
      %v7188 = vpop.f32.mrb[0].mxu0
      %v7189 = vadd.f32 %v7044, %v7188
      %v7190 = vpop.f32.mrb[0].mxu0
      %7191 = vmatprep.mubr.f32.mxu0 %v6270
      %7192 = vmatmul.mubr.f32.gmra.mrb[0].mxu0 %v6269
      %v7193 = vpop.f32.mrb[0].mxu0
      %v7194 = vadd.f32 %v7049, %v7193
      %v7195 = vpop.f32.mrb[0].mxu0
      %7196 = vmatprep.mubr.f32.mxu0 %v6276
      %7197 = vmatmul.mubr.f32.gmra.mrb[0].mxu0 %v6275
      %v7198 = vpop.f32.mrb[0].mxu0
      %v7199 = vadd.f32 %v7054, %v7198
      %v7200 = vpop.f32.mrb[0].mxu0
      %7201 = vmatprep.mubr.f32.mxu0 %v6282
      %7202 = vmatmul.mubr.f32.gmra.mrb[0].mxu0 %v6281
      %v7203 = vpop.f32.mrb[0].mxu0
      %v7204 = vadd.f32 %v7059, %v7203
      %v7205 = vpop.f32.mrb[0].mxu0
      %7206 = vmatprep.mubr.f32.mxu0 %v6288
      %7207 = vmatmul.mubr.f32.gmra.mrb[0].mxu0 %v6287
      %v7208 = vpop.f32.mrb[0].mxu0
      %v7209 = vadd.f32 %v7064, %v7208
      %v7210 = vpop.f32.mrb[0].mxu0
      %7211 = vmatprep.mubr.f32.mxu0 %v6294
      %7212 = vmatmul.mubr.f32.gmra.mrb[0].mxu0 %v6293
      %v7213 = vpop.f32.mrb[0].mxu0
      %v7214 = vadd.f32 %v7069, %v7213
      %v7215 = vpop.f32.mrb[0].mxu0
      %7216 = vmatprep.mubr.f32.mxu0 %v6300
      %7217 = vmatmul.mubr.f32.gmra.mrb[0].mxu0 %v6299
      %v7218 = vpop.f32.mrb[0].mxu0
      %v7219 = vadd.f32 %v7074, %v7218
      %v7220 = vpop.f32.mrb[0].mxu0
      %7221 = vmatprep.mubr.f32.mxu0 %v6306
      %7222 = vmatmul.mubr.f32.gmra.mrb[0].mxu0 %v6305
      %v7223 = vpop.f32.mrb[0].mxu0
      %v7224 = vadd.f32 %v7079, %v7223
      %v7225 = vpop.f32.mrb[0].mxu0
      %7226 = vmatprep.mubr.f32.mxu0 %v6312
      %7227 = vmatmul.mubr.f32.gmra.mrb[0].mxu0 %v6311
      %v7228 = vpop.f32.mrb[0].mxu0
      %v7229 = vadd.f32 %v7084, %v7228
      %v7230 = vpop.f32.mrb[0].mxu0
      %7231 = vdwg.mxu0
      %7232 = vmatprep.subr.mxu0 0.0
      %7233 = vmatpush1.msra.mxu0 %v6910
      %7234 = vmatprep.subr.mxu0 0.0
      %7235 = vmatpush1.msra.mxu0 %v6911
      %7236 = vmatprep.subr.mxu0 0.0
      %7237 = vmatpush1.msra.mxu0 %v6912
      %7238 = vmatprep.subr.mxu0 0.0
      %7239 = vmatpush1.msra.mxu0 %v6913
      %7240 = vmatprep.subr.mxu0 0.0
      %7241 = vmatpush1.msra.mxu0 %v6914
      %7242 = vmatprep.subr.mxu0 0.0
      %7243 = vmatpush1.msra.mxu0 %v6915
      %7244 = vmatprep.subr.mxu0 0.0
      %7245 = vmatpush1.msra.mxu0 %v6916
      %7246 = vmatprep.subr.mxu0 0.0
      %7247 = vmatpush1.msra.mxu0 %v6917
      %7248 = vmatprep.subr.mxu0 0.0
      %7249 = vmatpush1.msra.mxu0 %v6918
      %7250 = vmatprep.subr.mxu0 0.0
      %7251 = vmatpush1.msra.mxu0 %v6919
      %7252 = vmatprep.subr.mxu0 0.0
      %7253 = vmatpush1.msra.mxu0 %v6920
      %7254 = vmatprep.subr.mxu0 0.0
      %7255 = vmatpush1.msra.mxu0 %v6921
      %7256 = vmatprep.subr.mxu0 0.0
      %7257 = vmatpush1.msra.mxu0 %v6922
      %7258 = vmatprep.subr.mxu0 0.0
      %7259 = vmatpush1.msra.mxu0 %v6923
      %7260 = vmatprep.subr.mxu0 0.0
      %7261 = vmatpush1.msra.mxu0 %v6924
      %7262 = vmatprep.subr.mxu0 0.0
      %7263 = vmatpush1.msra.mxu0 %v6925
      %7264 = vmatprep.subr.mxu0 0.0
      %7265 = vmatpush1.msra.mxu0 %v6926
      %7266 = vmatprep.subr.mxu0 0.0
      %7267 = vmatpush1.msra.mxu0 %v6927
      %7268 = vmatprep.subr.mxu0 0.0
      %7269 = vmatpush1.msra.mxu0 %v6928
      %7270 = vmatprep.subr.mxu0 0.0
      %7271 = vmatpush1.msra.mxu0 %v6929
      %7272 = vmatprep.subr.mxu0 0.0
      %7273 = vmatpush1.msra.mxu0 %v6930
      %7274 = vmatprep.subr.mxu0 0.0
      %7275 = vmatpush1.msra.mxu0 %v6931
      %7276 = vmatprep.subr.mxu0 0.0
      %7277 = vmatpush1.msra.mxu0 %v6932
      %7278 = vmatprep.subr.mxu0 0.0
      %7279 = vmatpush1.msra.mxu0 %v6933
      %7280 = vmatprep.subr.mxu0 0.0
      %7281 = vmatpush1.msra.mxu0 %v6934
      %7282 = vmatprep.subr.mxu0 0.0
      %7283 = vmatpush1.msra.mxu0 %v6935
      %7284 = vmatprep.subr.mxu0 0.0
      %7285 = vmatpush1.msra.mxu0 %v6936
      %7286 = vmatprep.subr.mxu0 0.0
      %7287 = vmatpush1.msra.mxu0 %v6937
      %7288 = vmatprep.subr.mxu0 0.0
      %7289 = vmatpush1.msra.mxu0 %v6938
      %7290 = vmatprep.subr.mxu0 0.0
      %7291 = vmatpush1.msra.mxu0 %v6939
      %7292 = vmatprep.subr.mxu0 0.0
      %7293 = vmatpush1.msra.mxu0 %v6940
      %7294 = vmatprep.subr.mxu0 0.0
      %7295 = vmatpush1.msra.mxu0 %v6941
      %7296 = vmatprep.mubr.f32.mxu0 %v6224
      %7297 = vmatmul.mubr.f32.gmra.mrb[0].mxu0 %v6223
      %v7298 = vpop.f32.mrb[0].mxu0
      %v7299 = vadd.f32 %v7154, %v7298
      %v7300 = vpop.f32.mrb[0].mxu0
      %7301 = vmatprep.mubr.f32.mxu0 %v6230
      %7302 = vmatmul.mubr.f32.gmra.mrb[0].mxu0 %v6229
      %v7303 = vpop.f32.mrb[0].mxu0
      %v7304 = vadd.f32 %v7159, %v7303
      %v7305 = vpop.f32.mrb[0].mxu0
      %7306 = vmatprep.mubr.f32.mxu0 %v6236
      %7307 = vmatmul.mubr.f32.gmra.mrb[0].mxu0 %v6235
      %v7308 = vpop.f32.mrb[0].mxu0
      %v7309 = vadd.f32 %v7164, %v7308
      %v7310 = vpop.f32.mrb[0].mxu0
      %7311 = vmatprep.mubr.f32.mxu0 %v6242
      %7312 = vmatmul.mubr.f32.gmra.mrb[0].mxu0 %v6241
      %v7313 = vpop.f32.mrb[0].mxu0
      %v7314 = vadd.f32 %v7169, %v7313
      %v7315 = vpop.f32.mrb[0].mxu0
      %7316 = vmatprep.mubr.f32.mxu0 %v6248
      %7317 = vmatmul.mubr.f32.gmra.mrb[0].mxu0 %v6247
      %v7318 = vpop.f32.mrb[0].mxu0
      %v7319 = vadd.f32 %v7174, %v7318
      %v7320 = vpop.f32.mrb[0].mxu0
      %7321 = vmatprep.mubr.f32.mxu0 %v6254
      %7322 = vmatmul.mubr.f32.gmra.mrb[0].mxu0 %v6253
      %v7323 = vpop.f32.mrb[0].mxu0
      %v7324 = vadd.f32 %v7179, %v7323
      %v7325 = vpop.f32.mrb[0].mxu0
      %7326 = vmatprep.mubr.f32.mxu0 %v6260
      %7327 = vmatmul.mubr.f32.gmra.mrb[0].mxu0 %v6259
      %v7328 = vpop.f32.mrb[0].mxu0
      %v7329 = vadd.f32 %v7184, %v7328
      %v7330 = vpop.f32.mrb[0].mxu0
      %7331 = vmatprep.mubr.f32.mxu0 %v6266
      %7332 = vmatmul.mubr.f32.gmra.mrb[0].mxu0 %v6265
      %v7333 = vpop.f32.mrb[0].mxu0
      %v7334 = vadd.f32 %v7189, %v7333
      %v7335 = vpop.f32.mrb[0].mxu0
      %7336 = vmatprep.mubr.f32.mxu0 %v6272
      %7337 = vmatmul.mubr.f32.gmra.mrb[0].mxu0 %v6271
      %v7338 = vpop.f32.mrb[0].mxu0
      %v7339 = vadd.f32 %v7194, %v7338
      %v7340 = vpop.f32.mrb[0].mxu0
      %7341 = vmatprep.mubr.f32.mxu0 %v6278
      %7342 = vmatmul.mubr.f32.gmra.mrb[0].mxu0 %v6277
      %v7343 = vpop.f32.mrb[0].mxu0
      %v7344 = vadd.f32 %v7199, %v7343
      %v7345 = vpop.f32.mrb[0].mxu0
      %7346 = vmatprep.mubr.f32.mxu0 %v6284
      %7347 = vmatmul.mubr.f32.gmra.mrb[0].mxu0 %v6283
      %v7348 = vpop.f32.mrb[0].mxu0
      %v7349 = vadd.f32 %v7204, %v7348
      %v7350 = vpop.f32.mrb[0].mxu0
      %7351 = vmatprep.mubr.f32.mxu0 %v6290
      %7352 = vmatmul.mubr.f32.gmra.mrb[0].mxu0 %v6289
      %v7353 = vpop.f32.mrb[0].mxu0
      %v7354 = vadd.f32 %v7209, %v7353
      %v7355 = vpop.f32.mrb[0].mxu0
      %7356 = vmatprep.mubr.f32.mxu0 %v6296
      %7357 = vmatmul.mubr.f32.gmra.mrb[0].mxu0 %v6295
      %v7358 = vpop.f32.mrb[0].mxu0
      %v7359 = vadd.f32 %v7214, %v7358
      %v7360 = vpop.f32.mrb[0].mxu0
      %7361 = vmatprep.mubr.f32.mxu0 %v6302
      %7362 = vmatmul.mubr.f32.gmra.mrb[0].mxu0 %v6301
      %v7363 = vpop.f32.mrb[0].mxu0
      %v7364 = vadd.f32 %v7219, %v7363
      %v7365 = vpop.f32.mrb[0].mxu0
      %7366 = vmatprep.mubr.f32.mxu0 %v6308
      %7367 = vmatmul.mubr.f32.gmra.mrb[0].mxu0 %v6307
      %v7368 = vpop.f32.mrb[0].mxu0
      %v7369 = vadd.f32 %v7224, %v7368
      %v7370 = vpop.f32.mrb[0].mxu0
      %7371 = vmatprep.mubr.f32.mxu0 %v6314
      %7372 = vmatmul.mubr.f32.gmra.mrb[0].mxu0 %v6313
      %v7373 = vpop.f32.mrb[0].mxu0
      %v7374 = vadd.f32 %v7229, %v7373
      %v7375 = vpop.f32.mrb[0].mxu0
      %7376 = vdwg.mxu0
      %v7377 = vmax.f32 %v6768, %v7299
      %v7378 = vmax.f32 %v6773, %v7304
      %v7379 = vmax.f32 %v6778, %v7309
      %v7380 = vmax.f32 %v6783, %v7314
      %v7381 = vmax.f32 %v6788, %v7319
      %v7382 = vmax.f32 %v6793, %v7324
      %v7383 = vmax.f32 %v6798, %v7329
      %v7384 = vmax.f32 %v6803, %v7334
      %v7385 = vmax.f32 %v6808, %v7339
      %v7386 = vmax.f32 %v6813, %v7344
      %v7387 = vmax.f32 %v6818, %v7349
      %v7388 = vmax.f32 %v6823, %v7354
      %v7389 = vmax.f32 %v6828, %v7359
      %v7390 = vmax.f32 %v6833, %v7364
      %v7391 = vmax.f32 %v6838, %v7369
      %v7392 = vmax.f32 %v6843, %v7374
      %v7393 = vld [vmem:[%s3 + $0x10] sm:$0xff]
      %v7394 = vld [vmem:[%s3 + $0x30] sm:$0xff]
      %v7395 = vld [vmem:[%s3 + $0x50] sm:$0xff]
      %v7396 = vld [vmem:[%s3 + $0x70] sm:$0xff]
      %v7397 = vld [vmem:[%s3 + $0x90] sm:$0xff]
      %v7398 = vld [vmem:[%s3 + $0xb0] sm:$0xff]
      %v7399 = vld [vmem:[%s3 + $0xd0] sm:$0xff]
      %v7400 = vld [vmem:[%s3 + $0xf0] sm:$0xff]
      %v7401 = vld [vmem:[%s3 + $0x110] sm:$0xff]
      %v7402 = vld [vmem:[%s3 + $0x130] sm:$0xff]
      %v7403 = vld [vmem:[%s3 + $0x150] sm:$0xff]
      %v7404 = vld [vmem:[%s3 + $0x170] sm:$0xff]
      %v7405 = vld [vmem:[%s3 + $0x190] sm:$0xff]
      %v7406 = vld [vmem:[%s3 + $0x1b0] sm:$0xff]
      %v7407 = vld [vmem:[%s3 + $0x1d0] sm:$0xff]
      %v7408 = vld [vmem:[%s3 + $0x1f0] sm:$0xff]
      %v7409 = vld [vmem:[%s3 + $0x210] sm:$0xff]
      %v7410 = vld [vmem:[%s3 + $0x230] sm:$0xff]
      %v7411 = vld [vmem:[%s3 + $0x250] sm:$0xff]
      %v7412 = vld [vmem:[%s3 + $0x270] sm:$0xff]
      %v7413 = vld [vmem:[%s3 + $0x290] sm:$0xff]
      %v7414 = vld [vmem:[%s3 + $0x2b0] sm:$0xff]
      %v7415 = vld [vmem:[%s3 + $0x2d0] sm:$0xff]
      %v7416 = vld [vmem:[%s3 + $0x2f0] sm:$0xff]
      %v7417 = vld [vmem:[%s3 + $0x310] sm:$0xff]
      %v7418 = vld [vmem:[%s3 + $0x330] sm:$0xff]
      %v7419 = vld [vmem:[%s3 + $0x350] sm:$0xff]
      %v7420 = vld [vmem:[%s3 + $0x370] sm:$0xff]
      %v7421 = vld [vmem:[%s3 + $0x390] sm:$0xff]
      %v7422 = vld [vmem:[%s3 + $0x3b0] sm:$0xff]
      %v7423 = vld [vmem:[%s3 + $0x3d0] sm:$0xff]
      %v7424 = vld [vmem:[%s3 + $0x3f0] sm:$0xff]
      %v7425 = vld [vmem:[%s3 + $0x410] sm:$0xff]
      %v7426 = vld [vmem:[%s3 + $0x430] sm:$0xff]
      %v7427 = vld [vmem:[%s3 + $0x450] sm:$0xff]
      %v7428 = vld [vmem:[%s3 + $0x470] sm:$0xff]
      %v7429 = vld [vmem:[%s3 + $0x490] sm:$0xff]
      %v7430 = vld [vmem:[%s3 + $0x4b0] sm:$0xff]
      %v7431 = vld [vmem:[%s3 + $0x4d0] sm:$0xff]
      %v7432 = vld [vmem:[%s3 + $0x4f0] sm:$0xff]
      %v7433 = vld [vmem:[%s3 + $0x510] sm:$0xff]
      %v7434 = vld [vmem:[%s3 + $0x530] sm:$0xff]
      %v7435 = vld [vmem:[%s3 + $0x550] sm:$0xff]
      %v7436 = vld [vmem:[%s3 + $0x570] sm:$0xff]
      %v7437 = vld [vmem:[%s3 + $0x590] sm:$0xff]
      %v7438 = vld [vmem:[%s3 + $0x5b0] sm:$0xff]
      %v7439 = vld [vmem:[%s3 + $0x5d0] sm:$0xff]
      %v7440 = vld [vmem:[%s3 + $0x5f0] sm:$0xff]
      %v7441 = vld [vmem:[%s3 + $0x610] sm:$0xff]
      %v7442 = vld [vmem:[%s3 + $0x630] sm:$0xff]
      %v7443 = vld [vmem:[%s3 + $0x650] sm:$0xff]
      %v7444 = vld [vmem:[%s3 + $0x670] sm:$0xff]
      %v7445 = vld [vmem:[%s3 + $0x690] sm:$0xff]
      %v7446 = vld [vmem:[%s3 + $0x6b0] sm:$0xff]
      %v7447 = vld [vmem:[%s3 + $0x6d0] sm:$0xff]
      %v7448 = vld [vmem:[%s3 + $0x6f0] sm:$0xff]
      %v7449 = vld [vmem:[%s3 + $0x710] sm:$0xff]
      %v7450 = vld [vmem:[%s3 + $0x730] sm:$0xff]
      %v7451 = vld [vmem:[%s3 + $0x750] sm:$0xff]
      %v7452 = vld [vmem:[%s3 + $0x770] sm:$0xff]
      %v7453 = vld [vmem:[%s3 + $0x790] sm:$0xff]
      %v7454 = vld [vmem:[%s3 + $0x7b0] sm:$0xff]
      %v7455 = vld [vmem:[%s3 + $0x7d0] sm:$0xff]
      %v7456 = vld [vmem:[%s3 + $0x7f0] sm:$0xff]
      %v7457 = vld [vmem:[%s3 + $0x810] sm:$0xff]
      %v7458 = vld [vmem:[%s3 + $0x830] sm:$0xff]
      %v7459 = vld [vmem:[%s3 + $0x850] sm:$0xff]
      %v7460 = vld [vmem:[%s3 + $0x870] sm:$0xff]
      %v7461 = vld [vmem:[%s3 + $0x890] sm:$0xff]
      %v7462 = vld [vmem:[%s3 + $0x8b0] sm:$0xff]
      %v7463 = vld [vmem:[%s3 + $0x8d0] sm:$0xff]
      %v7464 = vld [vmem:[%s3 + $0x8f0] sm:$0xff]
      %v7465 = vld [vmem:[%s3 + $0x910] sm:$0xff]
      %v7466 = vld [vmem:[%s3 + $0x930] sm:$0xff]
      %v7467 = vld [vmem:[%s3 + $0x950] sm:$0xff]
      %v7468 = vld [vmem:[%s3 + $0x970] sm:$0xff]
      %v7469 = vld [vmem:[%s3 + $0x990] sm:$0xff]
      %v7470 = vld [vmem:[%s3 + $0x9b0] sm:$0xff]
      %v7471 = vld [vmem:[%s3 + $0x9d0] sm:$0xff]
      %v7472 = vld [vmem:[%s3 + $0x9f0] sm:$0xff]
      %v7473 = vld [vmem:[%s3 + $0xa10] sm:$0xff]
      %v7474 = vld [vmem:[%s3 + $0xa30] sm:$0xff]
      %v7475 = vld [vmem:[%s3 + $0xa50] sm:$0xff]
      %v7476 = vld [vmem:[%s3 + $0xa70] sm:$0xff]
      %v7477 = vld [vmem:[%s3 + $0xa90] sm:$0xff]
      %v7478 = vld [vmem:[%s3 + $0xab0] sm:$0xff]
      %v7479 = vld [vmem:[%s3 + $0xad0] sm:$0xff]
      %v7480 = vld [vmem:[%s3 + $0xaf0] sm:$0xff]
      %v7481 = vld [vmem:[%s3 + $0xb10] sm:$0xff]
      %v7482 = vld [vmem:[%s3 + $0xb30] sm:$0xff]
      %v7483 = vld [vmem:[%s3 + $0xb50] sm:$0xff]
      %v7484 = vld [vmem:[%s3 + $0xb70] sm:$0xff]
      %v7485 = vld [vmem:[%s3 + $0xb90] sm:$0xff]
      %v7486 = vld [vmem:[%s3 + $0xbb0] sm:$0xff]
      %v7487 = vld [vmem:[%s3 + $0xbd0] sm:$0xff]
      %v7488 = vld [vmem:[%s3 + $0xbf0] sm:$0xff]
      %7489 = vmatprep.subr.mxu0 0.0
      %7490 = vmatpush1.msra.mxu0 %v7393
      %7491 = vmatprep.subr.mxu0 0.0
      %7492 = vmatpush1.msra.mxu0 %v7394
      %7493 = vmatprep.subr.mxu0 0.0
      %7494 = vmatpush1.msra.mxu0 %v7395
      %7495 = vmatprep.subr.mxu0 0.0
      %7496 = vmatpush1.msra.mxu0 %v7396
      %7497 = vmatprep.subr.mxu0 0.0
      %7498 = vmatpush1.msra.mxu0 %v7397
      %7499 = vmatprep.subr.mxu0 0.0
      %7500 = vmatpush1.msra.mxu0 %v7398
      %7501 = vmatprep.subr.mxu0 0.0
      %7502 = vmatpush1.msra.mxu0 %v7399
      %7503 = vmatprep.subr.mxu0 0.0
      %7504 = vmatpush1.msra.mxu0 %v7400
      %7505 = vmatprep.subr.mxu0 0.0
      %7506 = vmatpush1.msra.mxu0 %v7401
      %7507 = vmatprep.subr.mxu0 0.0
      %7508 = vmatpush1.msra.mxu0 %v7402
      %7509 = vmatprep.subr.mxu0 0.0
      %7510 = vmatpush1.msra.mxu0 %v7403
      %7511 = vmatprep.subr.mxu0 0.0
      %7512 = vmatpush1.msra.mxu0 %v7404
      %7513 = vmatprep.subr.mxu0 0.0
      %7514 = vmatpush1.msra.mxu0 %v7405
      %7515 = vmatprep.subr.mxu0 0.0
      %7516 = vmatpush1.msra.mxu0 %v7406
      %7517 = vmatprep.subr.mxu0 0.0
      %7518 = vmatpush1.msra.mxu0 %v7407
      %7519 = vmatprep.subr.mxu0 0.0
      %7520 = vmatpush1.msra.mxu0 %v7408
      %7521 = vmatprep.subr.mxu0 0.0
      %7522 = vmatpush1.msra.mxu0 %v7409
      %7523 = vmatprep.subr.mxu0 0.0
      %7524 = vmatpush1.msra.mxu0 %v7410
      %7525 = vmatprep.subr.mxu0 0.0
      %7526 = vmatpush1.msra.mxu0 %v7411
      %7527 = vmatprep.subr.mxu0 0.0
      %7528 = vmatpush1.msra.mxu0 %v7412
      %7529 = vmatprep.subr.mxu0 0.0
      %7530 = vmatpush1.msra.mxu0 %v7413
      %7531 = vmatprep.subr.mxu0 0.0
      %7532 = vmatpush1.msra.mxu0 %v7414
      %7533 = vmatprep.subr.mxu0 0.0
      %7534 = vmatpush1.msra.mxu0 %v7415
      %7535 = vmatprep.subr.mxu0 0.0
      %7536 = vmatpush1.msra.mxu0 %v7416
      %7537 = vmatprep.subr.mxu0 0.0
      %7538 = vmatpush1.msra.mxu0 %v7417
      %7539 = vmatprep.subr.mxu0 0.0
      %7540 = vmatpush1.msra.mxu0 %v7418
      %7541 = vmatprep.subr.mxu0 0.0
      %7542 = vmatpush1.msra.mxu0 %v7419
      %7543 = vmatprep.subr.mxu0 0.0
      %7544 = vmatpush1.msra.mxu0 %v7420
      %7545 = vmatprep.subr.mxu0 0.0
      %7546 = vmatpush1.msra.mxu0 %v7421
      %7547 = vmatprep.subr.mxu0 0.0
      %7548 = vmatpush1.msra.mxu0 %v7422
      %7549 = vmatprep.subr.mxu0 0.0
      %7550 = vmatpush1.msra.mxu0 %v7423
      %7551 = vmatprep.subr.mxu0 0.0
      %7552 = vmatpush1.msra.mxu0 %v7424
      %7553 = vmatprep.mubr.f32.mxu0 %v6220
      %7554 = vmatmul.mubr.f32.gmra.mrb[0].mxu0 %v6219
      %v7555 = vpop.f32.mrb[0].mxu0
      %v7556 = vadd.f32 0.0, %v7555
      %v7557 = vpop.f32.mrb[0].mxu0
      %7558 = vmatprep.mubr.f32.mxu0 %v6226
      %7559 = vmatmul.mubr.f32.gmra.mrb[0].mxu0 %v6225
      %v7560 = vpop.f32.mrb[0].mxu0
      %v7561 = vadd.f32 0.0, %v7560
      %v7562 = vpop.f32.mrb[0].mxu0
      %7563 = vmatprep.mubr.f32.mxu0 %v6232
      %7564 = vmatmul.mubr.f32.gmra.mrb[0].mxu0 %v6231
      %v7565 = vpop.f32.mrb[0].mxu0
      %v7566 = vadd.f32 0.0, %v7565
      %v7567 = vpop.f32.mrb[0].mxu0
      %7568 = vmatprep.mubr.f32.mxu0 %v6238
      %7569 = vmatmul.mubr.f32.gmra.mrb[0].mxu0 %v6237
      %v7570 = vpop.f32.mrb[0].mxu0
      %v7571 = vadd.f32 0.0, %v7570
      %v7572 = vpop.f32.mrb[0].mxu0
      %7573 = vmatprep.mubr.f32.mxu0 %v6244
      %7574 = vmatmul.mubr.f32.gmra.mrb[0].mxu0 %v6243
      %v7575 = vpop.f32.mrb[0].mxu0
      %v7576 = vadd.f32 0.0, %v7575
      %v7577 = vpop.f32.mrb[0].mxu0
      %7578 = vmatprep.mubr.f32.mxu0 %v6250
      %7579 = vmatmul.mubr.f32.gmra.mrb[0].mxu0 %v6249
      %v7580 = vpop.f32.mrb[0].mxu0
      %v7581 = vadd.f32 0.0, %v7580
      %v7582 = vpop.f32.mrb[0].mxu0
      %7583 = vmatprep.mubr.f32.mxu0 %v6256
      %7584 = vmatmul.mubr.f32.gmra.mrb[0].mxu0 %v6255
      %v7585 = vpop.f32.mrb[0].mxu0
      %v7586 = vadd.f32 0.0, %v7585
      %v7587 = vpop.f32.mrb[0].mxu0
      %7588 = vmatprep.mubr.f32.mxu0 %v6262
      %7589 = vmatmul.mubr.f32.gmra.mrb[0].mxu0 %v6261
      %v7590 = vpop.f32.mrb[0].mxu0
      %v7591 = vadd.f32 0.0, %v7590
      %v7592 = vpop.f32.mrb[0].mxu0
      %7593 = vmatprep.mubr.f32.mxu0 %v6268
      %7594 = vmatmul.mubr.f32.gmra.mrb[0].mxu0 %v6267
      %v7595 = vpop.f32.mrb[0].mxu0
      %v7596 = vadd.f32 0.0, %v7595
      %v7597 = vpop.f32.mrb[0].mxu0
      %7598 = vmatprep.mubr.f32.mxu0 %v6274
      %7599 = vmatmul.mubr.f32.gmra.mrb[0].mxu0 %v6273
      %v7600 = vpop.f32.mrb[0].mxu0
      %v7601 = vadd.f32 0.0, %v7600
      %v7602 = vpop.f32.mrb[0].mxu0
      %7603 = vmatprep.mubr.f32.mxu0 %v6280
      %7604 = vmatmul.mubr.f32.gmra.mrb[0].mxu0 %v6279
      %v7605 = vpop.f32.mrb[0].mxu0
      %v7606 = vadd.f32 0.0, %v7605
      %v7607 = vpop.f32.mrb[0].mxu0
      %7608 = vmatprep.mubr.f32.mxu0 %v6286
      %7609 = vmatmul.mubr.f32.gmra.mrb[0].mxu0 %v6285
      %v7610 = vpop.f32.mrb[0].mxu0
      %v7611 = vadd.f32 0.0, %v7610
      %v7612 = vpop.f32.mrb[0].mxu0
      %7613 = vmatprep.mubr.f32.mxu0 %v6292
      %7614 = vmatmul.mubr.f32.gmra.mrb[0].mxu0 %v6291
      %v7615 = vpop.f32.mrb[0].mxu0
      %v7616 = vadd.f32 0.0, %v7615
      %v7617 = vpop.f32.mrb[0].mxu0
      %7618 = vmatprep.mubr.f32.mxu0 %v6298
      %7619 = vmatmul.mubr.f32.gmra.mrb[0].mxu0 %v6297
      %v7620 = vpop.f32.mrb[0].mxu0
      %v7621 = vadd.f32 0.0, %v7620
      %v7622 = vpop.f32.mrb[0].mxu0
      %7623 = vmatprep.mubr.f32.mxu0 %v6304
      %7624 = vmatmul.mubr.f32.gmra.mrb[0].mxu0 %v6303
      %v7625 = vpop.f32.mrb[0].mxu0
      %v7626 = vadd.f32 0.0, %v7625
      %v7627 = vpop.f32.mrb[0].mxu0
      %7628 = vmatprep.mubr.f32.mxu0 %v6310
      %7629 = vmatmul.mubr.f32.gmra.mrb[0].mxu0 %v6309
      %v7630 = vpop.f32.mrb[0].mxu0
      %v7631 = vadd.f32 0.0, %v7630
      %v7632 = vpop.f32.mrb[0].mxu0
      %7633 = vdwg.mxu0
      %7634 = vmatprep.subr.mxu0 0.0
      %7635 = vmatpush1.msra.mxu0 %v7425
      %7636 = vmatprep.subr.mxu0 0.0
      %7637 = vmatpush1.msra.mxu0 %v7426
      %7638 = vmatprep.subr.mxu0 0.0
      %7639 = vmatpush1.msra.mxu0 %v7427
      %7640 = vmatprep.subr.mxu0 0.0
      %7641 = vmatpush1.msra.mxu0 %v7428
      %7642 = vmatprep.subr.mxu0 0.0
      %7643 = vmatpush1.msra.mxu0 %v7429
      %7644 = vmatprep.subr.mxu0 0.0
      %7645 = vmatpush1.msra.mxu0 %v7430
      %7646 = vmatprep.subr.mxu0 0.0
      %7647 = vmatpush1.msra.mxu0 %v7431
      %7648 = vmatprep.subr.mxu0 0.0
      %7649 = vmatpush1.msra.mxu0 %v7432
      %7650 = vmatprep.subr.mxu0 0.0
      %7651 = vmatpush1.msra.mxu0 %v7433
      %7652 = vmatprep.subr.mxu0 0.0
      %7653 = vmatpush1.msra.mxu0 %v7434
      %7654 = vmatprep.subr.mxu0 0.0
      %7655 = vmatpush1.msra.mxu0 %v7435
      %7656 = vmatprep.subr.mxu0 0.0
      %7657 = vmatpush1.msra.mxu0 %v7436
      %7658 = vmatprep.subr.mxu0 0.0
      %7659 = vmatpush1.msra.mxu0 %v7437
      %7660 = vmatprep.subr.mxu0 0.0
      %7661 = vmatpush1.msra.mxu0 %v7438
      %7662 = vmatprep.subr.mxu0 0.0
      %7663 = vmatpush1.msra.mxu0 %v7439
      %7664 = vmatprep.subr.mxu0 0.0
      %7665 = vmatpush1.msra.mxu0 %v7440
      %7666 = vmatprep.subr.mxu0 0.0
      %7667 = vmatpush1.msra.mxu0 %v7441
      %7668 = vmatprep.subr.mxu0 0.0
      %7669 = vmatpush1.msra.mxu0 %v7442
      %7670 = vmatprep.subr.mxu0 0.0
      %7671 = vmatpush1.msra.mxu0 %v7443
      %7672 = vmatprep.subr.mxu0 0.0
      %7673 = vmatpush1.msra.mxu0 %v7444
      %7674 = vmatprep.subr.mxu0 0.0
      %7675 = vmatpush1.msra.mxu0 %v7445
      %7676 = vmatprep.subr.mxu0 0.0
      %7677 = vmatpush1.msra.mxu0 %v7446
      %7678 = vmatprep.subr.mxu0 0.0
      %7679 = vmatpush1.msra.mxu0 %v7447
      %7680 = vmatprep.subr.mxu0 0.0
      %7681 = vmatpush1.msra.mxu0 %v7448
      %7682 = vmatprep.subr.mxu0 0.0
      %7683 = vmatpush1.msra.mxu0 %v7449
      %7684 = vmatprep.subr.mxu0 0.0
      %7685 = vmatpush1.msra.mxu0 %v7450
      %7686 = vmatprep.subr.mxu0 0.0
      %7687 = vmatpush1.msra.mxu0 %v7451
      %7688 = vmatprep.subr.mxu0 0.0
      %7689 = vmatpush1.msra.mxu0 %v7452
      %7690 = vmatprep.subr.mxu0 0.0
      %7691 = vmatpush1.msra.mxu0 %v7453
      %7692 = vmatprep.subr.mxu0 0.0
      %7693 = vmatpush1.msra.mxu0 %v7454
      %7694 = vmatprep.subr.mxu0 0.0
      %7695 = vmatpush1.msra.mxu0 %v7455
      %7696 = vmatprep.subr.mxu0 0.0
      %7697 = vmatpush1.msra.mxu0 %v7456
      %7698 = vmatprep.mubr.f32.mxu0 %v6222
      %7699 = vmatmul.mubr.f32.gmra.mrb[0].mxu0 %v6221
      %v7700 = vpop.f32.mrb[0].mxu0
      %v7701 = vadd.f32 %v7556, %v7700
      %v7702 = vpop.f32.mrb[0].mxu0
      %7703 = vmatprep.mubr.f32.mxu0 %v6228
      %7704 = vmatmul.mubr.f32.gmra.mrb[0].mxu0 %v6227
      %v7705 = vpop.f32.mrb[0].mxu0
      %v7706 = vadd.f32 %v7561, %v7705
      %v7707 = vpop.f32.mrb[0].mxu0
      %7708 = vmatprep.mubr.f32.mxu0 %v6234
      %7709 = vmatmul.mubr.f32.gmra.mrb[0].mxu0 %v6233
      %v7710 = vpop.f32.mrb[0].mxu0
      %v7711 = vadd.f32 %v7566, %v7710
      %v7712 = vpop.f32.mrb[0].mxu0
      %7713 = vmatprep.mubr.f32.mxu0 %v6240
      %7714 = vmatmul.mubr.f32.gmra.mrb[0].mxu0 %v6239
      %v7715 = vpop.f32.mrb[0].mxu0
      %v7716 = vadd.f32 %v7571, %v7715
      %v7717 = vpop.f32.mrb[0].mxu0
      %7718 = vmatprep.mubr.f32.mxu0 %v6246
      %7719 = vmatmul.mubr.f32.gmra.mrb[0].mxu0 %v6245
      %v7720 = vpop.f32.mrb[0].mxu0
      %v7721 = vadd.f32 %v7576, %v7720
      %v7722 = vpop.f32.mrb[0].mxu0
      %7723 = vmatprep.mubr.f32.mxu0 %v6252
      %7724 = vmatmul.mubr.f32.gmra.mrb[0].mxu0 %v6251
      %v7725 = vpop.f32.mrb[0].mxu0
      %v7726 = vadd.f32 %v7581, %v7725
      %v7727 = vpop.f32.mrb[0].mxu0
      %7728 = vmatprep.mubr.f32.mxu0 %v6258
      %7729 = vmatmul.mubr.f32.gmra.mrb[0].mxu0 %v6257
      %v7730 = vpop.f32.mrb[0].mxu0
      %v7731 = vadd.f32 %v7586, %v7730
      %v7732 = vpop.f32.mrb[0].mxu0
      %7733 = vmatprep.mubr.f32.mxu0 %v6264
      %7734 = vmatmul.mubr.f32.gmra.mrb[0].mxu0 %v6263
      %v7735 = vpop.f32.mrb[0].mxu0
      %v7736 = vadd.f32 %v7591, %v7735
      %v7737 = vpop.f32.mrb[0].mxu0
      %7738 = vmatprep.mubr.f32.mxu0 %v6270
      %7739 = vmatmul.mubr.f32.gmra.mrb[0].mxu0 %v6269
      %v7740 = vpop.f32.mrb[0].mxu0
      %v7741 = vadd.f32 %v7596, %v7740
      %v7742 = vpop.f32.mrb[0].mxu0
      %7743 = vmatprep.mubr.f32.mxu0 %v6276
      %7744 = vmatmul.mubr.f32.gmra.mrb[0].mxu0 %v6275
      %v7745 = vpop.f32.mrb[0].mxu0
      %v7746 = vadd.f32 %v7601, %v7745
      %v7747 = vpop.f32.mrb[0].mxu0
      %7748 = vmatprep.mubr.f32.mxu0 %v6282
      %7749 = vmatmul.mubr.f32.gmra.mrb[0].mxu0 %v6281
      %v7750 = vpop.f32.mrb[0].mxu0
      %v7751 = vadd.f32 %v7606, %v7750
      %v7752 = vpop.f32.mrb[0].mxu0
      %7753 = vmatprep.mubr.f32.mxu0 %v6288
      %7754 = vmatmul.mubr.f32.gmra.mrb[0].mxu0 %v6287
      %v7755 = vpop.f32.mrb[0].mxu0
      %v7756 = vadd.f32 %v7611, %v7755
      %v7757 = vpop.f32.mrb[0].mxu0
      %7758 = vmatprep.mubr.f32.mxu0 %v6294
      %7759 = vmatmul.mubr.f32.gmra.mrb[0].mxu0 %v6293
      %v7760 = vpop.f32.mrb[0].mxu0
      %v7761 = vadd.f32 %v7616, %v7760
      %v7762 = vpop.f32.mrb[0].mxu0
      %7763 = vmatprep.mubr.f32.mxu0 %v6300
      %7764 = vmatmul.mubr.f32.gmra.mrb[0].mxu0 %v6299
      %v7765 = vpop.f32.mrb[0].mxu0
      %v7766 = vadd.f32 %v7621, %v7765
      %v7767 = vpop.f32.mrb[0].mxu0
      %7768 = vmatprep.mubr.f32.mxu0 %v6306
      %7769 = vmatmul.mubr.f32.gmra.mrb[0].mxu0 %v6305
      %v7770 = vpop.f32.mrb[0].mxu0
      %v7771 = vadd.f32 %v7626, %v7770
      %v7772 = vpop.f32.mrb[0].mxu0
      %7773 = vmatprep.mubr.f32.mxu0 %v6312
      %7774 = vmatmul.mubr.f32.gmra.mrb[0].mxu0 %v6311
      %v7775 = vpop.f32.mrb[0].mxu0
      %v7776 = vadd.f32 %v7631, %v7775
      %v7777 = vpop.f32.mrb[0].mxu0
      %7778 = vdwg.mxu0
      %7779 = vmatprep.subr.mxu0 0.0
      %7780 = vmatpush1.msra.mxu0 %v7457
      %7781 = vmatprep.subr.mxu0 0.0
      %7782 = vmatpush1.msra.mxu0 %v7458
      %7783 = vmatprep.subr.mxu0 0.0
      %7784 = vmatpush1.msra.mxu0 %v7459
      %7785 = vmatprep.subr.mxu0 0.0
      %7786 = vmatpush1.msra.mxu0 %v7460
      %7787 = vmatprep.subr.mxu0 0.0
      %7788 = vmatpush1.msra.mxu0 %v7461
      %7789 = vmatprep.subr.mxu0 0.0
      %7790 = vmatpush1.msra.mxu0 %v7462
      %7791 = vmatprep.subr.mxu0 0.0
      %7792 = vmatpush1.msra.mxu0 %v7463
      %7793 = vmatprep.subr.mxu0 0.0
      %7794 = vmatpush1.msra.mxu0 %v7464
      %7795 = vmatprep.subr.mxu0 0.0
      %7796 = vmatpush1.msra.mxu0 %v7465
      %7797 = vmatprep.subr.mxu0 0.0
      %7798 = vmatpush1.msra.mxu0 %v7466
      %7799 = vmatprep.subr.mxu0 0.0
      %7800 = vmatpush1.msra.mxu0 %v7467
      %7801 = vmatprep.subr.mxu0 0.0
      %7802 = vmatpush1.msra.mxu0 %v7468
      %7803 = vmatprep.subr.mxu0 0.0
      %7804 = vmatpush1.msra.mxu0 %v7469
      %7805 = vmatprep.subr.mxu0 0.0
      %7806 = vmatpush1.msra.mxu0 %v7470
      %7807 = vmatprep.subr.mxu0 0.0
      %7808 = vmatpush1.msra.mxu0 %v7471
      %7809 = vmatprep.subr.mxu0 0.0
      %7810 = vmatpush1.msra.mxu0 %v7472
      %7811 = vmatprep.subr.mxu0 0.0
      %7812 = vmatpush1.msra.mxu0 %v7473
      %7813 = vmatprep.subr.mxu0 0.0
      %7814 = vmatpush1.msra.mxu0 %v7474
      %7815 = vmatprep.subr.mxu0 0.0
      %7816 = vmatpush1.msra.mxu0 %v7475
      %7817 = vmatprep.subr.mxu0 0.0
      %7818 = vmatpush1.msra.mxu0 %v7476
      %7819 = vmatprep.subr.mxu0 0.0
      %7820 = vmatpush1.msra.mxu0 %v7477
      %7821 = vmatprep.subr.mxu0 0.0
      %7822 = vmatpush1.msra.mxu0 %v7478
      %7823 = vmatprep.subr.mxu0 0.0
      %7824 = vmatpush1.msra.mxu0 %v7479
      %7825 = vmatprep.subr.mxu0 0.0
      %7826 = vmatpush1.msra.mxu0 %v7480
      %7827 = vmatprep.subr.mxu0 0.0
      %7828 = vmatpush1.msra.mxu0 %v7481
      %7829 = vmatprep.subr.mxu0 0.0
      %7830 = vmatpush1.msra.mxu0 %v7482
      %7831 = vmatprep.subr.mxu0 0.0
      %7832 = vmatpush1.msra.mxu0 %v7483
      %7833 = vmatprep.subr.mxu0 0.0
      %7834 = vmatpush1.msra.mxu0 %v7484
      %7835 = vmatprep.subr.mxu0 0.0
      %7836 = vmatpush1.msra.mxu0 %v7485
      %7837 = vmatprep.subr.mxu0 0.0
      %7838 = vmatpush1.msra.mxu0 %v7486
      %7839 = vmatprep.subr.mxu0 0.0
      %7840 = vmatpush1.msra.mxu0 %v7487
      %7841 = vmatprep.subr.mxu0 0.0
      %7842 = vmatpush1.msra.mxu0 %v7488
      %7843 = vmatprep.mubr.f32.mxu0 %v6224
      %7844 = vmatmul.mubr.f32.gmra.mrb[0].mxu0 %v6223
      %v7845 = vpop.f32.mrb[0].mxu0
      %v7846 = vadd.f32 %v7701, %v7845
      %v7847 = vpop.f32.mrb[0].mxu0
      %7848 = vmatprep.mubr.f32.mxu0 %v6230
      %7849 = vmatmul.mubr.f32.gmra.mrb[0].mxu0 %v6229
      %v7850 = vpop.f32.mrb[0].mxu0
      %v7851 = vadd.f32 %v7706, %v7850
      %v7852 = vpop.f32.mrb[0].mxu0
      %7853 = vmatprep.mubr.f32.mxu0 %v6236
      %7854 = vmatmul.mubr.f32.gmra.mrb[0].mxu0 %v6235
      %v7855 = vpop.f32.mrb[0].mxu0
      %v7856 = vadd.f32 %v7711, %v7855
      %v7857 = vpop.f32.mrb[0].mxu0
      %7858 = vmatprep.mubr.f32.mxu0 %v6242
      %7859 = vmatmul.mubr.f32.gmra.mrb[0].mxu0 %v6241
      %v7860 = vpop.f32.mrb[0].mxu0
      %v7861 = vadd.f32 %v7716, %v7860
      %v7862 = vpop.f32.mrb[0].mxu0
      %7863 = vmatprep.mubr.f32.mxu0 %v6248
      %7864 = vmatmul.mubr.f32.gmra.mrb[0].mxu0 %v6247
      %v7865 = vpop.f32.mrb[0].mxu0
      %v7866 = vadd.f32 %v7721, %v7865
      %v7867 = vpop.f32.mrb[0].mxu0
      %7868 = vmatprep.mubr.f32.mxu0 %v6254
      %7869 = vmatmul.mubr.f32.gmra.mrb[0].mxu0 %v6253
      %v7870 = vpop.f32.mrb[0].mxu0
      %v7871 = vadd.f32 %v7726, %v7870
      %v7872 = vpop.f32.mrb[0].mxu0
      %7873 = vmatprep.mubr.f32.mxu0 %v6260
      %7874 = vmatmul.mubr.f32.gmra.mrb[0].mxu0 %v6259
      %v7875 = vpop.f32.mrb[0].mxu0
      %v7876 = vadd.f32 %v7731, %v7875
      %v7877 = vpop.f32.mrb[0].mxu0
      %7878 = vmatprep.mubr.f32.mxu0 %v6266
      %7879 = vmatmul.mubr.f32.gmra.mrb[0].mxu0 %v6265
      %v7880 = vpop.f32.mrb[0].mxu0
      %v7881 = vadd.f32 %v7736, %v7880
      %v7882 = vpop.f32.mrb[0].mxu0
      %7883 = vmatprep.mubr.f32.mxu0 %v6272
      %7884 = vmatmul.mubr.f32.gmra.mrb[0].mxu0 %v6271
      %v7885 = vpop.f32.mrb[0].mxu0
      %v7886 = vadd.f32 %v7741, %v7885
      %v7887 = vpop.f32.mrb[0].mxu0
      %7888 = vmatprep.mubr.f32.mxu0 %v6278
      %7889 = vmatmul.mubr.f32.gmra.mrb[0].mxu0 %v6277
      %v7890 = vpop.f32.mrb[0].mxu0
      %v7891 = vadd.f32 %v7746, %v7890
      %v7892 = vpop.f32.mrb[0].mxu0
      %7893 = vmatprep.mubr.f32.mxu0 %v6284
      %7894 = vmatmul.mubr.f32.gmra.mrb[0].mxu0 %v6283
      %v7895 = vpop.f32.mrb[0].mxu0
      %v7896 = vadd.f32 %v7751, %v7895
      %v7897 = vpop.f32.mrb[0].mxu0
      %7898 = vmatprep.mubr.f32.mxu0 %v6290
      %7899 = vmatmul.mubr.f32.gmra.mrb[0].mxu0 %v6289
      %v7900 = vpop.f32.mrb[0].mxu0
      %v7901 = vadd.f32 %v7756, %v7900
      %v7902 = vpop.f32.mrb[0].mxu0
      %7903 = vmatprep.mubr.f32.mxu0 %v6296
      %7904 = vmatmul.mubr.f32.gmra.mrb[0].mxu0 %v6295
      %v7905 = vpop.f32.mrb[0].mxu0
      %v7906 = vadd.f32 %v7761, %v7905
      %v7907 = vpop.f32.mrb[0].mxu0
      %7908 = vmatprep.mubr.f32.mxu0 %v6302
      %7909 = vmatmul.mubr.f32.gmra.mrb[0].mxu0 %v6301
      %v7910 = vpop.f32.mrb[0].mxu0
      %v7911 = vadd.f32 %v7766, %v7910
      %v7912 = vpop.f32.mrb[0].mxu0
      %7913 = vmatprep.mubr.f32.mxu0 %v6308
      %7914 = vmatmul.mubr.f32.gmra.mrb[0].mxu0 %v6307
      %v7915 = vpop.f32.mrb[0].mxu0
      %v7916 = vadd.f32 %v7771, %v7915
      %v7917 = vpop.f32.mrb[0].mxu0
      %7918 = vmatprep.mubr.f32.mxu0 %v6314
      %7919 = vmatmul.mubr.f32.gmra.mrb[0].mxu0 %v6313
      %v7920 = vpop.f32.mrb[0].mxu0
      %v7921 = vadd.f32 %v7776, %v7920
      %v7922 = vpop.f32.mrb[0].mxu0
      %7923 = vdwg.mxu0
      %v7924 = vmax.f32 %v7377, %v7846
      %v7925 = vmax.f32 %v7378, %v7851
      %v7926 = vmax.f32 %v7379, %v7856
      %v7927 = vmax.f32 %v7380, %v7861
      %v7928 = vmax.f32 %v7381, %v7866
      %v7929 = vmax.f32 %v7382, %v7871
      %v7930 = vmax.f32 %v7383, %v7876
      %v7931 = vmax.f32 %v7384, %v7881
      %v7932 = vmax.f32 %v7385, %v7886
      %v7933 = vmax.f32 %v7386, %v7891
      %v7934 = vmax.f32 %v7387, %v7896
      %v7935 = vmax.f32 %v7388, %v7901
      %v7936 = vmax.f32 %v7389, %v7906
      %v7937 = vmax.f32 %v7390, %v7911
      %v7938 = vmax.f32 %v7391, %v7916
      %v7939 = vmax.f32 %v7392, %v7921
      %v7940 = vld [vmem:[%s3 + $0x18] sm:$0xff]
      %v7941 = vld [vmem:[%s3 + $0x38] sm:$0xff]
      %v7942 = vld [vmem:[%s3 + $0x58] sm:$0xff]
      %v7943 = vld [vmem:[%s3 + $0x78] sm:$0xff]
      %v7944 = vld [vmem:[%s3 + $0x98] sm:$0xff]
      %v7945 = vld [vmem:[%s3 + $0xb8] sm:$0xff]
      %v7946 = vld [vmem:[%s3 + $0xd8] sm:$0xff]
      %v7947 = vld [vmem:[%s3 + $0xf8] sm:$0xff]
      %v7948 = vld [vmem:[%s3 + $0x118] sm:$0xff]
      %v7949 = vld [vmem:[%s3 + $0x138] sm:$0xff]
      %v7950 = vld [vmem:[%s3 + $0x158] sm:$0xff]
      %v7951 = vld [vmem:[%s3 + $0x178] sm:$0xff]
      %v7952 = vld [vmem:[%s3 + $0x198] sm:$0xff]
      %v7953 = vld [vmem:[%s3 + $0x1b8] sm:$0xff]
      %v7954 = vld [vmem:[%s3 + $0x1d8] sm:$0xff]
      %v7955 = vld [vmem:[%s3 + $0x1f8] sm:$0xff]
      %v7956 = vld [vmem:[%s3 + $0x218] sm:$0xff]
      %v7957 = vld [vmem:[%s3 + $0x238] sm:$0xff]
      %v7958 = vld [vmem:[%s3 + $0x258] sm:$0xff]
      %v7959 = vld [vmem:[%s3 + $0x278] sm:$0xff]
      %v7960 = vld [vmem:[%s3 + $0x298] sm:$0xff]
      %v7961 = vld [vmem:[%s3 + $0x2b8] sm:$0xff]
      %v7962 = vld [vmem:[%s3 + $0x2d8] sm:$0xff]
      %v7963 = vld [vmem:[%s3 + $0x2f8] sm:$0xff]
      %v7964 = vld [vmem:[%s3 + $0x318] sm:$0xff]
      %v7965 = vld [vmem:[%s3 + $0x338] sm:$0xff]
      %v7966 = vld [vmem:[%s3 + $0x358] sm:$0xff]
      %v7967 = vld [vmem:[%s3 + $0x378] sm:$0xff]
      %v7968 = vld [vmem:[%s3 + $0x398] sm:$0xff]
      %v7969 = vld [vmem:[%s3 + $0x3b8] sm:$0xff]
      %v7970 = vld [vmem:[%s3 + $0x3d8] sm:$0xff]
      %v7971 = vld [vmem:[%s3 + $0x3f8] sm:$0xff]
      %v7972 = vld [vmem:[%s3 + $0x418] sm:$0xff]
      %v7973 = vld [vmem:[%s3 + $0x438] sm:$0xff]
      %v7974 = vld [vmem:[%s3 + $0x458] sm:$0xff]
      %v7975 = vld [vmem:[%s3 + $0x478] sm:$0xff]
      %v7976 = vld [vmem:[%s3 + $0x498] sm:$0xff]
      %v7977 = vld [vmem:[%s3 + $0x4b8] sm:$0xff]
      %v7978 = vld [vmem:[%s3 + $0x4d8] sm:$0xff]
      %v7979 = vld [vmem:[%s3 + $0x4f8] sm:$0xff]
      %v7980 = vld [vmem:[%s3 + $0x518] sm:$0xff]
      %v7981 = vld [vmem:[%s3 + $0x538] sm:$0xff]
      %v7982 = vld [vmem:[%s3 + $0x558] sm:$0xff]
      %v7983 = vld [vmem:[%s3 + $0x578] sm:$0xff]
      %v7984 = vld [vmem:[%s3 + $0x598] sm:$0xff]
      %v7985 = vld [vmem:[%s3 + $0x5b8] sm:$0xff]
      %v7986 = vld [vmem:[%s3 + $0x5d8] sm:$0xff]
      %v7987 = vld [vmem:[%s3 + $0x5f8] sm:$0xff]
      %v7988 = vld [vmem:[%s3 + $0x618] sm:$0xff]
      %v7989 = vld [vmem:[%s3 + $0x638] sm:$0xff]
      %v7990 = vld [vmem:[%s3 + $0x658] sm:$0xff]
      %v7991 = vld [vmem:[%s3 + $0x678] sm:$0xff]
      %v7992 = vld [vmem:[%s3 + $0x698] sm:$0xff]
      %v7993 = vld [vmem:[%s3 + $0x6b8] sm:$0xff]
      %v7994 = vld [vmem:[%s3 + $0x6d8] sm:$0xff]
      %v7995 = vld [vmem:[%s3 + $0x6f8] sm:$0xff]
      %v7996 = vld [vmem:[%s3 + $0x718] sm:$0xff]
      %v7997 = vld [vmem:[%s3 + $0x738] sm:$0xff]
      %v7998 = vld [vmem:[%s3 + $0x758] sm:$0xff]
      %v7999 = vld [vmem:[%s3 + $0x778] sm:$0xff]
      %v8000 = vld [vmem:[%s3 + $0x798] sm:$0xff]
      %v8001 = vld [vmem:[%s3 + $0x7b8] sm:$0xff]
      %v8002 = vld [vmem:[%s3 + $0x7d8] sm:$0xff]
      %v8003 = vld [vmem:[%s3 + $0x7f8] sm:$0xff]
      %v8004 = vld [vmem:[%s3 + $0x818] sm:$0xff]
      %v8005 = vld [vmem:[%s3 + $0x838] sm:$0xff]
      %v8006 = vld [vmem:[%s3 + $0x858] sm:$0xff]
      %v8007 = vld [vmem:[%s3 + $0x878] sm:$0xff]
      %v8008 = vld [vmem:[%s3 + $0x898] sm:$0xff]
      %v8009 = vld [vmem:[%s3 + $0x8b8] sm:$0xff]
      %v8010 = vld [vmem:[%s3 + $0x8d8] sm:$0xff]
      %v8011 = vld [vmem:[%s3 + $0x8f8] sm:$0xff]
      %v8012 = vld [vmem:[%s3 + $0x918] sm:$0xff]
      %v8013 = vld [vmem:[%s3 + $0x938] sm:$0xff]
      %v8014 = vld [vmem:[%s3 + $0x958] sm:$0xff]
      %v8015 = vld [vmem:[%s3 + $0x978] sm:$0xff]
      %v8016 = vld [vmem:[%s3 + $0x998] sm:$0xff]
      %v8017 = vld [vmem:[%s3 + $0x9b8] sm:$0xff]
      %v8018 = vld [vmem:[%s3 + $0x9d8] sm:$0xff]
      %v8019 = vld [vmem:[%s3 + $0x9f8] sm:$0xff]
      %v8020 = vld [vmem:[%s3 + $0xa18] sm:$0xff]
      %v8021 = vld [vmem:[%s3 + $0xa38] sm:$0xff]
      %v8022 = vld [vmem:[%s3 + $0xa58] sm:$0xff]
      %v8023 = vld [vmem:[%s3 + $0xa78] sm:$0xff]
      %v8024 = vld [vmem:[%s3 + $0xa98] sm:$0xff]
      %v8025 = vld [vmem:[%s3 + $0xab8] sm:$0xff]
      %v8026 = vld [vmem:[%s3 + $0xad8] sm:$0xff]
      %v8027 = vld [vmem:[%s3 + $0xaf8] sm:$0xff]
      %v8028 = vld [vmem:[%s3 + $0xb18] sm:$0xff]
      %v8029 = vld [vmem:[%s3 + $0xb38] sm:$0xff]
      %v8030 = vld [vmem:[%s3 + $0xb58] sm:$0xff]
      %v8031 = vld [vmem:[%s3 + $0xb78] sm:$0xff]
      %v8032 = vld [vmem:[%s3 + $0xb98] sm:$0xff]
      %v8033 = vld [vmem:[%s3 + $0xbb8] sm:$0xff]
      %v8034 = vld [vmem:[%s3 + $0xbd8] sm:$0xff]
      %v8035 = vld [vmem:[%s3 + $0xbf8] sm:$0xff]
      %8036 = vmatprep.subr.mxu0 0.0
      %8037 = vmatpush1.msra.mxu0 %v7940
      %8038 = vmatprep.subr.mxu0 0.0
      %8039 = vmatpush1.msra.mxu0 %v7941
      %8040 = vmatprep.subr.mxu0 0.0
      %8041 = vmatpush1.msra.mxu0 %v7942
      %8042 = vmatprep.subr.mxu0 0.0
      %8043 = vmatpush1.msra.mxu0 %v7943
      %8044 = vmatprep.subr.mxu0 0.0
      %8045 = vmatpush1.msra.mxu0 %v7944
      %8046 = vmatprep.subr.mxu0 0.0
      %8047 = vmatpush1.msra.mxu0 %v7945
      %8048 = vmatprep.subr.mxu0 0.0
      %8049 = vmatpush1.msra.mxu0 %v7946
      %8050 = vmatprep.subr.mxu0 0.0
      %8051 = vmatpush1.msra.mxu0 %v7947
      %8052 = vmatprep.subr.mxu0 0.0
      %8053 = vmatpush1.msra.mxu0 %v7948
      %8054 = vmatprep.subr.mxu0 0.0
      %8055 = vmatpush1.msra.mxu0 %v7949
      %8056 = vmatprep.subr.mxu0 0.0
      %8057 = vmatpush1.msra.mxu0 %v7950
      %8058 = vmatprep.subr.mxu0 0.0
      %8059 = vmatpush1.msra.mxu0 %v7951
      %8060 = vmatprep.subr.mxu0 0.0
      %8061 = vmatpush1.msra.mxu0 %v7952
      %8062 = vmatprep.subr.mxu0 0.0
      %8063 = vmatpush1.msra.mxu0 %v7953
      %8064 = vmatprep.subr.mxu0 0.0
      %8065 = vmatpush1.msra.mxu0 %v7954
      %8066 = vmatprep.subr.mxu0 0.0
      %8067 = vmatpush1.msra.mxu0 %v7955
      %8068 = vmatprep.subr.mxu0 0.0
      %8069 = vmatpush1.msra.mxu0 %v7956
      %8070 = vmatprep.subr.mxu0 0.0
      %8071 = vmatpush1.msra.mxu0 %v7957
      %8072 = vmatprep.subr.mxu0 0.0
      %8073 = vmatpush1.msra.mxu0 %v7958
      %8074 = vmatprep.subr.mxu0 0.0
      %8075 = vmatpush1.msra.mxu0 %v7959
      %8076 = vmatprep.subr.mxu0 0.0
      %8077 = vmatpush1.msra.mxu0 %v7960
      %8078 = vmatprep.subr.mxu0 0.0
      %8079 = vmatpush1.msra.mxu0 %v7961
      %8080 = vmatprep.subr.mxu0 0.0
      %8081 = vmatpush1.msra.mxu0 %v7962
      %8082 = vmatprep.subr.mxu0 0.0
      %8083 = vmatpush1.msra.mxu0 %v7963
      %8084 = vmatprep.subr.mxu0 0.0
      %8085 = vmatpush1.msra.mxu0 %v7964
      %8086 = vmatprep.subr.mxu0 0.0
      %8087 = vmatpush1.msra.mxu0 %v7965
      %8088 = vmatprep.subr.mxu0 0.0
      %8089 = vmatpush1.msra.mxu0 %v7966
      %8090 = vmatprep.subr.mxu0 0.0
      %8091 = vmatpush1.msra.mxu0 %v7967
      %8092 = vmatprep.subr.mxu0 0.0
      %8093 = vmatpush1.msra.mxu0 %v7968
      %8094 = vmatprep.subr.mxu0 0.0
      %8095 = vmatpush1.msra.mxu0 %v7969
      %8096 = vmatprep.subr.mxu0 0.0
      %8097 = vmatpush1.msra.mxu0 %v7970
      %8098 = vmatprep.subr.mxu0 0.0
      %8099 = vmatpush1.msra.mxu0 %v7971
      %8100 = vmatprep.mubr.f32.mxu0 %v6220
      %8101 = vmatmul.mubr.f32.gmra.mrb[0].mxu0 %v6219
      %v8102 = vpop.f32.mrb[0].mxu0
      %v8103 = vadd.f32 0.0, %v8102
      %v8104 = vpop.f32.mrb[0].mxu0
      %8105 = vmatprep.mubr.f32.mxu0 %v6226
      %8106 = vmatmul.mubr.f32.gmra.mrb[0].mxu0 %v6225
      %v8107 = vpop.f32.mrb[0].mxu0
      %v8108 = vadd.f32 0.0, %v8107
      %v8109 = vpop.f32.mrb[0].mxu0
      %8110 = vmatprep.mubr.f32.mxu0 %v6232
      %8111 = vmatmul.mubr.f32.gmra.mrb[0].mxu0 %v6231
      %v8112 = vpop.f32.mrb[0].mxu0
      %v8113 = vadd.f32 0.0, %v8112
      %v8114 = vpop.f32.mrb[0].mxu0
      %8115 = vmatprep.mubr.f32.mxu0 %v6238
      %8116 = vmatmul.mubr.f32.gmra.mrb[0].mxu0 %v6237
      %v8117 = vpop.f32.mrb[0].mxu0
      %v8118 = vadd.f32 0.0, %v8117
      %v8119 = vpop.f32.mrb[0].mxu0
      %8120 = vmatprep.mubr.f32.mxu0 %v6244
      %8121 = vmatmul.mubr.f32.gmra.mrb[0].mxu0 %v6243
      %v8122 = vpop.f32.mrb[0].mxu0
      %v8123 = vadd.f32 0.0, %v8122
      %v8124 = vpop.f32.mrb[0].mxu0
      %8125 = vmatprep.mubr.f32.mxu0 %v6250
      %8126 = vmatmul.mubr.f32.gmra.mrb[0].mxu0 %v6249
      %v8127 = vpop.f32.mrb[0].mxu0
      %v8128 = vadd.f32 0.0, %v8127
      %v8129 = vpop.f32.mrb[0].mxu0
      %8130 = vmatprep.mubr.f32.mxu0 %v6256
      %8131 = vmatmul.mubr.f32.gmra.mrb[0].mxu0 %v6255
      %v8132 = vpop.f32.mrb[0].mxu0
      %v8133 = vadd.f32 0.0, %v8132
      %v8134 = vpop.f32.mrb[0].mxu0
      %8135 = vmatprep.mubr.f32.mxu0 %v6262
      %8136 = vmatmul.mubr.f32.gmra.mrb[0].mxu0 %v6261
      %v8137 = vpop.f32.mrb[0].mxu0
      %v8138 = vadd.f32 0.0, %v8137
      %v8139 = vpop.f32.mrb[0].mxu0
      %8140 = vmatprep.mubr.f32.mxu0 %v6268
      %8141 = vmatmul.mubr.f32.gmra.mrb[0].mxu0 %v6267
      %v8142 = vpop.f32.mrb[0].mxu0
      %v8143 = vadd.f32 0.0, %v8142
      %v8144 = vpop.f32.mrb[0].mxu0
      %8145 = vmatprep.mubr.f32.mxu0 %v6274
      %8146 = vmatmul.mubr.f32.gmra.mrb[0].mxu0 %v6273
      %v8147 = vpop.f32.mrb[0].mxu0
      %v8148 = vadd.f32 0.0, %v8147
      %v8149 = vpop.f32.mrb[0].mxu0
      %8150 = vmatprep.mubr.f32.mxu0 %v6280
      %8151 = vmatmul.mubr.f32.gmra.mrb[0].mxu0 %v6279
      %v8152 = vpop.f32.mrb[0].mxu0
      %v8153 = vadd.f32 0.0, %v8152
      %v8154 = vpop.f32.mrb[0].mxu0
      %8155 = vmatprep.mubr.f32.mxu0 %v6286
      %8156 = vmatmul.mubr.f32.gmra.mrb[0].mxu0 %v6285
      %v8157 = vpop.f32.mrb[0].mxu0
      %v8158 = vadd.f32 0.0, %v8157
      %v8159 = vpop.f32.mrb[0].mxu0
      %8160 = vmatprep.mubr.f32.mxu0 %v6292
      %8161 = vmatmul.mubr.f32.gmra.mrb[0].mxu0 %v6291
      %v8162 = vpop.f32.mrb[0].mxu0
      %v8163 = vadd.f32 0.0, %v8162
      %v8164 = vpop.f32.mrb[0].mxu0
      %8165 = vmatprep.mubr.f32.mxu0 %v6298
      %8166 = vmatmul.mubr.f32.gmra.mrb[0].mxu0 %v6297
      %v8167 = vpop.f32.mrb[0].mxu0
      %v8168 = vadd.f32 0.0, %v8167
      %v8169 = vpop.f32.mrb[0].mxu0
      %8170 = vmatprep.mubr.f32.mxu0 %v6304
      %8171 = vmatmul.mubr.f32.gmra.mrb[0].mxu0 %v6303
      %v8172 = vpop.f32.mrb[0].mxu0
      %v8173 = vadd.f32 0.0, %v8172
      %v8174 = vpop.f32.mrb[0].mxu0
      %8175 = vmatprep.mubr.f32.mxu0 %v6310
      %8176 = vmatmul.mubr.f32.gmra.mrb[0].mxu0 %v6309
      %v8177 = vpop.f32.mrb[0].mxu0
      %v8178 = vadd.f32 0.0, %v8177
      %v8179 = vpop.f32.mrb[0].mxu0
      %8180 = vdwg.mxu0
      %8181 = vmatprep.subr.mxu0 0.0
      %8182 = vmatpush1.msra.mxu0 %v7972
      %8183 = vmatprep.subr.mxu0 0.0
      %8184 = vmatpush1.msra.mxu0 %v7973
      %8185 = vmatprep.subr.mxu0 0.0
      %8186 = vmatpush1.msra.mxu0 %v7974
      %8187 = vmatprep.subr.mxu0 0.0
      %8188 = vmatpush1.msra.mxu0 %v7975
      %8189 = vmatprep.subr.mxu0 0.0
      %8190 = vmatpush1.msra.mxu0 %v7976
      %8191 = vmatprep.subr.mxu0 0.0
      %8192 = vmatpush1.msra.mxu0 %v7977
      %8193 = vmatprep.subr.mxu0 0.0
      %8194 = vmatpush1.msra.mxu0 %v7978
      %8195 = vmatprep.subr.mxu0 0.0
      %8196 = vmatpush1.msra.mxu0 %v7979
      %8197 = vmatprep.subr.mxu0 0.0
      %8198 = vmatpush1.msra.mxu0 %v7980
      %8199 = vmatprep.subr.mxu0 0.0
      %8200 = vmatpush1.msra.mxu0 %v7981
      %8201 = vmatprep.subr.mxu0 0.0
      %8202 = vmatpush1.msra.mxu0 %v7982
      %8203 = vmatprep.subr.mxu0 0.0
      %8204 = vmatpush1.msra.mxu0 %v7983
      %8205 = vmatprep.subr.mxu0 0.0
      %8206 = vmatpush1.msra.mxu0 %v7984
      %8207 = vmatprep.subr.mxu0 0.0
      %8208 = vmatpush1.msra.mxu0 %v7985
      %8209 = vmatprep.subr.mxu0 0.0
      %8210 = vmatpush1.msra.mxu0 %v7986
      %8211 = vmatprep.subr.mxu0 0.0
      %8212 = vmatpush1.msra.mxu0 %v7987
      %8213 = vmatprep.subr.mxu0 0.0
      %8214 = vmatpush1.msra.mxu0 %v7988
      %8215 = vmatprep.subr.mxu0 0.0
      %8216 = vmatpush1.msra.mxu0 %v7989
      %8217 = vmatprep.subr.mxu0 0.0
      %8218 = vmatpush1.msra.mxu0 %v7990
      %8219 = vmatprep.subr.mxu0 0.0
      %8220 = vmatpush1.msra.mxu0 %v7991
      %8221 = vmatprep.subr.mxu0 0.0
      %8222 = vmatpush1.msra.mxu0 %v7992
      %8223 = vmatprep.subr.mxu0 0.0
      %8224 = vmatpush1.msra.mxu0 %v7993
      %8225 = vmatprep.subr.mxu0 0.0
      %8226 = vmatpush1.msra.mxu0 %v7994
      %8227 = vmatprep.subr.mxu0 0.0
      %8228 = vmatpush1.msra.mxu0 %v7995
      %8229 = vmatprep.subr.mxu0 0.0
      %8230 = vmatpush1.msra.mxu0 %v7996
      %8231 = vmatprep.subr.mxu0 0.0
      %8232 = vmatpush1.msra.mxu0 %v7997
      %8233 = vmatprep.subr.mxu0 0.0
      %8234 = vmatpush1.msra.mxu0 %v7998
      %8235 = vmatprep.subr.mxu0 0.0
      %8236 = vmatpush1.msra.mxu0 %v7999
      %8237 = vmatprep.subr.mxu0 0.0
      %8238 = vmatpush1.msra.mxu0 %v8000
      %8239 = vmatprep.subr.mxu0 0.0
      %8240 = vmatpush1.msra.mxu0 %v8001
      %8241 = vmatprep.subr.mxu0 0.0
      %8242 = vmatpush1.msra.mxu0 %v8002
      %8243 = vmatprep.subr.mxu0 0.0
      %8244 = vmatpush1.msra.mxu0 %v8003
      %8245 = vmatprep.mubr.f32.mxu0 %v6222
      %8246 = vmatmul.mubr.f32.gmra.mrb[0].mxu0 %v6221
      %v8247 = vpop.f32.mrb[0].mxu0
      %v8248 = vadd.f32 %v8103, %v8247
      %v8249 = vpop.f32.mrb[0].mxu0
      %8250 = vmatprep.mubr.f32.mxu0 %v6228
      %8251 = vmatmul.mubr.f32.gmra.mrb[0].mxu0 %v6227
      %v8252 = vpop.f32.mrb[0].mxu0
      %v8253 = vadd.f32 %v8108, %v8252
      %v8254 = vpop.f32.mrb[0].mxu0
      %8255 = vmatprep.mubr.f32.mxu0 %v6234
      %8256 = vmatmul.mubr.f32.gmra.mrb[0].mxu0 %v6233
      %v8257 = vpop.f32.mrb[0].mxu0
      %v8258 = vadd.f32 %v8113, %v8257
      %v8259 = vpop.f32.mrb[0].mxu0
      %8260 = vmatprep.mubr.f32.mxu0 %v6240
      %8261 = vmatmul.mubr.f32.gmra.mrb[0].mxu0 %v6239
      %v8262 = vpop.f32.mrb[0].mxu0
      %v8263 = vadd.f32 %v8118, %v8262
      %v8264 = vpop.f32.mrb[0].mxu0
      %8265 = vmatprep.mubr.f32.mxu0 %v6246
      %8266 = vmatmul.mubr.f32.gmra.mrb[0].mxu0 %v6245
      %v8267 = vpop.f32.mrb[0].mxu0
      %v8268 = vadd.f32 %v8123, %v8267
      %v8269 = vpop.f32.mrb[0].mxu0
      %8270 = vmatprep.mubr.f32.mxu0 %v6252
      %8271 = vmatmul.mubr.f32.gmra.mrb[0].mxu0 %v6251
      %v8272 = vpop.f32.mrb[0].mxu0
      %v8273 = vadd.f32 %v8128, %v8272
      %v8274 = vpop.f32.mrb[0].mxu0
      %8275 = vmatprep.mubr.f32.mxu0 %v6258
      %8276 = vmatmul.mubr.f32.gmra.mrb[0].mxu0 %v6257
      %v8277 = vpop.f32.mrb[0].mxu0
      %v8278 = vadd.f32 %v8133, %v8277
      %v8279 = vpop.f32.mrb[0].mxu0
      %8280 = vmatprep.mubr.f32.mxu0 %v6264
      %8281 = vmatmul.mubr.f32.gmra.mrb[0].mxu0 %v6263
      %v8282 = vpop.f32.mrb[0].mxu0
      %v8283 = vadd.f32 %v8138, %v8282
      %v8284 = vpop.f32.mrb[0].mxu0
      %8285 = vmatprep.mubr.f32.mxu0 %v6270
      %8286 = vmatmul.mubr.f32.gmra.mrb[0].mxu0 %v6269
      %v8287 = vpop.f32.mrb[0].mxu0
      %v8288 = vadd.f32 %v8143, %v8287
      %v8289 = vpop.f32.mrb[0].mxu0
      %8290 = vmatprep.mubr.f32.mxu0 %v6276
      %8291 = vmatmul.mubr.f32.gmra.mrb[0].mxu0 %v6275
      %v8292 = vpop.f32.mrb[0].mxu0
      %v8293 = vadd.f32 %v8148, %v8292
      %v8294 = vpop.f32.mrb[0].mxu0
      %8295 = vmatprep.mubr.f32.mxu0 %v6282
      %8296 = vmatmul.mubr.f32.gmra.mrb[0].mxu0 %v6281
      %v8297 = vpop.f32.mrb[0].mxu0
      %v8298 = vadd.f32 %v8153, %v8297
      %v8299 = vpop.f32.mrb[0].mxu0
      %8300 = vmatprep.mubr.f32.mxu0 %v6288
      %8301 = vmatmul.mubr.f32.gmra.mrb[0].mxu0 %v6287
      %v8302 = vpop.f32.mrb[0].mxu0
      %v8303 = vadd.f32 %v8158, %v8302
      %v8304 = vpop.f32.mrb[0].mxu0
      %8305 = vmatprep.mubr.f32.mxu0 %v6294
      %8306 = vmatmul.mubr.f32.gmra.mrb[0].mxu0 %v6293
      %v8307 = vpop.f32.mrb[0].mxu0
      %v8308 = vadd.f32 %v8163, %v8307
      %v8309 = vpop.f32.mrb[0].mxu0
      %8310 = vmatprep.mubr.f32.mxu0 %v6300
      %8311 = vmatmul.mubr.f32.gmra.mrb[0].mxu0 %v6299
      %v8312 = vpop.f32.mrb[0].mxu0
      %v8313 = vadd.f32 %v8168, %v8312
      %v8314 = vpop.f32.mrb[0].mxu0
      %8315 = vmatprep.mubr.f32.mxu0 %v6306
      %8316 = vmatmul.mubr.f32.gmra.mrb[0].mxu0 %v6305
      %v8317 = vpop.f32.mrb[0].mxu0
      %v8318 = vadd.f32 %v8173, %v8317
      %v8319 = vpop.f32.mrb[0].mxu0
      %8320 = vmatprep.mubr.f32.mxu0 %v6312
      %8321 = vmatmul.mubr.f32.gmra.mrb[0].mxu0 %v6311
      %v8322 = vpop.f32.mrb[0].mxu0
      %v8323 = vadd.f32 %v8178, %v8322
      %v8324 = vpop.f32.mrb[0].mxu0
      %8325 = vdwg.mxu0
      %8326 = vmatprep.subr.mxu0 0.0
      %8327 = vmatpush1.msra.mxu0 %v8004
      %8328 = vmatprep.subr.mxu0 0.0
      %8329 = vmatpush1.msra.mxu0 %v8005
      %8330 = vmatprep.subr.mxu0 0.0
      %8331 = vmatpush1.msra.mxu0 %v8006
      %8332 = vmatprep.subr.mxu0 0.0
      %8333 = vmatpush1.msra.mxu0 %v8007
      %8334 = vmatprep.subr.mxu0 0.0
      %8335 = vmatpush1.msra.mxu0 %v8008
      %8336 = vmatprep.subr.mxu0 0.0
      %8337 = vmatpush1.msra.mxu0 %v8009
      %8338 = vmatprep.subr.mxu0 0.0
      %8339 = vmatpush1.msra.mxu0 %v8010
      %8340 = vmatprep.subr.mxu0 0.0
      %8341 = vmatpush1.msra.mxu0 %v8011
      %8342 = vmatprep.subr.mxu0 0.0
      %8343 = vmatpush1.msra.mxu0 %v8012
      %8344 = vmatprep.subr.mxu0 0.0
      %8345 = vmatpush1.msra.mxu0 %v8013
      %8346 = vmatprep.subr.mxu0 0.0
      %8347 = vmatpush1.msra.mxu0 %v8014
      %8348 = vmatprep.subr.mxu0 0.0
      %8349 = vmatpush1.msra.mxu0 %v8015
      %8350 = vmatprep.subr.mxu0 0.0
      %8351 = vmatpush1.msra.mxu0 %v8016
      %8352 = vmatprep.subr.mxu0 0.0
      %8353 = vmatpush1.msra.mxu0 %v8017
      %8354 = vmatprep.subr.mxu0 0.0
      %8355 = vmatpush1.msra.mxu0 %v8018
      %8356 = vmatprep.subr.mxu0 0.0
      %8357 = vmatpush1.msra.mxu0 %v8019
      %8358 = vmatprep.subr.mxu0 0.0
      %8359 = vmatpush1.msra.mxu0 %v8020
      %8360 = vmatprep.subr.mxu0 0.0
      %8361 = vmatpush1.msra.mxu0 %v8021
      %8362 = vmatprep.subr.mxu0 0.0
      %8363 = vmatpush1.msra.mxu0 %v8022
      %8364 = vmatprep.subr.mxu0 0.0
      %8365 = vmatpush1.msra.mxu0 %v8023
      %8366 = vmatprep.subr.mxu0 0.0
      %8367 = vmatpush1.msra.mxu0 %v8024
      %8368 = vmatprep.subr.mxu0 0.0
      %8369 = vmatpush1.msra.mxu0 %v8025
      %8370 = vmatprep.subr.mxu0 0.0
      %8371 = vmatpush1.msra.mxu0 %v8026
      %8372 = vmatprep.subr.mxu0 0.0
      %8373 = vmatpush1.msra.mxu0 %v8027
      %8374 = vmatprep.subr.mxu0 0.0
      %8375 = vmatpush1.msra.mxu0 %v8028
      %8376 = vmatprep.subr.mxu0 0.0
      %8377 = vmatpush1.msra.mxu0 %v8029
      %8378 = vmatprep.subr.mxu0 0.0
      %8379 = vmatpush1.msra.mxu0 %v8030
      %8380 = vmatprep.subr.mxu0 0.0
      %8381 = vmatpush1.msra.mxu0 %v8031
      %8382 = vmatprep.subr.mxu0 0.0
      %8383 = vmatpush1.msra.mxu0 %v8032
      %8384 = vmatprep.subr.mxu0 0.0
      %8385 = vmatpush1.msra.mxu0 %v8033
      %8386 = vmatprep.subr.mxu0 0.0
      %8387 = vmatpush1.msra.mxu0 %v8034
      %8388 = vmatprep.subr.mxu0 0.0
      %8389 = vmatpush1.msra.mxu0 %v8035
      %8390 = vmatprep.mubr.f32.mxu0 %v6224
      %8391 = vmatmul.mubr.f32.gmra.mrb[0].mxu0 %v6223
      %v8392 = vpop.f32.mrb[0].mxu0
      %v8393 = vadd.f32 %v8248, %v8392
      %v8394 = vpop.f32.mrb[0].mxu0
      %8395 = vmatprep.mubr.f32.mxu0 %v6230
      %8396 = vmatmul.mubr.f32.gmra.mrb[0].mxu0 %v6229
      %v8397 = vpop.f32.mrb[0].mxu0
      %v8398 = vadd.f32 %v8253, %v8397
      %v8399 = vpop.f32.mrb[0].mxu0
      %8400 = vmatprep.mubr.f32.mxu0 %v6236
      %8401 = vmatmul.mubr.f32.gmra.mrb[0].mxu0 %v6235
      %v8402 = vpop.f32.mrb[0].mxu0
      %v8403 = vadd.f32 %v8258, %v8402
      %v8404 = vpop.f32.mrb[0].mxu0
      %8405 = vmatprep.mubr.f32.mxu0 %v6242
      %8406 = vmatmul.mubr.f32.gmra.mrb[0].mxu0 %v6241
      %v8407 = vpop.f32.mrb[0].mxu0
      %v8408 = vadd.f32 %v8263, %v8407
      %v8409 = vpop.f32.mrb[0].mxu0
      %8410 = vmatprep.mubr.f32.mxu0 %v6248
      %8411 = vmatmul.mubr.f32.gmra.mrb[0].mxu0 %v6247
      %v8412 = vpop.f32.mrb[0].mxu0
      %v8413 = vadd.f32 %v8268, %v8412
      %v8414 = vpop.f32.mrb[0].mxu0
      %8415 = vmatprep.mubr.f32.mxu0 %v6254
      %8416 = vmatmul.mubr.f32.gmra.mrb[0].mxu0 %v6253
      %v8417 = vpop.f32.mrb[0].mxu0
      %v8418 = vadd.f32 %v8273, %v8417
      %v8419 = vpop.f32.mrb[0].mxu0
      %8420 = vmatprep.mubr.f32.mxu0 %v6260
      %8421 = vmatmul.mubr.f32.gmra.mrb[0].mxu0 %v6259
      %v8422 = vpop.f32.mrb[0].mxu0
      %v8423 = vadd.f32 %v8278, %v8422
      %v8424 = vpop.f32.mrb[0].mxu0
      %8425 = vmatprep.mubr.f32.mxu0 %v6266
      %8426 = vmatmul.mubr.f32.gmra.mrb[0].mxu0 %v6265
      %v8427 = vpop.f32.mrb[0].mxu0
      %v8428 = vadd.f32 %v8283, %v8427
      %v8429 = vpop.f32.mrb[0].mxu0
      %8430 = vmatprep.mubr.f32.mxu0 %v6272
      %8431 = vmatmul.mubr.f32.gmra.mrb[0].mxu0 %v6271
      %v8432 = vpop.f32.mrb[0].mxu0
      %v8433 = vadd.f32 %v8288, %v8432
      %v8434 = vpop.f32.mrb[0].mxu0
      %8435 = vmatprep.mubr.f32.mxu0 %v6278
      %8436 = vmatmul.mubr.f32.gmra.mrb[0].mxu0 %v6277
      %v8437 = vpop.f32.mrb[0].mxu0
      %v8438 = vadd.f32 %v8293, %v8437
      %v8439 = vpop.f32.mrb[0].mxu0
      %8440 = vmatprep.mubr.f32.mxu0 %v6284
      %8441 = vmatmul.mubr.f32.gmra.mrb[0].mxu0 %v6283
      %v8442 = vpop.f32.mrb[0].mxu0
      %v8443 = vadd.f32 %v8298, %v8442
      %v8444 = vpop.f32.mrb[0].mxu0
      %8445 = vmatprep.mubr.f32.mxu0 %v6290
      %8446 = vmatmul.mubr.f32.gmra.mrb[0].mxu0 %v6289
      %v8447 = vpop.f32.mrb[0].mxu0
      %v8448 = vadd.f32 %v8303, %v8447
      %v8449 = vpop.f32.mrb[0].mxu0
      %8450 = vmatprep.mubr.f32.mxu0 %v6296
      %8451 = vmatmul.mubr.f32.gmra.mrb[0].mxu0 %v6295
      %v8452 = vpop.f32.mrb[0].mxu0
      %v8453 = vadd.f32 %v8308, %v8452
      %v8454 = vpop.f32.mrb[0].mxu0
      %8455 = vmatprep.mubr.f32.mxu0 %v6302
      %8456 = vmatmul.mubr.f32.gmra.mrb[0].mxu0 %v6301
      %v8457 = vpop.f32.mrb[0].mxu0
      %v8458 = vadd.f32 %v8313, %v8457
      %v8459 = vpop.f32.mrb[0].mxu0
      %8460 = vmatprep.mubr.f32.mxu0 %v6308
      %8461 = vmatmul.mubr.f32.gmra.mrb[0].mxu0 %v6307
      %v8462 = vpop.f32.mrb[0].mxu0
      %v8463 = vadd.f32 %v8318, %v8462
      %v8464 = vpop.f32.mrb[0].mxu0
      %8465 = vmatprep.mubr.f32.mxu0 %v6314
      %8466 = vmatmul.mubr.f32.gmra.mrb[0].mxu0 %v6313
      %v8467 = vpop.f32.mrb[0].mxu0
      %v8468 = vadd.f32 %v8323, %v8467
      %v8469 = vpop.f32.mrb[0].mxu0
      %8470 = vdwg.mxu0
      %v8471 = vmax.f32 %v7924, %v8393
      %v8472 = vmax.f32 %v7925, %v8398
      %v8473 = vmax.f32 %v7926, %v8403
      %v8474 = vmax.f32 %v7927, %v8408
      %v8475 = vmax.f32 %v7928, %v8413
      %v8476 = vmax.f32 %v7929, %v8418
      %v8477 = vmax.f32 %v7930, %v8423
      %v8478 = vmax.f32 %v7931, %v8428
      %v8479 = vmax.f32 %v7932, %v8433
      %v8480 = vmax.f32 %v7933, %v8438
      %v8481 = vmax.f32 %v7934, %v8443
      %v8482 = vmax.f32 %v7935, %v8448
      %v8483 = vmax.f32 %v7936, %v8453
      %v8484 = vmax.f32 %v7937, %v8458
      %v8485 = vmax.f32 %v7938, %v8463
      %v8486 = vmax.f32 %v7939, %v8468
      %v8487 = vld [vmem:[%s4] sm:$0x1]
      %v8489 = vlaneseq
      %v8490 = vshrl.u32 %v8489, 7
      %v8491 = vsub.s32 0, %v8490
      %v8492 = vrot.slane %v8487, %v8491
      %v8494 = vadd.f32 %v8471, %v8492
      %v8495 = vadd.f32 %v8472, %v8492
      %v8496 = vadd.f32 %v8473, %v8492
      %v8497 = vadd.f32 %v8474, %v8492
      %v8498 = vadd.f32 %v8475, %v8492
      %v8499 = vadd.f32 %v8476, %v8492
      %v8500 = vadd.f32 %v8477, %v8492
      %v8501 = vadd.f32 %v8478, %v8492
      %v8502 = vadd.f32 %v8479, %v8492
      %v8503 = vadd.f32 %v8480, %v8492
      %v8504 = vadd.f32 %v8481, %v8492
      %v8505 = vadd.f32 %v8482, %v8492
      %v8506 = vadd.f32 %v8483, %v8492
      %v8507 = vadd.f32 %v8484, %v8492
      %v8508 = vadd.f32 %v8485, %v8492
      %v8509 = vadd.f32 %v8486, %v8492
      %v8510 = vmax.f32 %v8494, 0.0
      %v8511 = vmax.f32 %v8495, 0.0
      %v8512 = vmax.f32 %v8496, 0.0
      %v8513 = vmax.f32 %v8497, 0.0
      %v8514 = vmax.f32 %v8498, 0.0
      %v8515 = vmax.f32 %v8499, 0.0
      %v8516 = vmax.f32 %v8500, 0.0
      %v8517 = vmax.f32 %v8501, 0.0
      %v8518 = vmax.f32 %v8502, 0.0
      %v8519 = vmax.f32 %v8503, 0.0
      %v8520 = vmax.f32 %v8504, 0.0
      %v8521 = vmax.f32 %v8505, 0.0
      %v8522 = vmax.f32 %v8506, 0.0
      %v8523 = vmax.f32 %v8507, 0.0
      %v8524 = vmax.f32 %v8508, 0.0
      %v8525 = vmax.f32 %v8509, 0.0
      %v8526 = vld [vmem:[%s5] sm:$0xff]
      %v8527 = vld [vmem:[%s5 + $0x8] sm:$0xff]
      %v8528 = vld [vmem:[%s5 + $0x10] sm:$0xff]
      %v8529 = vld [vmem:[%s5 + $0x18] sm:$0xff]
      %v8530 = vld [vmem:[%s5 + $0x20] sm:$0xff]
      %v8531 = vld [vmem:[%s5 + $0x28] sm:$0xff]
      %v8532 = vld [vmem:[%s5 + $0x30] sm:$0xff]
      %v8533 = vld [vmem:[%s5 + $0x38] sm:$0xff]
      %v8534 = vld [vmem:[%s5 + $0x40] sm:$0xff]
      %v8535 = vld [vmem:[%s5 + $0x48] sm:$0xff]
      %v8536 = vld [vmem:[%s5 + $0x50] sm:$0xff]
      %v8537 = vld [vmem:[%s5 + $0x58] sm:$0xff]
      %v8538 = vld [vmem:[%s5 + $0x60] sm:$0xff]
      %v8539 = vld [vmem:[%s5 + $0x68] sm:$0xff]
      %v8540 = vld [vmem:[%s5 + $0x70] sm:$0xff]
      %v8541 = vld [vmem:[%s5 + $0x78] sm:$0xff]
      %v8542 = vld [vmem:[%s5 + $0x80] sm:$0xff]
      %v8543 = vld [vmem:[%s5 + $0x88] sm:$0xff]
      %v8544 = vld [vmem:[%s5 + $0x90] sm:$0xff]
      %v8545 = vld [vmem:[%s5 + $0x98] sm:$0xff]
      %v8546 = vld [vmem:[%s5 + $0xa0] sm:$0xff]
      %v8547 = vld [vmem:[%s5 + $0xa8] sm:$0xff]
      %v8548 = vld [vmem:[%s5 + $0xb0] sm:$0xff]
      %v8549 = vld [vmem:[%s5 + $0xb8] sm:$0xff]
      %v8550 = vld [vmem:[%s5 + $0xc0] sm:$0xff]
      %v8551 = vld [vmem:[%s5 + $0xc8] sm:$0xff]
      %v8552 = vld [vmem:[%s5 + $0xd0] sm:$0xff]
      %v8553 = vld [vmem:[%s5 + $0xd8] sm:$0xff]
      %v8554 = vld [vmem:[%s5 + $0xe0] sm:$0xff]
      %v8555 = vld [vmem:[%s5 + $0xe8] sm:$0xff]
      %v8556 = vld [vmem:[%s5 + $0xf0] sm:$0xff]
      %v8557 = vld [vmem:[%s5 + $0xf8] sm:$0xff]
      %8558 = vmatprep.subr.mxu0 0.0
      %8559 = vmatpush1.msra.mxu0 %v8542
      %8560 = vmatprep.subr.mxu0 0.0
      %8561 = vmatpush1.msra.mxu0 %v8543
      %8562 = vmatprep.subr.mxu0 0.0
      %8563 = vmatpush1.msra.mxu0 %v8544
      %8564 = vmatprep.subr.mxu0 0.0
      %8565 = vmatpush1.msra.mxu0 %v8545
      %8566 = vmatprep.subr.mxu0 0.0
      %8567 = vmatpush1.msra.mxu0 %v8546
      %8568 = vmatprep.subr.mxu0 0.0
      %8569 = vmatpush1.msra.mxu0 %v8547
      %8570 = vmatprep.subr.mxu0 0.0
      %8571 = vmatpush1.msra.mxu0 %v8548
      %8572 = vmatprep.subr.mxu0 0.0
      %8573 = vmatpush1.msra.mxu0 %v8549
      %8574 = vmatprep.subr.mxu0 0.0
      %8575 = vmatpush1.msra.mxu0 %v8550
      %8576 = vmatprep.subr.mxu0 0.0
      %8577 = vmatpush1.msra.mxu0 %v8551
      %8578 = vmatprep.subr.mxu0 0.0
      %8579 = vmatpush1.msra.mxu0 %v8552
      %8580 = vmatprep.subr.mxu0 0.0
      %8581 = vmatpush1.msra.mxu0 %v8553
      %8582 = vmatprep.subr.mxu0 0.0
      %8583 = vmatpush1.msra.mxu0 %v8554
      %8584 = vmatprep.subr.mxu0 0.0
      %8585 = vmatpush1.msra.mxu0 %v8555
      %8586 = vmatprep.subr.mxu0 0.0
      %8587 = vmatpush1.msra.mxu0 %v8556
      %8588 = vmatprep.subr.mxu0 0.0
      %8589 = vmatpush1.msra.mxu0 %v8557
      %8590 = vmatprep.subr.mxu0 0.0
      %8591 = vmatpush1.msra.mxu0 0.0
      %8592 = vmatprep.subr.mxu0 0.0
      %8593 = vmatpush1.msra.mxu0 0.0
      %8594 = vmatprep.subr.mxu0 0.0
      %8595 = vmatpush1.msra.mxu0 0.0
      %8596 = vmatprep.subr.mxu0 0.0
      %8597 = vmatpush1.msra.mxu0 0.0
      %8598 = vmatprep.subr.mxu0 0.0
      %8599 = vmatpush1.msra.mxu0 0.0
      %8600 = vmatprep.subr.mxu0 0.0
      %8601 = vmatpush1.msra.mxu0 0.0
      %8602 = vmatprep.subr.mxu0 0.0
      %8603 = vmatpush1.msra.mxu0 0.0
      %8604 = vmatprep.subr.mxu0 0.0
      %8605 = vmatpush1.msra.mxu0 0.0
      %8606 = vmatprep.subr.mxu0 0.0
      %8607 = vmatpush1.msra.mxu0 0.0
      %8608 = vmatprep.subr.mxu0 0.0
      %8609 = vmatpush1.msra.mxu0 0.0
      %8610 = vmatprep.subr.mxu0 0.0
      %8611 = vmatpush1.msra.mxu0 0.0
      %8612 = vmatprep.subr.mxu0 0.0
      %8613 = vmatpush1.msra.mxu0 0.0
      %8614 = vmatprep.subr.mxu0 0.0
      %8615 = vmatpush1.msra.mxu0 0.0
      %8616 = vmatprep.subr.mxu0 0.0
      %8617 = vmatpush1.msra.mxu0 0.0
      %8618 = vmatprep.subr.mxu0 0.0
      %8619 = vmatpush1.msra.mxu0 0.0
      %8620 = vmatprep.subr.mxu0 0.0
      %8621 = vmatpush1.msra.mxu0 0.0
      %8622 = vmatprep.mubr.f32.mxu0 0.0
      %8623 = vmatmul.mubr.f32.gmra.mrb[0].mxu0 %v8514
      %v8624 = vpop.f32.mrb[0].mxu0
      %v8625 = vadd.f32 0.0, %v8624
      %v8626 = vpop.f32.mrb[0].mxu0
      %8627 = vmatprep.mubr.f32.mxu0 0.0
      %8628 = vmatmul.mubr.f32.gmra.mrb[0].mxu0 %v8515
      %v8629 = vpop.f32.mrb[0].mxu0
      %v8630 = vadd.f32 0.0, %v8629
      %v8631 = vpop.f32.mrb[0].mxu0
      %8632 = vmatprep.mubr.f32.mxu0 0.0
      %8633 = vmatmul.mubr.f32.gmra.mrb[0].mxu0 %v8516
      %v8634 = vpop.f32.mrb[0].mxu0
      %v8635 = vadd.f32 0.0, %v8634
      %v8636 = vpop.f32.mrb[0].mxu0
      %8637 = vmatprep.mubr.f32.mxu0 0.0
      %8638 = vmatmul.mubr.f32.gmra.mrb[0].mxu0 %v8517
      %v8639 = vpop.f32.mrb[0].mxu0
      %v8640 = vadd.f32 0.0, %v8639
      %v8641 = vpop.f32.mrb[0].mxu0
      %8642 = vdwg.mxu0
      %8643 = vmatprep.subr.mxu0 0.0
      %8644 = vmatpush1.msra.mxu0 %v8526
      %8645 = vmatprep.subr.mxu0 0.0
      %8646 = vmatpush1.msra.mxu0 %v8527
      %8647 = vmatprep.subr.mxu0 0.0
      %8648 = vmatpush1.msra.mxu0 %v8528
      %8649 = vmatprep.subr.mxu0 0.0
      %8650 = vmatpush1.msra.mxu0 %v8529
      %8651 = vmatprep.subr.mxu0 0.0
      %8652 = vmatpush1.msra.mxu0 %v8530
      %8653 = vmatprep.subr.mxu0 0.0
      %8654 = vmatpush1.msra.mxu0 %v8531
      %8655 = vmatprep.subr.mxu0 0.0
      %8656 = vmatpush1.msra.mxu0 %v8532
      %8657 = vmatprep.subr.mxu0 0.0
      %8658 = vmatpush1.msra.mxu0 %v8533
      %8659 = vmatprep.subr.mxu0 0.0
      %8660 = vmatpush1.msra.mxu0 %v8534
      %8661 = vmatprep.subr.mxu0 0.0
      %8662 = vmatpush1.msra.mxu0 %v8535
      %8663 = vmatprep.subr.mxu0 0.0
      %8664 = vmatpush1.msra.mxu0 %v8536
      %8665 = vmatprep.subr.mxu0 0.0
      %8666 = vmatpush1.msra.mxu0 %v8537
      %8667 = vmatprep.subr.mxu0 0.0
      %8668 = vmatpush1.msra.mxu0 %v8538
      %8669 = vmatprep.subr.mxu0 0.0
      %8670 = vmatpush1.msra.mxu0 %v8539
      %8671 = vmatprep.subr.mxu0 0.0
      %8672 = vmatpush1.msra.mxu0 %v8540
      %8673 = vmatprep.subr.mxu0 0.0
      %8674 = vmatpush1.msra.mxu0 %v8541
      %8675 = vmatprep.subr.mxu0 0.0
      %8676 = vmatpush1.msra.mxu0 0.0
      %8677 = vmatprep.subr.mxu0 0.0
      %8678 = vmatpush1.msra.mxu0 0.0
      %8679 = vmatprep.subr.mxu0 0.0
      %8680 = vmatpush1.msra.mxu0 0.0
      %8681 = vmatprep.subr.mxu0 0.0
      %8682 = vmatpush1.msra.mxu0 0.0
      %8683 = vmatprep.subr.mxu0 0.0
      %8684 = vmatpush1.msra.mxu0 0.0
      %8685 = vmatprep.subr.mxu0 0.0
      %8686 = vmatpush1.msra.mxu0 0.0
      %8687 = vmatprep.subr.mxu0 0.0
      %8688 = vmatpush1.msra.mxu0 0.0
      %8689 = vmatprep.subr.mxu0 0.0
      %8690 = vmatpush1.msra.mxu0 0.0
      %8691 = vmatprep.subr.mxu0 0.0
      %8692 = vmatpush1.msra.mxu0 0.0
      %8693 = vmatprep.subr.mxu0 0.0
      %8694 = vmatpush1.msra.mxu0 0.0
      %8695 = vmatprep.subr.mxu0 0.0
      %8696 = vmatpush1.msra.mxu0 0.0
      %8697 = vmatprep.subr.mxu0 0.0
      %8698 = vmatpush1.msra.mxu0 0.0
      %8699 = vmatprep.subr.mxu0 0.0
      %8700 = vmatpush1.msra.mxu0 0.0
      %8701 = vmatprep.subr.mxu0 0.0
      %8702 = vmatpush1.msra.mxu0 0.0
      %8703 = vmatprep.subr.mxu0 0.0
      %8704 = vmatpush1.msra.mxu0 0.0
      %8705 = vmatprep.subr.mxu0 0.0
      %8706 = vmatpush1.msra.mxu0 0.0
      %8707 = vmatprep.mubr.f32.mxu0 0.0
      %8708 = vmatmul.mubr.f32.gmra.mrb[0].mxu0 %v8510
      %v8709 = vpop.f32.mrb[0].mxu0
      %v8710 = vadd.f32 %v8625, %v8709
      %v8711 = vpop.f32.mrb[0].mxu0
      %8712 = vmatprep.mubr.f32.mxu0 0.0
      %8713 = vmatmul.mubr.f32.gmra.mrb[0].mxu0 %v8511
      %v8714 = vpop.f32.mrb[0].mxu0
      %v8715 = vadd.f32 %v8630, %v8714
      %v8716 = vpop.f32.mrb[0].mxu0
      %8717 = vmatprep.mubr.f32.mxu0 0.0
      %8718 = vmatmul.mubr.f32.gmra.mrb[0].mxu0 %v8512
      %v8719 = vpop.f32.mrb[0].mxu0
      %v8720 = vadd.f32 %v8635, %v8719
      %v8721 = vpop.f32.mrb[0].mxu0
      %8722 = vmatprep.mubr.f32.mxu0 0.0
      %8723 = vmatmul.mubr.f32.gmra.mrb[0].mxu0 %v8513
      %v8724 = vpop.f32.mrb[0].mxu0
      %v8725 = vadd.f32 %v8640, %v8724
      %v8726 = vpop.f32.mrb[0].mxu0
      %8727 = vdwg.mxu0
      %v8728 = vld [vmem:[%s5 + $0x100] sm:$0xff]
      %v8729 = vld [vmem:[%s5 + $0x108] sm:$0xff]
      %v8730 = vld [vmem:[%s5 + $0x110] sm:$0xff]
      %v8731 = vld [vmem:[%s5 + $0x118] sm:$0xff]
      %v8732 = vld [vmem:[%s5 + $0x120] sm:$0xff]
      %v8733 = vld [vmem:[%s5 + $0x128] sm:$0xff]
      %v8734 = vld [vmem:[%s5 + $0x130] sm:$0xff]
      %v8735 = vld [vmem:[%s5 + $0x138] sm:$0xff]
      %v8736 = vld [vmem:[%s5 + $0x140] sm:$0xff]
      %v8737 = vld [vmem:[%s5 + $0x148] sm:$0xff]
      %v8738 = vld [vmem:[%s5 + $0x150] sm:$0xff]
      %v8739 = vld [vmem:[%s5 + $0x158] sm:$0xff]
      %v8740 = vld [vmem:[%s5 + $0x160] sm:$0xff]
      %v8741 = vld [vmem:[%s5 + $0x168] sm:$0xff]
      %v8742 = vld [vmem:[%s5 + $0x170] sm:$0xff]
      %v8743 = vld [vmem:[%s5 + $0x178] sm:$0xff]
      %8744 = vmatprep.subr.mxu0 0.0
      %8745 = vmatpush1.msra.mxu0 %v8728
      %8746 = vmatprep.subr.mxu0 0.0
      %8747 = vmatpush1.msra.mxu0 %v8729
      %8748 = vmatprep.subr.mxu0 0.0
      %8749 = vmatpush1.msra.mxu0 %v8730
      %8750 = vmatprep.subr.mxu0 0.0
      %8751 = vmatpush1.msra.mxu0 %v8731
      %8752 = vmatprep.subr.mxu0 0.0
      %8753 = vmatpush1.msra.mxu0 %v8732
      %8754 = vmatprep.subr.mxu0 0.0
      %8755 = vmatpush1.msra.mxu0 %v8733
      %8756 = vmatprep.subr.mxu0 0.0
      %8757 = vmatpush1.msra.mxu0 %v8734
      %8758 = vmatprep.subr.mxu0 0.0
      %8759 = vmatpush1.msra.mxu0 %v8735
      %8760 = vmatprep.subr.mxu0 0.0
      %8761 = vmatpush1.msra.mxu0 %v8736
      %8762 = vmatprep.subr.mxu0 0.0
      %8763 = vmatpush1.msra.mxu0 %v8737
      %8764 = vmatprep.subr.mxu0 0.0
      %8765 = vmatpush1.msra.mxu0 %v8738
      %8766 = vmatprep.subr.mxu0 0.0
      %8767 = vmatpush1.msra.mxu0 %v8739
      %8768 = vmatprep.subr.mxu0 0.0
      %8769 = vmatpush1.msra.mxu0 %v8740
      %8770 = vmatprep.subr.mxu0 0.0
      %8771 = vmatpush1.msra.mxu0 %v8741
      %8772 = vmatprep.subr.mxu0 0.0
      %8773 = vmatpush1.msra.mxu0 %v8742
      %8774 = vmatprep.subr.mxu0 0.0
      %8775 = vmatpush1.msra.mxu0 %v8743
      %8776 = vmatprep.subr.mxu0 0.0
      %8777 = vmatpush1.msra.mxu0 0.0
      %8778 = vmatprep.subr.mxu0 0.0
      %8779 = vmatpush1.msra.mxu0 0.0
      %8780 = vmatprep.subr.mxu0 0.0
      %8781 = vmatpush1.msra.mxu0 0.0
      %8782 = vmatprep.subr.mxu0 0.0
      %8783 = vmatpush1.msra.mxu0 0.0
      %8784 = vmatprep.subr.mxu0 0.0
      %8785 = vmatpush1.msra.mxu0 0.0
      %8786 = vmatprep.subr.mxu0 0.0
      %8787 = vmatpush1.msra.mxu0 0.0
      %8788 = vmatprep.subr.mxu0 0.0
      %8789 = vmatpush1.msra.mxu0 0.0
      %8790 = vmatprep.subr.mxu0 0.0
      %8791 = vmatpush1.msra.mxu0 0.0
      %8792 = vmatprep.subr.mxu0 0.0
      %8793 = vmatpush1.msra.mxu0 0.0
      %8794 = vmatprep.subr.mxu0 0.0
      %8795 = vmatpush1.msra.mxu0 0.0
      %8796 = vmatprep.subr.mxu0 0.0
      %8797 = vmatpush1.msra.mxu0 0.0
      %8798 = vmatprep.subr.mxu0 0.0
      %8799 = vmatpush1.msra.mxu0 0.0
      %8800 = vmatprep.subr.mxu0 0.0
      %8801 = vmatpush1.msra.mxu0 0.0
      %8802 = vmatprep.subr.mxu0 0.0
      %8803 = vmatpush1.msra.mxu0 0.0
      %8804 = vmatprep.subr.mxu0 0.0
      %8805 = vmatpush1.msra.mxu0 0.0
      %8806 = vmatprep.subr.mxu0 0.0
      %8807 = vmatpush1.msra.mxu0 0.0
      %8808 = vmatprep.mubr.f32.mxu0 0.0
      %8809 = vmatmul.mubr.f32.gmra.mrb[0].mxu0 %v8518
      %v8810 = vpop.f32.mrb[0].mxu0
      %v8811 = vadd.f32 0.0, %v8810
      %v8812 = vpop.f32.mrb[0].mxu0
      %8813 = vmatprep.mubr.f32.mxu0 0.0
      %8814 = vmatmul.mubr.f32.gmra.mrb[0].mxu0 %v8519
      %v8815 = vpop.f32.mrb[0].mxu0
      %v8816 = vadd.f32 0.0, %v8815
      %v8817 = vpop.f32.mrb[0].mxu0
      %8818 = vmatprep.mubr.f32.mxu0 0.0
      %8819 = vmatmul.mubr.f32.gmra.mrb[0].mxu0 %v8520
      %v8820 = vpop.f32.mrb[0].mxu0
      %v8821 = vadd.f32 0.0, %v8820
      %v8822 = vpop.f32.mrb[0].mxu0
      %8823 = vmatprep.mubr.f32.mxu0 0.0
      %8824 = vmatmul.mubr.f32.gmra.mrb[0].mxu0 %v8521
      %v8825 = vpop.f32.mrb[0].mxu0
      %v8826 = vadd.f32 0.0, %v8825
      %v8827 = vpop.f32.mrb[0].mxu0
      %8828 = vdwg.mxu0
      %v8829 = vadd.f32 %v8710, %v8811
      %v8830 = vadd.f32 %v8715, %v8816
      %v8831 = vadd.f32 %v8720, %v8821
      %v8832 = vadd.f32 %v8725, %v8826
      %v8833 = vld [vmem:[%s5 + $0x180] sm:$0xff]
      %v8834 = vld [vmem:[%s5 + $0x188] sm:$0xff]
      %v8835 = vld [vmem:[%s5 + $0x190] sm:$0xff]
      %v8836 = vld [vmem:[%s5 + $0x198] sm:$0xff]
      %v8837 = vld [vmem:[%s5 + $0x1a0] sm:$0xff]
      %v8838 = vld [vmem:[%s5 + $0x1a8] sm:$0xff]
      %v8839 = vld [vmem:[%s5 + $0x1b0] sm:$0xff]
      %v8840 = vld [vmem:[%s5 + $0x1b8] sm:$0xff]
      %v8841 = vld [vmem:[%s5 + $0x1c0] sm:$0xff]
      %v8842 = vld [vmem:[%s5 + $0x1c8] sm:$0xff]
      %v8843 = vld [vmem:[%s5 + $0x1d0] sm:$0xff]
      %v8844 = vld [vmem:[%s5 + $0x1d8] sm:$0xff]
      %v8845 = vld [vmem:[%s5 + $0x1e0] sm:$0xff]
      %v8846 = vld [vmem:[%s5 + $0x1e8] sm:$0xff]
      %v8847 = vld [vmem:[%s5 + $0x1f0] sm:$0xff]
      %v8848 = vld [vmem:[%s5 + $0x1f8] sm:$0xff]
      %8849 = vmatprep.subr.mxu0 0.0
      %8850 = vmatpush1.msra.mxu0 %v8833
      %8851 = vmatprep.subr.mxu0 0.0
      %8852 = vmatpush1.msra.mxu0 %v8834
      %8853 = vmatprep.subr.mxu0 0.0
      %8854 = vmatpush1.msra.mxu0 %v8835
      %8855 = vmatprep.subr.mxu0 0.0
      %8856 = vmatpush1.msra.mxu0 %v8836
      %8857 = vmatprep.subr.mxu0 0.0
      %8858 = vmatpush1.msra.mxu0 %v8837
      %8859 = vmatprep.subr.mxu0 0.0
      %8860 = vmatpush1.msra.mxu0 %v8838
      %8861 = vmatprep.subr.mxu0 0.0
      %8862 = vmatpush1.msra.mxu0 %v8839
      %8863 = vmatprep.subr.mxu0 0.0
      %8864 = vmatpush1.msra.mxu0 %v8840
      %8865 = vmatprep.subr.mxu0 0.0
      %8866 = vmatpush1.msra.mxu0 %v8841
      %8867 = vmatprep.subr.mxu0 0.0
      %8868 = vmatpush1.msra.mxu0 %v8842
      %8869 = vmatprep.subr.mxu0 0.0
      %8870 = vmatpush1.msra.mxu0 %v8843
      %8871 = vmatprep.subr.mxu0 0.0
      %8872 = vmatpush1.msra.mxu0 %v8844
      %8873 = vmatprep.subr.mxu0 0.0
      %8874 = vmatpush1.msra.mxu0 %v8845
      %8875 = vmatprep.subr.mxu0 0.0
      %8876 = vmatpush1.msra.mxu0 %v8846
      %8877 = vmatprep.subr.mxu0 0.0
      %8878 = vmatpush1.msra.mxu0 %v8847
      %8879 = vmatprep.subr.mxu0 0.0
      %8880 = vmatpush1.msra.mxu0 %v8848
      %8881 = vmatprep.subr.mxu0 0.0
      %8882 = vmatpush1.msra.mxu0 0.0
      %8883 = vmatprep.subr.mxu0 0.0
      %8884 = vmatpush1.msra.mxu0 0.0
      %8885 = vmatprep.subr.mxu0 0.0
      %8886 = vmatpush1.msra.mxu0 0.0
      %8887 = vmatprep.subr.mxu0 0.0
      %8888 = vmatpush1.msra.mxu0 0.0
      %8889 = vmatprep.subr.mxu0 0.0
      %8890 = vmatpush1.msra.mxu0 0.0
      %8891 = vmatprep.subr.mxu0 0.0
      %8892 = vmatpush1.msra.mxu0 0.0
      %8893 = vmatprep.subr.mxu0 0.0
      %8894 = vmatpush1.msra.mxu0 0.0
      %8895 = vmatprep.subr.mxu0 0.0
      %8896 = vmatpush1.msra.mxu0 0.0
      %8897 = vmatprep.subr.mxu0 0.0
      %8898 = vmatpush1.msra.mxu0 0.0
      %8899 = vmatprep.subr.mxu0 0.0
      %8900 = vmatpush1.msra.mxu0 0.0
      %8901 = vmatprep.subr.mxu0 0.0
      %8902 = vmatpush1.msra.mxu0 0.0
      %8903 = vmatprep.subr.mxu0 0.0
      %8904 = vmatpush1.msra.mxu0 0.0
      %8905 = vmatprep.subr.mxu0 0.0
      %8906 = vmatpush1.msra.mxu0 0.0
      %8907 = vmatprep.subr.mxu0 0.0
      %8908 = vmatpush1.msra.mxu0 0.0
      %8909 = vmatprep.subr.mxu0 0.0
      %8910 = vmatpush1.msra.mxu0 0.0
      %8911 = vmatprep.subr.mxu0 0.0
      %8912 = vmatpush1.msra.mxu0 0.0
      %8913 = vmatprep.mubr.f32.mxu0 0.0
      %8914 = vmatmul.mubr.f32.gmra.mrb[0].mxu0 %v8522
      %v8915 = vpop.f32.mrb[0].mxu0
      %v8916 = vadd.f32 0.0, %v8915
      %v8917 = vpop.f32.mrb[0].mxu0
      %8918 = vmatprep.mubr.f32.mxu0 0.0
      %8919 = vmatmul.mubr.f32.gmra.mrb[0].mxu0 %v8523
      %v8920 = vpop.f32.mrb[0].mxu0
      %v8921 = vadd.f32 0.0, %v8920
      %v8922 = vpop.f32.mrb[0].mxu0
      %8923 = vmatprep.mubr.f32.mxu0 0.0
      %8924 = vmatmul.mubr.f32.gmra.mrb[0].mxu0 %v8524
      %v8925 = vpop.f32.mrb[0].mxu0
      %v8926 = vadd.f32 0.0, %v8925
      %v8927 = vpop.f32.mrb[0].mxu0
      %8928 = vmatprep.mubr.f32.mxu0 0.0
      %8929 = vmatmul.mubr.f32.gmra.mrb[0].mxu0 %v8525
      %v8930 = vpop.f32.mrb[0].mxu0
      %v8931 = vadd.f32 0.0, %v8930
      %v8932 = vpop.f32.mrb[0].mxu0
      %8933 = vdwg.mxu0
      %v8934 = vadd.f32 %v8829, %v8916
      %v8935 = vadd.f32 %v8830, %v8921
      %v8936 = vadd.f32 %v8831, %v8926
      %v8937 = vadd.f32 %v8832, %v8931
      %v8938 = vld [vmem:[%s6] sm:$0x1]
      %v8940 = vlaneseq
      %v8941 = vshrl.u32 %v8940, 7
      %v8942 = vsub.s32 0, %v8941
      %v8943 = vrot.slane %v8938, %v8942
      %v8945 = vadd.f32 %v8934, %v8943
      %v8946 = vadd.f32 %v8935, %v8943
      %v8947 = vadd.f32 %v8936, %v8943
      %v8948 = vadd.f32 %v8937, %v8943
      %v8949 = vmax.f32 %v8945, 0.0
      %v8950 = vmax.f32 %v8946, 0.0
      %v8951 = vmax.f32 %v8947, 0.0
      %v8952 = vmax.f32 %v8948, 0.0
      %v8953 = vld [vmem:[%s7] sm:$0xff]
      %v8954 = vld [vmem:[%s7 + $0x8] sm:$0xff]
      %v8955 = vld [vmem:[%s7 + $0x10] sm:$0xff]
      %v8956 = vld [vmem:[%s7 + $0x18] sm:$0xff]
      %v8957 = vld [vmem:[%s7 + $0x20] sm:$0xff]
      %v8958 = vld [vmem:[%s7 + $0x28] sm:$0xff]
      %v8959 = vld [vmem:[%s7 + $0x30] sm:$0xff]
      %v8960 = vld [vmem:[%s7 + $0x38] sm:$0xff]
      %v8961 = vld [vmem:[%s7 + $0x40] sm:$0xff]
      %v8962 = vld [vmem:[%s7 + $0x48] sm:$0xff]
      %v8963 = vld [vmem:[%s7 + $0x50] sm:$0xff]
      %v8964 = vld [vmem:[%s7 + $0x58] sm:$0xff]
      %v8965 = vld [vmem:[%s7 + $0x60] sm:$0xff]
      %v8966 = vld [vmem:[%s7 + $0x68] sm:$0xff]
      %v8967 = vld [vmem:[%s7 + $0x70] sm:$0xff]
      %v8968 = vld [vmem:[%s7 + $0x78] sm:$0xff]
      %v8969 = vld [vmem:[%s8] sm:$0x1]
      %v8971 = vlaneseq
      %v8972 = vshrl.u32 %v8971, 7
      %v8973 = vsub.s32 0, %v8972
      %v8974 = vrot.slane %v8969, %v8973
      %8976 = vmatprep.subr.mxu0 0.0
      %8977 = vmatpush1.msra.mxu0 %v8953
      %8978 = vmatprep.subr.mxu0 0.0
      %8979 = vmatpush1.msra.mxu0 %v8954
      %8980 = vmatprep.subr.mxu0 0.0
      %8981 = vmatpush1.msra.mxu0 %v8955
      %8982 = vmatprep.subr.mxu0 0.0
      %8983 = vmatpush1.msra.mxu0 %v8956
      %8984 = vmatprep.subr.mxu0 0.0
      %8985 = vmatpush1.msra.mxu0 %v8957
      %8986 = vmatprep.subr.mxu0 0.0
      %8987 = vmatpush1.msra.mxu0 %v8958
      %8988 = vmatprep.subr.mxu0 0.0
      %8989 = vmatpush1.msra.mxu0 %v8959
      %8990 = vmatprep.subr.mxu0 0.0
      %8991 = vmatpush1.msra.mxu0 %v8960
      %8992 = vmatprep.subr.mxu0 0.0
      %8993 = vmatpush1.msra.mxu0 %v8961
      %8994 = vmatprep.subr.mxu0 0.0
      %8995 = vmatpush1.msra.mxu0 %v8962
      %8996 = vmatprep.subr.mxu0 0.0
      %8997 = vmatpush1.msra.mxu0 %v8963
      %8998 = vmatprep.subr.mxu0 0.0
      %8999 = vmatpush1.msra.mxu0 %v8964
      %9000 = vmatprep.subr.mxu0 0.0
      %9001 = vmatpush1.msra.mxu0 %v8965
      %9002 = vmatprep.subr.mxu0 0.0
      %9003 = vmatpush1.msra.mxu0 %v8966
      %9004 = vmatprep.subr.mxu0 0.0
      %9005 = vmatpush1.msra.mxu0 %v8967
      %9006 = vmatprep.subr.mxu0 0.0
      %9007 = vmatpush1.msra.mxu0 %v8968
      %9008 = vmatprep.subr.mxu0 0.0
      %9009 = vmatpush1.msra.mxu0 0.0
      %9010 = vmatprep.subr.mxu0 0.0
      %9011 = vmatpush1.msra.mxu0 0.0
      %9012 = vmatprep.subr.mxu0 0.0
      %9013 = vmatpush1.msra.mxu0 0.0
      %9014 = vmatprep.subr.mxu0 0.0
      %9015 = vmatpush1.msra.mxu0 0.0
      %9016 = vmatprep.subr.mxu0 0.0
      %9017 = vmatpush1.msra.mxu0 0.0
      %9018 = vmatprep.subr.mxu0 0.0
      %9019 = vmatpush1.msra.mxu0 0.0
      %9020 = vmatprep.subr.mxu0 0.0
      %9021 = vmatpush1.msra.mxu0 0.0
      %9022 = vmatprep.subr.mxu0 0.0
      %9023 = vmatpush1.msra.mxu0 0.0
      %9024 = vmatprep.subr.mxu0 0.0
      %9025 = vmatpush1.msra.mxu0 0.0
      %9026 = vmatprep.subr.mxu0 0.0
      %9027 = vmatpush1.msra.mxu0 0.0
      %9028 = vmatprep.subr.mxu0 0.0
      %9029 = vmatpush1.msra.mxu0 0.0
      %9030 = vmatprep.subr.mxu0 0.0
      %9031 = vmatpush1.msra.mxu0 0.0
      %9032 = vmatprep.subr.mxu0 0.0
      %9033 = vmatpush1.msra.mxu0 0.0
      %9034 = vmatprep.subr.mxu0 0.0
      %9035 = vmatpush1.msra.mxu0 0.0
      %9036 = vmatprep.subr.mxu0 0.0
      %9037 = vmatpush1.msra.mxu0 0.0
      %9038 = vmatprep.subr.mxu0 0.0
      %9039 = vmatpush1.msra.mxu0 0.0
      %9040 = vmatprep.mubr.f32.mxu0 0.0
      %9041 = vmatmul.mubr.f32.gmra.mrb[0].mxu0 %v8949
      %v9042 = vpop.f32.mrb[0].mxu0
      %v9043 = vadd.f32 %v8974, %v9042
      %v9044 = vpop.f32.mrb[0].mxu0
      %9045 = vmatprep.mubr.f32.mxu0 0.0
      %9046 = vmatmul.mubr.f32.gmra.mrb[0].mxu0 %v8950
      %v9047 = vpop.f32.mrb[0].mxu0
      %v9048 = vadd.f32 %v8974, %v9047
      %v9049 = vpop.f32.mrb[0].mxu0
      %9050 = vmatprep.mubr.f32.mxu0 0.0
      %9051 = vmatmul.mubr.f32.gmra.mrb[0].mxu0 %v8951
      %v9052 = vpop.f32.mrb[0].mxu0
      %v9053 = vadd.f32 %v8974, %v9052
      %v9054 = vpop.f32.mrb[0].mxu0
      %9055 = vmatprep.mubr.f32.mxu0 0.0
      %9056 = vmatmul.mubr.f32.gmra.mrb[0].mxu0 %v8952
      %v9057 = vpop.f32.mrb[0].mxu0
      %v9058 = vadd.f32 %v8974, %v9057
      %v9059 = vpop.f32.mrb[0].mxu0
      %9060 = vdwg.mxu0
      %9061 = vst [vmem:[%s337] sm:$0xff] %v9043
      %9062 = vst [vmem:[%s337 + $0x8] sm:$0xff] %v9048
      %9063 = vst [vmem:[%s337 + $0x10] sm:$0xff] %v9053
      %9064 = vst [vmem:[%s337 + $0x18] sm:$0xff] %v9058
      %s9065 = smul.u32 4, %s20
      %p9066 = scmp.lt.s32.totalorder %s9065, 7
      %s9067 = scalar_select %p9066, %s9065, 7
      %s9068 = smul.addr %s9067, 8
      %s9069 = scalar_lea.vmem %s9, %s9068
      // Predicated region
      $region57: #{unbounded_grid_locnet_forward.1} parent=55 // pred_check
        %p9070 = pneg %p232
      $region58: #{unbounded_grid_locnet_forward.1} parent=55 // pred_check_branch
        %9072 = sbr.rel (%p9070) target = $region60
      $region59: #{unbounded_grid_locnet_forward.1} parent=55 // pred_region
        %s9073 = smul.u32 4, %s20
      $region60: #{unbounded_grid_locnet_forward.1} parent=55 // pred_fallthru
        _
    $region56: #{unbounded_grid_locnet_forward.1} parent=5 // pred_fallthru
      _
    %p9074 = scmp.le.s32.totalorder 2, %s15
    // Predicated region
    $region61: #{unbounded_grid_locnet_forward.1} parent=5 // pred_check
      %p9075 = pneg %p9074
    $region62: #{unbounded_grid_locnet_forward.1} parent=5 // pred_check_branch
      %9077 = sbr.rel (%p9075) target = $region64
    $region63: #{unbounded_grid_locnet_forward.1} parent=5 // pred_region
      %s9078 = ssub.s32 %s15, 2
      // Predicated region
      $region65: #{unbounded_grid_locnet_forward.1} parent=63 // pred_check
        %p9079 = pneg %p238
      $region66: #{unbounded_grid_locnet_forward.1} parent=63 // pred_check_branch
        %9081 = sbr.rel (%p9079) target = $region68
      $region67: #{unbounded_grid_locnet_forward.1} parent=63 // pred_region
        %s9082 = smul.u32 4, %s21
        %p9083 = scmp.lt.s32.totalorder %s9082, 7
        %s9084 = scalar_select %p9083, %s9082, 7
        %s9085 = smul.addr %s9084, 8
        %s9086 = scalar_lea.vmem %s9, %s9085
      $region68: #{unbounded_grid_locnet_forward.1} parent=63 // pred_fallthru
        _
    $region64: #{unbounded_grid_locnet_forward.1} parent=5 // pred_fallthru
      _
  $region6: #{unbounded_grid_locnet_forward.1} parent=0 // loop_footer
    %s19 = sadd.s32 1, %s15
  $region7: #{unbounded_grid_locnet_forward.1} parent=0 // loop_footer_branch
    %14 = sbr.rel target = $region3
  $region8: #{unbounded_grid_locnet_forward.1} parent=0 // loop_exit
    _

</llo_original>
